<compile_context>
chip_gen: v7x
topology: tpu7x:2x2x1
jax: 0.10.0
libtpu: 0.0.40
codegen_flags: <defaults>
</compile_context>

<pallas_src>
import math

import jax
import jax.numpy as jnp
from jax.experimental import pallas as pl
from jax.experimental.pallas import tpu as pltpu

# Whole-array, VMEM-resident spec for weights/biases (copied in once, reused per step).
_WSPEC = pl.BlockSpec(memory_space=pltpu.MemorySpace.VMEM)


# ------------------------------------------------------------------ kernel ----

def _region_detector_kernel(
        x_ref,                                      # (H, W, C0) one batch element (NHWC)
        w1, b1, w2, b2, w3, b3, w4, b4, w5, b5,     # conv3x3: (9, Cin, Cout) bf16 / (1, Cout) f32
        wc1, bc1, wc2, bc2, wc3, bc3,               # 1x1 classifier: (Cin, Cout) bf16 / (1, Cout) f32
        sm_ref, lsm_ref,                            # (Ho, Wo, ncls) outputs
        pb1, pb2, pb3, pb4, pb5):                   # padded-input VMEM scratch, one per conv

    def conv3x3_bn_relu(pad_ref, src, w_ref, b_ref):
        """3x3 'same' conv + folded eval-BatchNorm + ReLU. src: (H, W, Cin) f32 value."""
        Hp, Wp, cin = pad_ref.shape
        H, W = Hp - 2, Wp - 2
        cout = w_ref.shape[-1]
        pad_ref[...] = jnp.zeros(pad_ref.shape, pad_ref.dtype)   # zero halo (padding=1)
        pad_ref[1:H + 1, 1:W + 1, :] = src                       # interior
        # TODO(synk): the 9 taps could be packed into a single K=9*Cin matmul via a
        # lane-dim concat; kept per-tap dots for lowering robustness (overhead-bound here).
        acc = jnp.zeros((H * W, cout), jnp.float32)
        for t in range(9):                                       # statically unrolled taps
            dy, dx = divmod(t, 3)
            patch = pad_ref[dy:dy + H, dx:dx + W, :].reshape(H * W, cin)
            acc = acc + jnp.dot(patch.astype(jnp.bfloat16), w_ref[t],
                                preferred_element_type=jnp.float32)
        y = jnp.maximum(acc + b_ref[...], 0.0)                   # bias(+BN shift) + ReLU
        return y.reshape(H, W, cout)

    def maxpool2(y):
        H, W, C = y.shape
        y = y.reshape(H // 2, 2, W // 2, 2, C)
        y = jnp.max(y, axis=3)                                   # pool over W window
        return jnp.max(y, axis=1)                                # pool over H window

    x = x_ref[...].astype(jnp.float32)

    y = conv3x3_bn_relu(pb1, x, w1, b1)          # (H,   W,   16)
    y = maxpool2(y)                              # (H/2, W/2, 16)
    y = conv3x3_bn_relu(pb2, y, w2, b2)          # (H/2, W/2, 16)
    y = conv3x3_bn_relu(pb3, y, w3, b3)          # (H/2, W/2, 32)
    y = maxpool2(y)                              # (H/4, W/4, 32)
    y = conv3x3_bn_relu(pb4, y, w4, b4)          # (H/4, W/4, 32)
    y = maxpool2(y)                              # (H/8, W/8, 32)
    y = conv3x3_bn_relu(pb5, y, w5, b5)          # (H/8, W/8, 64)

    Ho, Wo, c5 = y.shape
    h = y.reshape(Ho * Wo, c5)
    # 1x1 convs over flattened positions == matmuls; Dropout is an inference no-op.
    h = jnp.maximum(jnp.dot(h.astype(jnp.bfloat16), wc1[...],
                            preferred_element_type=jnp.float32) + bc1[...], 0.0)
    h = jnp.maximum(jnp.dot(h.astype(jnp.bfloat16), wc2[...],
                            preferred_element_type=jnp.float32) + bc2[...], 0.0)
    logits = jnp.dot(h.astype(jnp.bfloat16), wc3[...],
                     preferred_element_type=jnp.float32) + bc3[...]

    # softmax / log_softmax over the class (channel) dim.
    m = jnp.max(logits, axis=-1, keepdims=True)
    z = logits - m
    e = jnp.exp(z)
    s = jnp.sum(e, axis=-1, keepdims=True)
    ncls = logits.shape[-1]
    sm_ref[...] = (e * pl.reciprocal(s, approx=True)).reshape(Ho, Wo, ncls)
    lsm_ref[...] = (z - jnp.log(s)).reshape(Ho, Wo, ncls)


# ----------------------------------------------------------------- wrapper ----

def region_detector_forward(x_nchw, params):
    """x_nchw: (N, C, H, W) -> {'softmax','log_softmax'} each (N, n_classes, H/8, W/8)."""
    x = jnp.transpose(x_nchw, (0, 2, 3, 1)).astype(jnp.float32)   # NCHW -> NHWC (channels on lanes)
    N, H, W, C0 = x.shape
    assert H % 8 == 0 and W % 8 == 0, "three 2x2 maxpools require H, W divisible by 8"
    conv_ws, conv_bs = params['conv_ws'], params['conv_bs']
    cls_ws, cls_bs = params['cls_ws'], params['cls_bs']
    assert len(conv_ws) == 5 and len(cls_ws) == 3
    ncls = cls_ws[-1].shape[-1]
    Ho, Wo = H // 8, W // 8

    args = [x]
    in_specs = [pl.BlockSpec((None, H, W, C0), lambda b: (b, 0, 0, 0))]
    for w, b in zip(conv_ws, conv_bs):
        args += [w, b]
        in_specs += [_WSPEC, _WSPEC]
    for w, b in zip(cls_ws, cls_bs):
        args += [w, b]
        in_specs += [_WSPEC, _WSPEC]

    # One padded-input scratch buffer per conv layer; all stay resident in VMEM.
    conv_hw = [(H, W), (H // 2, W // 2), (H // 2, W // 2), (H // 4, W // 4), (H // 8, W // 8)]
    scratch_shapes = [pltpu.VMEM((h + 2, w + 2, cw.shape[1]), jnp.float32)
                      for (h, w), cw in zip(conv_hw, conv_ws)]

    out_spec = pl.BlockSpec((None, Ho, Wo, ncls), lambda b: (b, 0, 0, 0))
    sm, lsm = pl.pallas_call(
        _region_detector_kernel,
        grid=(N,),
        out_shape=(jax.ShapeDtypeStruct((N, Ho, Wo, ncls), jnp.float32),
                   jax.ShapeDtypeStruct((N, Ho, Wo, ncls), jnp.float32)),
        in_specs=in_specs,
        out_specs=(out_spec, out_spec),
        scratch_shapes=scratch_shapes,
        compiler_params=pltpu.CompilerParams(
            dimension_semantics=("parallel",)),   # batch splits across v7x's two TensorCores
    )(*args)

    sm = jnp.transpose(sm, (0, 3, 1, 2))          # NHWC -> NCHW to match PyTorch
    lsm = jnp.transpose(lsm, (0, 3, 1, 2))
    return {'softmax': sm, 'log_softmax': lsm}


# ------------------------------------------------------------ params (init) ----

def init_params(key, n_channels=3, n_classes=2):
    """Mirror RegionDetector._initialize_weights: conv W ~ N(0, sqrt(2/(k*k*Cout))),
    conv bias = 0; eval-mode BatchNorm (gamma=1, beta=0, mean=0, var=1) is folded
    into the conv weights (scale) and biases (shift)."""
    cfg = [16, 'M', 16, 32, 'M', 32, 'M', 64]
    eps = 1e-5
    bn_scale = 1.0 / math.sqrt(1.0 + eps)
    conv_ws, conv_bs = [], []
    cin = n_channels
    for v in cfg:
        if v == 'M':
            continue
        key, sub = jax.random.split(key)
        std = math.sqrt(2.0 / (3 * 3 * v))
        w = std * jax.random.normal(sub, (9, cin, v), jnp.float32)   # (tap, Cin, Cout)
        w = w * bn_scale                                             # fold eval-BN scale
        conv_ws.append(w.astype(jnp.bfloat16))                       # MXU operand in bf16
        conv_bs.append(jnp.zeros((1, v), jnp.float32))               # conv bias(0) + BN shift(0)
        cin = v
    cls_ws, cls_bs = [], []
    for cout in (128, 128, n_classes):
        key, sub = jax.random.split(key)
        std = math.sqrt(2.0 / (1 * 1 * cout))
        w = std * jax.random.normal(sub, (cin, cout), jnp.float32)   # (Cin, Cout)
        cls_ws.append(w.astype(jnp.bfloat16))
        cls_bs.append(jnp.zeros((1, cout), jnp.float32))
        cin = cout
    return {'conv_ws': conv_ws, 'conv_bs': conv_bs, 'cls_ws': cls_ws, 'cls_bs': cls_bs}


# --------------------------------------------------------------------- main ----

if __name__ == "__main__":
    key = jax.random.PRNGKey(0)
    kx, kp = jax.random.split(key)
    # Matches PyTorch NCHW input convention: batch=2, n_channels=3, 16x16 spatial.
    x = jax.random.normal(kx, (2, 3, 16, 16), jnp.float32)
    params = init_params(kp, n_channels=3, n_classes=2)

    fwd = jax.jit(lambda inp: region_detector_forward(inp, params))
    out = jax.block_until_ready(fwd(x))

    assert out['softmax'].shape == (2, 2, 2, 2)        # N, n_classes, H/8, W/8
    assert out['log_softmax'].shape == (2, 2, 2, 2)
    # tolerances account for bf16 matmul operands + approx EUP reciprocal in softmax.
    chan_sum = jnp.sum(out['softmax'], axis=1)
    assert jnp.allclose(chan_sum, jnp.ones_like(chan_sum), atol=5e-3)
    assert jnp.allclose(jnp.log(out['softmax']), out['log_softmax'], atol=5e-3)
    print("KERNEL_OK")
</pallas_src>

<mosaic_0001>
module attributes {stable_mosaic.version = 11 : i64} {
  func.func @_region_detector_kernel(%arg0: i32, %arg1: memref<1x16x16x3xf32, #tpu.memory_space<vmem>>, %arg2: memref<9x3x16xbf16, #tpu.memory_space<vmem>>, %arg3: memref<1x16xf32, #tpu.memory_space<vmem>>, %arg4: memref<9x16x16xbf16, #tpu.memory_space<vmem>>, %arg5: memref<1x16xf32, #tpu.memory_space<vmem>>, %arg6: memref<9x16x32xbf16, #tpu.memory_space<vmem>>, %arg7: memref<1x32xf32, #tpu.memory_space<vmem>>, %arg8: memref<9x32x32xbf16, #tpu.memory_space<vmem>>, %arg9: memref<1x32xf32, #tpu.memory_space<vmem>>, %arg10: memref<9x32x64xbf16, #tpu.memory_space<vmem>>, %arg11: memref<1x64xf32, #tpu.memory_space<vmem>>, %arg12: memref<64x128xbf16, #tpu.memory_space<vmem>>, %arg13: memref<1x128xf32, #tpu.memory_space<vmem>>, %arg14: memref<128x128xbf16, #tpu.memory_space<vmem>>, %arg15: memref<1x128xf32, #tpu.memory_space<vmem>>, %arg16: memref<128x2xbf16, #tpu.memory_space<vmem>>, %arg17: memref<1x2xf32, #tpu.memory_space<vmem>>, %arg18: memref<1x2x2x2xf32, #tpu.memory_space<vmem>>, %arg19: memref<1x2x2x2xf32, #tpu.memory_space<vmem>>, %arg20: memref<18x18x3xf32, #tpu.memory_space<vmem>>, %arg21: memref<10x10x16xf32, #tpu.memory_space<vmem>>, %arg22: memref<10x10x16xf32, #tpu.memory_space<vmem>>, %arg23: memref<6x6x32xf32, #tpu.memory_space<vmem>>, %arg24: memref<4x4x32xf32, #tpu.memory_space<vmem>>) attributes {dimension_semantics = [#tpu.dimension_semantics<parallel>], iteration_bounds = array<i64: 2>, scalar_prefetch = 0 : i64, scratch_operands = 5 : i64, tpu.core_type = #tpu.core_type<tc>, window_params = [{transform_indices = @transform_0, window_bounds = array<i64: 1, 16, 16, 3>}, {pipeline_mode = #tpu.pipeline_mode<synchronous>, transform_indices = @transform_1, window_bounds = array<i64: 9, 3, 16>}, {pipeline_mode = #tpu.pipeline_mode<synchronous>, transform_indices = @transform_2, window_bounds = array<i64: 1, 16>}, {pipeline_mode = #tpu.pipeline_mode<synchronous>, transform_indices = @transform_3, window_bounds = array<i64: 9, 16, 16>}, {pipeline_mode = #tpu.pipeline_mode<synchronous>, transform_indices = @transform_4, window_bounds = array<i64: 1, 16>}, {pipeline_mode = #tpu.pipeline_mode<synchronous>, transform_indices = @transform_5, window_bounds = array<i64: 9, 16, 32>}, {pipeline_mode = #tpu.pipeline_mode<synchronous>, transform_indices = @transform_6, window_bounds = array<i64: 1, 32>}, {pipeline_mode = #tpu.pipeline_mode<synchronous>, transform_indices = @transform_7, window_bounds = array<i64: 9, 32, 32>}, {pipeline_mode = #tpu.pipeline_mode<synchronous>, transform_indices = @transform_8, window_bounds = array<i64: 1, 32>}, {pipeline_mode = #tpu.pipeline_mode<synchronous>, transform_indices = @transform_9, window_bounds = array<i64: 9, 32, 64>}, {pipeline_mode = #tpu.pipeline_mode<synchronous>, transform_indices = @transform_10, window_bounds = array<i64: 1, 64>}, {pipeline_mode = #tpu.pipeline_mode<synchronous>, transform_indices = @transform_11, window_bounds = array<i64: 64, 128>}, {pipeline_mode = #tpu.pipeline_mode<synchronous>, transform_indices = @transform_12, window_bounds = array<i64: 1, 128>}, {pipeline_mode = #tpu.pipeline_mode<synchronous>, transform_indices = @transform_13, window_bounds = array<i64: 128, 128>}, {pipeline_mode = #tpu.pipeline_mode<synchronous>, transform_indices = @transform_14, window_bounds = array<i64: 1, 128>}, {pipeline_mode = #tpu.pipeline_mode<synchronous>, transform_indices = @transform_15, window_bounds = array<i64: 128, 2>}, {pipeline_mode = #tpu.pipeline_mode<synchronous>, transform_indices = @transform_16, window_bounds = array<i64: 1, 2>}, {transform_indices = @transform_17, window_bounds = array<i64: 1, 2, 2, 2>}, {transform_indices = @transform_18, window_bounds = array<i64: 1, 2, 2, 2>}]} {
    %c0 = arith.constant 0 : index
    %c0_0 = arith.constant 0 : index
    %c0_1 = arith.constant 0 : index
    %c0_2 = arith.constant 0 : index
    %0 = vector.load %arg1[%c0, %c0_0, %c0_1, %c0_2] : memref<1x16x16x3xf32, #tpu.memory_space<vmem>>, vector<1x16x16x3xf32>
    %1 = vector.shape_cast %0 : vector<1x16x16x3xf32> to vector<16x16x3xf32>
    %cst = arith.constant 0.000000e+00 : f32
    %2 = vector.broadcast %cst : f32 to vector<18x18x3xf32>
    %c0_3 = arith.constant 0 : index
    %c0_4 = arith.constant 0 : index
    %c0_5 = arith.constant 0 : index
    %3 = vector.load %arg20[%c0_3, %c0_4, %c0_5] : memref<18x18x3xf32, #tpu.memory_space<vmem>>, vector<18x18x3xf32>
    tpu.vector_store %arg20[%c0_3, %c0_4, %c0_5], %2 {strides = array<i32>} : memref<18x18x3xf32, #tpu.memory_space<vmem>>, vector<18x18x3xf32>,
    %c1 = arith.constant 1 : index
    %c1_6 = arith.constant 1 : index
    %c0_7 = arith.constant 0 : index
    %4 = vector.load %arg20[%c1, %c1_6, %c0_7] : memref<18x18x3xf32, #tpu.memory_space<vmem>>, vector<16x16x3xf32>
    tpu.vector_store %arg20[%c1, %c1_6, %c0_7], %1 {strides = array<i32>} : memref<18x18x3xf32, #tpu.memory_space<vmem>>, vector<16x16x3xf32>,
    %cst_8 = arith.constant 0.000000e+00 : f32
    %5 = vector.broadcast %cst_8 : f32 to vector<256x16xf32>
    %c0_9 = arith.constant 0 : index
    %c0_10 = arith.constant 0 : index
    %c0_11 = arith.constant 0 : index
    %6 = vector.load %arg20[%c0_9, %c0_10, %c0_11] : memref<18x18x3xf32, #tpu.memory_space<vmem>>, vector<16x16x3xf32>
    %7 = vector.shape_cast %6 : vector<16x16x3xf32> to vector<256x3xf32>
    %8 = arith.truncf %7 : vector<256x3xf32> to vector<256x3xbf16>
    %c0_12 = arith.constant 0 : index
    %c0_13 = arith.constant 0 : index
    %c0_14 = arith.constant 0 : index
    %9 = vector.load %arg2[%c0_12, %c0_13, %c0_14] : memref<9x3x16xbf16, #tpu.memory_space<vmem>>, vector<1x3x16xbf16>
    %10 = vector.shape_cast %9 : vector<1x3x16xbf16> to vector<3x16xbf16>
    %cst_15 = arith.constant dense<0.000000e+00> : vector<256x16xf32>
    %11 = tpu.matmul %8, %10, %cst_15 {dimension_numbers = #tpu.dot_dimension_numbers<[1], [0], [0], [1], [0, 0, 1, 1], [], []>} : vector<256x3xbf16>, vector<3x16xbf16>, vector<256x16xf32> -> vector<256x16xf32>
    %12 = arith.addf %5, %11 : vector<256x16xf32>
    %c0_16 = arith.constant 0 : index
    %c1_17 = arith.constant 1 : index
    %c0_18 = arith.constant 0 : index
    %13 = vector.load %arg20[%c0_16, %c1_17, %c0_18] : memref<18x18x3xf32, #tpu.memory_space<vmem>>, vector<16x16x3xf32>
    %14 = vector.shape_cast %13 : vector<16x16x3xf32> to vector<256x3xf32>
    %15 = arith.truncf %14 : vector<256x3xf32> to vector<256x3xbf16>
    %c1_19 = arith.constant 1 : index
    %c0_20 = arith.constant 0 : index
    %c0_21 = arith.constant 0 : index
    %16 = vector.load %arg2[%c1_19, %c0_20, %c0_21] : memref<9x3x16xbf16, #tpu.memory_space<vmem>>, vector<1x3x16xbf16>
    %17 = vector.shape_cast %16 : vector<1x3x16xbf16> to vector<3x16xbf16>
    %cst_22 = arith.constant dense<0.000000e+00> : vector<256x16xf32>
    %18 = tpu.matmul %15, %17, %cst_22 {dimension_numbers = #tpu.dot_dimension_numbers<[1], [0], [0], [1], [0, 0, 1, 1], [], []>} : vector<256x3xbf16>, vector<3x16xbf16>, vector<256x16xf32> -> vector<256x16xf32>
    %19 = arith.addf %12, %18 : vector<256x16xf32>
    %c0_23 = arith.constant 0 : index
    %c2 = arith.constant 2 : index
    %c0_24 = arith.constant 0 : index
    %20 = vector.load %arg20[%c0_23, %c2, %c0_24] : memref<18x18x3xf32, #tpu.memory_space<vmem>>, vector<16x16x3xf32>
    %21 = vector.shape_cast %20 : vector<16x16x3xf32> to vector<256x3xf32>
    %22 = arith.truncf %21 : vector<256x3xf32> to vector<256x3xbf16>
    %c2_25 = arith.constant 2 : index
    %c0_26 = arith.constant 0 : index
    %c0_27 = arith.constant 0 : index
    %23 = vector.load %arg2[%c2_25, %c0_26, %c0_27] : memref<9x3x16xbf16, #tpu.memory_space<vmem>>, vector<1x3x16xbf16>
    %24 = vector.shape_cast %23 : vector<1x3x16xbf16> to vector<3x16xbf16>
    %cst_28 = arith.constant dense<0.000000e+00> : vector<256x16xf32>
    %25 = tpu.matmul %22, %24, %cst_28 {dimension_numbers = #tpu.dot_dimension_numbers<[1], [0], [0], [1], [0, 0, 1, 1], [], []>} : vector<256x3xbf16>, vector<3x16xbf16>, vector<256x16xf32> -> vector<256x16xf32>
    %26 = arith.addf %19, %25 : vector<256x16xf32>
    %c1_29 = arith.constant 1 : index
    %c0_30 = arith.constant 0 : index
    %c0_31 = arith.constant 0 : index
    %27 = vector.load %arg20[%c1_29, %c0_30, %c0_31] : memref<18x18x3xf32, #tpu.memory_space<vmem>>, vector<16x16x3xf32>
    %28 = vector.shape_cast %27 : vector<16x16x3xf32> to vector<256x3xf32>
    %29 = arith.truncf %28 : vector<256x3xf32> to vector<256x3xbf16>
    %c3 = arith.constant 3 : index
    %c0_32 = arith.constant 0 : index
    %c0_33 = arith.constant 0 : index
    %30 = vector.load %arg2[%c3, %c0_32, %c0_33] : memref<9x3x16xbf16, #tpu.memory_space<vmem>>, vector<1x3x16xbf16>
    %31 = vector.shape_cast %30 : vector<1x3x16xbf16> to vector<3x16xbf16>
    %cst_34 = arith.constant dense<0.000000e+00> : vector<256x16xf32>
    %32 = tpu.matmul %29, %31, %cst_34 {dimension_numbers = #tpu.dot_dimension_numbers<[1], [0], [0], [1], [0, 0, 1, 1], [], []>} : vector<256x3xbf16>, vector<3x16xbf16>, vector<256x16xf32> -> vector<256x16xf32>
    %33 = arith.addf %26, %32 : vector<256x16xf32>
    %c1_35 = arith.constant 1 : index
    %c1_36 = arith.constant 1 : index
    %c0_37 = arith.constant 0 : index
    %34 = vector.load %arg20[%c1_35, %c1_36, %c0_37] : memref<18x18x3xf32, #tpu.memory_space<vmem>>, vector<16x16x3xf32>
    %35 = vector.shape_cast %34 : vector<16x16x3xf32> to vector<256x3xf32>
    %36 = arith.truncf %35 : vector<256x3xf32> to vector<256x3xbf16>
    %c4 = arith.constant 4 : index
    %c0_38 = arith.constant 0 : index
    %c0_39 = arith.constant 0 : index
    %37 = vector.load %arg2[%c4, %c0_38, %c0_39] : memref<9x3x16xbf16, #tpu.memory_space<vmem>>, vector<1x3x16xbf16>
    %38 = vector.shape_cast %37 : vector<1x3x16xbf16> to vector<3x16xbf16>
    %cst_40 = arith.constant dense<0.000000e+00> : vector<256x16xf32>
    %39 = tpu.matmul %36, %38, %cst_40 {dimension_numbers = #tpu.dot_dimension_numbers<[1], [0], [0], [1], [0, 0, 1, 1], [], []>} : vector<256x3xbf16>, vector<3x16xbf16>, vector<256x16xf32> -> vector<256x16xf32>
    %40 = arith.addf %33, %39 : vector<256x16xf32>
    %c1_41 = arith.constant 1 : index
    %c2_42 = arith.constant 2 : index
    %c0_43 = arith.constant 0 : index
    %41 = vector.load %arg20[%c1_41, %c2_42, %c0_43] : memref<18x18x3xf32, #tpu.memory_space<vmem>>, vector<16x16x3xf32>
    %42 = vector.shape_cast %41 : vector<16x16x3xf32> to vector<256x3xf32>
    %43 = arith.truncf %42 : vector<256x3xf32> to vector<256x3xbf16>
    %c5 = arith.constant 5 : index
    %c0_44 = arith.constant 0 : index
    %c0_45 = arith.constant 0 : index
    %44 = vector.load %arg2[%c5, %c0_44, %c0_45] : memref<9x3x16xbf16, #tpu.memory_space<vmem>>, vector<1x3x16xbf16>
    %45 = vector.shape_cast %44 : vector<1x3x16xbf16> to vector<3x16xbf16>
    %cst_46 = arith.constant dense<0.000000e+00> : vector<256x16xf32>
    %46 = tpu.matmul %43, %45, %cst_46 {dimension_numbers = #tpu.dot_dimension_numbers<[1], [0], [0], [1], [0, 0, 1, 1], [], []>} : vector<256x3xbf16>, vector<3x16xbf16>, vector<256x16xf32> -> vector<256x16xf32>
    %47 = arith.addf %40, %46 : vector<256x16xf32>
    %c2_47 = arith.constant 2 : index
    %c0_48 = arith.constant 0 : index
    %c0_49 = arith.constant 0 : index
    %48 = vector.load %arg20[%c2_47, %c0_48, %c0_49] : memref<18x18x3xf32, #tpu.memory_space<vmem>>, vector<16x16x3xf32>
    %49 = vector.shape_cast %48 : vector<16x16x3xf32> to vector<256x3xf32>
    %50 = arith.truncf %49 : vector<256x3xf32> to vector<256x3xbf16>
    %c6 = arith.constant 6 : index
    %c0_50 = arith.constant 0 : index
    %c0_51 = arith.constant 0 : index
    %51 = vector.load %arg2[%c6, %c0_50, %c0_51] : memref<9x3x16xbf16, #tpu.memory_space<vmem>>, vector<1x3x16xbf16>
    %52 = vector.shape_cast %51 : vector<1x3x16xbf16> to vector<3x16xbf16>
    %cst_52 = arith.constant dense<0.000000e+00> : vector<256x16xf32>
    %53 = tpu.matmul %50, %52, %cst_52 {dimension_numbers = #tpu.dot_dimension_numbers<[1], [0], [0], [1], [0, 0, 1, 1], [], []>} : vector<256x3xbf16>, vector<3x16xbf16>, vector<256x16xf32> -> vector<256x16xf32>
    %54 = arith.addf %47, %53 : vector<256x16xf32>
    %c2_53 = arith.constant 2 : index
    %c1_54 = arith.constant 1 : index
    %c0_55 = arith.constant 0 : index
    %55 = vector.load %arg20[%c2_53, %c1_54, %c0_55] : memref<18x18x3xf32, #tpu.memory_space<vmem>>, vector<16x16x3xf32>
    %56 = vector.shape_cast %55 : vector<16x16x3xf32> to vector<256x3xf32>
    %57 = arith.truncf %56 : vector<256x3xf32> to vector<256x3xbf16>
    %c7 = arith.constant 7 : index
    %c0_56 = arith.constant 0 : index
    %c0_57 = arith.constant 0 : index
    %58 = vector.load %arg2[%c7, %c0_56, %c0_57] : memref<9x3x16xbf16, #tpu.memory_space<vmem>>, vector<1x3x16xbf16>
    %59 = vector.shape_cast %58 : vector<1x3x16xbf16> to vector<3x16xbf16>
    %cst_58 = arith.constant dense<0.000000e+00> : vector<256x16xf32>
    %60 = tpu.matmul %57, %59, %cst_58 {dimension_numbers = #tpu.dot_dimension_numbers<[1], [0], [0], [1], [0, 0, 1, 1], [], []>} : vector<256x3xbf16>, vector<3x16xbf16>, vector<256x16xf32> -> vector<256x16xf32>
    %61 = arith.addf %54, %60 : vector<256x16xf32>
    %c2_59 = arith.constant 2 : index
    %c2_60 = arith.constant 2 : index
    %c0_61 = arith.constant 0 : index
    %62 = vector.load %arg20[%c2_59, %c2_60, %c0_61] : memref<18x18x3xf32, #tpu.memory_space<vmem>>, vector<16x16x3xf32>
    %63 = vector.shape_cast %62 : vector<16x16x3xf32> to vector<256x3xf32>
    %64 = arith.truncf %63 : vector<256x3xf32> to vector<256x3xbf16>
    %c8 = arith.constant 8 : index
    %c0_62 = arith.constant 0 : index
    %c0_63 = arith.constant 0 : index
    %65 = vector.load %arg2[%c8, %c0_62, %c0_63] : memref<9x3x16xbf16, #tpu.memory_space<vmem>>, vector<1x3x16xbf16>
    %66 = vector.shape_cast %65 : vector<1x3x16xbf16> to vector<3x16xbf16>
    %cst_64 = arith.constant dense<0.000000e+00> : vector<256x16xf32>
    %67 = tpu.matmul %64, %66, %cst_64 {dimension_numbers = #tpu.dot_dimension_numbers<[1], [0], [0], [1], [0, 0, 1, 1], [], []>} : vector<256x3xbf16>, vector<3x16xbf16>, vector<256x16xf32> -> vector<256x16xf32>
    %68 = arith.addf %61, %67 : vector<256x16xf32>
    %c0_65 = arith.constant 0 : index
    %c0_66 = arith.constant 0 : index
    %69 = vector.load %arg3[%c0_65, %c0_66] : memref<1x16xf32, #tpu.memory_space<vmem>>, vector<1x16xf32>
    %70 = vector.broadcast %69 : vector<1x16xf32> to vector<256x16xf32>
    %71 = arith.addf %68, %70 : vector<256x16xf32>
    %cst_67 = arith.constant 0.000000e+00 : f32
    %72 = vector.broadcast %cst_67 : f32 to vector<256x16xf32>
    %73 = arith.maximumf %71, %72 : vector<256x16xf32>
    %74 = vector.shape_cast %73 : vector<256x16xf32> to vector<16x16x16xf32>
    %75 = vector.shape_cast %74 : vector<16x16x16xf32> to vector<8x2x8x2x16xf32>
    %cst_68 = arith.constant dense<0xFF800000> : vector<8x2x8x16xf32>
    %76 = vector.multi_reduction <maximumf>, %75, %cst_68 [3] : vector<8x2x8x2x16xf32> to vector<8x2x8x16xf32>
    %cst_69 = arith.constant dense<0xFF800000> : vector<8x8x16xf32>
    %77 = vector.multi_reduction <maximumf>, %76, %cst_69 [1] : vector<8x2x8x16xf32> to vector<8x8x16xf32>
    %cst_70 = arith.constant 0.000000e+00 : f32
    %78 = vector.broadcast %cst_70 : f32 to vector<10x10x16xf32>
    %c0_71 = arith.constant 0 : index
    %c0_72 = arith.constant 0 : index
    %c0_73 = arith.constant 0 : index
    %79 = vector.load %arg21[%c0_71, %c0_72, %c0_73] : memref<10x10x16xf32, #tpu.memory_space<vmem>>, vector<10x10x16xf32>
    tpu.vector_store %arg21[%c0_71, %c0_72, %c0_73], %78 {strides = array<i32>} : memref<10x10x16xf32, #tpu.memory_space<vmem>>, vector<10x10x16xf32>,
    %c1_74 = arith.constant 1 : index
    %c1_75 = arith.constant 1 : index
    %c0_76 = arith.constant 0 : index
    %80 = vector.load %arg21[%c1_74, %c1_75, %c0_76] : memref<10x10x16xf32, #tpu.memory_space<vmem>>, vector<8x8x16xf32>
    tpu.vector_store %arg21[%c1_74, %c1_75, %c0_76], %77 {strides = array<i32>} : memref<10x10x16xf32, #tpu.memory_space<vmem>>, vector<8x8x16xf32>,
    %cst_77 = arith.constant 0.000000e+00 : f32
    %81 = vector.broadcast %cst_77 : f32 to vector<64x16xf32>
    %c0_78 = arith.constant 0 : index
    %c0_79 = arith.constant 0 : index
    %c0_80 = arith.constant 0 : index
    %82 = vector.load %arg21[%c0_78, %c0_79, %c0_80] : memref<10x10x16xf32, #tpu.memory_space<vmem>>, vector<8x8x16xf32>
    %83 = vector.shape_cast %82 : vector<8x8x16xf32> to vector<64x16xf32>
    %84 = arith.truncf %83 : vector<64x16xf32> to vector<64x16xbf16>
    %c0_81 = arith.constant 0 : index
    %c0_82 = arith.constant 0 : index
    %c0_83 = arith.constant 0 : index
    %85 = vector.load %arg4[%c0_81, %c0_82, %c0_83] : memref<9x16x16xbf16, #tpu.memory_space<vmem>>, vector<1x16x16xbf16>
    %86 = vector.shape_cast %85 : vector<1x16x16xbf16> to vector<16x16xbf16>
    %cst_84 = arith.constant dense<0.000000e+00> : vector<64x16xf32>
    %87 = tpu.matmul %84, %86, %cst_84 {dimension_numbers = #tpu.dot_dimension_numbers<[1], [0], [0], [1], [0, 0, 1, 1], [], []>} : vector<64x16xbf16>, vector<16x16xbf16>, vector<64x16xf32> -> vector<64x16xf32>
    %88 = arith.addf %81, %87 : vector<64x16xf32>
    %c0_85 = arith.constant 0 : index
    %c1_86 = arith.constant 1 : index
    %c0_87 = arith.constant 0 : index
    %89 = vector.load %arg21[%c0_85, %c1_86, %c0_87] : memref<10x10x16xf32, #tpu.memory_space<vmem>>, vector<8x8x16xf32>
    %90 = vector.shape_cast %89 : vector<8x8x16xf32> to vector<64x16xf32>
    %91 = arith.truncf %90 : vector<64x16xf32> to vector<64x16xbf16>
    %c1_88 = arith.constant 1 : index
    %c0_89 = arith.constant 0 : index
    %c0_90 = arith.constant 0 : index
    %92 = vector.load %arg4[%c1_88, %c0_89, %c0_90] : memref<9x16x16xbf16, #tpu.memory_space<vmem>>, vector<1x16x16xbf16>
    %93 = vector.shape_cast %92 : vector<1x16x16xbf16> to vector<16x16xbf16>
    %cst_91 = arith.constant dense<0.000000e+00> : vector<64x16xf32>
    %94 = tpu.matmul %91, %93, %cst_91 {dimension_numbers = #tpu.dot_dimension_numbers<[1], [0], [0], [1], [0, 0, 1, 1], [], []>} : vector<64x16xbf16>, vector<16x16xbf16>, vector<64x16xf32> -> vector<64x16xf32>
    %95 = arith.addf %88, %94 : vector<64x16xf32>
    %c0_92 = arith.constant 0 : index
    %c2_93 = arith.constant 2 : index
    %c0_94 = arith.constant 0 : index
    %96 = vector.load %arg21[%c0_92, %c2_93, %c0_94] : memref<10x10x16xf32, #tpu.memory_space<vmem>>, vector<8x8x16xf32>
    %97 = vector.shape_cast %96 : vector<8x8x16xf32> to vector<64x16xf32>
    %98 = arith.truncf %97 : vector<64x16xf32> to vector<64x16xbf16>
    %c2_95 = arith.constant 2 : index
    %c0_96 = arith.constant 0 : index
    %c0_97 = arith.constant 0 : index
    %99 = vector.load %arg4[%c2_95, %c0_96, %c0_97] : memref<9x16x16xbf16, #tpu.memory_space<vmem>>, vector<1x16x16xbf16>
    %100 = vector.shape_cast %99 : vector<1x16x16xbf16> to vector<16x16xbf16>
    %cst_98 = arith.constant dense<0.000000e+00> : vector<64x16xf32>
    %101 = tpu.matmul %98, %100, %cst_98 {dimension_numbers = #tpu.dot_dimension_numbers<[1], [0], [0], [1], [0, 0, 1, 1], [], []>} : vector<64x16xbf16>, vector<16x16xbf16>, vector<64x16xf32> -> vector<64x16xf32>
    %102 = arith.addf %95, %101 : vector<64x16xf32>
    %c1_99 = arith.constant 1 : index
    %c0_100 = arith.constant 0 : index
    %c0_101 = arith.constant 0 : index
    %103 = vector.load %arg21[%c1_99, %c0_100, %c0_101] : memref<10x10x16xf32, #tpu.memory_space<vmem>>, vector<8x8x16xf32>
    %104 = vector.shape_cast %103 : vector<8x8x16xf32> to vector<64x16xf32>
    %105 = arith.truncf %104 : vector<64x16xf32> to vector<64x16xbf16>
    %c3_102 = arith.constant 3 : index
    %c0_103 = arith.constant 0 : index
    %c0_104 = arith.constant 0 : index
    %106 = vector.load %arg4[%c3_102, %c0_103, %c0_104] : memref<9x16x16xbf16, #tpu.memory_space<vmem>>, vector<1x16x16xbf16>
    %107 = vector.shape_cast %106 : vector<1x16x16xbf16> to vector<16x16xbf16>
    %cst_105 = arith.constant dense<0.000000e+00> : vector<64x16xf32>
    %108 = tpu.matmul %105, %107, %cst_105 {dimension_numbers = #tpu.dot_dimension_numbers<[1], [0], [0], [1], [0, 0, 1, 1], [], []>} : vector<64x16xbf16>, vector<16x16xbf16>, vector<64x16xf32> -> vector<64x16xf32>
    %109 = arith.addf %102, %108 : vector<64x16xf32>
    %c1_106 = arith.constant 1 : index
    %c1_107 = arith.constant 1 : index
    %c0_108 = arith.constant 0 : index
    %110 = vector.load %arg21[%c1_106, %c1_107, %c0_108] : memref<10x10x16xf32, #tpu.memory_space<vmem>>, vector<8x8x16xf32>
    %111 = vector.shape_cast %110 : vector<8x8x16xf32> to vector<64x16xf32>
    %112 = arith.truncf %111 : vector<64x16xf32> to vector<64x16xbf16>
    %c4_109 = arith.constant 4 : index
    %c0_110 = arith.constant 0 : index
    %c0_111 = arith.constant 0 : index
    %113 = vector.load %arg4[%c4_109, %c0_110, %c0_111] : memref<9x16x16xbf16, #tpu.memory_space<vmem>>, vector<1x16x16xbf16>
    %114 = vector.shape_cast %113 : vector<1x16x16xbf16> to vector<16x16xbf16>
    %cst_112 = arith.constant dense<0.000000e+00> : vector<64x16xf32>
    %115 = tpu.matmul %112, %114, %cst_112 {dimension_numbers = #tpu.dot_dimension_numbers<[1], [0], [0], [1], [0, 0, 1, 1], [], []>} : vector<64x16xbf16>, vector<16x16xbf16>, vector<64x16xf32> -> vector<64x16xf32>
    %116 = arith.addf %109, %115 : vector<64x16xf32>
    %c1_113 = arith.constant 1 : index
    %c2_114 = arith.constant 2 : index
    %c0_115 = arith.constant 0 : index
    %117 = vector.load %arg21[%c1_113, %c2_114, %c0_115] : memref<10x10x16xf32, #tpu.memory_space<vmem>>, vector<8x8x16xf32>
    %118 = vector.shape_cast %117 : vector<8x8x16xf32> to vector<64x16xf32>
    %119 = arith.truncf %118 : vector<64x16xf32> to vector<64x16xbf16>
    %c5_116 = arith.constant 5 : index
    %c0_117 = arith.constant 0 : index
    %c0_118 = arith.constant 0 : index
    %120 = vector.load %arg4[%c5_116, %c0_117, %c0_118] : memref<9x16x16xbf16, #tpu.memory_space<vmem>>, vector<1x16x16xbf16>
    %121 = vector.shape_cast %120 : vector<1x16x16xbf16> to vector<16x16xbf16>
    %cst_119 = arith.constant dense<0.000000e+00> : vector<64x16xf32>
    %122 = tpu.matmul %119, %121, %cst_119 {dimension_numbers = #tpu.dot_dimension_numbers<[1], [0], [0], [1], [0, 0, 1, 1], [], []>} : vector<64x16xbf16>, vector<16x16xbf16>, vector<64x16xf32> -> vector<64x16xf32>
    %123 = arith.addf %116, %122 : vector<64x16xf32>
    %c2_120 = arith.constant 2 : index
    %c0_121 = arith.constant 0 : index
    %c0_122 = arith.constant 0 : index
    %124 = vector.load %arg21[%c2_120, %c0_121, %c0_122] : memref<10x10x16xf32, #tpu.memory_space<vmem>>, vector<8x8x16xf32>
    %125 = vector.shape_cast %124 : vector<8x8x16xf32> to vector<64x16xf32>
    %126 = arith.truncf %125 : vector<64x16xf32> to vector<64x16xbf16>
    %c6_123 = arith.constant 6 : index
    %c0_124 = arith.constant 0 : index
    %c0_125 = arith.constant 0 : index
    %127 = vector.load %arg4[%c6_123, %c0_124, %c0_125] : memref<9x16x16xbf16, #tpu.memory_space<vmem>>, vector<1x16x16xbf16>
    %128 = vector.shape_cast %127 : vector<1x16x16xbf16> to vector<16x16xbf16>
    %cst_126 = arith.constant dense<0.000000e+00> : vector<64x16xf32>
    %129 = tpu.matmul %126, %128, %cst_126 {dimension_numbers = #tpu.dot_dimension_numbers<[1], [0], [0], [1], [0, 0, 1, 1], [], []>} : vector<64x16xbf16>, vector<16x16xbf16>, vector<64x16xf32> -> vector<64x16xf32>
    %130 = arith.addf %123, %129 : vector<64x16xf32>
    %c2_127 = arith.constant 2 : index
    %c1_128 = arith.constant 1 : index
    %c0_129 = arith.constant 0 : index
    %131 = vector.load %arg21[%c2_127, %c1_128, %c0_129] : memref<10x10x16xf32, #tpu.memory_space<vmem>>, vector<8x8x16xf32>
    %132 = vector.shape_cast %131 : vector<8x8x16xf32> to vector<64x16xf32>
    %133 = arith.truncf %132 : vector<64x16xf32> to vector<64x16xbf16>
    %c7_130 = arith.constant 7 : index
    %c0_131 = arith.constant 0 : index
    %c0_132 = arith.constant 0 : index
    %134 = vector.load %arg4[%c7_130, %c0_131, %c0_132] : memref<9x16x16xbf16, #tpu.memory_space<vmem>>, vector<1x16x16xbf16>
    %135 = vector.shape_cast %134 : vector<1x16x16xbf16> to vector<16x16xbf16>
    %cst_133 = arith.constant dense<0.000000e+00> : vector<64x16xf32>
    %136 = tpu.matmul %133, %135, %cst_133 {dimension_numbers = #tpu.dot_dimension_numbers<[1], [0], [0], [1], [0, 0, 1, 1], [], []>} : vector<64x16xbf16>, vector<16x16xbf16>, vector<64x16xf32> -> vector<64x16xf32>
    %137 = arith.addf %130, %136 : vector<64x16xf32>
    %c2_134 = arith.constant 2 : index
    %c2_135 = arith.constant 2 : index
    %c0_136 = arith.constant 0 : index
    %138 = vector.load %arg21[%c2_134, %c2_135, %c0_136] : memref<10x10x16xf32, #tpu.memory_space<vmem>>, vector<8x8x16xf32>
    %139 = vector.shape_cast %138 : vector<8x8x16xf32> to vector<64x16xf32>
    %140 = arith.truncf %139 : vector<64x16xf32> to vector<64x16xbf16>
    %c8_137 = arith.constant 8 : index
    %c0_138 = arith.constant 0 : index
    %c0_139 = arith.constant 0 : index
    %141 = vector.load %arg4[%c8_137, %c0_138, %c0_139] : memref<9x16x16xbf16, #tpu.memory_space<vmem>>, vector<1x16x16xbf16>
    %142 = vector.shape_cast %141 : vector<1x16x16xbf16> to vector<16x16xbf16>
    %cst_140 = arith.constant dense<0.000000e+00> : vector<64x16xf32>
    %143 = tpu.matmul %140, %142, %cst_140 {dimension_numbers = #tpu.dot_dimension_numbers<[1], [0], [0], [1], [0, 0, 1, 1], [], []>} : vector<64x16xbf16>, vector<16x16xbf16>, vector<64x16xf32> -> vector<64x16xf32>
    %144 = arith.addf %137, %143 : vector<64x16xf32>
    %c0_141 = arith.constant 0 : index
    %c0_142 = arith.constant 0 : index
    %145 = vector.load %arg5[%c0_141, %c0_142] : memref<1x16xf32, #tpu.memory_space<vmem>>, vector<1x16xf32>
    %146 = vector.broadcast %145 : vector<1x16xf32> to vector<64x16xf32>
    %147 = arith.addf %144, %146 : vector<64x16xf32>
    %cst_143 = arith.constant 0.000000e+00 : f32
    %148 = vector.broadcast %cst_143 : f32 to vector<64x16xf32>
    %149 = arith.maximumf %147, %148 : vector<64x16xf32>
    %150 = vector.shape_cast %149 : vector<64x16xf32> to vector<8x8x16xf32>
    %cst_144 = arith.constant 0.000000e+00 : f32
    %151 = vector.broadcast %cst_144 : f32 to vector<10x10x16xf32>
    %c0_145 = arith.constant 0 : index
    %c0_146 = arith.constant 0 : index
    %c0_147 = arith.constant 0 : index
    %152 = vector.load %arg22[%c0_145, %c0_146, %c0_147] : memref<10x10x16xf32, #tpu.memory_space<vmem>>, vector<10x10x16xf32>
    tpu.vector_store %arg22[%c0_145, %c0_146, %c0_147], %151 {strides = array<i32>} : memref<10x10x16xf32, #tpu.memory_space<vmem>>, vector<10x10x16xf32>,
    %c1_148 = arith.constant 1 : index
    %c1_149 = arith.constant 1 : index
    %c0_150 = arith.constant 0 : index
    %153 = vector.load %arg22[%c1_148, %c1_149, %c0_150] : memref<10x10x16xf32, #tpu.memory_space<vmem>>, vector<8x8x16xf32>
    tpu.vector_store %arg22[%c1_148, %c1_149, %c0_150], %150 {strides = array<i32>} : memref<10x10x16xf32, #tpu.memory_space<vmem>>, vector<8x8x16xf32>,
    %cst_151 = arith.constant 0.000000e+00 : f32
    %154 = vector.broadcast %cst_151 : f32 to vector<64x32xf32>
    %c0_152 = arith.constant 0 : index
    %c0_153 = arith.constant 0 : index
    %c0_154 = arith.constant 0 : index
    %155 = vector.load %arg22[%c0_152, %c0_153, %c0_154] : memref<10x10x16xf32, #tpu.memory_space<vmem>>, vector<8x8x16xf32>
    %156 = vector.shape_cast %155 : vector<8x8x16xf32> to vector<64x16xf32>
    %157 = arith.truncf %156 : vector<64x16xf32> to vector<64x16xbf16>
    %c0_155 = arith.constant 0 : index
    %c0_156 = arith.constant 0 : index
    %c0_157 = arith.constant 0 : index
    %158 = vector.load %arg6[%c0_155, %c0_156, %c0_157] : memref<9x16x32xbf16, #tpu.memory_space<vmem>>, vector<1x16x32xbf16>
    %159 = vector.shape_cast %158 : vector<1x16x32xbf16> to vector<16x32xbf16>
    %cst_158 = arith.constant dense<0.000000e+00> : vector<64x32xf32>
    %160 = tpu.matmul %157, %159, %cst_158 {dimension_numbers = #tpu.dot_dimension_numbers<[1], [0], [0], [1], [0, 0, 1, 1], [], []>} : vector<64x16xbf16>, vector<16x32xbf16>, vector<64x32xf32> -> vector<64x32xf32>
    %161 = arith.addf %154, %160 : vector<64x32xf32>
    %c0_159 = arith.constant 0 : index
    %c1_160 = arith.constant 1 : index
    %c0_161 = arith.constant 0 : index
    %162 = vector.load %arg22[%c0_159, %c1_160, %c0_161] : memref<10x10x16xf32, #tpu.memory_space<vmem>>, vector<8x8x16xf32>
    %163 = vector.shape_cast %162 : vector<8x8x16xf32> to vector<64x16xf32>
    %164 = arith.truncf %163 : vector<64x16xf32> to vector<64x16xbf16>
    %c1_162 = arith.constant 1 : index
    %c0_163 = arith.constant 0 : index
    %c0_164 = arith.constant 0 : index
    %165 = vector.load %arg6[%c1_162, %c0_163, %c0_164] : memref<9x16x32xbf16, #tpu.memory_space<vmem>>, vector<1x16x32xbf16>
    %166 = vector.shape_cast %165 : vector<1x16x32xbf16> to vector<16x32xbf16>
    %cst_165 = arith.constant dense<0.000000e+00> : vector<64x32xf32>
    %167 = tpu.matmul %164, %166, %cst_165 {dimension_numbers = #tpu.dot_dimension_numbers<[1], [0], [0], [1], [0, 0, 1, 1], [], []>} : vector<64x16xbf16>, vector<16x32xbf16>, vector<64x32xf32> -> vector<64x32xf32>
    %168 = arith.addf %161, %167 : vector<64x32xf32>
    %c0_166 = arith.constant 0 : index
    %c2_167 = arith.constant 2 : index
    %c0_168 = arith.constant 0 : index
    %169 = vector.load %arg22[%c0_166, %c2_167, %c0_168] : memref<10x10x16xf32, #tpu.memory_space<vmem>>, vector<8x8x16xf32>
    %170 = vector.shape_cast %169 : vector<8x8x16xf32> to vector<64x16xf32>
    %171 = arith.truncf %170 : vector<64x16xf32> to vector<64x16xbf16>
    %c2_169 = arith.constant 2 : index
    %c0_170 = arith.constant 0 : index
    %c0_171 = arith.constant 0 : index
    %172 = vector.load %arg6[%c2_169, %c0_170, %c0_171] : memref<9x16x32xbf16, #tpu.memory_space<vmem>>, vector<1x16x32xbf16>
    %173 = vector.shape_cast %172 : vector<1x16x32xbf16> to vector<16x32xbf16>
    %cst_172 = arith.constant dense<0.000000e+00> : vector<64x32xf32>
    %174 = tpu.matmul %171, %173, %cst_172 {dimension_numbers = #tpu.dot_dimension_numbers<[1], [0], [0], [1], [0, 0, 1, 1], [], []>} : vector<64x16xbf16>, vector<16x32xbf16>, vector<64x32xf32> -> vector<64x32xf32>
    %175 = arith.addf %168, %174 : vector<64x32xf32>
    %c1_173 = arith.constant 1 : index
    %c0_174 = arith.constant 0 : index
    %c0_175 = arith.constant 0 : index
    %176 = vector.load %arg22[%c1_173, %c0_174, %c0_175] : memref<10x10x16xf32, #tpu.memory_space<vmem>>, vector<8x8x16xf32>
    %177 = vector.shape_cast %176 : vector<8x8x16xf32> to vector<64x16xf32>
    %178 = arith.truncf %177 : vector<64x16xf32> to vector<64x16xbf16>
    %c3_176 = arith.constant 3 : index
    %c0_177 = arith.constant 0 : index
    %c0_178 = arith.constant 0 : index
    %179 = vector.load %arg6[%c3_176, %c0_177, %c0_178] : memref<9x16x32xbf16, #tpu.memory_space<vmem>>, vector<1x16x32xbf16>
    %180 = vector.shape_cast %179 : vector<1x16x32xbf16> to vector<16x32xbf16>
    %cst_179 = arith.constant dense<0.000000e+00> : vector<64x32xf32>
    %181 = tpu.matmul %178, %180, %cst_179 {dimension_numbers = #tpu.dot_dimension_numbers<[1], [0], [0], [1], [0, 0, 1, 1], [], []>} : vector<64x16xbf16>, vector<16x32xbf16>, vector<64x32xf32> -> vector<64x32xf32>
    %182 = arith.addf %175, %181 : vector<64x32xf32>
    %c1_180 = arith.constant 1 : index
    %c1_181 = arith.constant 1 : index
    %c0_182 = arith.constant 0 : index
    %183 = vector.load %arg22[%c1_180, %c1_181, %c0_182] : memref<10x10x16xf32, #tpu.memory_space<vmem>>, vector<8x8x16xf32>
    %184 = vector.shape_cast %183 : vector<8x8x16xf32> to vector<64x16xf32>
    %185 = arith.truncf %184 : vector<64x16xf32> to vector<64x16xbf16>
    %c4_183 = arith.constant 4 : index
    %c0_184 = arith.constant 0 : index
    %c0_185 = arith.constant 0 : index
    %186 = vector.load %arg6[%c4_183, %c0_184, %c0_185] : memref<9x16x32xbf16, #tpu.memory_space<vmem>>, vector<1x16x32xbf16>
    %187 = vector.shape_cast %186 : vector<1x16x32xbf16> to vector<16x32xbf16>
    %cst_186 = arith.constant dense<0.000000e+00> : vector<64x32xf32>
    %188 = tpu.matmul %185, %187, %cst_186 {dimension_numbers = #tpu.dot_dimension_numbers<[1], [0], [0], [1], [0, 0, 1, 1], [], []>} : vector<64x16xbf16>, vector<16x32xbf16>, vector<64x32xf32> -> vector<64x32xf32>
    %189 = arith.addf %182, %188 : vector<64x32xf32>
    %c1_187 = arith.constant 1 : index
    %c2_188 = arith.constant 2 : index
    %c0_189 = arith.constant 0 : index
    %190 = vector.load %arg22[%c1_187, %c2_188, %c0_189] : memref<10x10x16xf32, #tpu.memory_space<vmem>>, vector<8x8x16xf32>
    %191 = vector.shape_cast %190 : vector<8x8x16xf32> to vector<64x16xf32>
    %192 = arith.truncf %191 : vector<64x16xf32> to vector<64x16xbf16>
    %c5_190 = arith.constant 5 : index
    %c0_191 = arith.constant 0 : index
    %c0_192 = arith.constant 0 : index
    %193 = vector.load %arg6[%c5_190, %c0_191, %c0_192] : memref<9x16x32xbf16, #tpu.memory_space<vmem>>, vector<1x16x32xbf16>
    %194 = vector.shape_cast %193 : vector<1x16x32xbf16> to vector<16x32xbf16>
    %cst_193 = arith.constant dense<0.000000e+00> : vector<64x32xf32>
    %195 = tpu.matmul %192, %194, %cst_193 {dimension_numbers = #tpu.dot_dimension_numbers<[1], [0], [0], [1], [0, 0, 1, 1], [], []>} : vector<64x16xbf16>, vector<16x32xbf16>, vector<64x32xf32> -> vector<64x32xf32>
    %196 = arith.addf %189, %195 : vector<64x32xf32>
    %c2_194 = arith.constant 2 : index
    %c0_195 = arith.constant 0 : index
    %c0_196 = arith.constant 0 : index
    %197 = vector.load %arg22[%c2_194, %c0_195, %c0_196] : memref<10x10x16xf32, #tpu.memory_space<vmem>>, vector<8x8x16xf32>
    %198 = vector.shape_cast %197 : vector<8x8x16xf32> to vector<64x16xf32>
    %199 = arith.truncf %198 : vector<64x16xf32> to vector<64x16xbf16>
    %c6_197 = arith.constant 6 : index
    %c0_198 = arith.constant 0 : index
    %c0_199 = arith.constant 0 : index
    %200 = vector.load %arg6[%c6_197, %c0_198, %c0_199] : memref<9x16x32xbf16, #tpu.memory_space<vmem>>, vector<1x16x32xbf16>
    %201 = vector.shape_cast %200 : vector<1x16x32xbf16> to vector<16x32xbf16>
    %cst_200 = arith.constant dense<0.000000e+00> : vector<64x32xf32>
    %202 = tpu.matmul %199, %201, %cst_200 {dimension_numbers = #tpu.dot_dimension_numbers<[1], [0], [0], [1], [0, 0, 1, 1], [], []>} : vector<64x16xbf16>, vector<16x32xbf16>, vector<64x32xf32> -> vector<64x32xf32>
    %203 = arith.addf %196, %202 : vector<64x32xf32>
    %c2_201 = arith.constant 2 : index
    %c1_202 = arith.constant 1 : index
    %c0_203 = arith.constant 0 : index
    %204 = vector.load %arg22[%c2_201, %c1_202, %c0_203] : memref<10x10x16xf32, #tpu.memory_space<vmem>>, vector<8x8x16xf32>
    %205 = vector.shape_cast %204 : vector<8x8x16xf32> to vector<64x16xf32>
    %206 = arith.truncf %205 : vector<64x16xf32> to vector<64x16xbf16>
    %c7_204 = arith.constant 7 : index
    %c0_205 = arith.constant 0 : index
    %c0_206 = arith.constant 0 : index
    %207 = vector.load %arg6[%c7_204, %c0_205, %c0_206] : memref<9x16x32xbf16, #tpu.memory_space<vmem>>, vector<1x16x32xbf16>
    %208 = vector.shape_cast %207 : vector<1x16x32xbf16> to vector<16x32xbf16>
    %cst_207 = arith.constant dense<0.000000e+00> : vector<64x32xf32>
    %209 = tpu.matmul %206, %208, %cst_207 {dimension_numbers = #tpu.dot_dimension_numbers<[1], [0], [0], [1], [0, 0, 1, 1], [], []>} : vector<64x16xbf16>, vector<16x32xbf16>, vector<64x32xf32> -> vector<64x32xf32>
    %210 = arith.addf %203, %209 : vector<64x32xf32>
    %c2_208 = arith.constant 2 : index
    %c2_209 = arith.constant 2 : index
    %c0_210 = arith.constant 0 : index
    %211 = vector.load %arg22[%c2_208, %c2_209, %c0_210] : memref<10x10x16xf32, #tpu.memory_space<vmem>>, vector<8x8x16xf32>
    %212 = vector.shape_cast %211 : vector<8x8x16xf32> to vector<64x16xf32>
    %213 = arith.truncf %212 : vector<64x16xf32> to vector<64x16xbf16>
    %c8_211 = arith.constant 8 : index
    %c0_212 = arith.constant 0 : index
    %c0_213 = arith.constant 0 : index
    %214 = vector.load %arg6[%c8_211, %c0_212, %c0_213] : memref<9x16x32xbf16, #tpu.memory_space<vmem>>, vector<1x16x32xbf16>
    %215 = vector.shape_cast %214 : vector<1x16x32xbf16> to vector<16x32xbf16>
    %cst_214 = arith.constant dense<0.000000e+00> : vector<64x32xf32>
    %216 = tpu.matmul %213, %215, %cst_214 {dimension_numbers = #tpu.dot_dimension_numbers<[1], [0], [0], [1], [0, 0, 1, 1], [], []>} : vector<64x16xbf16>, vector<16x32xbf16>, vector<64x32xf32> -> vector<64x32xf32>
    %217 = arith.addf %210, %216 : vector<64x32xf32>
    %c0_215 = arith.constant 0 : index
    %c0_216 = arith.constant 0 : index
    %218 = vector.load %arg7[%c0_215, %c0_216] : memref<1x32xf32, #tpu.memory_space<vmem>>, vector<1x32xf32>
    %219 = vector.broadcast %218 : vector<1x32xf32> to vector<64x32xf32>
    %220 = arith.addf %217, %219 : vector<64x32xf32>
    %cst_217 = arith.constant 0.000000e+00 : f32
    %221 = vector.broadcast %cst_217 : f32 to vector<64x32xf32>
    %222 = arith.maximumf %220, %221 : vector<64x32xf32>
    %223 = vector.shape_cast %222 : vector<64x32xf32> to vector<8x8x32xf32>
    %224 = vector.shape_cast %223 : vector<8x8x32xf32> to vector<4x2x4x2x32xf32>
    %cst_218 = arith.constant dense<0xFF800000> : vector<4x2x4x32xf32>
    %225 = vector.multi_reduction <maximumf>, %224, %cst_218 [3] : vector<4x2x4x2x32xf32> to vector<4x2x4x32xf32>
    %cst_219 = arith.constant dense<0xFF800000> : vector<4x4x32xf32>
    %226 = vector.multi_reduction <maximumf>, %225, %cst_219 [1] : vector<4x2x4x32xf32> to vector<4x4x32xf32>
    %cst_220 = arith.constant 0.000000e+00 : f32
    %227 = vector.broadcast %cst_220 : f32 to vector<6x6x32xf32>
    %c0_221 = arith.constant 0 : index
    %c0_222 = arith.constant 0 : index
    %c0_223 = arith.constant 0 : index
    %228 = vector.load %arg23[%c0_221, %c0_222, %c0_223] : memref<6x6x32xf32, #tpu.memory_space<vmem>>, vector<6x6x32xf32>
    tpu.vector_store %arg23[%c0_221, %c0_222, %c0_223], %227 {strides = array<i32>} : memref<6x6x32xf32, #tpu.memory_space<vmem>>, vector<6x6x32xf32>,
    %c1_224 = arith.constant 1 : index
    %c1_225 = arith.constant 1 : index
    %c0_226 = arith.constant 0 : index
    %229 = vector.load %arg23[%c1_224, %c1_225, %c0_226] : memref<6x6x32xf32, #tpu.memory_space<vmem>>, vector<4x4x32xf32>
    tpu.vector_store %arg23[%c1_224, %c1_225, %c0_226], %226 {strides = array<i32>} : memref<6x6x32xf32, #tpu.memory_space<vmem>>, vector<4x4x32xf32>,
    %cst_227 = arith.constant 0.000000e+00 : f32
    %230 = vector.broadcast %cst_227 : f32 to vector<16x32xf32>
    %c0_228 = arith.constant 0 : index
    %c0_229 = arith.constant 0 : index
    %c0_230 = arith.constant 0 : index
    %231 = vector.load %arg23[%c0_228, %c0_229, %c0_230] : memref<6x6x32xf32, #tpu.memory_space<vmem>>, vector<4x4x32xf32>
    %232 = vector.shape_cast %231 : vector<4x4x32xf32> to vector<16x32xf32>
    %233 = arith.truncf %232 : vector<16x32xf32> to vector<16x32xbf16>
    %c0_231 = arith.constant 0 : index
    %c0_232 = arith.constant 0 : index
    %c0_233 = arith.constant 0 : index
    %234 = vector.load %arg8[%c0_231, %c0_232, %c0_233] : memref<9x32x32xbf16, #tpu.memory_space<vmem>>, vector<1x32x32xbf16>
    %235 = vector.shape_cast %234 : vector<1x32x32xbf16> to vector<32x32xbf16>
    %cst_234 = arith.constant dense<0.000000e+00> : vector<16x32xf32>
    %236 = tpu.matmul %233, %235, %cst_234 {dimension_numbers = #tpu.dot_dimension_numbers<[1], [0], [0], [1], [0, 0, 1, 1], [], []>} : vector<16x32xbf16>, vector<32x32xbf16>, vector<16x32xf32> -> vector<16x32xf32>
    %237 = arith.addf %230, %236 : vector<16x32xf32>
    %c0_235 = arith.constant 0 : index
    %c1_236 = arith.constant 1 : index
    %c0_237 = arith.constant 0 : index
    %238 = vector.load %arg23[%c0_235, %c1_236, %c0_237] : memref<6x6x32xf32, #tpu.memory_space<vmem>>, vector<4x4x32xf32>
    %239 = vector.shape_cast %238 : vector<4x4x32xf32> to vector<16x32xf32>
    %240 = arith.truncf %239 : vector<16x32xf32> to vector<16x32xbf16>
    %c1_238 = arith.constant 1 : index
    %c0_239 = arith.constant 0 : index
    %c0_240 = arith.constant 0 : index
    %241 = vector.load %arg8[%c1_238, %c0_239, %c0_240] : memref<9x32x32xbf16, #tpu.memory_space<vmem>>, vector<1x32x32xbf16>
    %242 = vector.shape_cast %241 : vector<1x32x32xbf16> to vector<32x32xbf16>
    %cst_241 = arith.constant dense<0.000000e+00> : vector<16x32xf32>
    %243 = tpu.matmul %240, %242, %cst_241 {dimension_numbers = #tpu.dot_dimension_numbers<[1], [0], [0], [1], [0, 0, 1, 1], [], []>} : vector<16x32xbf16>, vector<32x32xbf16>, vector<16x32xf32> -> vector<16x32xf32>
    %244 = arith.addf %237, %243 : vector<16x32xf32>
    %c0_242 = arith.constant 0 : index
    %c2_243 = arith.constant 2 : index
    %c0_244 = arith.constant 0 : index
    %245 = vector.load %arg23[%c0_242, %c2_243, %c0_244] : memref<6x6x32xf32, #tpu.memory_space<vmem>>, vector<4x4x32xf32>
    %246 = vector.shape_cast %245 : vector<4x4x32xf32> to vector<16x32xf32>
    %247 = arith.truncf %246 : vector<16x32xf32> to vector<16x32xbf16>
    %c2_245 = arith.constant 2 : index
    %c0_246 = arith.constant 0 : index
    %c0_247 = arith.constant 0 : index
    %248 = vector.load %arg8[%c2_245, %c0_246, %c0_247] : memref<9x32x32xbf16, #tpu.memory_space<vmem>>, vector<1x32x32xbf16>
    %249 = vector.shape_cast %248 : vector<1x32x32xbf16> to vector<32x32xbf16>
    %cst_248 = arith.constant dense<0.000000e+00> : vector<16x32xf32>
    %250 = tpu.matmul %247, %249, %cst_248 {dimension_numbers = #tpu.dot_dimension_numbers<[1], [0], [0], [1], [0, 0, 1, 1], [], []>} : vector<16x32xbf16>, vector<32x32xbf16>, vector<16x32xf32> -> vector<16x32xf32>
    %251 = arith.addf %244, %250 : vector<16x32xf32>
    %c1_249 = arith.constant 1 : index
    %c0_250 = arith.constant 0 : index
    %c0_251 = arith.constant 0 : index
    %252 = vector.load %arg23[%c1_249, %c0_250, %c0_251] : memref<6x6x32xf32, #tpu.memory_space<vmem>>, vector<4x4x32xf32>
    %253 = vector.shape_cast %252 : vector<4x4x32xf32> to vector<16x32xf32>
    %254 = arith.truncf %253 : vector<16x32xf32> to vector<16x32xbf16>
    %c3_252 = arith.constant 3 : index
    %c0_253 = arith.constant 0 : index
    %c0_254 = arith.constant 0 : index
    %255 = vector.load %arg8[%c3_252, %c0_253, %c0_254] : memref<9x32x32xbf16, #tpu.memory_space<vmem>>, vector<1x32x32xbf16>
    %256 = vector.shape_cast %255 : vector<1x32x32xbf16> to vector<32x32xbf16>
    %cst_255 = arith.constant dense<0.000000e+00> : vector<16x32xf32>
    %257 = tpu.matmul %254, %256, %cst_255 {dimension_numbers = #tpu.dot_dimension_numbers<[1], [0], [0], [1], [0, 0, 1, 1], [], []>} : vector<16x32xbf16>, vector<32x32xbf16>, vector<16x32xf32> -> vector<16x32xf32>
    %258 = arith.addf %251, %257 : vector<16x32xf32>
    %c1_256 = arith.constant 1 : index
    %c1_257 = arith.constant 1 : index
    %c0_258 = arith.constant 0 : index
    %259 = vector.load %arg23[%c1_256, %c1_257, %c0_258] : memref<6x6x32xf32, #tpu.memory_space<vmem>>, vector<4x4x32xf32>
    %260 = vector.shape_cast %259 : vector<4x4x32xf32> to vector<16x32xf32>
    %261 = arith.truncf %260 : vector<16x32xf32> to vector<16x32xbf16>
    %c4_259 = arith.constant 4 : index
    %c0_260 = arith.constant 0 : index
    %c0_261 = arith.constant 0 : index
    %262 = vector.load %arg8[%c4_259, %c0_260, %c0_261] : memref<9x32x32xbf16, #tpu.memory_space<vmem>>, vector<1x32x32xbf16>
    %263 = vector.shape_cast %262 : vector<1x32x32xbf16> to vector<32x32xbf16>
    %cst_262 = arith.constant dense<0.000000e+00> : vector<16x32xf32>
    %264 = tpu.matmul %261, %263, %cst_262 {dimension_numbers = #tpu.dot_dimension_numbers<[1], [0], [0], [1], [0, 0, 1, 1], [], []>} : vector<16x32xbf16>, vector<32x32xbf16>, vector<16x32xf32> -> vector<16x32xf32>
    %265 = arith.addf %258, %264 : vector<16x32xf32>
    %c1_263 = arith.constant 1 : index
    %c2_264 = arith.constant 2 : index
    %c0_265 = arith.constant 0 : index
    %266 = vector.load %arg23[%c1_263, %c2_264, %c0_265] : memref<6x6x32xf32, #tpu.memory_space<vmem>>, vector<4x4x32xf32>
    %267 = vector.shape_cast %266 : vector<4x4x32xf32> to vector<16x32xf32>
    %268 = arith.truncf %267 : vector<16x32xf32> to vector<16x32xbf16>
    %c5_266 = arith.constant 5 : index
    %c0_267 = arith.constant 0 : index
    %c0_268 = arith.constant 0 : index
    %269 = vector.load %arg8[%c5_266, %c0_267, %c0_268] : memref<9x32x32xbf16, #tpu.memory_space<vmem>>, vector<1x32x32xbf16>
    %270 = vector.shape_cast %269 : vector<1x32x32xbf16> to vector<32x32xbf16>
    %cst_269 = arith.constant dense<0.000000e+00> : vector<16x32xf32>
    %271 = tpu.matmul %268, %270, %cst_269 {dimension_numbers = #tpu.dot_dimension_numbers<[1], [0], [0], [1], [0, 0, 1, 1], [], []>} : vector<16x32xbf16>, vector<32x32xbf16>, vector<16x32xf32> -> vector<16x32xf32>
    %272 = arith.addf %265, %271 : vector<16x32xf32>
    %c2_270 = arith.constant 2 : index
    %c0_271 = arith.constant 0 : index
    %c0_272 = arith.constant 0 : index
    %273 = vector.load %arg23[%c2_270, %c0_271, %c0_272] : memref<6x6x32xf32, #tpu.memory_space<vmem>>, vector<4x4x32xf32>
    %274 = vector.shape_cast %273 : vector<4x4x32xf32> to vector<16x32xf32>
    %275 = arith.truncf %274 : vector<16x32xf32> to vector<16x32xbf16>
    %c6_273 = arith.constant 6 : index
    %c0_274 = arith.constant 0 : index
    %c0_275 = arith.constant 0 : index
    %276 = vector.load %arg8[%c6_273, %c0_274, %c0_275] : memref<9x32x32xbf16, #tpu.memory_space<vmem>>, vector<1x32x32xbf16>
    %277 = vector.shape_cast %276 : vector<1x32x32xbf16> to vector<32x32xbf16>
    %cst_276 = arith.constant dense<0.000000e+00> : vector<16x32xf32>
    %278 = tpu.matmul %275, %277, %cst_276 {dimension_numbers = #tpu.dot_dimension_numbers<[1], [0], [0], [1], [0, 0, 1, 1], [], []>} : vector<16x32xbf16>, vector<32x32xbf16>, vector<16x32xf32> -> vector<16x32xf32>
    %279 = arith.addf %272, %278 : vector<16x32xf32>
    %c2_277 = arith.constant 2 : index
    %c1_278 = arith.constant 1 : index
    %c0_279 = arith.constant 0 : index
    %280 = vector.load %arg23[%c2_277, %c1_278, %c0_279] : memref<6x6x32xf32, #tpu.memory_space<vmem>>, vector<4x4x32xf32>
    %281 = vector.shape_cast %280 : vector<4x4x32xf32> to vector<16x32xf32>
    %282 = arith.truncf %281 : vector<16x32xf32> to vector<16x32xbf16>
    %c7_280 = arith.constant 7 : index
    %c0_281 = arith.constant 0 : index
    %c0_282 = arith.constant 0 : index
    %283 = vector.load %arg8[%c7_280, %c0_281, %c0_282] : memref<9x32x32xbf16, #tpu.memory_space<vmem>>, vector<1x32x32xbf16>
    %284 = vector.shape_cast %283 : vector<1x32x32xbf16> to vector<32x32xbf16>
    %cst_283 = arith.constant dense<0.000000e+00> : vector<16x32xf32>
    %285 = tpu.matmul %282, %284, %cst_283 {dimension_numbers = #tpu.dot_dimension_numbers<[1], [0], [0], [1], [0, 0, 1, 1], [], []>} : vector<16x32xbf16>, vector<32x32xbf16>, vector<16x32xf32> -> vector<16x32xf32>
    %286 = arith.addf %279, %285 : vector<16x32xf32>
    %c2_284 = arith.constant 2 : index
    %c2_285 = arith.constant 2 : index
    %c0_286 = arith.constant 0 : index
    %287 = vector.load %arg23[%c2_284, %c2_285, %c0_286] : memref<6x6x32xf32, #tpu.memory_space<vmem>>, vector<4x4x32xf32>
    %288 = vector.shape_cast %287 : vector<4x4x32xf32> to vector<16x32xf32>
    %289 = arith.truncf %288 : vector<16x32xf32> to vector<16x32xbf16>
    %c8_287 = arith.constant 8 : index
    %c0_288 = arith.constant 0 : index
    %c0_289 = arith.constant 0 : index
    %290 = vector.load %arg8[%c8_287, %c0_288, %c0_289] : memref<9x32x32xbf16, #tpu.memory_space<vmem>>, vector<1x32x32xbf16>
    %291 = vector.shape_cast %290 : vector<1x32x32xbf16> to vector<32x32xbf16>
    %cst_290 = arith.constant dense<0.000000e+00> : vector<16x32xf32>
    %292 = tpu.matmul %289, %291, %cst_290 {dimension_numbers = #tpu.dot_dimension_numbers<[1], [0], [0], [1], [0, 0, 1, 1], [], []>} : vector<16x32xbf16>, vector<32x32xbf16>, vector<16x32xf32> -> vector<16x32xf32>
    %293 = arith.addf %286, %292 : vector<16x32xf32>
    %c0_291 = arith.constant 0 : index
    %c0_292 = arith.constant 0 : index
    %294 = vector.load %arg9[%c0_291, %c0_292] : memref<1x32xf32, #tpu.memory_space<vmem>>, vector<1x32xf32>
    %295 = vector.broadcast %294 : vector<1x32xf32> to vector<16x32xf32>
    %296 = arith.addf %293, %295 : vector<16x32xf32>
    %cst_293 = arith.constant 0.000000e+00 : f32
    %297 = vector.broadcast %cst_293 : f32 to vector<16x32xf32>
    %298 = arith.maximumf %296, %297 : vector<16x32xf32>
    %299 = vector.shape_cast %298 : vector<16x32xf32> to vector<4x4x32xf32>
    %300 = vector.shape_cast %299 : vector<4x4x32xf32> to vector<2x2x2x2x32xf32>
    %cst_294 = arith.constant dense<0xFF800000> : vector<2x2x2x32xf32>
    %301 = vector.multi_reduction <maximumf>, %300, %cst_294 [3] : vector<2x2x2x2x32xf32> to vector<2x2x2x32xf32>
    %cst_295 = arith.constant dense<0xFF800000> : vector<2x2x32xf32>
    %302 = vector.multi_reduction <maximumf>, %301, %cst_295 [1] : vector<2x2x2x32xf32> to vector<2x2x32xf32>
    %cst_296 = arith.constant 0.000000e+00 : f32
    %303 = vector.broadcast %cst_296 : f32 to vector<4x4x32xf32>
    %c0_297 = arith.constant 0 : index
    %c0_298 = arith.constant 0 : index
    %c0_299 = arith.constant 0 : index
    %304 = vector.load %arg24[%c0_297, %c0_298, %c0_299] : memref<4x4x32xf32, #tpu.memory_space<vmem>>, vector<4x4x32xf32>
    tpu.vector_store %arg24[%c0_297, %c0_298, %c0_299], %303 {strides = array<i32>} : memref<4x4x32xf32, #tpu.memory_space<vmem>>, vector<4x4x32xf32>,
    %c1_300 = arith.constant 1 : index
    %c1_301 = arith.constant 1 : index
    %c0_302 = arith.constant 0 : index
    %305 = vector.load %arg24[%c1_300, %c1_301, %c0_302] : memref<4x4x32xf32, #tpu.memory_space<vmem>>, vector<2x2x32xf32>
    tpu.vector_store %arg24[%c1_300, %c1_301, %c0_302], %302 {strides = array<i32>} : memref<4x4x32xf32, #tpu.memory_space<vmem>>, vector<2x2x32xf32>,
    %cst_303 = arith.constant 0.000000e+00 : f32
    %306 = vector.broadcast %cst_303 : f32 to vector<4x64xf32>
    %c0_304 = arith.constant 0 : index
    %c0_305 = arith.constant 0 : index
    %c0_306 = arith.constant 0 : index
    %307 = vector.load %arg24[%c0_304, %c0_305, %c0_306] : memref<4x4x32xf32, #tpu.memory_space<vmem>>, vector<2x2x32xf32>
    %308 = vector.shape_cast %307 : vector<2x2x32xf32> to vector<4x32xf32>
    %309 = arith.truncf %308 : vector<4x32xf32> to vector<4x32xbf16>
    %c0_307 = arith.constant 0 : index
    %c0_308 = arith.constant 0 : index
    %c0_309 = arith.constant 0 : index
    %310 = vector.load %arg10[%c0_307, %c0_308, %c0_309] : memref<9x32x64xbf16, #tpu.memory_space<vmem>>, vector<1x32x64xbf16>
    %311 = vector.shape_cast %310 : vector<1x32x64xbf16> to vector<32x64xbf16>
    %cst_310 = arith.constant dense<0.000000e+00> : vector<4x64xf32>
    %312 = tpu.matmul %309, %311, %cst_310 {dimension_numbers = #tpu.dot_dimension_numbers<[1], [0], [0], [1], [0, 0, 1, 1], [], []>} : vector<4x32xbf16>, vector<32x64xbf16>, vector<4x64xf32> -> vector<4x64xf32>
    %313 = arith.addf %306, %312 : vector<4x64xf32>
    %c0_311 = arith.constant 0 : index
    %c1_312 = arith.constant 1 : index
    %c0_313 = arith.constant 0 : index
    %314 = vector.load %arg24[%c0_311, %c1_312, %c0_313] : memref<4x4x32xf32, #tpu.memory_space<vmem>>, vector<2x2x32xf32>
    %315 = vector.shape_cast %314 : vector<2x2x32xf32> to vector<4x32xf32>
    %316 = arith.truncf %315 : vector<4x32xf32> to vector<4x32xbf16>
    %c1_314 = arith.constant 1 : index
    %c0_315 = arith.constant 0 : index
    %c0_316 = arith.constant 0 : index
    %317 = vector.load %arg10[%c1_314, %c0_315, %c0_316] : memref<9x32x64xbf16, #tpu.memory_space<vmem>>, vector<1x32x64xbf16>
    %318 = vector.shape_cast %317 : vector<1x32x64xbf16> to vector<32x64xbf16>
    %cst_317 = arith.constant dense<0.000000e+00> : vector<4x64xf32>
    %319 = tpu.matmul %316, %318, %cst_317 {dimension_numbers = #tpu.dot_dimension_numbers<[1], [0], [0], [1], [0, 0, 1, 1], [], []>} : vector<4x32xbf16>, vector<32x64xbf16>, vector<4x64xf32> -> vector<4x64xf32>
    %320 = arith.addf %313, %319 : vector<4x64xf32>
    %c0_318 = arith.constant 0 : index
    %c2_319 = arith.constant 2 : index
    %c0_320 = arith.constant 0 : index
    %321 = vector.load %arg24[%c0_318, %c2_319, %c0_320] : memref<4x4x32xf32, #tpu.memory_space<vmem>>, vector<2x2x32xf32>
    %322 = vector.shape_cast %321 : vector<2x2x32xf32> to vector<4x32xf32>
    %323 = arith.truncf %322 : vector<4x32xf32> to vector<4x32xbf16>
    %c2_321 = arith.constant 2 : index
    %c0_322 = arith.constant 0 : index
    %c0_323 = arith.constant 0 : index
    %324 = vector.load %arg10[%c2_321, %c0_322, %c0_323] : memref<9x32x64xbf16, #tpu.memory_space<vmem>>, vector<1x32x64xbf16>
    %325 = vector.shape_cast %324 : vector<1x32x64xbf16> to vector<32x64xbf16>
    %cst_324 = arith.constant dense<0.000000e+00> : vector<4x64xf32>
    %326 = tpu.matmul %323, %325, %cst_324 {dimension_numbers = #tpu.dot_dimension_numbers<[1], [0], [0], [1], [0, 0, 1, 1], [], []>} : vector<4x32xbf16>, vector<32x64xbf16>, vector<4x64xf32> -> vector<4x64xf32>
    %327 = arith.addf %320, %326 : vector<4x64xf32>
    %c1_325 = arith.constant 1 : index
    %c0_326 = arith.constant 0 : index
    %c0_327 = arith.constant 0 : index
    %328 = vector.load %arg24[%c1_325, %c0_326, %c0_327] : memref<4x4x32xf32, #tpu.memory_space<vmem>>, vector<2x2x32xf32>
    %329 = vector.shape_cast %328 : vector<2x2x32xf32> to vector<4x32xf32>
    %330 = arith.truncf %329 : vector<4x32xf32> to vector<4x32xbf16>
    %c3_328 = arith.constant 3 : index
    %c0_329 = arith.constant 0 : index
    %c0_330 = arith.constant 0 : index
    %331 = vector.load %arg10[%c3_328, %c0_329, %c0_330] : memref<9x32x64xbf16, #tpu.memory_space<vmem>>, vector<1x32x64xbf16>
    %332 = vector.shape_cast %331 : vector<1x32x64xbf16> to vector<32x64xbf16>
    %cst_331 = arith.constant dense<0.000000e+00> : vector<4x64xf32>
    %333 = tpu.matmul %330, %332, %cst_331 {dimension_numbers = #tpu.dot_dimension_numbers<[1], [0], [0], [1], [0, 0, 1, 1], [], []>} : vector<4x32xbf16>, vector<32x64xbf16>, vector<4x64xf32> -> vector<4x64xf32>
    %334 = arith.addf %327, %333 : vector<4x64xf32>
    %c1_332 = arith.constant 1 : index
    %c1_333 = arith.constant 1 : index
    %c0_334 = arith.constant 0 : index
    %335 = vector.load %arg24[%c1_332, %c1_333, %c0_334] : memref<4x4x32xf32, #tpu.memory_space<vmem>>, vector<2x2x32xf32>
    %336 = vector.shape_cast %335 : vector<2x2x32xf32> to vector<4x32xf32>
    %337 = arith.truncf %336 : vector<4x32xf32> to vector<4x32xbf16>
    %c4_335 = arith.constant 4 : index
    %c0_336 = arith.constant 0 : index
    %c0_337 = arith.constant 0 : index
    %338 = vector.load %arg10[%c4_335, %c0_336, %c0_337] : memref<9x32x64xbf16, #tpu.memory_space<vmem>>, vector<1x32x64xbf16>
    %339 = vector.shape_cast %338 : vector<1x32x64xbf16> to vector<32x64xbf16>
    %cst_338 = arith.constant dense<0.000000e+00> : vector<4x64xf32>
    %340 = tpu.matmul %337, %339, %cst_338 {dimension_numbers = #tpu.dot_dimension_numbers<[1], [0], [0], [1], [0, 0, 1, 1], [], []>} : vector<4x32xbf16>, vector<32x64xbf16>, vector<4x64xf32> -> vector<4x64xf32>
    %341 = arith.addf %334, %340 : vector<4x64xf32>
    %c1_339 = arith.constant 1 : index
    %c2_340 = arith.constant 2 : index
    %c0_341 = arith.constant 0 : index
    %342 = vector.load %arg24[%c1_339, %c2_340, %c0_341] : memref<4x4x32xf32, #tpu.memory_space<vmem>>, vector<2x2x32xf32>
    %343 = vector.shape_cast %342 : vector<2x2x32xf32> to vector<4x32xf32>
    %344 = arith.truncf %343 : vector<4x32xf32> to vector<4x32xbf16>
    %c5_342 = arith.constant 5 : index
    %c0_343 = arith.constant 0 : index
    %c0_344 = arith.constant 0 : index
    %345 = vector.load %arg10[%c5_342, %c0_343, %c0_344] : memref<9x32x64xbf16, #tpu.memory_space<vmem>>, vector<1x32x64xbf16>
    %346 = vector.shape_cast %345 : vector<1x32x64xbf16> to vector<32x64xbf16>
    %cst_345 = arith.constant dense<0.000000e+00> : vector<4x64xf32>
    %347 = tpu.matmul %344, %346, %cst_345 {dimension_numbers = #tpu.dot_dimension_numbers<[1], [0], [0], [1], [0, 0, 1, 1], [], []>} : vector<4x32xbf16>, vector<32x64xbf16>, vector<4x64xf32> -> vector<4x64xf32>
    %348 = arith.addf %341, %347 : vector<4x64xf32>
    %c2_346 = arith.constant 2 : index
    %c0_347 = arith.constant 0 : index
    %c0_348 = arith.constant 0 : index
    %349 = vector.load %arg24[%c2_346, %c0_347, %c0_348] : memref<4x4x32xf32, #tpu.memory_space<vmem>>, vector<2x2x32xf32>
    %350 = vector.shape_cast %349 : vector<2x2x32xf32> to vector<4x32xf32>
    %351 = arith.truncf %350 : vector<4x32xf32> to vector<4x32xbf16>
    %c6_349 = arith.constant 6 : index
    %c0_350 = arith.constant 0 : index
    %c0_351 = arith.constant 0 : index
    %352 = vector.load %arg10[%c6_349, %c0_350, %c0_351] : memref<9x32x64xbf16, #tpu.memory_space<vmem>>, vector<1x32x64xbf16>
    %353 = vector.shape_cast %352 : vector<1x32x64xbf16> to vector<32x64xbf16>
    %cst_352 = arith.constant dense<0.000000e+00> : vector<4x64xf32>
    %354 = tpu.matmul %351, %353, %cst_352 {dimension_numbers = #tpu.dot_dimension_numbers<[1], [0], [0], [1], [0, 0, 1, 1], [], []>} : vector<4x32xbf16>, vector<32x64xbf16>, vector<4x64xf32> -> vector<4x64xf32>
    %355 = arith.addf %348, %354 : vector<4x64xf32>
    %c2_353 = arith.constant 2 : index
    %c1_354 = arith.constant 1 : index
    %c0_355 = arith.constant 0 : index
    %356 = vector.load %arg24[%c2_353, %c1_354, %c0_355] : memref<4x4x32xf32, #tpu.memory_space<vmem>>, vector<2x2x32xf32>
    %357 = vector.shape_cast %356 : vector<2x2x32xf32> to vector<4x32xf32>
    %358 = arith.truncf %357 : vector<4x32xf32> to vector<4x32xbf16>
    %c7_356 = arith.constant 7 : index
    %c0_357 = arith.constant 0 : index
    %c0_358 = arith.constant 0 : index
    %359 = vector.load %arg10[%c7_356, %c0_357, %c0_358] : memref<9x32x64xbf16, #tpu.memory_space<vmem>>, vector<1x32x64xbf16>
    %360 = vector.shape_cast %359 : vector<1x32x64xbf16> to vector<32x64xbf16>
    %cst_359 = arith.constant dense<0.000000e+00> : vector<4x64xf32>
    %361 = tpu.matmul %358, %360, %cst_359 {dimension_numbers = #tpu.dot_dimension_numbers<[1], [0], [0], [1], [0, 0, 1, 1], [], []>} : vector<4x32xbf16>, vector<32x64xbf16>, vector<4x64xf32> -> vector<4x64xf32>
    %362 = arith.addf %355, %361 : vector<4x64xf32>
    %c2_360 = arith.constant 2 : index
    %c2_361 = arith.constant 2 : index
    %c0_362 = arith.constant 0 : index
    %363 = vector.load %arg24[%c2_360, %c2_361, %c0_362] : memref<4x4x32xf32, #tpu.memory_space<vmem>>, vector<2x2x32xf32>
    %364 = vector.shape_cast %363 : vector<2x2x32xf32> to vector<4x32xf32>
    %365 = arith.truncf %364 : vector<4x32xf32> to vector<4x32xbf16>
    %c8_363 = arith.constant 8 : index
    %c0_364 = arith.constant 0 : index
    %c0_365 = arith.constant 0 : index
    %366 = vector.load %arg10[%c8_363, %c0_364, %c0_365] : memref<9x32x64xbf16, #tpu.memory_space<vmem>>, vector<1x32x64xbf16>
    %367 = vector.shape_cast %366 : vector<1x32x64xbf16> to vector<32x64xbf16>
    %cst_366 = arith.constant dense<0.000000e+00> : vector<4x64xf32>
    %368 = tpu.matmul %365, %367, %cst_366 {dimension_numbers = #tpu.dot_dimension_numbers<[1], [0], [0], [1], [0, 0, 1, 1], [], []>} : vector<4x32xbf16>, vector<32x64xbf16>, vector<4x64xf32> -> vector<4x64xf32>
    %369 = arith.addf %362, %368 : vector<4x64xf32>
    %c0_367 = arith.constant 0 : index
    %c0_368 = arith.constant 0 : index
    %370 = vector.load %arg11[%c0_367, %c0_368] : memref<1x64xf32, #tpu.memory_space<vmem>>, vector<1x64xf32>
    %371 = vector.broadcast %370 : vector<1x64xf32> to vector<4x64xf32>
    %372 = arith.addf %369, %371 : vector<4x64xf32>
    %cst_369 = arith.constant 0.000000e+00 : f32
    %373 = vector.broadcast %cst_369 : f32 to vector<4x64xf32>
    %374 = arith.maximumf %372, %373 : vector<4x64xf32>
    %375 = vector.shape_cast %374 : vector<4x64xf32> to vector<2x2x64xf32>
    %376 = vector.shape_cast %375 : vector<2x2x64xf32> to vector<4x64xf32>
    %377 = arith.truncf %376 : vector<4x64xf32> to vector<4x64xbf16>
    %c0_370 = arith.constant 0 : index
    %c0_371 = arith.constant 0 : index
    %378 = vector.load %arg12[%c0_370, %c0_371] : memref<64x128xbf16, #tpu.memory_space<vmem>>, vector<64x128xbf16>
    %cst_372 = arith.constant dense<0.000000e+00> : vector<4x128xf32>
    %379 = tpu.matmul %377, %378, %cst_372 {dimension_numbers = #tpu.dot_dimension_numbers<[1], [0], [0], [1], [0, 0, 1, 1], [], []>} : vector<4x64xbf16>, vector<64x128xbf16>, vector<4x128xf32> -> vector<4x128xf32>
    %c0_373 = arith.constant 0 : index
    %c0_374 = arith.constant 0 : index
    %380 = vector.load %arg13[%c0_373, %c0_374] : memref<1x128xf32, #tpu.memory_space<vmem>>, vector<1x128xf32>
    %381 = vector.broadcast %380 : vector<1x128xf32> to vector<4x128xf32>
    %382 = arith.addf %379, %381 : vector<4x128xf32>
    %cst_375 = arith.constant 0.000000e+00 : f32
    %383 = vector.broadcast %cst_375 : f32 to vector<4x128xf32>
    %384 = arith.maximumf %382, %383 : vector<4x128xf32>
    %385 = arith.truncf %384 : vector<4x128xf32> to vector<4x128xbf16>
    %c0_376 = arith.constant 0 : index
    %c0_377 = arith.constant 0 : index
    %386 = vector.load %arg14[%c0_376, %c0_377] : memref<128x128xbf16, #tpu.memory_space<vmem>>, vector<128x128xbf16>
    %cst_378 = arith.constant dense<0.000000e+00> : vector<4x128xf32>
    %387 = tpu.matmul %385, %386, %cst_378 {dimension_numbers = #tpu.dot_dimension_numbers<[1], [0], [0], [1], [0, 0, 1, 1], [], []>} : vector<4x128xbf16>, vector<128x128xbf16>, vector<4x128xf32> -> vector<4x128xf32>
    %c0_379 = arith.constant 0 : index
    %c0_380 = arith.constant 0 : index
    %388 = vector.load %arg15[%c0_379, %c0_380] : memref<1x128xf32, #tpu.memory_space<vmem>>, vector<1x128xf32>
    %389 = vector.broadcast %388 : vector<1x128xf32> to vector<4x128xf32>
    %390 = arith.addf %387, %389 : vector<4x128xf32>
    %cst_381 = arith.constant 0.000000e+00 : f32
    %391 = vector.broadcast %cst_381 : f32 to vector<4x128xf32>
    %392 = arith.maximumf %390, %391 : vector<4x128xf32>
    %393 = arith.truncf %392 : vector<4x128xf32> to vector<4x128xbf16>
    %c0_382 = arith.constant 0 : index
    %c0_383 = arith.constant 0 : index
    %394 = vector.load %arg16[%c0_382, %c0_383] : memref<128x2xbf16, #tpu.memory_space<vmem>>, vector<128x2xbf16>
    %cst_384 = arith.constant dense<0.000000e+00> : vector<4x2xf32>
    %395 = tpu.matmul %393, %394, %cst_384 {dimension_numbers = #tpu.dot_dimension_numbers<[1], [0], [0], [1], [0, 0, 1, 1], [], []>} : vector<4x128xbf16>, vector<128x2xbf16>, vector<4x2xf32> -> vector<4x2xf32>
    %c0_385 = arith.constant 0 : index
    %c0_386 = arith.constant 0 : index
    %396 = vector.load %arg17[%c0_385, %c0_386] : memref<1x2xf32, #tpu.memory_space<vmem>>, vector<1x2xf32>
    %397 = vector.broadcast %396 : vector<1x2xf32> to vector<4x2xf32>
    %398 = arith.addf %395, %397 : vector<4x2xf32>
    %cst_387 = arith.constant dense<0xFF800000> : vector<4xf32>
    %399 = vector.multi_reduction <maximumf>, %398, %cst_387 [1] : vector<4x2xf32> to vector<4xf32>
    %400 = vector.shape_cast %399 : vector<4xf32> to vector<4x1xf32>
    %401 = vector.broadcast %400 : vector<4x1xf32> to vector<4x2xf32>
    %402 = arith.subf %398, %401 : vector<4x2xf32>
    %403 = math.exp %402 : vector<4x2xf32>
    %cst_388 = arith.constant dense<0.000000e+00> : vector<4xf32>
    %404 = vector.multi_reduction <add>, %403, %cst_388 [1] : vector<4x2xf32> to vector<4xf32>
    %405 = vector.shape_cast %404 : vector<4xf32> to vector<4x1xf32>
    %406 = tpu.reciprocal %405 {approx = true} : vector<4x1xf32> -> vector<4x1xf32>
    %407 = vector.broadcast %406 : vector<4x1xf32> to vector<4x2xf32>
    %408 = arith.mulf %403, %407 : vector<4x2xf32>
    %409 = vector.shape_cast %408 : vector<4x2xf32> to vector<2x2x2xf32>
    %c0_389 = arith.constant 0 : index
    %c0_390 = arith.constant 0 : index
    %c0_391 = arith.constant 0 : index
    %c0_392 = arith.constant 0 : index
    %410 = vector.load %arg18[%c0_389, %c0_390, %c0_391, %c0_392] : memref<1x2x2x2xf32, #tpu.memory_space<vmem>>, vector<1x2x2x2xf32>
    %411 = vector.shape_cast %410 : vector<1x2x2x2xf32> to vector<2x2x2xf32>
    %412 = vector.shape_cast %409 : vector<2x2x2xf32> to vector<1x2x2x2xf32>
    tpu.vector_store %arg18[%c0_389, %c0_390, %c0_391, %c0_392], %412 {strides = array<i32>} : memref<1x2x2x2xf32, #tpu.memory_space<vmem>>, vector<1x2x2x2xf32>,
    %413 = math.log %405 : vector<4x1xf32>
    %414 = vector.broadcast %413 : vector<4x1xf32> to vector<4x2xf32>
    %415 = arith.subf %402, %414 : vector<4x2xf32>
    %416 = vector.shape_cast %415 : vector<4x2xf32> to vector<2x2x2xf32>
    %c0_393 = arith.constant 0 : index
    %c0_394 = arith.constant 0 : index
    %c0_395 = arith.constant 0 : index
    %c0_396 = arith.constant 0 : index
    %417 = vector.load %arg19[%c0_393, %c0_394, %c0_395, %c0_396] : memref<1x2x2x2xf32, #tpu.memory_space<vmem>>, vector<1x2x2x2xf32>
    %418 = vector.shape_cast %417 : vector<1x2x2x2xf32> to vector<2x2x2xf32>
    %419 = vector.shape_cast %416 : vector<2x2x2xf32> to vector<1x2x2x2xf32>
    tpu.vector_store %arg19[%c0_393, %c0_394, %c0_395, %c0_396], %419 {strides = array<i32>} : memref<1x2x2x2xf32, #tpu.memory_space<vmem>>, vector<1x2x2x2xf32>,
    return
  }
  func.func @transform_0(%arg0: i32) -> (i32, i32, i32, i32) {
    %c0_i32 = arith.constant 0 : i32
    %c0_i32_0 = arith.constant 0 : i32
    %c0_i32_1 = arith.constant 0 : i32
    %c0_i32_2 = arith.constant 0 : i32
    return %arg0, %c0_i32, %c0_i32_0, %c0_i32_1 : i32, i32, i32, i32
  }
  func.func @transform_1(%arg0: i32) -> (i32, i32, i32) {
    %c0_i32 = arith.constant 0 : i32
    %c0_i32_0 = arith.constant 0 : i32
    %c0_i32_1 = arith.constant 0 : i32
    %c0_i32_2 = arith.constant 0 : i32
    return %c0_i32, %c0_i32_0, %c0_i32_1 : i32, i32, i32
  }
  func.func @transform_2(%arg0: i32) -> (i32, i32) {
    %c0_i32 = arith.constant 0 : i32
    %c0_i32_0 = arith.constant 0 : i32
    %c0_i32_1 = arith.constant 0 : i32
    return %c0_i32, %c0_i32_0 : i32, i32
  }
  func.func @transform_3(%arg0: i32) -> (i32, i32, i32) {
    %c0_i32 = arith.constant 0 : i32
    %c0_i32_0 = arith.constant 0 : i32
    %c0_i32_1 = arith.constant 0 : i32
    %c0_i32_2 = arith.constant 0 : i32
    return %c0_i32, %c0_i32_0, %c0_i32_1 : i32, i32, i32
  }
  func.func @transform_4(%arg0: i32) -> (i32, i32) {
    %c0_i32 = arith.constant 0 : i32
    %c0_i32_0 = arith.constant 0 : i32
    %c0_i32_1 = arith.constant 0 : i32
    return %c0_i32, %c0_i32_0 : i32, i32
  }
  func.func @transform_5(%arg0: i32) -> (i32, i32, i32) {
    %c0_i32 = arith.constant 0 : i32
    %c0_i32_0 = arith.constant 0 : i32
    %c0_i32_1 = arith.constant 0 : i32
    %c0_i32_2 = arith.constant 0 : i32
    return %c0_i32, %c0_i32_0, %c0_i32_1 : i32, i32, i32
  }
  func.func @transform_6(%arg0: i32) -> (i32, i32) {
    %c0_i32 = arith.constant 0 : i32
    %c0_i32_0 = arith.constant 0 : i32
    %c0_i32_1 = arith.constant 0 : i32
    return %c0_i32, %c0_i32_0 : i32, i32
  }
  func.func @transform_7(%arg0: i32) -> (i32, i32, i32) {
    %c0_i32 = arith.constant 0 : i32
    %c0_i32_0 = arith.constant 0 : i32
    %c0_i32_1 = arith.constant 0 : i32
    %c0_i32_2 = arith.constant 0 : i32
    return %c0_i32, %c0_i32_0, %c0_i32_1 : i32, i32, i32
  }
  func.func @transform_8(%arg0: i32) -> (i32, i32) {
    %c0_i32 = arith.constant 0 : i32
    %c0_i32_0 = arith.constant 0 : i32
    %c0_i32_1 = arith.constant 0 : i32
    return %c0_i32, %c0_i32_0 : i32, i32
  }
  func.func @transform_9(%arg0: i32) -> (i32, i32, i32) {
    %c0_i32 = arith.constant 0 : i32
    %c0_i32_0 = arith.constant 0 : i32
    %c0_i32_1 = arith.constant 0 : i32
    %c0_i32_2 = arith.constant 0 : i32
    return %c0_i32, %c0_i32_0, %c0_i32_1 : i32, i32, i32
  }
  func.func @transform_10(%arg0: i32) -> (i32, i32) {
    %c0_i32 = arith.constant 0 : i32
    %c0_i32_0 = arith.constant 0 : i32
    %c0_i32_1 = arith.constant 0 : i32
    return %c0_i32, %c0_i32_0 : i32, i32
  }
  func.func @transform_11(%arg0: i32) -> (i32, i32) {
    %c0_i32 = arith.constant 0 : i32
    %c0_i32_0 = arith.constant 0 : i32
    %c0_i32_1 = arith.constant 0 : i32
    return %c0_i32, %c0_i32_0 : i32, i32
  }
  func.func @transform_12(%arg0: i32) -> (i32, i32) {
    %c0_i32 = arith.constant 0 : i32
    %c0_i32_0 = arith.constant 0 : i32
    %c0_i32_1 = arith.constant 0 : i32
    return %c0_i32, %c0_i32_0 : i32, i32
  }
  func.func @transform_13(%arg0: i32) -> (i32, i32) {
    %c0_i32 = arith.constant 0 : i32
    %c0_i32_0 = arith.constant 0 : i32
    %c0_i32_1 = arith.constant 0 : i32
    return %c0_i32, %c0_i32_0 : i32, i32
  }
  func.func @transform_14(%arg0: i32) -> (i32, i32) {
    %c0_i32 = arith.constant 0 : i32
    %c0_i32_0 = arith.constant 0 : i32
    %c0_i32_1 = arith.constant 0 : i32
    return %c0_i32, %c0_i32_0 : i32, i32
  }
  func.func @transform_15(%arg0: i32) -> (i32, i32) {
    %c0_i32 = arith.constant 0 : i32
    %c0_i32_0 = arith.constant 0 : i32
    %c0_i32_1 = arith.constant 0 : i32
    return %c0_i32, %c0_i32_0 : i32, i32
  }
  func.func @transform_16(%arg0: i32) -> (i32, i32) {
    %c0_i32 = arith.constant 0 : i32
    %c0_i32_0 = arith.constant 0 : i32
    %c0_i32_1 = arith.constant 0 : i32
    return %c0_i32, %c0_i32_0 : i32, i32
  }
  func.func @transform_17(%arg0: i32) -> (i32, i32, i32, i32) {
    %c0_i32 = arith.constant 0 : i32
    %c0_i32_0 = arith.constant 0 : i32
    %c0_i32_1 = arith.constant 0 : i32
    %c0_i32_2 = arith.constant 0 : i32
    return %arg0, %c0_i32, %c0_i32_0, %c0_i32_1 : i32, i32, i32, i32
  }
  func.func @transform_18(%arg0: i32) -> (i32, i32, i32, i32) {
    %c0_i32 = arith.constant 0 : i32
    %c0_i32_0 = arith.constant 0 : i32
    %c0_i32_1 = arith.constant 0 : i32
    %c0_i32_2 = arith.constant 0 : i32
    return %arg0, %c0_i32, %c0_i32_0, %c0_i32_1 : i32, i32, i32, i32
  }
}

</mosaic_0001>

<llo_original>
// kernel: _lambda_.1
$region0: #{_lambda_.1}
  #allocation0 [shape = 'u32[]', space=smem, size = 0x4, offset = 0x4, fixed_abs, tag = 'smem constant byte address 0x4 - core index']
  #allocation1 [shape = 'u32[144,128]{1,0:T(1,128)}', space=vmem, size = 0x12000, scoped, tag = 'internal scratch']
  #allocation2 [shape = 'f32[18,18,3]{2,1,0:T(8,128)}', space=vmem, size = 0x36000, scoped, tag = 'scratch operand']
  #allocation3 [shape = 'f32[10,10,16]{2,1,0:T(8,128)}', space=vmem, size = 0x14000, scoped, tag = 'scratch operand']
  #allocation4 [shape = 'f32[10,10,16]{2,1,0:T(8,128)}', space=vmem, size = 0x14000, scoped, tag = 'scratch operand']
  #allocation5 [shape = 'f32[6,6,32]{2,1,0:T(8,128)}', space=vmem, size = 0x6000, scoped, tag = 'scratch operand']
  #allocation6 [shape = 'f32[4,4,32]{2,1,0:T(4,128)}', space=vmem, size = 0x2000, scoped, tag = 'scratch operand']
  %s0 = inlined_call_operand.vmem [shape: f32[2,16,16,3], index: 0, kind: input, shape index: {}]
  %s1 = inlined_call_operand.vmem [shape: bf16[9,3,16], index: 1, kind: input, shape index: {}]
  %s2 = inlined_call_operand.vmem [shape: f32[1,16], index: 2, kind: input, shape index: {}, may-alias: {2,4}]
  %s3 = inlined_call_operand.vmem [shape: bf16[9,16,16], index: 3, kind: input, shape index: {}]
  %s4 = inlined_call_operand.vmem [shape: f32[1,16], index: 4, kind: input, shape index: {}, may-alias: {2,4}]
  %s5 = inlined_call_operand.vmem [shape: bf16[9,16,32], index: 5, kind: input, shape index: {}]
  %s6 = inlined_call_operand.vmem [shape: f32[1,32], index: 6, kind: input, shape index: {}, may-alias: {6,8}]
  %s7 = inlined_call_operand.vmem [shape: bf16[9,32,32], index: 7, kind: input, shape index: {}]
  %s8 = inlined_call_operand.vmem [shape: f32[1,32], index: 8, kind: input, shape index: {}, may-alias: {6,8}]
  %s9 = inlined_call_operand.vmem [shape: bf16[9,32,64], index: 9, kind: input, shape index: {}]
  %s10 = inlined_call_operand.vmem [shape: f32[1,64], index: 10, kind: input, shape index: {}]
  %s11 = inlined_call_operand.vmem [shape: bf16[64,128], index: 11, kind: input, shape index: {}]
  %s12 = inlined_call_operand.vmem [shape: f32[1,128], index: 12, kind: input, shape index: {}, may-alias: {12,14}]
  %s13 = inlined_call_operand.vmem [shape: bf16[128,128], index: 13, kind: input, shape index: {}]
  %s14 = inlined_call_operand.vmem [shape: f32[1,128], index: 14, kind: input, shape index: {}, may-alias: {12,14}]
  %s15 = inlined_call_operand.vmem [shape: bf16[128,2], index: 15, kind: input, shape index: {}]
  %s16 = inlined_call_operand.vmem [shape: f32[1,2], index: 16, kind: input, shape index: {}]
  %s17 = inlined_call_operand.vmem [shape: f32[2,2,2,2], index: 17, kind: output, shape index: {0}]
  %s18 = inlined_call_operand.vmem [shape: f32[2,2,2,2], index: 18, kind: output, shape index: {1}]
  %19 = xla_tuple %s17, %s18
  %s20 = sld [smem:[#allocation0]]
  $region109: #{_lambda_.1} parent=0
    _
  %s22 = ssub.s32 1, %s20
  %s23 = scalar_select 0, %s22, %s20
  loop: start=0, step=1, limit=4
  $region2: #{_lambda_.1} parent=0 // loop_pre_header
    _
  $region3: #{_lambda_.1} parent=0 // loop_header
    %s25 = sphi 0, %s29
    %p26 = scmp.ge.s32.totalorder %s25, 4
    %s35 = sphi 0, %s37
    %s38 = sphi 0, %s35
    %s39 = sphi 0, %s38
    %s55 = sphi 0, %s39
    %s59 = sphi 0, %s59
    %s61 = sphi 0, %s59
    %s62 = sphi 0, %s61
    %s76 = sphi 0, %s62
    %s80 = sphi 0, %s80
    %s82 = sphi 0, %s80
    %s83 = sphi 0, %s82
    %s97 = sphi 0, %s83
    %s101 = sphi 0, %s101
    %s103 = sphi 0, %s101
    %s104 = sphi 0, %s103
    %s118 = sphi 0, %s104
    %s122 = sphi 0, %s122
    %s124 = sphi 0, %s122
    %s125 = sphi 0, %s124
    %s139 = sphi 0, %s125
    %s143 = sphi 0, %s143
    %s145 = sphi 0, %s143
    %s146 = sphi 0, %s145
    %s160 = sphi 0, %s146
    %s164 = sphi 0, %s164
    %s166 = sphi 0, %s164
    %s167 = sphi 0, %s166
    %s181 = sphi 0, %s167
    %s185 = sphi 0, %s185
    %s187 = sphi 0, %s185
    %s188 = sphi 0, %s187
    %s202 = sphi 0, %s188
    %s206 = sphi 0, %s206
    %s208 = sphi 0, %s206
    %s209 = sphi 0, %s208
    %s223 = sphi 0, %s209
    %s227 = sphi 0, %s227
    %s229 = sphi 0, %s227
    %s230 = sphi 0, %s229
    %s244 = sphi 0, %s230
    %s248 = sphi 0, %s248
    %s250 = sphi 0, %s248
    %s251 = sphi 0, %s250
    %s265 = sphi 0, %s251
    %s269 = sphi 0, %s269
    %s271 = sphi 0, %s269
    %s272 = sphi 0, %s271
    %s286 = sphi 0, %s272
    %s290 = sphi 0, %s290
    %s292 = sphi 0, %s290
    %s293 = sphi 0, %s292
    %s307 = sphi 0, %s293
    %s311 = sphi 0, %s311
    %s313 = sphi 0, %s311
    %s314 = sphi 0, %s313
    %s328 = sphi 0, %s314
    %s332 = sphi 0, %s332
    %s334 = sphi 0, %s332
    %s335 = sphi 0, %s334
    %s349 = sphi 0, %s335
    %s353 = sphi 0, %s353
    %s355 = sphi 0, %s353
    %s356 = sphi 0, %s355
    %s370 = sphi 0, %s356
    %s374 = sphi 0, %s374
    %s376 = sphi 0, %s374
    %s377 = sphi 0, %s376
    %s391 = sphi 0, %s377
    %s397 = sphi 0, %s399
    %s400 = sphi 0, %s397
    %s401 = sphi 0, %s400
    %s417 = sphi 0, %s401
    %s423 = sphi 0, %s425
    %s426 = sphi 0, %s423
    %s427 = sphi 0, %s426
    %s443 = sphi 0, %s427
  $region4: #{_lambda_.1} parent=0 // loop_header_branch
    %28 = sbr.rel (%p26) target = $region8
  $region5: #{_lambda_.1} parent=0 // loop_body
    %s30 = ssub.s32 %s25, 1
    %s31 = ssub.s32 %s25, 2
    %s32 = sadd.s32 %s25, 1
    %s33 = ssub.s32 %s25, %s32
    %p34 = scmp.eq.s32.totalorder %s33, 0
    %s36 = sadd.s32 %s35, 1
    %s37 = scalar_select %p34, %s35, %s36
    %p40 = pneg %p34
    %p41 = scmp.eq.s32.totalorder %s25, 1
    %p42 = por %p40, %p41
    %p43 = scmp.ne.s32.totalorder %s35, %s38
    %p44 = scmp.eq.s32.totalorder %s25, 0
    %p45 = por %p43, %p44
    %p46 = scmp.ne.s32.totalorder %s35, %s38
    %p47 = scmp.eq.s32.totalorder %s30, 1
    %p48 = por %p46, %p47
    %p49 = scmp.ne.s32.totalorder %s38, %s39
    %p50 = scmp.eq.s32.totalorder %s30, 0
    %p51 = por %p49, %p50
    %p52 = scmp.ne.s32.totalorder %s38, %s39
    %p53 = scmp.eq.s32.totalorder %s31, 1
    %p54 = por %p52, %p53
    %p56 = scmp.ne.s32.totalorder %s39, %s55
    %p57 = scmp.eq.s32.totalorder %s31, 0
    %p58 = por %p56, %p57
    %s60 = sadd.s32 %s59, 1
    %p63 = scmp.eq.s32.totalorder %s25, 1
    %p64 = scmp.ne.s32.totalorder %s59, %s61
    %p65 = scmp.eq.s32.totalorder %s25, 0
    %p66 = por %p64, %p65
    %p67 = scmp.ne.s32.totalorder %s59, %s61
    %p68 = scmp.eq.s32.totalorder %s30, 1
    %p69 = por %p67, %p68
    %p70 = scmp.ne.s32.totalorder %s61, %s62
    %p71 = scmp.eq.s32.totalorder %s30, 0
    %p72 = por %p70, %p71
    %p73 = scmp.ne.s32.totalorder %s61, %s62
    %p74 = scmp.eq.s32.totalorder %s31, 1
    %p75 = por %p73, %p74
    %p77 = scmp.ne.s32.totalorder %s62, %s76
    %p78 = scmp.eq.s32.totalorder %s31, 0
    %p79 = por %p77, %p78
    %s81 = sadd.s32 %s80, 1
    %p84 = scmp.eq.s32.totalorder %s25, 1
    %p85 = scmp.ne.s32.totalorder %s80, %s82
    %p86 = scmp.eq.s32.totalorder %s25, 0
    %p87 = por %p85, %p86
    %p88 = scmp.ne.s32.totalorder %s80, %s82
    %p89 = scmp.eq.s32.totalorder %s30, 1
    %p90 = por %p88, %p89
    %p91 = scmp.ne.s32.totalorder %s82, %s83
    %p92 = scmp.eq.s32.totalorder %s30, 0
    %p93 = por %p91, %p92
    %p94 = scmp.ne.s32.totalorder %s82, %s83
    %p95 = scmp.eq.s32.totalorder %s31, 1
    %p96 = por %p94, %p95
    %p98 = scmp.ne.s32.totalorder %s83, %s97
    %p99 = scmp.eq.s32.totalorder %s31, 0
    %p100 = por %p98, %p99
    %s102 = sadd.s32 %s101, 1
    %p105 = scmp.eq.s32.totalorder %s25, 1
    %p106 = scmp.ne.s32.totalorder %s101, %s103
    %p107 = scmp.eq.s32.totalorder %s25, 0
    %p108 = por %p106, %p107
    %p109 = scmp.ne.s32.totalorder %s101, %s103
    %p110 = scmp.eq.s32.totalorder %s30, 1
    %p111 = por %p109, %p110
    %p112 = scmp.ne.s32.totalorder %s103, %s104
    %p113 = scmp.eq.s32.totalorder %s30, 0
    %p114 = por %p112, %p113
    %p115 = scmp.ne.s32.totalorder %s103, %s104
    %p116 = scmp.eq.s32.totalorder %s31, 1
    %p117 = por %p115, %p116
    %p119 = scmp.ne.s32.totalorder %s104, %s118
    %p120 = scmp.eq.s32.totalorder %s31, 0
    %p121 = por %p119, %p120
    %s123 = sadd.s32 %s122, 1
    %p126 = scmp.eq.s32.totalorder %s25, 1
    %p127 = scmp.ne.s32.totalorder %s122, %s124
    %p128 = scmp.eq.s32.totalorder %s25, 0
    %p129 = por %p127, %p128
    %p130 = scmp.ne.s32.totalorder %s122, %s124
    %p131 = scmp.eq.s32.totalorder %s30, 1
    %p132 = por %p130, %p131
    %p133 = scmp.ne.s32.totalorder %s124, %s125
    %p134 = scmp.eq.s32.totalorder %s30, 0
    %p135 = por %p133, %p134
    %p136 = scmp.ne.s32.totalorder %s124, %s125
    %p137 = scmp.eq.s32.totalorder %s31, 1
    %p138 = por %p136, %p137
    %p140 = scmp.ne.s32.totalorder %s125, %s139
    %p141 = scmp.eq.s32.totalorder %s31, 0
    %p142 = por %p140, %p141
    %s144 = sadd.s32 %s143, 1
    %p147 = scmp.eq.s32.totalorder %s25, 1
    %p148 = scmp.ne.s32.totalorder %s143, %s145
    %p149 = scmp.eq.s32.totalorder %s25, 0
    %p150 = por %p148, %p149
    %p151 = scmp.ne.s32.totalorder %s143, %s145
    %p152 = scmp.eq.s32.totalorder %s30, 1
    %p153 = por %p151, %p152
    %p154 = scmp.ne.s32.totalorder %s145, %s146
    %p155 = scmp.eq.s32.totalorder %s30, 0
    %p156 = por %p154, %p155
    %p157 = scmp.ne.s32.totalorder %s145, %s146
    %p158 = scmp.eq.s32.totalorder %s31, 1
    %p159 = por %p157, %p158
    %p161 = scmp.ne.s32.totalorder %s146, %s160
    %p162 = scmp.eq.s32.totalorder %s31, 0
    %p163 = por %p161, %p162
    %s165 = sadd.s32 %s164, 1
    %p168 = scmp.eq.s32.totalorder %s25, 1
    %p169 = scmp.ne.s32.totalorder %s164, %s166
    %p170 = scmp.eq.s32.totalorder %s25, 0
    %p171 = por %p169, %p170
    %p172 = scmp.ne.s32.totalorder %s164, %s166
    %p173 = scmp.eq.s32.totalorder %s30, 1
    %p174 = por %p172, %p173
    %p175 = scmp.ne.s32.totalorder %s166, %s167
    %p176 = scmp.eq.s32.totalorder %s30, 0
    %p177 = por %p175, %p176
    %p178 = scmp.ne.s32.totalorder %s166, %s167
    %p179 = scmp.eq.s32.totalorder %s31, 1
    %p180 = por %p178, %p179
    %p182 = scmp.ne.s32.totalorder %s167, %s181
    %p183 = scmp.eq.s32.totalorder %s31, 0
    %p184 = por %p182, %p183
    %s186 = sadd.s32 %s185, 1
    %p189 = scmp.eq.s32.totalorder %s25, 1
    %p190 = scmp.ne.s32.totalorder %s185, %s187
    %p191 = scmp.eq.s32.totalorder %s25, 0
    %p192 = por %p190, %p191
    %p193 = scmp.ne.s32.totalorder %s185, %s187
    %p194 = scmp.eq.s32.totalorder %s30, 1
    %p195 = por %p193, %p194
    %p196 = scmp.ne.s32.totalorder %s187, %s188
    %p197 = scmp.eq.s32.totalorder %s30, 0
    %p198 = por %p196, %p197
    %p199 = scmp.ne.s32.totalorder %s187, %s188
    %p200 = scmp.eq.s32.totalorder %s31, 1
    %p201 = por %p199, %p200
    %p203 = scmp.ne.s32.totalorder %s188, %s202
    %p204 = scmp.eq.s32.totalorder %s31, 0
    %p205 = por %p203, %p204
    %s207 = sadd.s32 %s206, 1
    %p210 = scmp.eq.s32.totalorder %s25, 1
    %p211 = scmp.ne.s32.totalorder %s206, %s208
    %p212 = scmp.eq.s32.totalorder %s25, 0
    %p213 = por %p211, %p212
    %p214 = scmp.ne.s32.totalorder %s206, %s208
    %p215 = scmp.eq.s32.totalorder %s30, 1
    %p216 = por %p214, %p215
    %p217 = scmp.ne.s32.totalorder %s208, %s209
    %p218 = scmp.eq.s32.totalorder %s30, 0
    %p219 = por %p217, %p218
    %p220 = scmp.ne.s32.totalorder %s208, %s209
    %p221 = scmp.eq.s32.totalorder %s31, 1
    %p222 = por %p220, %p221
    %p224 = scmp.ne.s32.totalorder %s209, %s223
    %p225 = scmp.eq.s32.totalorder %s31, 0
    %p226 = por %p224, %p225
    %s228 = sadd.s32 %s227, 1
    %p231 = scmp.eq.s32.totalorder %s25, 1
    %p232 = scmp.ne.s32.totalorder %s227, %s229
    %p233 = scmp.eq.s32.totalorder %s25, 0
    %p234 = por %p232, %p233
    %p235 = scmp.ne.s32.totalorder %s227, %s229
    %p236 = scmp.eq.s32.totalorder %s30, 1
    %p237 = por %p235, %p236
    %p238 = scmp.ne.s32.totalorder %s229, %s230
    %p239 = scmp.eq.s32.totalorder %s30, 0
    %p240 = por %p238, %p239
    %p241 = scmp.ne.s32.totalorder %s229, %s230
    %p242 = scmp.eq.s32.totalorder %s31, 1
    %p243 = por %p241, %p242
    %p245 = scmp.ne.s32.totalorder %s230, %s244
    %p246 = scmp.eq.s32.totalorder %s31, 0
    %p247 = por %p245, %p246
    %s249 = sadd.s32 %s248, 1
    %p252 = scmp.eq.s32.totalorder %s25, 1
    %p253 = scmp.ne.s32.totalorder %s248, %s250
    %p254 = scmp.eq.s32.totalorder %s25, 0
    %p255 = por %p253, %p254
    %p256 = scmp.ne.s32.totalorder %s248, %s250
    %p257 = scmp.eq.s32.totalorder %s30, 1
    %p258 = por %p256, %p257
    %p259 = scmp.ne.s32.totalorder %s250, %s251
    %p260 = scmp.eq.s32.totalorder %s30, 0
    %p261 = por %p259, %p260
    %p262 = scmp.ne.s32.totalorder %s250, %s251
    %p263 = scmp.eq.s32.totalorder %s31, 1
    %p264 = por %p262, %p263
    %p266 = scmp.ne.s32.totalorder %s251, %s265
    %p267 = scmp.eq.s32.totalorder %s31, 0
    %p268 = por %p266, %p267
    %s270 = sadd.s32 %s269, 1
    %p273 = scmp.eq.s32.totalorder %s25, 1
    %p274 = scmp.ne.s32.totalorder %s269, %s271
    %p275 = scmp.eq.s32.totalorder %s25, 0
    %p276 = por %p274, %p275
    %p277 = scmp.ne.s32.totalorder %s269, %s271
    %p278 = scmp.eq.s32.totalorder %s30, 1
    %p279 = por %p277, %p278
    %p280 = scmp.ne.s32.totalorder %s271, %s272
    %p281 = scmp.eq.s32.totalorder %s30, 0
    %p282 = por %p280, %p281
    %p283 = scmp.ne.s32.totalorder %s271, %s272
    %p284 = scmp.eq.s32.totalorder %s31, 1
    %p285 = por %p283, %p284
    %p287 = scmp.ne.s32.totalorder %s272, %s286
    %p288 = scmp.eq.s32.totalorder %s31, 0
    %p289 = por %p287, %p288
    %s291 = sadd.s32 %s290, 1
    %p294 = scmp.eq.s32.totalorder %s25, 1
    %p295 = scmp.ne.s32.totalorder %s290, %s292
    %p296 = scmp.eq.s32.totalorder %s25, 0
    %p297 = por %p295, %p296
    %p298 = scmp.ne.s32.totalorder %s290, %s292
    %p299 = scmp.eq.s32.totalorder %s30, 1
    %p300 = por %p298, %p299
    %p301 = scmp.ne.s32.totalorder %s292, %s293
    %p302 = scmp.eq.s32.totalorder %s30, 0
    %p303 = por %p301, %p302
    %p304 = scmp.ne.s32.totalorder %s292, %s293
    %p305 = scmp.eq.s32.totalorder %s31, 1
    %p306 = por %p304, %p305
    %p308 = scmp.ne.s32.totalorder %s293, %s307
    %p309 = scmp.eq.s32.totalorder %s31, 0
    %p310 = por %p308, %p309
    %s312 = sadd.s32 %s311, 1
    %p315 = scmp.eq.s32.totalorder %s25, 1
    %p316 = scmp.ne.s32.totalorder %s311, %s313
    %p317 = scmp.eq.s32.totalorder %s25, 0
    %p318 = por %p316, %p317
    %p319 = scmp.ne.s32.totalorder %s311, %s313
    %p320 = scmp.eq.s32.totalorder %s30, 1
    %p321 = por %p319, %p320
    %p322 = scmp.ne.s32.totalorder %s313, %s314
    %p323 = scmp.eq.s32.totalorder %s30, 0
    %p324 = por %p322, %p323
    %p325 = scmp.ne.s32.totalorder %s313, %s314
    %p326 = scmp.eq.s32.totalorder %s31, 1
    %p327 = por %p325, %p326
    %p329 = scmp.ne.s32.totalorder %s314, %s328
    %p330 = scmp.eq.s32.totalorder %s31, 0
    %p331 = por %p329, %p330
    %s333 = sadd.s32 %s332, 1
    %p336 = scmp.eq.s32.totalorder %s25, 1
    %p337 = scmp.ne.s32.totalorder %s332, %s334
    %p338 = scmp.eq.s32.totalorder %s25, 0
    %p339 = por %p337, %p338
    %p340 = scmp.ne.s32.totalorder %s332, %s334
    %p341 = scmp.eq.s32.totalorder %s30, 1
    %p342 = por %p340, %p341
    %p343 = scmp.ne.s32.totalorder %s334, %s335
    %p344 = scmp.eq.s32.totalorder %s30, 0
    %p345 = por %p343, %p344
    %p346 = scmp.ne.s32.totalorder %s334, %s335
    %p347 = scmp.eq.s32.totalorder %s31, 1
    %p348 = por %p346, %p347
    %p350 = scmp.ne.s32.totalorder %s335, %s349
    %p351 = scmp.eq.s32.totalorder %s31, 0
    %p352 = por %p350, %p351
    %s354 = sadd.s32 %s353, 1
    %p357 = scmp.eq.s32.totalorder %s25, 1
    %p358 = scmp.ne.s32.totalorder %s353, %s355
    %p359 = scmp.eq.s32.totalorder %s25, 0
    %p360 = por %p358, %p359
    %p361 = scmp.ne.s32.totalorder %s353, %s355
    %p362 = scmp.eq.s32.totalorder %s30, 1
    %p363 = por %p361, %p362
    %p364 = scmp.ne.s32.totalorder %s355, %s356
    %p365 = scmp.eq.s32.totalorder %s30, 0
    %p366 = por %p364, %p365
    %p367 = scmp.ne.s32.totalorder %s355, %s356
    %p368 = scmp.eq.s32.totalorder %s31, 1
    %p369 = por %p367, %p368
    %p371 = scmp.ne.s32.totalorder %s356, %s370
    %p372 = scmp.eq.s32.totalorder %s31, 0
    %p373 = por %p371, %p372
    %s375 = sadd.s32 %s374, 1
    %p378 = scmp.eq.s32.totalorder %s25, 1
    %p379 = scmp.ne.s32.totalorder %s374, %s376
    %p380 = scmp.eq.s32.totalorder %s25, 0
    %p381 = por %p379, %p380
    %p382 = scmp.ne.s32.totalorder %s374, %s376
    %p383 = scmp.eq.s32.totalorder %s30, 1
    %p384 = por %p382, %p383
    %p385 = scmp.ne.s32.totalorder %s376, %s377
    %p386 = scmp.eq.s32.totalorder %s30, 0
    %p387 = por %p385, %p386
    %p388 = scmp.ne.s32.totalorder %s376, %s377
    %p389 = scmp.eq.s32.totalorder %s31, 1
    %p390 = por %p388, %p389
    %p392 = scmp.ne.s32.totalorder %s377, %s391
    %p393 = scmp.eq.s32.totalorder %s31, 0
    %p394 = por %p392, %p393
    %s395 = ssub.s32 %s25, %s32
    %p396 = scmp.eq.s32.totalorder %s395, 0
    %s398 = sadd.s32 %s397, 1
    %s399 = scalar_select %p396, %s397, %s398
    %p402 = pneg %p396
    %p403 = scmp.eq.s32.totalorder %s25, 1
    %p404 = por %p402, %p403
    %p405 = scmp.ne.s32.totalorder %s397, %s400
    %p406 = scmp.eq.s32.totalorder %s25, 0
    %p407 = por %p405, %p406
    %p408 = scmp.ne.s32.totalorder %s397, %s400
    %p409 = scmp.eq.s32.totalorder %s30, 1
    %p410 = por %p408, %p409
    %p411 = scmp.ne.s32.totalorder %s400, %s401
    %p412 = scmp.eq.s32.totalorder %s30, 0
    %p413 = por %p411, %p412
    %p414 = scmp.ne.s32.totalorder %s400, %s401
    %p415 = scmp.eq.s32.totalorder %s31, 1
    %p416 = por %p414, %p415
    %p418 = scmp.ne.s32.totalorder %s401, %s417
    %p419 = scmp.eq.s32.totalorder %s31, 0
    %p420 = por %p418, %p419
    %s421 = ssub.s32 %s25, %s32
    %p422 = scmp.eq.s32.totalorder %s421, 0
    %s424 = sadd.s32 %s423, 1
    %s425 = scalar_select %p422, %s423, %s424
    %p428 = pneg %p422
    %p429 = scmp.eq.s32.totalorder %s25, 1
    %p430 = por %p428, %p429
    %p431 = scmp.ne.s32.totalorder %s423, %s426
    %p432 = scmp.eq.s32.totalorder %s25, 0
    %p433 = por %p431, %p432
    %p434 = scmp.ne.s32.totalorder %s423, %s426
    %p435 = scmp.eq.s32.totalorder %s30, 1
    %p436 = por %p434, %p435
    %p437 = scmp.ne.s32.totalorder %s426, %s427
    %p438 = scmp.eq.s32.totalorder %s30, 0
    %p439 = por %p437, %p438
    %p440 = scmp.ne.s32.totalorder %s426, %s427
    %p441 = scmp.eq.s32.totalorder %s31, 1
    %p442 = por %p440, %p441
    %p444 = scmp.ne.s32.totalorder %s427, %s443
    %p445 = scmp.eq.s32.totalorder %s31, 0
    %p446 = por %p444, %p445
    %p447 = scmp.le.s32.totalorder 1, %s25
    %p448 = scmp.lt.s32.totalorder %s25, 3
    %p449 = pnand %p447, %p448
    %p450 = pneg %p449
    // Predicated region
    $region9: #{_lambda_.1} parent=5 // pred_check
      _
    $region10: #{_lambda_.1} parent=5 // pred_check_branch
      %452 = sbr.rel (%p449) target = $region12
    $region11: #{_lambda_.1} parent=5 // pred_region
      %s453 = ssub.s32 %s25, 1
      // Predicated region
      $region13: #{_lambda_.1} parent=11 // pred_check
        %p454 = pneg %p72
      $region14: #{_lambda_.1} parent=11 // pred_check_branch
        %456 = sbr.rel (%p454) target = $region16
      $region15: #{_lambda_.1} parent=11 // pred_region
        _
      $region16: #{_lambda_.1} parent=11 // pred_fallthru
        _
      // Predicated region
      $region17: #{_lambda_.1} parent=11 // pred_check
        %p457 = pneg %p93
      $region18: #{_lambda_.1} parent=11 // pred_check_branch
        %459 = sbr.rel (%p457) target = $region20
      $region19: #{_lambda_.1} parent=11 // pred_region
        _
      $region20: #{_lambda_.1} parent=11 // pred_fallthru
        _
      // Predicated region
      $region21: #{_lambda_.1} parent=11 // pred_check
        %p460 = pneg %p114
      $region22: #{_lambda_.1} parent=11 // pred_check_branch
        %462 = sbr.rel (%p460) target = $region24
      $region23: #{_lambda_.1} parent=11 // pred_region
        _
      $region24: #{_lambda_.1} parent=11 // pred_fallthru
        _
      // Predicated region
      $region25: #{_lambda_.1} parent=11 // pred_check
        %p463 = pneg %p135
      $region26: #{_lambda_.1} parent=11 // pred_check_branch
        %465 = sbr.rel (%p463) target = $region28
      $region27: #{_lambda_.1} parent=11 // pred_region
        _
      $region28: #{_lambda_.1} parent=11 // pred_fallthru
        _
      // Predicated region
      $region29: #{_lambda_.1} parent=11 // pred_check
        %p466 = pneg %p156
      $region30: #{_lambda_.1} parent=11 // pred_check_branch
        %468 = sbr.rel (%p466) target = $region32
      $region31: #{_lambda_.1} parent=11 // pred_region
        _
      $region32: #{_lambda_.1} parent=11 // pred_fallthru
        _
      // Predicated region
      $region33: #{_lambda_.1} parent=11 // pred_check
        %p469 = pneg %p177
      $region34: #{_lambda_.1} parent=11 // pred_check_branch
        %471 = sbr.rel (%p469) target = $region36
      $region35: #{_lambda_.1} parent=11 // pred_region
        _
      $region36: #{_lambda_.1} parent=11 // pred_fallthru
        _
      // Predicated region
      $region37: #{_lambda_.1} parent=11 // pred_check
        %p472 = pneg %p198
      $region38: #{_lambda_.1} parent=11 // pred_check_branch
        %474 = sbr.rel (%p472) target = $region40
      $region39: #{_lambda_.1} parent=11 // pred_region
        _
      $region40: #{_lambda_.1} parent=11 // pred_fallthru
        _
      // Predicated region
      $region41: #{_lambda_.1} parent=11 // pred_check
        %p475 = pneg %p219
      $region42: #{_lambda_.1} parent=11 // pred_check_branch
        %477 = sbr.rel (%p475) target = $region44
      $region43: #{_lambda_.1} parent=11 // pred_region
        _
      $region44: #{_lambda_.1} parent=11 // pred_fallthru
        _
      // Predicated region
      $region45: #{_lambda_.1} parent=11 // pred_check
        %p478 = pneg %p240
      $region46: #{_lambda_.1} parent=11 // pred_check_branch
        %480 = sbr.rel (%p478) target = $region48
      $region47: #{_lambda_.1} parent=11 // pred_region
        _
      $region48: #{_lambda_.1} parent=11 // pred_fallthru
        _
      // Predicated region
      $region49: #{_lambda_.1} parent=11 // pred_check
        %p481 = pneg %p261
      $region50: #{_lambda_.1} parent=11 // pred_check_branch
        %483 = sbr.rel (%p481) target = $region52
      $region51: #{_lambda_.1} parent=11 // pred_region
        _
      $region52: #{_lambda_.1} parent=11 // pred_fallthru
        _
      // Predicated region
      $region53: #{_lambda_.1} parent=11 // pred_check
        %p484 = pneg %p282
      $region54: #{_lambda_.1} parent=11 // pred_check_branch
        %486 = sbr.rel (%p484) target = $region56
      $region55: #{_lambda_.1} parent=11 // pred_region
        _
      $region56: #{_lambda_.1} parent=11 // pred_fallthru
        _
      // Predicated region
      $region57: #{_lambda_.1} parent=11 // pred_check
        %p487 = pneg %p303
      $region58: #{_lambda_.1} parent=11 // pred_check_branch
        %489 = sbr.rel (%p487) target = $region60
      $region59: #{_lambda_.1} parent=11 // pred_region
        _
      $region60: #{_lambda_.1} parent=11 // pred_fallthru
        _
      // Predicated region
      $region61: #{_lambda_.1} parent=11 // pred_check
        %p490 = pneg %p324
      $region62: #{_lambda_.1} parent=11 // pred_check_branch
        %492 = sbr.rel (%p490) target = $region64
      $region63: #{_lambda_.1} parent=11 // pred_region
        _
      $region64: #{_lambda_.1} parent=11 // pred_fallthru
        _
      // Predicated region
      $region65: #{_lambda_.1} parent=11 // pred_check
        %p493 = pneg %p345
      $region66: #{_lambda_.1} parent=11 // pred_check_branch
        %495 = sbr.rel (%p493) target = $region68
      $region67: #{_lambda_.1} parent=11 // pred_region
        _
      $region68: #{_lambda_.1} parent=11 // pred_fallthru
        _
      // Predicated region
      $region69: #{_lambda_.1} parent=11 // pred_check
        %p496 = pneg %p366
      $region70: #{_lambda_.1} parent=11 // pred_check_branch
        %498 = sbr.rel (%p496) target = $region72
      $region71: #{_lambda_.1} parent=11 // pred_region
        _
      $region72: #{_lambda_.1} parent=11 // pred_fallthru
        _
      // Predicated region
      $region73: #{_lambda_.1} parent=11 // pred_check
        %p499 = pneg %p387
      $region74: #{_lambda_.1} parent=11 // pred_check_branch
        %501 = sbr.rel (%p499) target = $region76
      $region75: #{_lambda_.1} parent=11 // pred_region
        _
      $region76: #{_lambda_.1} parent=11 // pred_fallthru
        _
    $region12: #{_lambda_.1} parent=5 // pred_fallthru
      _
    %p502 = scmp.lt.s32.totalorder %s25, 2
    // Predicated region
    $region77: #{_lambda_.1} parent=5 // pred_check
      %p503 = pneg %p502
    $region78: #{_lambda_.1} parent=5 // pred_check_branch
      %505 = sbr.rel (%p503) target = $region80
    $region79: #{_lambda_.1} parent=5 // pred_region
      // Predicated region
      $region81: #{_lambda_.1} parent=79 // pred_check
        %p506 = pneg %p45
      $region82: #{_lambda_.1} parent=79 // pred_check_branch
        %508 = sbr.rel (%p506) target = $region84
      $region83: #{_lambda_.1} parent=79 // pred_region
        %p509 = scmp.lt.s32.totalorder %s25, 1
        %s510 = scalar_select %p509, %s25, 1
        %s511 = smul.addr %s510, 32
        %s512 = smul.addr %s511, 8
        %s513 = scalar_lea.vmem %s0, %s512
      $region84: #{_lambda_.1} parent=79 // pred_fallthru
        _
    $region80: #{_lambda_.1} parent=5 // pred_fallthru
      _
    %p514 = scmp.le.s32.totalorder 1, %s25
    %p515 = scmp.lt.s32.totalorder %s25, 3
    %p516 = pnand %p514, %p515
    %p517 = pneg %p516
    // Predicated region
    $region85: #{_lambda_.1} parent=5 // pred_check
      _
    $region86: #{_lambda_.1} parent=5 // pred_check_branch
      %519 = sbr.rel (%p516) target = $region88
    $region87: #{_lambda_.1} parent=5 // pred_region
      %s520 = ssub.s32 %s25, 1
      %p521 = scmp.lt.s32.totalorder %s30, 1
      %s522 = scalar_select %p521, %s30, 1
      %s523 = smul.addr %s522, 32
      %s524 = smul.addr %s523, 8
      %s525 = scalar_lea.vmem %s0, %s524
      %p526 = pneg %p51
      %p527 = pneg %p48
      %p528 = pneg %p72
      %p529 = pneg %p69
      %p530 = pneg %p93
      %p531 = pneg %p90
      %p532 = pneg %p114
      %p533 = pneg %p111
      %p534 = pneg %p135
      %p535 = pneg %p132
      %p536 = pneg %p156
      %p537 = pneg %p153
      %p538 = pneg %p177
      %p539 = pneg %p174
      %p540 = pneg %p198
      %p541 = pneg %p195
      %p542 = pneg %p219
      %p543 = pneg %p216
      %p544 = pneg %p240
      %p545 = pneg %p237
      %p546 = pneg %p261
      %p547 = pneg %p258
      %p548 = pneg %p282
      %p549 = pneg %p279
      %p550 = pneg %p303
      %p551 = pneg %p300
      %p552 = pneg %p324
      %p553 = pneg %p321
      %p554 = pneg %p345
      %p555 = pneg %p342
      %p556 = pneg %p366
      %p557 = pneg %p363
      %p558 = pneg %p387
      %p559 = pneg %p384
      %p560 = pneg %p413
      %p561 = pneg %p410
      %p562 = scmp.lt.s32.totalorder %s30, 1
      %s563 = scalar_select %p562, %s30, 1
      %s564 = smul.addr %s563, 2
      %s565 = smul.addr %s564, 2
      %s566 = scalar_lea.vmem %s17, %s565
      %p567 = pneg %p439
      %p568 = pneg %p436
      %p569 = scmp.lt.s32.totalorder %s30, 1
      %s570 = scalar_select %p569, %s30, 1
      %s571 = smul.addr %s570, 2
      %s572 = smul.addr %s571, 2
      %s573 = scalar_lea.vmem %s18, %s572
      %p574 = scmp.lt.s32.totalorder %s30, 1
      %s575 = scalar_select %p574, %s30, 1
      %s576 = smul.addr %s575, 32
      %s577 = smul.addr %s576, 8
      %s578 = scalar_lea.vmem %s0, %s577
      %p579 = scmp.lt.s32.totalorder %s30, 1
      %s580 = scalar_select %p579, %s30, 1
      %s581 = smul.addr %s580, 2
      %s582 = smul.addr %s581, 2
      %s583 = scalar_lea.vmem %s17, %s582
      %p584 = scmp.lt.s32.totalorder %s30, 1
      %s585 = scalar_select %p584, %s30, 1
      %s586 = smul.addr %s585, 2
      %s587 = smul.addr %s586, 2
      %s588 = scalar_lea.vmem %s18, %s587
      %v590 = vld [vmem:[%s578] sm:$0xff]
      %v591 = vld [vmem:[%s578 + $0x8] sm:$0xff]
      %v592 = vld [vmem:[%s578 + $0x10] sm:$0xff]
      %v593 = vld [vmem:[%s578 + $0x18] sm:$0xff]
      %v594 = vld [vmem:[%s578 + $0x20] sm:$0xff]
      %v595 = vld [vmem:[%s578 + $0x28] sm:$0xff]
      %v596 = vld [vmem:[%s578 + $0x30] sm:$0xff]
      %v597 = vld [vmem:[%s578 + $0x38] sm:$0xff]
      %v598 = vld [vmem:[%s578 + $0x40] sm:$0xff]
      %v599 = vld [vmem:[%s578 + $0x48] sm:$0xff]
      %v600 = vld [vmem:[%s578 + $0x50] sm:$0xff]
      %v601 = vld [vmem:[%s578 + $0x58] sm:$0xff]
      %v602 = vld [vmem:[%s578 + $0x60] sm:$0xff]
      %v603 = vld [vmem:[%s578 + $0x68] sm:$0xff]
      %v604 = vld [vmem:[%s578 + $0x70] sm:$0xff]
      %v605 = vld [vmem:[%s578 + $0x78] sm:$0xff]
      %v606 = vld [vmem:[%s578 + $0x80] sm:$0xff]
      %v607 = vld [vmem:[%s578 + $0x88] sm:$0xff]
      %v608 = vld [vmem:[%s578 + $0x90] sm:$0xff]
      %v609 = vld [vmem:[%s578 + $0x98] sm:$0xff]
      %v610 = vld [vmem:[%s578 + $0xa0] sm:$0xff]
      %v611 = vld [vmem:[%s578 + $0xa8] sm:$0xff]
      %v612 = vld [vmem:[%s578 + $0xb0] sm:$0xff]
      %v613 = vld [vmem:[%s578 + $0xb8] sm:$0xff]
      %v614 = vld [vmem:[%s578 + $0xc0] sm:$0xff]
      %v615 = vld [vmem:[%s578 + $0xc8] sm:$0xff]
      %v616 = vld [vmem:[%s578 + $0xd0] sm:$0xff]
      %v617 = vld [vmem:[%s578 + $0xd8] sm:$0xff]
      %v618 = vld [vmem:[%s578 + $0xe0] sm:$0xff]
      %v619 = vld [vmem:[%s578 + $0xe8] sm:$0xff]
      %v620 = vld [vmem:[%s578 + $0xf0] sm:$0xff]
      %v621 = vld [vmem:[%s578 + $0xf8] sm:$0xff]
      %vm622 = vcmask 23552
      %623 = vst.msk [vmem:[#allocation2] sm:$0xff] %vm622, 0.0
      %624 = vst.msk [vmem:[#allocation2 + $0x8] sm:$0xff] %vm622, 0.0
      %vm625 = vcmask 17408
      %626 = vst.msk [vmem:[#allocation2 + $0x10] sm:$0x3] %vm625, 0.0
      %627 = vst.msk [vmem:[#allocation2 + $0x18] sm:$0xff] %vm622, 0.0
      %628 = vst.msk [vmem:[#allocation2 + $0x20] sm:$0xff] %vm622, 0.0
      %629 = vst.msk [vmem:[#allocation2 + $0x28] sm:$0x3] %vm625, 0.0
      %630 = vst.msk [vmem:[#allocation2 + $0x30] sm:$0xff] %vm622, 0.0
      %631 = vst.msk [vmem:[#allocation2 + $0x38] sm:$0xff] %vm622, 0.0
      %632 = vst.msk [vmem:[#allocation2 + $0x40] sm:$0x3] %vm625, 0.0
      %633 = vst.msk [vmem:[#allocation2 + $0x48] sm:$0xff] %vm622, 0.0
      %634 = vst.msk [vmem:[#allocation2 + $0x50] sm:$0xff] %vm622, 0.0
      %635 = vst.msk [vmem:[#allocation2 + $0x58] sm:$0x3] %vm625, 0.0
      %636 = vst.msk [vmem:[#allocation2 + $0x60] sm:$0xff] %vm622, 0.0
      %637 = vst.msk [vmem:[#allocation2 + $0x68] sm:$0xff] %vm622, 0.0
      %638 = vst.msk [vmem:[#allocation2 + $0x70] sm:$0x3] %vm625, 0.0
      %639 = vst.msk [vmem:[#allocation2 + $0x78] sm:$0xff] %vm622, 0.0
      %640 = vst.msk [vmem:[#allocation2 + $0x80] sm:$0xff] %vm622, 0.0
      %641 = vst.msk [vmem:[#allocation2 + $0x88] sm:$0x3] %vm625, 0.0
      %642 = vst.msk [vmem:[#allocation2 + $0x90] sm:$0xff] %vm622, 0.0
      %643 = vst.msk [vmem:[#allocation2 + $0x98] sm:$0xff] %vm622, 0.0
      %644 = vst.msk [vmem:[#allocation2 + $0xa0] sm:$0x3] %vm625, 0.0
      %645 = vst.msk [vmem:[#allocation2 + $0xa8] sm:$0xff] %vm622, 0.0
      %646 = vst.msk [vmem:[#allocation2 + $0xb0] sm:$0xff] %vm622, 0.0
      %647 = vst.msk [vmem:[#allocation2 + $0xb8] sm:$0x3] %vm625, 0.0
      %648 = vst.msk [vmem:[#allocation2 + $0xc0] sm:$0xff] %vm622, 0.0
      %649 = vst.msk [vmem:[#allocation2 + $0xc8] sm:$0xff] %vm622, 0.0
      %650 = vst.msk [vmem:[#allocation2 + $0xd0] sm:$0x3] %vm625, 0.0
      %651 = vst.msk [vmem:[#allocation2 + $0xd8] sm:$0xff] %vm622, 0.0
      %652 = vst.msk [vmem:[#allocation2 + $0xe0] sm:$0xff] %vm622, 0.0
      %653 = vst.msk [vmem:[#allocation2 + $0xe8] sm:$0x3] %vm625, 0.0
      %654 = vst.msk [vmem:[#allocation2 + $0xf0] sm:$0xff] %vm622, 0.0
      %655 = vst.msk [vmem:[#allocation2 + $0xf8] sm:$0xff] %vm622, 0.0
      %656 = vst.msk [vmem:[#allocation2 + $0x100] sm:$0x3] %vm625, 0.0
      %657 = vst.msk [vmem:[#allocation2 + $0x108] sm:$0xff] %vm622, 0.0
      %658 = vst.msk [vmem:[#allocation2 + $0x110] sm:$0xff] %vm622, 0.0
      %659 = vst.msk [vmem:[#allocation2 + $0x118] sm:$0x3] %vm625, 0.0
      %660 = vst.msk [vmem:[#allocation2 + $0x120] sm:$0xff] %vm622, 0.0
      %661 = vst.msk [vmem:[#allocation2 + $0x128] sm:$0xff] %vm622, 0.0
      %662 = vst.msk [vmem:[#allocation2 + $0x130] sm:$0x3] %vm625, 0.0
      %663 = vst.msk [vmem:[#allocation2 + $0x138] sm:$0xff] %vm622, 0.0
      %664 = vst.msk [vmem:[#allocation2 + $0x140] sm:$0xff] %vm622, 0.0
      %665 = vst.msk [vmem:[#allocation2 + $0x148] sm:$0x3] %vm625, 0.0
      %666 = vst.msk [vmem:[#allocation2 + $0x150] sm:$0xff] %vm622, 0.0
      %667 = vst.msk [vmem:[#allocation2 + $0x158] sm:$0xff] %vm622, 0.0
      %668 = vst.msk [vmem:[#allocation2 + $0x160] sm:$0x3] %vm625, 0.0
      %669 = vst.msk [vmem:[#allocation2 + $0x168] sm:$0xff] %vm622, 0.0
      %670 = vst.msk [vmem:[#allocation2 + $0x170] sm:$0xff] %vm622, 0.0
      %671 = vst.msk [vmem:[#allocation2 + $0x178] sm:$0x3] %vm625, 0.0
      %672 = vst.msk [vmem:[#allocation2 + $0x180] sm:$0xff] %vm622, 0.0
      %673 = vst.msk [vmem:[#allocation2 + $0x188] sm:$0xff] %vm622, 0.0
      %674 = vst.msk [vmem:[#allocation2 + $0x190] sm:$0x3] %vm625, 0.0
      %675 = vst.msk [vmem:[#allocation2 + $0x198] sm:$0xff] %vm622, 0.0
      %676 = vst.msk [vmem:[#allocation2 + $0x1a0] sm:$0xff] %vm622, 0.0
      %677 = vst.msk [vmem:[#allocation2 + $0x1a8] sm:$0x3] %vm625, 0.0
      %s678 = scalar_lea.vmem [#allocation2], 24
      %679 = vst.msk [vmem:[%s678 + $0x1] sm:$0xff] %vm622, %v590
      %680 = vst.msk [vmem:[%s678 + $0x9] sm:$0xff] %vm622, %v591
      %681 = vst.msk [vmem:[%s678 + $0x19] sm:$0xff] %vm622, %v592
      %682 = vst.msk [vmem:[%s678 + $0x21] sm:$0xff] %vm622, %v593
      %683 = vst.msk [vmem:[%s678 + $0x31] sm:$0xff] %vm622, %v594
      %684 = vst.msk [vmem:[%s678 + $0x39] sm:$0xff] %vm622, %v595
      %685 = vst.msk [vmem:[%s678 + $0x49] sm:$0xff] %vm622, %v596
      %686 = vst.msk [vmem:[%s678 + $0x51] sm:$0xff] %vm622, %v597
      %687 = vst.msk [vmem:[%s678 + $0x61] sm:$0xff] %vm622, %v598
      %688 = vst.msk [vmem:[%s678 + $0x69] sm:$0xff] %vm622, %v599
      %689 = vst.msk [vmem:[%s678 + $0x79] sm:$0xff] %vm622, %v600
      %690 = vst.msk [vmem:[%s678 + $0x81] sm:$0xff] %vm622, %v601
      %691 = vst.msk [vmem:[%s678 + $0x91] sm:$0xff] %vm622, %v602
      %692 = vst.msk [vmem:[%s678 + $0x99] sm:$0xff] %vm622, %v603
      %693 = vst.msk [vmem:[%s678 + $0xa9] sm:$0xff] %vm622, %v604
      %694 = vst.msk [vmem:[%s678 + $0xb1] sm:$0xff] %vm622, %v605
      %695 = vst.msk [vmem:[%s678 + $0xc1] sm:$0xff] %vm622, %v606
      %696 = vst.msk [vmem:[%s678 + $0xc9] sm:$0xff] %vm622, %v607
      %697 = vst.msk [vmem:[%s678 + $0xd9] sm:$0xff] %vm622, %v608
      %698 = vst.msk [vmem:[%s678 + $0xe1] sm:$0xff] %vm622, %v609
      %699 = vst.msk [vmem:[%s678 + $0xf1] sm:$0xff] %vm622, %v610
      %700 = vst.msk [vmem:[%s678 + $0xf9] sm:$0xff] %vm622, %v611
      %701 = vst.msk [vmem:[%s678 + $0x109] sm:$0xff] %vm622, %v612
      %702 = vst.msk [vmem:[%s678 + $0x111] sm:$0xff] %vm622, %v613
      %703 = vst.msk [vmem:[%s678 + $0x121] sm:$0xff] %vm622, %v614
      %704 = vst.msk [vmem:[%s678 + $0x129] sm:$0xff] %vm622, %v615
      %705 = vst.msk [vmem:[%s678 + $0x139] sm:$0xff] %vm622, %v616
      %706 = vst.msk [vmem:[%s678 + $0x141] sm:$0xff] %vm622, %v617
      %707 = vst.msk [vmem:[%s678 + $0x151] sm:$0xff] %vm622, %v618
      %708 = vst.msk [vmem:[%s678 + $0x159] sm:$0xff] %vm622, %v619
      %709 = vst.msk [vmem:[%s678 + $0x169] sm:$0xff] %vm622, %v620
      %710 = vst.msk [vmem:[%s678 + $0x171] sm:$0xff] %vm622, %v621
      %v711 = vld [vmem:[#allocation2] sm:$0xff]
      %v712 = vld [vmem:[#allocation2 + $0x8] sm:$0xff]
      %v713 = vld [vmem:[#allocation2 + $0x18] sm:$0xff]
      %v714 = vld [vmem:[#allocation2 + $0x20] sm:$0xff]
      %v715 = vld [vmem:[#allocation2 + $0x30] sm:$0xff]
      %v716 = vld [vmem:[#allocation2 + $0x38] sm:$0xff]
      %v717 = vld [vmem:[#allocation2 + $0x48] sm:$0xff]
      %v718 = vld [vmem:[#allocation2 + $0x50] sm:$0xff]
      %v719 = vld [vmem:[#allocation2 + $0x60] sm:$0xff]
      %v720 = vld [vmem:[#allocation2 + $0x68] sm:$0xff]
      %v721 = vld [vmem:[#allocation2 + $0x78] sm:$0xff]
      %v722 = vld [vmem:[#allocation2 + $0x80] sm:$0xff]
      %v723 = vld [vmem:[#allocation2 + $0x90] sm:$0xff]
      %v724 = vld [vmem:[#allocation2 + $0x98] sm:$0xff]
      %v725 = vld [vmem:[#allocation2 + $0xa8] sm:$0xff]
      %v726 = vld [vmem:[#allocation2 + $0xb0] sm:$0xff]
      %v727 = vld [vmem:[#allocation2 + $0xc0] sm:$0xff]
      %v728 = vld [vmem:[#allocation2 + $0xc8] sm:$0xff]
      %v729 = vld [vmem:[#allocation2 + $0xd8] sm:$0xff]
      %v730 = vld [vmem:[#allocation2 + $0xe0] sm:$0xff]
      %v731 = vld [vmem:[#allocation2 + $0xf0] sm:$0xff]
      %v732 = vld [vmem:[#allocation2 + $0xf8] sm:$0xff]
      %v733 = vld [vmem:[#allocation2 + $0x108] sm:$0xff]
      %v734 = vld [vmem:[#allocation2 + $0x110] sm:$0xff]
      %v735 = vld [vmem:[#allocation2 + $0x120] sm:$0xff]
      %v736 = vld [vmem:[#allocation2 + $0x128] sm:$0xff]
      %v737 = vld [vmem:[#allocation2 + $0x138] sm:$0xff]
      %v738 = vld [vmem:[#allocation2 + $0x140] sm:$0xff]
      %v739 = vld [vmem:[#allocation2 + $0x150] sm:$0xff]
      %v740 = vld [vmem:[#allocation2 + $0x158] sm:$0xff]
      %v741 = vld [vmem:[#allocation2 + $0x168] sm:$0xff]
      %v742 = vld [vmem:[#allocation2 + $0x170] sm:$0xff]
      %v743 = vpack.c.bf16 %v712, %v711
      %v744 = vpack.c.bf16 %v714, %v713
      %v745 = vpack.c.bf16 %v716, %v715
      %v746 = vpack.c.bf16 %v718, %v717
      %v747 = vpack.c.bf16 %v720, %v719
      %v748 = vpack.c.bf16 %v722, %v721
      %v749 = vpack.c.bf16 %v724, %v723
      %v750 = vpack.c.bf16 %v726, %v725
      %v751 = vpack.c.bf16 %v728, %v727
      %v752 = vpack.c.bf16 %v730, %v729
      %v753 = vpack.c.bf16 %v732, %v731
      %v754 = vpack.c.bf16 %v734, %v733
      %v755 = vpack.c.bf16 %v736, %v735
      %v756 = vpack.c.bf16 %v738, %v737
      %v757 = vpack.c.bf16 %v740, %v739
      %v758 = vpack.c.bf16 %v742, %v741
      %v759 = vld [vmem:[%s1] sm:$0x3]
      %v760 = vld [vmem:[#allocation2 + $0x1] sm:$0xff]
      %v761 = vld [vmem:[#allocation2 + $0x9] sm:$0xff]
      %v762 = vld [vmem:[#allocation2 + $0x19] sm:$0xff]
      %v763 = vld [vmem:[#allocation2 + $0x21] sm:$0xff]
      %v764 = vld [vmem:[#allocation2 + $0x31] sm:$0xff]
      %v765 = vld [vmem:[#allocation2 + $0x39] sm:$0xff]
      %v766 = vld [vmem:[#allocation2 + $0x49] sm:$0xff]
      %v767 = vld [vmem:[#allocation2 + $0x51] sm:$0xff]
      %v768 = vld [vmem:[#allocation2 + $0x61] sm:$0xff]
      %v769 = vld [vmem:[#allocation2 + $0x69] sm:$0xff]
      %v770 = vld [vmem:[#allocation2 + $0x79] sm:$0xff]
      %v771 = vld [vmem:[#allocation2 + $0x81] sm:$0xff]
      %v772 = vld [vmem:[#allocation2 + $0x91] sm:$0xff]
      %v773 = vld [vmem:[#allocation2 + $0x99] sm:$0xff]
      %v774 = vld [vmem:[#allocation2 + $0xa9] sm:$0xff]
      %v775 = vld [vmem:[#allocation2 + $0xb1] sm:$0xff]
      %v776 = vld [vmem:[#allocation2 + $0xc1] sm:$0xff]
      %v777 = vld [vmem:[#allocation2 + $0xc9] sm:$0xff]
      %v778 = vld [vmem:[#allocation2 + $0xd9] sm:$0xff]
      %v779 = vld [vmem:[#allocation2 + $0xe1] sm:$0xff]
      %v780 = vld [vmem:[#allocation2 + $0xf1] sm:$0xff]
      %v781 = vld [vmem:[#allocation2 + $0xf9] sm:$0xff]
      %v782 = vld [vmem:[#allocation2 + $0x109] sm:$0xff]
      %v783 = vld [vmem:[#allocation2 + $0x111] sm:$0xff]
      %v784 = vld [vmem:[#allocation2 + $0x121] sm:$0xff]
      %v785 = vld [vmem:[#allocation2 + $0x129] sm:$0xff]
      %v786 = vld [vmem:[#allocation2 + $0x139] sm:$0xff]
      %v787 = vld [vmem:[#allocation2 + $0x141] sm:$0xff]
      %v788 = vld [vmem:[#allocation2 + $0x151] sm:$0xff]
      %v789 = vld [vmem:[#allocation2 + $0x159] sm:$0xff]
      %v790 = vld [vmem:[#allocation2 + $0x169] sm:$0xff]
      %v791 = vld [vmem:[#allocation2 + $0x171] sm:$0xff]
      %v792 = vpack.c.bf16 %v761, %v760
      %v793 = vpack.c.bf16 %v763, %v762
      %v794 = vpack.c.bf16 %v765, %v764
      %v795 = vpack.c.bf16 %v767, %v766
      %v796 = vpack.c.bf16 %v769, %v768
      %v797 = vpack.c.bf16 %v771, %v770
      %v798 = vpack.c.bf16 %v773, %v772
      %v799 = vpack.c.bf16 %v775, %v774
      %v800 = vpack.c.bf16 %v777, %v776
      %v801 = vpack.c.bf16 %v779, %v778
      %v802 = vpack.c.bf16 %v781, %v780
      %v803 = vpack.c.bf16 %v783, %v782
      %v804 = vpack.c.bf16 %v785, %v784
      %v805 = vpack.c.bf16 %v787, %v786
      %v806 = vpack.c.bf16 %v789, %v788
      %v807 = vpack.c.bf16 %v791, %v790
      %s808 = scalar_lea.vmem %s1, 2
      %v809 = vld [vmem:[%s808] sm:$0x3]
      %v811 = vsel %vm622, %v792, 0
      %v814 = vsel %vm622, %v793, 0
      %v817 = vsel %vm622, %v794, 0
      %v820 = vsel %vm622, %v795, 0
      %v823 = vsel %vm622, %v796, 0
      %v826 = vsel %vm622, %v797, 0
      %v829 = vsel %vm622, %v798, 0
      %v832 = vsel %vm622, %v799, 0
      %v835 = vsel %vm622, %v800, 0
      %v838 = vsel %vm622, %v801, 0
      %v841 = vsel %vm622, %v802, 0
      %v844 = vsel %vm622, %v803, 0
      %v847 = vsel %vm622, %v804, 0
      %v850 = vsel %vm622, %v805, 0
      %v853 = vsel %vm622, %v806, 0
      %v856 = vsel %vm622, %v807, 0
      %vm858 = vcmask 1040384
      %vm859 = vcmask 1041408
      %v860 = vsel %vm858, 4294967295, 65535
      %v861 = vsel %vm859, %v860, 0
      %v863 = vand.u32 %v809, %v861
      %865 = vmatprep.subr.bf16.mxu0 0
      %866 = vmatpush1.bf16.msra.mxu0 %v863
      %867 = vmatprep.subr.bf16.mxu0 0
      %868 = vmatpush1.bf16.msra.mxu0 0
      %869 = vmatprep.subr.bf16.mxu0 0
      %870 = vmatpush1.bf16.msra.mxu0 0
      %871 = vmatprep.subr.bf16.mxu0 0
      %872 = vmatpush1.bf16.msra.mxu0 0
      %873 = vmatprep.subr.bf16.mxu0 0
      %874 = vmatpush1.bf16.msra.mxu0 0
      %875 = vmatprep.subr.bf16.mxu0 0
      %876 = vmatpush1.bf16.msra.mxu0 0
      %877 = vmatprep.subr.bf16.mxu0 0
      %878 = vmatpush1.bf16.msra.mxu0 0
      %879 = vmatprep.subr.bf16.mxu0 0
      %880 = vmatpush1.bf16.msra.mxu0 0
      %881 = vmatprep.subr.bf16.mxu0 0
      %882 = vmatpush1.bf16.msra.mxu0 0
      %883 = vmatprep.subr.bf16.mxu0 0
      %884 = vmatpush1.bf16.msra.mxu0 0
      %885 = vmatprep.subr.bf16.mxu0 0
      %886 = vmatpush1.bf16.msra.mxu0 0
      %887 = vmatprep.subr.bf16.mxu0 0
      %888 = vmatpush1.bf16.msra.mxu0 0
      %889 = vmatprep.subr.bf16.mxu0 0
      %890 = vmatpush1.bf16.msra.mxu0 0
      %891 = vmatprep.subr.bf16.mxu0 0
      %892 = vmatpush1.bf16.msra.mxu0 0
      %893 = vmatprep.subr.bf16.mxu0 0
      %894 = vmatpush1.bf16.msra.mxu0 0
      %895 = vmatprep.subr.bf16.mxu0 0
      %896 = vmatpush1.bf16.msra.mxu0 0
      %897 = vmatprep.mubr.bf16.mxu0 0
      %898 = vmatmul.mubr.bf16.gmra.mrb[0].mxu0 %v811
      %v899 = vpop.f32.mrb[0].mxu0
      %v900 = vadd.f32 0.0, %v899
      %v901 = vpop.f32.mrb[0].mxu0
      %v902 = vpop.f32.mrb[0].mxu0
      %v903 = vadd.f32 0.0, %v902
      %v904 = vpop.f32.mrb[0].mxu0
      %905 = vmatprep.mubr.bf16.mxu0 0
      %906 = vmatmul.mubr.bf16.gmra.mrb[0].mxu0 %v814
      %v907 = vpop.f32.mrb[0].mxu0
      %v908 = vadd.f32 0.0, %v907
      %v909 = vpop.f32.mrb[0].mxu0
      %v910 = vpop.f32.mrb[0].mxu0
      %v911 = vadd.f32 0.0, %v910
      %v912 = vpop.f32.mrb[0].mxu0
      %913 = vmatprep.mubr.bf16.mxu0 0
      %914 = vmatmul.mubr.bf16.gmra.mrb[0].mxu0 %v817
      %v915 = vpop.f32.mrb[0].mxu0
      %v916 = vadd.f32 0.0, %v915
      %v917 = vpop.f32.mrb[0].mxu0
      %v918 = vpop.f32.mrb[0].mxu0
      %v919 = vadd.f32 0.0, %v918
      %v920 = vpop.f32.mrb[0].mxu0
      %921 = vmatprep.mubr.bf16.mxu0 0
      %922 = vmatmul.mubr.bf16.gmra.mrb[0].mxu0 %v820
      %v923 = vpop.f32.mrb[0].mxu0
      %v924 = vadd.f32 0.0, %v923
      %v925 = vpop.f32.mrb[0].mxu0
      %v926 = vpop.f32.mrb[0].mxu0
      %v927 = vadd.f32 0.0, %v926
      %v928 = vpop.f32.mrb[0].mxu0
      %929 = vmatprep.mubr.bf16.mxu0 0
      %930 = vmatmul.mubr.bf16.gmra.mrb[0].mxu0 %v823
      %v931 = vpop.f32.mrb[0].mxu0
      %v932 = vadd.f32 0.0, %v931
      %v933 = vpop.f32.mrb[0].mxu0
      %v934 = vpop.f32.mrb[0].mxu0
      %v935 = vadd.f32 0.0, %v934
      %v936 = vpop.f32.mrb[0].mxu0
      %937 = vmatprep.mubr.bf16.mxu0 0
      %938 = vmatmul.mubr.bf16.gmra.mrb[0].mxu0 %v826
      %v939 = vpop.f32.mrb[0].mxu0
      %v940 = vadd.f32 0.0, %v939
      %v941 = vpop.f32.mrb[0].mxu0
      %v942 = vpop.f32.mrb[0].mxu0
      %v943 = vadd.f32 0.0, %v942
      %v944 = vpop.f32.mrb[0].mxu0
      %945 = vmatprep.mubr.bf16.mxu0 0
      %946 = vmatmul.mubr.bf16.gmra.mrb[0].mxu0 %v829
      %v947 = vpop.f32.mrb[0].mxu0
      %v948 = vadd.f32 0.0, %v947
      %v949 = vpop.f32.mrb[0].mxu0
      %v950 = vpop.f32.mrb[0].mxu0
      %v951 = vadd.f32 0.0, %v950
      %v952 = vpop.f32.mrb[0].mxu0
      %953 = vmatprep.mubr.bf16.mxu0 0
      %954 = vmatmul.mubr.bf16.gmra.mrb[0].mxu0 %v832
      %v955 = vpop.f32.mrb[0].mxu0
      %v956 = vadd.f32 0.0, %v955
      %v957 = vpop.f32.mrb[0].mxu0
      %v958 = vpop.f32.mrb[0].mxu0
      %v959 = vadd.f32 0.0, %v958
      %v960 = vpop.f32.mrb[0].mxu0
      %961 = vmatprep.mubr.bf16.mxu0 0
      %962 = vmatmul.mubr.bf16.gmra.mrb[0].mxu0 %v835
      %v963 = vpop.f32.mrb[0].mxu0
      %v964 = vadd.f32 0.0, %v963
      %v965 = vpop.f32.mrb[0].mxu0
      %v966 = vpop.f32.mrb[0].mxu0
      %v967 = vadd.f32 0.0, %v966
      %v968 = vpop.f32.mrb[0].mxu0
      %969 = vmatprep.mubr.bf16.mxu0 0
      %970 = vmatmul.mubr.bf16.gmra.mrb[0].mxu0 %v838
      %v971 = vpop.f32.mrb[0].mxu0
      %v972 = vadd.f32 0.0, %v971
      %v973 = vpop.f32.mrb[0].mxu0
      %v974 = vpop.f32.mrb[0].mxu0
      %v975 = vadd.f32 0.0, %v974
      %v976 = vpop.f32.mrb[0].mxu0
      %977 = vmatprep.mubr.bf16.mxu0 0
      %978 = vmatmul.mubr.bf16.gmra.mrb[0].mxu0 %v841
      %v979 = vpop.f32.mrb[0].mxu0
      %v980 = vadd.f32 0.0, %v979
      %v981 = vpop.f32.mrb[0].mxu0
      %v982 = vpop.f32.mrb[0].mxu0
      %v983 = vadd.f32 0.0, %v982
      %v984 = vpop.f32.mrb[0].mxu0
      %985 = vmatprep.mubr.bf16.mxu0 0
      %986 = vmatmul.mubr.bf16.gmra.mrb[0].mxu0 %v844
      %v987 = vpop.f32.mrb[0].mxu0
      %v988 = vadd.f32 0.0, %v987
      %v989 = vpop.f32.mrb[0].mxu0
      %v990 = vpop.f32.mrb[0].mxu0
      %v991 = vadd.f32 0.0, %v990
      %v992 = vpop.f32.mrb[0].mxu0
      %993 = vmatprep.mubr.bf16.mxu0 0
      %994 = vmatmul.mubr.bf16.gmra.mrb[0].mxu0 %v847
      %v995 = vpop.f32.mrb[0].mxu0
      %v996 = vadd.f32 0.0, %v995
      %v997 = vpop.f32.mrb[0].mxu0
      %v998 = vpop.f32.mrb[0].mxu0
      %v999 = vadd.f32 0.0, %v998
      %v1000 = vpop.f32.mrb[0].mxu0
      %1001 = vmatprep.mubr.bf16.mxu0 0
      %1002 = vmatmul.mubr.bf16.gmra.mrb[0].mxu0 %v850
      %v1003 = vpop.f32.mrb[0].mxu0
      %v1004 = vadd.f32 0.0, %v1003
      %v1005 = vpop.f32.mrb[0].mxu0
      %v1006 = vpop.f32.mrb[0].mxu0
      %v1007 = vadd.f32 0.0, %v1006
      %v1008 = vpop.f32.mrb[0].mxu0
      %1009 = vmatprep.mubr.bf16.mxu0 0
      %1010 = vmatmul.mubr.bf16.gmra.mrb[0].mxu0 %v853
      %v1011 = vpop.f32.mrb[0].mxu0
      %v1012 = vadd.f32 0.0, %v1011
      %v1013 = vpop.f32.mrb[0].mxu0
      %v1014 = vpop.f32.mrb[0].mxu0
      %v1015 = vadd.f32 0.0, %v1014
      %v1016 = vpop.f32.mrb[0].mxu0
      %1017 = vmatprep.mubr.bf16.mxu0 0
      %1018 = vmatmul.mubr.bf16.gmra.mrb[0].mxu0 %v856
      %v1019 = vpop.f32.mrb[0].mxu0
      %v1020 = vadd.f32 0.0, %v1019
      %v1021 = vpop.f32.mrb[0].mxu0
      %v1022 = vpop.f32.mrb[0].mxu0
      %v1023 = vadd.f32 0.0, %v1022
      %v1024 = vpop.f32.mrb[0].mxu0
      %1025 = vdwg.mxu0
      %v1027 = vsel %vm622, %v743, 0
      %v1030 = vsel %vm622, %v744, 0
      %v1033 = vsel %vm622, %v745, 0
      %v1036 = vsel %vm622, %v746, 0
      %v1039 = vsel %vm622, %v747, 0
      %v1042 = vsel %vm622, %v748, 0
      %v1045 = vsel %vm622, %v749, 0
      %v1048 = vsel %vm622, %v750, 0
      %v1051 = vsel %vm622, %v751, 0
      %v1054 = vsel %vm622, %v752, 0
      %v1057 = vsel %vm622, %v753, 0
      %v1060 = vsel %vm622, %v754, 0
      %v1063 = vsel %vm622, %v755, 0
      %v1066 = vsel %vm622, %v756, 0
      %v1069 = vsel %vm622, %v757, 0
      %v1072 = vsel %vm622, %v758, 0
      %v1075 = vand.u32 %v759, %v861
      %1077 = vmatprep.subr.bf16.mxu0 0
      %1078 = vmatpush1.bf16.msra.mxu0 %v1075
      %1079 = vmatprep.subr.bf16.mxu0 0
      %1080 = vmatpush1.bf16.msra.mxu0 0
      %1081 = vmatprep.subr.bf16.mxu0 0
      %1082 = vmatpush1.bf16.msra.mxu0 0
      %1083 = vmatprep.subr.bf16.mxu0 0
      %1084 = vmatpush1.bf16.msra.mxu0 0
      %1085 = vmatprep.subr.bf16.mxu0 0
      %1086 = vmatpush1.bf16.msra.mxu0 0
      %1087 = vmatprep.subr.bf16.mxu0 0
      %1088 = vmatpush1.bf16.msra.mxu0 0
      %1089 = vmatprep.subr.bf16.mxu0 0
      %1090 = vmatpush1.bf16.msra.mxu0 0
      %1091 = vmatprep.subr.bf16.mxu0 0
      %1092 = vmatpush1.bf16.msra.mxu0 0
      %1093 = vmatprep.subr.bf16.mxu0 0
      %1094 = vmatpush1.bf16.msra.mxu0 0
      %1095 = vmatprep.subr.bf16.mxu0 0
      %1096 = vmatpush1.bf16.msra.mxu0 0
      %1097 = vmatprep.subr.bf16.mxu0 0
      %1098 = vmatpush1.bf16.msra.mxu0 0
      %1099 = vmatprep.subr.bf16.mxu0 0
      %1100 = vmatpush1.bf16.msra.mxu0 0
      %1101 = vmatprep.subr.bf16.mxu0 0
      %1102 = vmatpush1.bf16.msra.mxu0 0
      %1103 = vmatprep.subr.bf16.mxu0 0
      %1104 = vmatpush1.bf16.msra.mxu0 0
      %1105 = vmatprep.subr.bf16.mxu0 0
      %1106 = vmatpush1.bf16.msra.mxu0 0
      %1107 = vmatprep.subr.bf16.mxu0 0
      %1108 = vmatpush1.bf16.msra.mxu0 0
      %1109 = vmatprep.mubr.bf16.mxu0 0
      %1110 = vmatmul.mubr.bf16.gmra.mrb[0].mxu0 %v1027
      %v1111 = vpop.f32.mrb[0].mxu0
      %v1112 = vadd.f32 %v900, %v1111
      %v1113 = vpop.f32.mrb[0].mxu0
      %v1114 = vpop.f32.mrb[0].mxu0
      %v1115 = vadd.f32 %v903, %v1114
      %v1116 = vpop.f32.mrb[0].mxu0
      %1117 = vmatprep.mubr.bf16.mxu0 0
      %1118 = vmatmul.mubr.bf16.gmra.mrb[0].mxu0 %v1030
      %v1119 = vpop.f32.mrb[0].mxu0
      %v1120 = vadd.f32 %v908, %v1119
      %v1121 = vpop.f32.mrb[0].mxu0
      %v1122 = vpop.f32.mrb[0].mxu0
      %v1123 = vadd.f32 %v911, %v1122
      %v1124 = vpop.f32.mrb[0].mxu0
      %1125 = vmatprep.mubr.bf16.mxu0 0
      %1126 = vmatmul.mubr.bf16.gmra.mrb[0].mxu0 %v1033
      %v1127 = vpop.f32.mrb[0].mxu0
      %v1128 = vadd.f32 %v916, %v1127
      %v1129 = vpop.f32.mrb[0].mxu0
      %v1130 = vpop.f32.mrb[0].mxu0
      %v1131 = vadd.f32 %v919, %v1130
      %v1132 = vpop.f32.mrb[0].mxu0
      %1133 = vmatprep.mubr.bf16.mxu0 0
      %1134 = vmatmul.mubr.bf16.gmra.mrb[0].mxu0 %v1036
      %v1135 = vpop.f32.mrb[0].mxu0
      %v1136 = vadd.f32 %v924, %v1135
      %v1137 = vpop.f32.mrb[0].mxu0
      %v1138 = vpop.f32.mrb[0].mxu0
      %v1139 = vadd.f32 %v927, %v1138
      %v1140 = vpop.f32.mrb[0].mxu0
      %1141 = vmatprep.mubr.bf16.mxu0 0
      %1142 = vmatmul.mubr.bf16.gmra.mrb[0].mxu0 %v1039
      %v1143 = vpop.f32.mrb[0].mxu0
      %v1144 = vadd.f32 %v932, %v1143
      %v1145 = vpop.f32.mrb[0].mxu0
      %v1146 = vpop.f32.mrb[0].mxu0
      %v1147 = vadd.f32 %v935, %v1146
      %v1148 = vpop.f32.mrb[0].mxu0
      %1149 = vmatprep.mubr.bf16.mxu0 0
      %1150 = vmatmul.mubr.bf16.gmra.mrb[0].mxu0 %v1042
      %v1151 = vpop.f32.mrb[0].mxu0
      %v1152 = vadd.f32 %v940, %v1151
      %v1153 = vpop.f32.mrb[0].mxu0
      %v1154 = vpop.f32.mrb[0].mxu0
      %v1155 = vadd.f32 %v943, %v1154
      %v1156 = vpop.f32.mrb[0].mxu0
      %1157 = vmatprep.mubr.bf16.mxu0 0
      %1158 = vmatmul.mubr.bf16.gmra.mrb[0].mxu0 %v1045
      %v1159 = vpop.f32.mrb[0].mxu0
      %v1160 = vadd.f32 %v948, %v1159
      %v1161 = vpop.f32.mrb[0].mxu0
      %v1162 = vpop.f32.mrb[0].mxu0
      %v1163 = vadd.f32 %v951, %v1162
      %v1164 = vpop.f32.mrb[0].mxu0
      %1165 = vmatprep.mubr.bf16.mxu0 0
      %1166 = vmatmul.mubr.bf16.gmra.mrb[0].mxu0 %v1048
      %v1167 = vpop.f32.mrb[0].mxu0
      %v1168 = vadd.f32 %v956, %v1167
      %v1169 = vpop.f32.mrb[0].mxu0
      %v1170 = vpop.f32.mrb[0].mxu0
      %v1171 = vadd.f32 %v959, %v1170
      %v1172 = vpop.f32.mrb[0].mxu0
      %1173 = vmatprep.mubr.bf16.mxu0 0
      %1174 = vmatmul.mubr.bf16.gmra.mrb[0].mxu0 %v1051
      %v1175 = vpop.f32.mrb[0].mxu0
      %v1176 = vadd.f32 %v964, %v1175
      %v1177 = vpop.f32.mrb[0].mxu0
      %v1178 = vpop.f32.mrb[0].mxu0
      %v1179 = vadd.f32 %v967, %v1178
      %v1180 = vpop.f32.mrb[0].mxu0
      %1181 = vmatprep.mubr.bf16.mxu0 0
      %1182 = vmatmul.mubr.bf16.gmra.mrb[0].mxu0 %v1054
      %v1183 = vpop.f32.mrb[0].mxu0
      %v1184 = vadd.f32 %v972, %v1183
      %v1185 = vpop.f32.mrb[0].mxu0
      %v1186 = vpop.f32.mrb[0].mxu0
      %v1187 = vadd.f32 %v975, %v1186
      %v1188 = vpop.f32.mrb[0].mxu0
      %1189 = vmatprep.mubr.bf16.mxu0 0
      %1190 = vmatmul.mubr.bf16.gmra.mrb[0].mxu0 %v1057
      %v1191 = vpop.f32.mrb[0].mxu0
      %v1192 = vadd.f32 %v980, %v1191
      %v1193 = vpop.f32.mrb[0].mxu0
      %v1194 = vpop.f32.mrb[0].mxu0
      %v1195 = vadd.f32 %v983, %v1194
      %v1196 = vpop.f32.mrb[0].mxu0
      %1197 = vmatprep.mubr.bf16.mxu0 0
      %1198 = vmatmul.mubr.bf16.gmra.mrb[0].mxu0 %v1060
      %v1199 = vpop.f32.mrb[0].mxu0
      %v1200 = vadd.f32 %v988, %v1199
      %v1201 = vpop.f32.mrb[0].mxu0
      %v1202 = vpop.f32.mrb[0].mxu0
      %v1203 = vadd.f32 %v991, %v1202
      %v1204 = vpop.f32.mrb[0].mxu0
      %1205 = vmatprep.mubr.bf16.mxu0 0
      %1206 = vmatmul.mubr.bf16.gmra.mrb[0].mxu0 %v1063
      %v1207 = vpop.f32.mrb[0].mxu0
      %v1208 = vadd.f32 %v996, %v1207
      %v1209 = vpop.f32.mrb[0].mxu0
      %v1210 = vpop.f32.mrb[0].mxu0
      %v1211 = vadd.f32 %v999, %v1210
      %v1212 = vpop.f32.mrb[0].mxu0
      %1213 = vmatprep.mubr.bf16.mxu0 0
      %1214 = vmatmul.mubr.bf16.gmra.mrb[0].mxu0 %v1066
      %v1215 = vpop.f32.mrb[0].mxu0
      %v1216 = vadd.f32 %v1004, %v1215
      %v1217 = vpop.f32.mrb[0].mxu0
      %v1218 = vpop.f32.mrb[0].mxu0
      %v1219 = vadd.f32 %v1007, %v1218
      %v1220 = vpop.f32.mrb[0].mxu0
      %1221 = vmatprep.mubr.bf16.mxu0 0
      %1222 = vmatmul.mubr.bf16.gmra.mrb[0].mxu0 %v1069
      %v1223 = vpop.f32.mrb[0].mxu0
      %v1224 = vadd.f32 %v1012, %v1223
      %v1225 = vpop.f32.mrb[0].mxu0
      %v1226 = vpop.f32.mrb[0].mxu0
      %v1227 = vadd.f32 %v1015, %v1226
      %v1228 = vpop.f32.mrb[0].mxu0
      %1229 = vmatprep.mubr.bf16.mxu0 0
      %1230 = vmatmul.mubr.bf16.gmra.mrb[0].mxu0 %v1072
      %v1231 = vpop.f32.mrb[0].mxu0
      %v1232 = vadd.f32 %v1020, %v1231
      %v1233 = vpop.f32.mrb[0].mxu0
      %v1234 = vpop.f32.mrb[0].mxu0
      %v1235 = vadd.f32 %v1023, %v1234
      %v1236 = vpop.f32.mrb[0].mxu0
      %1237 = vdwg.mxu0
      %v1238 = vld [vmem:[#allocation2 + $0x2] sm:$0xff]
      %v1239 = vld [vmem:[#allocation2 + $0xa] sm:$0xff]
      %v1240 = vld [vmem:[#allocation2 + $0x1a] sm:$0xff]
      %v1241 = vld [vmem:[#allocation2 + $0x22] sm:$0xff]
      %v1242 = vld [vmem:[#allocation2 + $0x32] sm:$0xff]
      %v1243 = vld [vmem:[#allocation2 + $0x3a] sm:$0xff]
      %v1244 = vld [vmem:[#allocation2 + $0x4a] sm:$0xff]
      %v1245 = vld [vmem:[#allocation2 + $0x52] sm:$0xff]
      %v1246 = vld [vmem:[#allocation2 + $0x62] sm:$0xff]
      %v1247 = vld [vmem:[#allocation2 + $0x6a] sm:$0xff]
      %v1248 = vld [vmem:[#allocation2 + $0x7a] sm:$0xff]
      %v1249 = vld [vmem:[#allocation2 + $0x82] sm:$0xff]
      %v1250 = vld [vmem:[#allocation2 + $0x92] sm:$0xff]
      %v1251 = vld [vmem:[#allocation2 + $0x9a] sm:$0xff]
      %v1252 = vld [vmem:[#allocation2 + $0xaa] sm:$0xff]
      %v1253 = vld [vmem:[#allocation2 + $0xb2] sm:$0xff]
      %v1254 = vld [vmem:[#allocation2 + $0xc2] sm:$0xff]
      %v1255 = vld [vmem:[#allocation2 + $0xca] sm:$0xff]
      %v1256 = vld [vmem:[#allocation2 + $0xda] sm:$0xff]
      %v1257 = vld [vmem:[#allocation2 + $0xe2] sm:$0xff]
      %v1258 = vld [vmem:[#allocation2 + $0xf2] sm:$0xff]
      %v1259 = vld [vmem:[#allocation2 + $0xfa] sm:$0xff]
      %v1260 = vld [vmem:[#allocation2 + $0x10a] sm:$0xff]
      %v1261 = vld [vmem:[#allocation2 + $0x112] sm:$0xff]
      %v1262 = vld [vmem:[#allocation2 + $0x122] sm:$0xff]
      %v1263 = vld [vmem:[#allocation2 + $0x12a] sm:$0xff]
      %v1264 = vld [vmem:[#allocation2 + $0x13a] sm:$0xff]
      %v1265 = vld [vmem:[#allocation2 + $0x142] sm:$0xff]
      %v1266 = vld [vmem:[#allocation2 + $0x152] sm:$0xff]
      %v1267 = vld [vmem:[#allocation2 + $0x15a] sm:$0xff]
      %v1268 = vld [vmem:[#allocation2 + $0x16a] sm:$0xff]
      %v1269 = vld [vmem:[#allocation2 + $0x172] sm:$0xff]
      %v1270 = vpack.c.bf16 %v1239, %v1238
      %v1271 = vpack.c.bf16 %v1241, %v1240
      %v1272 = vpack.c.bf16 %v1243, %v1242
      %v1273 = vpack.c.bf16 %v1245, %v1244
      %v1274 = vpack.c.bf16 %v1247, %v1246
      %v1275 = vpack.c.bf16 %v1249, %v1248
      %v1276 = vpack.c.bf16 %v1251, %v1250
      %v1277 = vpack.c.bf16 %v1253, %v1252
      %v1278 = vpack.c.bf16 %v1255, %v1254
      %v1279 = vpack.c.bf16 %v1257, %v1256
      %v1280 = vpack.c.bf16 %v1259, %v1258
      %v1281 = vpack.c.bf16 %v1261, %v1260
      %v1282 = vpack.c.bf16 %v1263, %v1262
      %v1283 = vpack.c.bf16 %v1265, %v1264
      %v1284 = vpack.c.bf16 %v1267, %v1266
      %v1285 = vpack.c.bf16 %v1269, %v1268
      %s1286 = scalar_lea.vmem %s1, 4
      %v1287 = vld [vmem:[%s1286] sm:$0x3]
      %v1289 = vsel %vm622, %v1270, 0
      %v1292 = vsel %vm622, %v1271, 0
      %v1295 = vsel %vm622, %v1272, 0
      %v1298 = vsel %vm622, %v1273, 0
      %v1301 = vsel %vm622, %v1274, 0
      %v1304 = vsel %vm622, %v1275, 0
      %v1307 = vsel %vm622, %v1276, 0
      %v1310 = vsel %vm622, %v1277, 0
      %v1313 = vsel %vm622, %v1278, 0
      %v1316 = vsel %vm622, %v1279, 0
      %v1319 = vsel %vm622, %v1280, 0
      %v1322 = vsel %vm622, %v1281, 0
      %v1325 = vsel %vm622, %v1282, 0
      %v1328 = vsel %vm622, %v1283, 0
      %v1331 = vsel %vm622, %v1284, 0
      %v1334 = vsel %vm622, %v1285, 0
      %v1337 = vand.u32 %v1287, %v861
      %1339 = vmatprep.subr.bf16.mxu0 0
      %1340 = vmatpush1.bf16.msra.mxu0 %v1337
      %1341 = vmatprep.subr.bf16.mxu0 0
      %1342 = vmatpush1.bf16.msra.mxu0 0
      %1343 = vmatprep.subr.bf16.mxu0 0
      %1344 = vmatpush1.bf16.msra.mxu0 0
      %1345 = vmatprep.subr.bf16.mxu0 0
      %1346 = vmatpush1.bf16.msra.mxu0 0
      %1347 = vmatprep.subr.bf16.mxu0 0
      %1348 = vmatpush1.bf16.msra.mxu0 0
      %1349 = vmatprep.subr.bf16.mxu0 0
      %1350 = vmatpush1.bf16.msra.mxu0 0
      %1351 = vmatprep.subr.bf16.mxu0 0
      %1352 = vmatpush1.bf16.msra.mxu0 0
      %1353 = vmatprep.subr.bf16.mxu0 0
      %1354 = vmatpush1.bf16.msra.mxu0 0
      %1355 = vmatprep.subr.bf16.mxu0 0
      %1356 = vmatpush1.bf16.msra.mxu0 0
      %1357 = vmatprep.subr.bf16.mxu0 0
      %1358 = vmatpush1.bf16.msra.mxu0 0
      %1359 = vmatprep.subr.bf16.mxu0 0
      %1360 = vmatpush1.bf16.msra.mxu0 0
      %1361 = vmatprep.subr.bf16.mxu0 0
      %1362 = vmatpush1.bf16.msra.mxu0 0
      %1363 = vmatprep.subr.bf16.mxu0 0
      %1364 = vmatpush1.bf16.msra.mxu0 0
      %1365 = vmatprep.subr.bf16.mxu0 0
      %1366 = vmatpush1.bf16.msra.mxu0 0
      %1367 = vmatprep.subr.bf16.mxu0 0
      %1368 = vmatpush1.bf16.msra.mxu0 0
      %1369 = vmatprep.subr.bf16.mxu0 0
      %1370 = vmatpush1.bf16.msra.mxu0 0
      %1371 = vmatprep.mubr.bf16.mxu0 0
      %1372 = vmatmul.mubr.bf16.gmra.mrb[0].mxu0 %v1289
      %v1373 = vpop.f32.mrb[0].mxu0
      %v1374 = vadd.f32 0.0, %v1373
      %v1375 = vpop.f32.mrb[0].mxu0
      %v1376 = vpop.f32.mrb[0].mxu0
      %v1377 = vadd.f32 0.0, %v1376
      %v1378 = vpop.f32.mrb[0].mxu0
      %1379 = vmatprep.mubr.bf16.mxu0 0
      %1380 = vmatmul.mubr.bf16.gmra.mrb[0].mxu0 %v1292
      %v1381 = vpop.f32.mrb[0].mxu0
      %v1382 = vadd.f32 0.0, %v1381
      %v1383 = vpop.f32.mrb[0].mxu0
      %v1384 = vpop.f32.mrb[0].mxu0
      %v1385 = vadd.f32 0.0, %v1384
      %v1386 = vpop.f32.mrb[0].mxu0
      %1387 = vmatprep.mubr.bf16.mxu0 0
      %1388 = vmatmul.mubr.bf16.gmra.mrb[0].mxu0 %v1295
      %v1389 = vpop.f32.mrb[0].mxu0
      %v1390 = vadd.f32 0.0, %v1389
      %v1391 = vpop.f32.mrb[0].mxu0
      %v1392 = vpop.f32.mrb[0].mxu0
      %v1393 = vadd.f32 0.0, %v1392
      %v1394 = vpop.f32.mrb[0].mxu0
      %1395 = vmatprep.mubr.bf16.mxu0 0
      %1396 = vmatmul.mubr.bf16.gmra.mrb[0].mxu0 %v1298
      %v1397 = vpop.f32.mrb[0].mxu0
      %v1398 = vadd.f32 0.0, %v1397
      %v1399 = vpop.f32.mrb[0].mxu0
      %v1400 = vpop.f32.mrb[0].mxu0
      %v1401 = vadd.f32 0.0, %v1400
      %v1402 = vpop.f32.mrb[0].mxu0
      %1403 = vmatprep.mubr.bf16.mxu0 0
      %1404 = vmatmul.mubr.bf16.gmra.mrb[0].mxu0 %v1301
      %v1405 = vpop.f32.mrb[0].mxu0
      %v1406 = vadd.f32 0.0, %v1405
      %v1407 = vpop.f32.mrb[0].mxu0
      %v1408 = vpop.f32.mrb[0].mxu0
      %v1409 = vadd.f32 0.0, %v1408
      %v1410 = vpop.f32.mrb[0].mxu0
      %1411 = vmatprep.mubr.bf16.mxu0 0
      %1412 = vmatmul.mubr.bf16.gmra.mrb[0].mxu0 %v1304
      %v1413 = vpop.f32.mrb[0].mxu0
      %v1414 = vadd.f32 0.0, %v1413
      %v1415 = vpop.f32.mrb[0].mxu0
      %v1416 = vpop.f32.mrb[0].mxu0
      %v1417 = vadd.f32 0.0, %v1416
      %v1418 = vpop.f32.mrb[0].mxu0
      %1419 = vmatprep.mubr.bf16.mxu0 0
      %1420 = vmatmul.mubr.bf16.gmra.mrb[0].mxu0 %v1307
      %v1421 = vpop.f32.mrb[0].mxu0
      %v1422 = vadd.f32 0.0, %v1421
      %v1423 = vpop.f32.mrb[0].mxu0
      %v1424 = vpop.f32.mrb[0].mxu0
      %v1425 = vadd.f32 0.0, %v1424
      %v1426 = vpop.f32.mrb[0].mxu0
      %1427 = vmatprep.mubr.bf16.mxu0 0
      %1428 = vmatmul.mubr.bf16.gmra.mrb[0].mxu0 %v1310
      %v1429 = vpop.f32.mrb[0].mxu0
      %v1430 = vadd.f32 0.0, %v1429
      %v1431 = vpop.f32.mrb[0].mxu0
      %v1432 = vpop.f32.mrb[0].mxu0
      %v1433 = vadd.f32 0.0, %v1432
      %v1434 = vpop.f32.mrb[0].mxu0
      %1435 = vmatprep.mubr.bf16.mxu0 0
      %1436 = vmatmul.mubr.bf16.gmra.mrb[0].mxu0 %v1313
      %v1437 = vpop.f32.mrb[0].mxu0
      %v1438 = vadd.f32 0.0, %v1437
      %v1439 = vpop.f32.mrb[0].mxu0
      %v1440 = vpop.f32.mrb[0].mxu0
      %v1441 = vadd.f32 0.0, %v1440
      %v1442 = vpop.f32.mrb[0].mxu0
      %1443 = vmatprep.mubr.bf16.mxu0 0
      %1444 = vmatmul.mubr.bf16.gmra.mrb[0].mxu0 %v1316
      %v1445 = vpop.f32.mrb[0].mxu0
      %v1446 = vadd.f32 0.0, %v1445
      %v1447 = vpop.f32.mrb[0].mxu0
      %v1448 = vpop.f32.mrb[0].mxu0
      %v1449 = vadd.f32 0.0, %v1448
      %v1450 = vpop.f32.mrb[0].mxu0
      %1451 = vmatprep.mubr.bf16.mxu0 0
      %1452 = vmatmul.mubr.bf16.gmra.mrb[0].mxu0 %v1319
      %v1453 = vpop.f32.mrb[0].mxu0
      %v1454 = vadd.f32 0.0, %v1453
      %v1455 = vpop.f32.mrb[0].mxu0
      %v1456 = vpop.f32.mrb[0].mxu0
      %v1457 = vadd.f32 0.0, %v1456
      %v1458 = vpop.f32.mrb[0].mxu0
      %1459 = vmatprep.mubr.bf16.mxu0 0
      %1460 = vmatmul.mubr.bf16.gmra.mrb[0].mxu0 %v1322
      %v1461 = vpop.f32.mrb[0].mxu0
      %v1462 = vadd.f32 0.0, %v1461
      %v1463 = vpop.f32.mrb[0].mxu0
      %v1464 = vpop.f32.mrb[0].mxu0
      %v1465 = vadd.f32 0.0, %v1464
      %v1466 = vpop.f32.mrb[0].mxu0
      %1467 = vmatprep.mubr.bf16.mxu0 0
      %1468 = vmatmul.mubr.bf16.gmra.mrb[0].mxu0 %v1325
      %v1469 = vpop.f32.mrb[0].mxu0
      %v1470 = vadd.f32 0.0, %v1469
      %v1471 = vpop.f32.mrb[0].mxu0
      %v1472 = vpop.f32.mrb[0].mxu0
      %v1473 = vadd.f32 0.0, %v1472
      %v1474 = vpop.f32.mrb[0].mxu0
      %1475 = vmatprep.mubr.bf16.mxu0 0
      %1476 = vmatmul.mubr.bf16.gmra.mrb[0].mxu0 %v1328
      %v1477 = vpop.f32.mrb[0].mxu0
      %v1478 = vadd.f32 0.0, %v1477
      %v1479 = vpop.f32.mrb[0].mxu0
      %v1480 = vpop.f32.mrb[0].mxu0
      %v1481 = vadd.f32 0.0, %v1480
      %v1482 = vpop.f32.mrb[0].mxu0
      %1483 = vmatprep.mubr.bf16.mxu0 0
      %1484 = vmatmul.mubr.bf16.gmra.mrb[0].mxu0 %v1331
      %v1485 = vpop.f32.mrb[0].mxu0
      %v1486 = vadd.f32 0.0, %v1485
      %v1487 = vpop.f32.mrb[0].mxu0
      %v1488 = vpop.f32.mrb[0].mxu0
      %v1489 = vadd.f32 0.0, %v1488
      %v1490 = vpop.f32.mrb[0].mxu0
      %1491 = vmatprep.mubr.bf16.mxu0 0
      %1492 = vmatmul.mubr.bf16.gmra.mrb[0].mxu0 %v1334
      %v1493 = vpop.f32.mrb[0].mxu0
      %v1494 = vadd.f32 0.0, %v1493
      %v1495 = vpop.f32.mrb[0].mxu0
      %v1496 = vpop.f32.mrb[0].mxu0
      %v1497 = vadd.f32 0.0, %v1496
      %v1498 = vpop.f32.mrb[0].mxu0
      %1499 = vdwg.mxu0
      %v1500 = vadd.f32 %v1112, %v1374
      %v1501 = vadd.f32 %v1115, %v1377
      %v1502 = vadd.f32 %v1120, %v1382
      %v1503 = vadd.f32 %v1123, %v1385
      %v1504 = vadd.f32 %v1128, %v1390
      %v1505 = vadd.f32 %v1131, %v1393
      %v1506 = vadd.f32 %v1136, %v1398
      %v1507 = vadd.f32 %v1139, %v1401
      %v1508 = vadd.f32 %v1144, %v1406
      %v1509 = vadd.f32 %v1147, %v1409
      %v1510 = vadd.f32 %v1152, %v1414
      %v1511 = vadd.f32 %v1155, %v1417
      %v1512 = vadd.f32 %v1160, %v1422
      %v1513 = vadd.f32 %v1163, %v1425
      %v1514 = vadd.f32 %v1168, %v1430
      %v1515 = vadd.f32 %v1171, %v1433
      %v1516 = vadd.f32 %v1176, %v1438
      %v1517 = vadd.f32 %v1179, %v1441
      %v1518 = vadd.f32 %v1184, %v1446
      %v1519 = vadd.f32 %v1187, %v1449
      %v1520 = vadd.f32 %v1192, %v1454
      %v1521 = vadd.f32 %v1195, %v1457
      %v1522 = vadd.f32 %v1200, %v1462
      %v1523 = vadd.f32 %v1203, %v1465
      %v1524 = vadd.f32 %v1208, %v1470
      %v1525 = vadd.f32 %v1211, %v1473
      %v1526 = vadd.f32 %v1216, %v1478
      %v1527 = vadd.f32 %v1219, %v1481
      %v1528 = vadd.f32 %v1224, %v1486
      %v1529 = vadd.f32 %v1227, %v1489
      %v1530 = vadd.f32 %v1232, %v1494
      %v1531 = vadd.f32 %v1235, %v1497
      %v1532 = vld [vmem:[%s678] sm:$0xff]
      %v1533 = vld [vmem:[%s678 + $0x8] sm:$0xff]
      %v1534 = vld [vmem:[%s678 + $0x18] sm:$0xff]
      %v1535 = vld [vmem:[%s678 + $0x20] sm:$0xff]
      %v1536 = vld [vmem:[%s678 + $0x30] sm:$0xff]
      %v1537 = vld [vmem:[%s678 + $0x38] sm:$0xff]
      %v1538 = vld [vmem:[%s678 + $0x48] sm:$0xff]
      %v1539 = vld [vmem:[%s678 + $0x50] sm:$0xff]
      %v1540 = vld [vmem:[%s678 + $0x60] sm:$0xff]
      %v1541 = vld [vmem:[%s678 + $0x68] sm:$0xff]
      %v1542 = vld [vmem:[%s678 + $0x78] sm:$0xff]
      %v1543 = vld [vmem:[%s678 + $0x80] sm:$0xff]
      %v1544 = vld [vmem:[%s678 + $0x90] sm:$0xff]
      %v1545 = vld [vmem:[%s678 + $0x98] sm:$0xff]
      %v1546 = vld [vmem:[%s678 + $0xa8] sm:$0xff]
      %v1547 = vld [vmem:[%s678 + $0xb0] sm:$0xff]
      %v1548 = vld [vmem:[%s678 + $0xc0] sm:$0xff]
      %v1549 = vld [vmem:[%s678 + $0xc8] sm:$0xff]
      %v1550 = vld [vmem:[%s678 + $0xd8] sm:$0xff]
      %v1551 = vld [vmem:[%s678 + $0xe0] sm:$0xff]
      %v1552 = vld [vmem:[%s678 + $0xf0] sm:$0xff]
      %v1553 = vld [vmem:[%s678 + $0xf8] sm:$0xff]
      %v1554 = vld [vmem:[%s678 + $0x108] sm:$0xff]
      %v1555 = vld [vmem:[%s678 + $0x110] sm:$0xff]
      %v1556 = vld [vmem:[%s678 + $0x120] sm:$0xff]
      %v1557 = vld [vmem:[%s678 + $0x128] sm:$0xff]
      %v1558 = vld [vmem:[%s678 + $0x138] sm:$0xff]
      %v1559 = vld [vmem:[%s678 + $0x140] sm:$0xff]
      %v1560 = vld [vmem:[%s678 + $0x150] sm:$0xff]
      %v1561 = vld [vmem:[%s678 + $0x158] sm:$0xff]
      %v1562 = vld [vmem:[%s678 + $0x168] sm:$0xff]
      %v1563 = vld [vmem:[%s678 + $0x170] sm:$0xff]
      %v1564 = vpack.c.bf16 %v1533, %v1532
      %v1565 = vpack.c.bf16 %v1535, %v1534
      %v1566 = vpack.c.bf16 %v1537, %v1536
      %v1567 = vpack.c.bf16 %v1539, %v1538
      %v1568 = vpack.c.bf16 %v1541, %v1540
      %v1569 = vpack.c.bf16 %v1543, %v1542
      %v1570 = vpack.c.bf16 %v1545, %v1544
      %v1571 = vpack.c.bf16 %v1547, %v1546
      %v1572 = vpack.c.bf16 %v1549, %v1548
      %v1573 = vpack.c.bf16 %v1551, %v1550
      %v1574 = vpack.c.bf16 %v1553, %v1552
      %v1575 = vpack.c.bf16 %v1555, %v1554
      %v1576 = vpack.c.bf16 %v1557, %v1556
      %v1577 = vpack.c.bf16 %v1559, %v1558
      %v1578 = vpack.c.bf16 %v1561, %v1560
      %v1579 = vpack.c.bf16 %v1563, %v1562
      %s1580 = scalar_lea.vmem %s1, 6
      %v1581 = vld [vmem:[%s1580] sm:$0x3]
      %v1583 = vsel %vm622, %v1564, 0
      %v1586 = vsel %vm622, %v1565, 0
      %v1589 = vsel %vm622, %v1566, 0
      %v1592 = vsel %vm622, %v1567, 0
      %v1595 = vsel %vm622, %v1568, 0
      %v1598 = vsel %vm622, %v1569, 0
      %v1601 = vsel %vm622, %v1570, 0
      %v1604 = vsel %vm622, %v1571, 0
      %v1607 = vsel %vm622, %v1572, 0
      %v1610 = vsel %vm622, %v1573, 0
      %v1613 = vsel %vm622, %v1574, 0
      %v1616 = vsel %vm622, %v1575, 0
      %v1619 = vsel %vm622, %v1576, 0
      %v1622 = vsel %vm622, %v1577, 0
      %v1625 = vsel %vm622, %v1578, 0
      %v1628 = vsel %vm622, %v1579, 0
      %v1631 = vand.u32 %v1581, %v861
      %1633 = vmatprep.subr.bf16.mxu0 0
      %1634 = vmatpush1.bf16.msra.mxu0 %v1631
      %1635 = vmatprep.subr.bf16.mxu0 0
      %1636 = vmatpush1.bf16.msra.mxu0 0
      %1637 = vmatprep.subr.bf16.mxu0 0
      %1638 = vmatpush1.bf16.msra.mxu0 0
      %1639 = vmatprep.subr.bf16.mxu0 0
      %1640 = vmatpush1.bf16.msra.mxu0 0
      %1641 = vmatprep.subr.bf16.mxu0 0
      %1642 = vmatpush1.bf16.msra.mxu0 0
      %1643 = vmatprep.subr.bf16.mxu0 0
      %1644 = vmatpush1.bf16.msra.mxu0 0
      %1645 = vmatprep.subr.bf16.mxu0 0
      %1646 = vmatpush1.bf16.msra.mxu0 0
      %1647 = vmatprep.subr.bf16.mxu0 0
      %1648 = vmatpush1.bf16.msra.mxu0 0
      %1649 = vmatprep.subr.bf16.mxu0 0
      %1650 = vmatpush1.bf16.msra.mxu0 0
      %1651 = vmatprep.subr.bf16.mxu0 0
      %1652 = vmatpush1.bf16.msra.mxu0 0
      %1653 = vmatprep.subr.bf16.mxu0 0
      %1654 = vmatpush1.bf16.msra.mxu0 0
      %1655 = vmatprep.subr.bf16.mxu0 0
      %1656 = vmatpush1.bf16.msra.mxu0 0
      %1657 = vmatprep.subr.bf16.mxu0 0
      %1658 = vmatpush1.bf16.msra.mxu0 0
      %1659 = vmatprep.subr.bf16.mxu0 0
      %1660 = vmatpush1.bf16.msra.mxu0 0
      %1661 = vmatprep.subr.bf16.mxu0 0
      %1662 = vmatpush1.bf16.msra.mxu0 0
      %1663 = vmatprep.subr.bf16.mxu0 0
      %1664 = vmatpush1.bf16.msra.mxu0 0
      %1665 = vmatprep.mubr.bf16.mxu0 0
      %1666 = vmatmul.mubr.bf16.gmra.mrb[0].mxu0 %v1583
      %v1667 = vpop.f32.mrb[0].mxu0
      %v1668 = vadd.f32 0.0, %v1667
      %v1669 = vpop.f32.mrb[0].mxu0
      %v1670 = vpop.f32.mrb[0].mxu0
      %v1671 = vadd.f32 0.0, %v1670
      %v1672 = vpop.f32.mrb[0].mxu0
      %1673 = vmatprep.mubr.bf16.mxu0 0
      %1674 = vmatmul.mubr.bf16.gmra.mrb[0].mxu0 %v1586
      %v1675 = vpop.f32.mrb[0].mxu0
      %v1676 = vadd.f32 0.0, %v1675
      %v1677 = vpop.f32.mrb[0].mxu0
      %v1678 = vpop.f32.mrb[0].mxu0
      %v1679 = vadd.f32 0.0, %v1678
      %v1680 = vpop.f32.mrb[0].mxu0
      %1681 = vmatprep.mubr.bf16.mxu0 0
      %1682 = vmatmul.mubr.bf16.gmra.mrb[0].mxu0 %v1589
      %v1683 = vpop.f32.mrb[0].mxu0
      %v1684 = vadd.f32 0.0, %v1683
      %v1685 = vpop.f32.mrb[0].mxu0
      %v1686 = vpop.f32.mrb[0].mxu0
      %v1687 = vadd.f32 0.0, %v1686
      %v1688 = vpop.f32.mrb[0].mxu0
      %1689 = vmatprep.mubr.bf16.mxu0 0
      %1690 = vmatmul.mubr.bf16.gmra.mrb[0].mxu0 %v1592
      %v1691 = vpop.f32.mrb[0].mxu0
      %v1692 = vadd.f32 0.0, %v1691
      %v1693 = vpop.f32.mrb[0].mxu0
      %v1694 = vpop.f32.mrb[0].mxu0
      %v1695 = vadd.f32 0.0, %v1694
      %v1696 = vpop.f32.mrb[0].mxu0
      %1697 = vmatprep.mubr.bf16.mxu0 0
      %1698 = vmatmul.mubr.bf16.gmra.mrb[0].mxu0 %v1595
      %v1699 = vpop.f32.mrb[0].mxu0
      %v1700 = vadd.f32 0.0, %v1699
      %v1701 = vpop.f32.mrb[0].mxu0
      %v1702 = vpop.f32.mrb[0].mxu0
      %v1703 = vadd.f32 0.0, %v1702
      %v1704 = vpop.f32.mrb[0].mxu0
      %1705 = vmatprep.mubr.bf16.mxu0 0
      %1706 = vmatmul.mubr.bf16.gmra.mrb[0].mxu0 %v1598
      %v1707 = vpop.f32.mrb[0].mxu0
      %v1708 = vadd.f32 0.0, %v1707
      %v1709 = vpop.f32.mrb[0].mxu0
      %v1710 = vpop.f32.mrb[0].mxu0
      %v1711 = vadd.f32 0.0, %v1710
      %v1712 = vpop.f32.mrb[0].mxu0
      %1713 = vmatprep.mubr.bf16.mxu0 0
      %1714 = vmatmul.mubr.bf16.gmra.mrb[0].mxu0 %v1601
      %v1715 = vpop.f32.mrb[0].mxu0
      %v1716 = vadd.f32 0.0, %v1715
      %v1717 = vpop.f32.mrb[0].mxu0
      %v1718 = vpop.f32.mrb[0].mxu0
      %v1719 = vadd.f32 0.0, %v1718
      %v1720 = vpop.f32.mrb[0].mxu0
      %1721 = vmatprep.mubr.bf16.mxu0 0
      %1722 = vmatmul.mubr.bf16.gmra.mrb[0].mxu0 %v1604
      %v1723 = vpop.f32.mrb[0].mxu0
      %v1724 = vadd.f32 0.0, %v1723
      %v1725 = vpop.f32.mrb[0].mxu0
      %v1726 = vpop.f32.mrb[0].mxu0
      %v1727 = vadd.f32 0.0, %v1726
      %v1728 = vpop.f32.mrb[0].mxu0
      %1729 = vmatprep.mubr.bf16.mxu0 0
      %1730 = vmatmul.mubr.bf16.gmra.mrb[0].mxu0 %v1607
      %v1731 = vpop.f32.mrb[0].mxu0
      %v1732 = vadd.f32 0.0, %v1731
      %v1733 = vpop.f32.mrb[0].mxu0
      %v1734 = vpop.f32.mrb[0].mxu0
      %v1735 = vadd.f32 0.0, %v1734
      %v1736 = vpop.f32.mrb[0].mxu0
      %1737 = vmatprep.mubr.bf16.mxu0 0
      %1738 = vmatmul.mubr.bf16.gmra.mrb[0].mxu0 %v1610
      %v1739 = vpop.f32.mrb[0].mxu0
      %v1740 = vadd.f32 0.0, %v1739
      %v1741 = vpop.f32.mrb[0].mxu0
      %v1742 = vpop.f32.mrb[0].mxu0
      %v1743 = vadd.f32 0.0, %v1742
      %v1744 = vpop.f32.mrb[0].mxu0
      %1745 = vmatprep.mubr.bf16.mxu0 0
      %1746 = vmatmul.mubr.bf16.gmra.mrb[0].mxu0 %v1613
      %v1747 = vpop.f32.mrb[0].mxu0
      %v1748 = vadd.f32 0.0, %v1747
      %v1749 = vpop.f32.mrb[0].mxu0
      %v1750 = vpop.f32.mrb[0].mxu0
      %v1751 = vadd.f32 0.0, %v1750
      %v1752 = vpop.f32.mrb[0].mxu0
      %1753 = vmatprep.mubr.bf16.mxu0 0
      %1754 = vmatmul.mubr.bf16.gmra.mrb[0].mxu0 %v1616
      %v1755 = vpop.f32.mrb[0].mxu0
      %v1756 = vadd.f32 0.0, %v1755
      %v1757 = vpop.f32.mrb[0].mxu0
      %v1758 = vpop.f32.mrb[0].mxu0
      %v1759 = vadd.f32 0.0, %v1758
      %v1760 = vpop.f32.mrb[0].mxu0
      %1761 = vmatprep.mubr.bf16.mxu0 0
      %1762 = vmatmul.mubr.bf16.gmra.mrb[0].mxu0 %v1619
      %v1763 = vpop.f32.mrb[0].mxu0
      %v1764 = vadd.f32 0.0, %v1763
      %v1765 = vpop.f32.mrb[0].mxu0
      %v1766 = vpop.f32.mrb[0].mxu0
      %v1767 = vadd.f32 0.0, %v1766
      %v1768 = vpop.f32.mrb[0].mxu0
      %1769 = vmatprep.mubr.bf16.mxu0 0
      %1770 = vmatmul.mubr.bf16.gmra.mrb[0].mxu0 %v1622
      %v1771 = vpop.f32.mrb[0].mxu0
      %v1772 = vadd.f32 0.0, %v1771
      %v1773 = vpop.f32.mrb[0].mxu0
      %v1774 = vpop.f32.mrb[0].mxu0
      %v1775 = vadd.f32 0.0, %v1774
      %v1776 = vpop.f32.mrb[0].mxu0
      %1777 = vmatprep.mubr.bf16.mxu0 0
      %1778 = vmatmul.mubr.bf16.gmra.mrb[0].mxu0 %v1625
      %v1779 = vpop.f32.mrb[0].mxu0
      %v1780 = vadd.f32 0.0, %v1779
      %v1781 = vpop.f32.mrb[0].mxu0
      %v1782 = vpop.f32.mrb[0].mxu0
      %v1783 = vadd.f32 0.0, %v1782
      %v1784 = vpop.f32.mrb[0].mxu0
      %1785 = vmatprep.mubr.bf16.mxu0 0
      %1786 = vmatmul.mubr.bf16.gmra.mrb[0].mxu0 %v1628
      %v1787 = vpop.f32.mrb[0].mxu0
      %v1788 = vadd.f32 0.0, %v1787
      %v1789 = vpop.f32.mrb[0].mxu0
      %v1790 = vpop.f32.mrb[0].mxu0
      %v1791 = vadd.f32 0.0, %v1790
      %v1792 = vpop.f32.mrb[0].mxu0
      %1793 = vdwg.mxu0
      %v1794 = vadd.f32 %v1500, %v1668
      %v1795 = vadd.f32 %v1501, %v1671
      %v1796 = vadd.f32 %v1502, %v1676
      %v1797 = vadd.f32 %v1503, %v1679
      %v1798 = vadd.f32 %v1504, %v1684
      %v1799 = vadd.f32 %v1505, %v1687
      %v1800 = vadd.f32 %v1506, %v1692
      %v1801 = vadd.f32 %v1507, %v1695
      %v1802 = vadd.f32 %v1508, %v1700
      %v1803 = vadd.f32 %v1509, %v1703
      %v1804 = vadd.f32 %v1510, %v1708
      %v1805 = vadd.f32 %v1511, %v1711
      %v1806 = vadd.f32 %v1512, %v1716
      %v1807 = vadd.f32 %v1513, %v1719
      %v1808 = vadd.f32 %v1514, %v1724
      %v1809 = vadd.f32 %v1515, %v1727
      %v1810 = vadd.f32 %v1516, %v1732
      %v1811 = vadd.f32 %v1517, %v1735
      %v1812 = vadd.f32 %v1518, %v1740
      %v1813 = vadd.f32 %v1519, %v1743
      %v1814 = vadd.f32 %v1520, %v1748
      %v1815 = vadd.f32 %v1521, %v1751
      %v1816 = vadd.f32 %v1522, %v1756
      %v1817 = vadd.f32 %v1523, %v1759
      %v1818 = vadd.f32 %v1524, %v1764
      %v1819 = vadd.f32 %v1525, %v1767
      %v1820 = vadd.f32 %v1526, %v1772
      %v1821 = vadd.f32 %v1527, %v1775
      %v1822 = vadd.f32 %v1528, %v1780
      %v1823 = vadd.f32 %v1529, %v1783
      %v1824 = vadd.f32 %v1530, %v1788
      %v1825 = vadd.f32 %v1531, %v1791
      %v1826 = vld [vmem:[%s678 + $0x1] sm:$0xff]
      %v1827 = vld [vmem:[%s678 + $0x9] sm:$0xff]
      %v1828 = vld [vmem:[%s678 + $0x19] sm:$0xff]
      %v1829 = vld [vmem:[%s678 + $0x21] sm:$0xff]
      %v1830 = vld [vmem:[%s678 + $0x31] sm:$0xff]
      %v1831 = vld [vmem:[%s678 + $0x39] sm:$0xff]
      %v1832 = vld [vmem:[%s678 + $0x49] sm:$0xff]
      %v1833 = vld [vmem:[%s678 + $0x51] sm:$0xff]
      %v1834 = vld [vmem:[%s678 + $0x61] sm:$0xff]
      %v1835 = vld [vmem:[%s678 + $0x69] sm:$0xff]
      %v1836 = vld [vmem:[%s678 + $0x79] sm:$0xff]
      %v1837 = vld [vmem:[%s678 + $0x81] sm:$0xff]
      %v1838 = vld [vmem:[%s678 + $0x91] sm:$0xff]
      %v1839 = vld [vmem:[%s678 + $0x99] sm:$0xff]
      %v1840 = vld [vmem:[%s678 + $0xa9] sm:$0xff]
      %v1841 = vld [vmem:[%s678 + $0xb1] sm:$0xff]
      %v1842 = vld [vmem:[%s678 + $0xc1] sm:$0xff]
      %v1843 = vld [vmem:[%s678 + $0xc9] sm:$0xff]
      %v1844 = vld [vmem:[%s678 + $0xd9] sm:$0xff]
      %v1845 = vld [vmem:[%s678 + $0xe1] sm:$0xff]
      %v1846 = vld [vmem:[%s678 + $0xf1] sm:$0xff]
      %v1847 = vld [vmem:[%s678 + $0xf9] sm:$0xff]
      %v1848 = vld [vmem:[%s678 + $0x109] sm:$0xff]
      %v1849 = vld [vmem:[%s678 + $0x111] sm:$0xff]
      %v1850 = vld [vmem:[%s678 + $0x121] sm:$0xff]
      %v1851 = vld [vmem:[%s678 + $0x129] sm:$0xff]
      %v1852 = vld [vmem:[%s678 + $0x139] sm:$0xff]
      %v1853 = vld [vmem:[%s678 + $0x141] sm:$0xff]
      %v1854 = vld [vmem:[%s678 + $0x151] sm:$0xff]
      %v1855 = vld [vmem:[%s678 + $0x159] sm:$0xff]
      %v1856 = vld [vmem:[%s678 + $0x169] sm:$0xff]
      %v1857 = vld [vmem:[%s678 + $0x171] sm:$0xff]
      %v1858 = vpack.c.bf16 %v1827, %v1826
      %v1859 = vpack.c.bf16 %v1829, %v1828
      %v1860 = vpack.c.bf16 %v1831, %v1830
      %v1861 = vpack.c.bf16 %v1833, %v1832
      %v1862 = vpack.c.bf16 %v1835, %v1834
      %v1863 = vpack.c.bf16 %v1837, %v1836
      %v1864 = vpack.c.bf16 %v1839, %v1838
      %v1865 = vpack.c.bf16 %v1841, %v1840
      %v1866 = vpack.c.bf16 %v1843, %v1842
      %v1867 = vpack.c.bf16 %v1845, %v1844
      %v1868 = vpack.c.bf16 %v1847, %v1846
      %v1869 = vpack.c.bf16 %v1849, %v1848
      %v1870 = vpack.c.bf16 %v1851, %v1850
      %v1871 = vpack.c.bf16 %v1853, %v1852
      %v1872 = vpack.c.bf16 %v1855, %v1854
      %v1873 = vpack.c.bf16 %v1857, %v1856
      %s1874 = scalar_lea.vmem %s1, 8
      %v1875 = vld [vmem:[%s1874] sm:$0x3]
      %v1877 = vsel %vm622, %v1858, 0
      %v1880 = vsel %vm622, %v1859, 0
      %v1883 = vsel %vm622, %v1860, 0
      %v1886 = vsel %vm622, %v1861, 0
      %v1889 = vsel %vm622, %v1862, 0
      %v1892 = vsel %vm622, %v1863, 0
      %v1895 = vsel %vm622, %v1864, 0
      %v1898 = vsel %vm622, %v1865, 0
      %v1901 = vsel %vm622, %v1866, 0
      %v1904 = vsel %vm622, %v1867, 0
      %v1907 = vsel %vm622, %v1868, 0
      %v1910 = vsel %vm622, %v1869, 0
      %v1913 = vsel %vm622, %v1870, 0
      %v1916 = vsel %vm622, %v1871, 0
      %v1919 = vsel %vm622, %v1872, 0
      %v1922 = vsel %vm622, %v1873, 0
      %v1925 = vand.u32 %v1875, %v861
      %1927 = vmatprep.subr.bf16.mxu0 0
      %1928 = vmatpush1.bf16.msra.mxu0 %v1925
      %1929 = vmatprep.subr.bf16.mxu0 0
      %1930 = vmatpush1.bf16.msra.mxu0 0
      %1931 = vmatprep.subr.bf16.mxu0 0
      %1932 = vmatpush1.bf16.msra.mxu0 0
      %1933 = vmatprep.subr.bf16.mxu0 0
      %1934 = vmatpush1.bf16.msra.mxu0 0
      %1935 = vmatprep.subr.bf16.mxu0 0
      %1936 = vmatpush1.bf16.msra.mxu0 0
      %1937 = vmatprep.subr.bf16.mxu0 0
      %1938 = vmatpush1.bf16.msra.mxu0 0
      %1939 = vmatprep.subr.bf16.mxu0 0
      %1940 = vmatpush1.bf16.msra.mxu0 0
      %1941 = vmatprep.subr.bf16.mxu0 0
      %1942 = vmatpush1.bf16.msra.mxu0 0
      %1943 = vmatprep.subr.bf16.mxu0 0
      %1944 = vmatpush1.bf16.msra.mxu0 0
      %1945 = vmatprep.subr.bf16.mxu0 0
      %1946 = vmatpush1.bf16.msra.mxu0 0
      %1947 = vmatprep.subr.bf16.mxu0 0
      %1948 = vmatpush1.bf16.msra.mxu0 0
      %1949 = vmatprep.subr.bf16.mxu0 0
      %1950 = vmatpush1.bf16.msra.mxu0 0
      %1951 = vmatprep.subr.bf16.mxu0 0
      %1952 = vmatpush1.bf16.msra.mxu0 0
      %1953 = vmatprep.subr.bf16.mxu0 0
      %1954 = vmatpush1.bf16.msra.mxu0 0
      %1955 = vmatprep.subr.bf16.mxu0 0
      %1956 = vmatpush1.bf16.msra.mxu0 0
      %1957 = vmatprep.subr.bf16.mxu0 0
      %1958 = vmatpush1.bf16.msra.mxu0 0
      %1959 = vmatprep.mubr.bf16.mxu0 0
      %1960 = vmatmul.mubr.bf16.gmra.mrb[0].mxu0 %v1877
      %v1961 = vpop.f32.mrb[0].mxu0
      %v1962 = vadd.f32 0.0, %v1961
      %v1963 = vpop.f32.mrb[0].mxu0
      %v1964 = vpop.f32.mrb[0].mxu0
      %v1965 = vadd.f32 0.0, %v1964
      %v1966 = vpop.f32.mrb[0].mxu0
      %1967 = vmatprep.mubr.bf16.mxu0 0
      %1968 = vmatmul.mubr.bf16.gmra.mrb[0].mxu0 %v1880
      %v1969 = vpop.f32.mrb[0].mxu0
      %v1970 = vadd.f32 0.0, %v1969
      %v1971 = vpop.f32.mrb[0].mxu0
      %v1972 = vpop.f32.mrb[0].mxu0
      %v1973 = vadd.f32 0.0, %v1972
      %v1974 = vpop.f32.mrb[0].mxu0
      %1975 = vmatprep.mubr.bf16.mxu0 0
      %1976 = vmatmul.mubr.bf16.gmra.mrb[0].mxu0 %v1883
      %v1977 = vpop.f32.mrb[0].mxu0
      %v1978 = vadd.f32 0.0, %v1977
      %v1979 = vpop.f32.mrb[0].mxu0
      %v1980 = vpop.f32.mrb[0].mxu0
      %v1981 = vadd.f32 0.0, %v1980
      %v1982 = vpop.f32.mrb[0].mxu0
      %1983 = vmatprep.mubr.bf16.mxu0 0
      %1984 = vmatmul.mubr.bf16.gmra.mrb[0].mxu0 %v1886
      %v1985 = vpop.f32.mrb[0].mxu0
      %v1986 = vadd.f32 0.0, %v1985
      %v1987 = vpop.f32.mrb[0].mxu0
      %v1988 = vpop.f32.mrb[0].mxu0
      %v1989 = vadd.f32 0.0, %v1988
      %v1990 = vpop.f32.mrb[0].mxu0
      %1991 = vmatprep.mubr.bf16.mxu0 0
      %1992 = vmatmul.mubr.bf16.gmra.mrb[0].mxu0 %v1889
      %v1993 = vpop.f32.mrb[0].mxu0
      %v1994 = vadd.f32 0.0, %v1993
      %v1995 = vpop.f32.mrb[0].mxu0
      %v1996 = vpop.f32.mrb[0].mxu0
      %v1997 = vadd.f32 0.0, %v1996
      %v1998 = vpop.f32.mrb[0].mxu0
      %1999 = vmatprep.mubr.bf16.mxu0 0
      %2000 = vmatmul.mubr.bf16.gmra.mrb[0].mxu0 %v1892
      %v2001 = vpop.f32.mrb[0].mxu0
      %v2002 = vadd.f32 0.0, %v2001
      %v2003 = vpop.f32.mrb[0].mxu0
      %v2004 = vpop.f32.mrb[0].mxu0
      %v2005 = vadd.f32 0.0, %v2004
      %v2006 = vpop.f32.mrb[0].mxu0
      %2007 = vmatprep.mubr.bf16.mxu0 0
      %2008 = vmatmul.mubr.bf16.gmra.mrb[0].mxu0 %v1895
      %v2009 = vpop.f32.mrb[0].mxu0
      %v2010 = vadd.f32 0.0, %v2009
      %v2011 = vpop.f32.mrb[0].mxu0
      %v2012 = vpop.f32.mrb[0].mxu0
      %v2013 = vadd.f32 0.0, %v2012
      %v2014 = vpop.f32.mrb[0].mxu0
      %2015 = vmatprep.mubr.bf16.mxu0 0
      %2016 = vmatmul.mubr.bf16.gmra.mrb[0].mxu0 %v1898
      %v2017 = vpop.f32.mrb[0].mxu0
      %v2018 = vadd.f32 0.0, %v2017
      %v2019 = vpop.f32.mrb[0].mxu0
      %v2020 = vpop.f32.mrb[0].mxu0
      %v2021 = vadd.f32 0.0, %v2020
      %v2022 = vpop.f32.mrb[0].mxu0
      %2023 = vmatprep.mubr.bf16.mxu0 0
      %2024 = vmatmul.mubr.bf16.gmra.mrb[0].mxu0 %v1901
      %v2025 = vpop.f32.mrb[0].mxu0
      %v2026 = vadd.f32 0.0, %v2025
      %v2027 = vpop.f32.mrb[0].mxu0
      %v2028 = vpop.f32.mrb[0].mxu0
      %v2029 = vadd.f32 0.0, %v2028
      %v2030 = vpop.f32.mrb[0].mxu0
      %2031 = vmatprep.mubr.bf16.mxu0 0
      %2032 = vmatmul.mubr.bf16.gmra.mrb[0].mxu0 %v1904
      %v2033 = vpop.f32.mrb[0].mxu0
      %v2034 = vadd.f32 0.0, %v2033
      %v2035 = vpop.f32.mrb[0].mxu0
      %v2036 = vpop.f32.mrb[0].mxu0
      %v2037 = vadd.f32 0.0, %v2036
      %v2038 = vpop.f32.mrb[0].mxu0
      %2039 = vmatprep.mubr.bf16.mxu0 0
      %2040 = vmatmul.mubr.bf16.gmra.mrb[0].mxu0 %v1907
      %v2041 = vpop.f32.mrb[0].mxu0
      %v2042 = vadd.f32 0.0, %v2041
      %v2043 = vpop.f32.mrb[0].mxu0
      %v2044 = vpop.f32.mrb[0].mxu0
      %v2045 = vadd.f32 0.0, %v2044
      %v2046 = vpop.f32.mrb[0].mxu0
      %2047 = vmatprep.mubr.bf16.mxu0 0
      %2048 = vmatmul.mubr.bf16.gmra.mrb[0].mxu0 %v1910
      %v2049 = vpop.f32.mrb[0].mxu0
      %v2050 = vadd.f32 0.0, %v2049
      %v2051 = vpop.f32.mrb[0].mxu0
      %v2052 = vpop.f32.mrb[0].mxu0
      %v2053 = vadd.f32 0.0, %v2052
      %v2054 = vpop.f32.mrb[0].mxu0
      %2055 = vmatprep.mubr.bf16.mxu0 0
      %2056 = vmatmul.mubr.bf16.gmra.mrb[0].mxu0 %v1913
      %v2057 = vpop.f32.mrb[0].mxu0
      %v2058 = vadd.f32 0.0, %v2057
      %v2059 = vpop.f32.mrb[0].mxu0
      %v2060 = vpop.f32.mrb[0].mxu0
      %v2061 = vadd.f32 0.0, %v2060
      %v2062 = vpop.f32.mrb[0].mxu0
      %2063 = vmatprep.mubr.bf16.mxu0 0
      %2064 = vmatmul.mubr.bf16.gmra.mrb[0].mxu0 %v1916
      %v2065 = vpop.f32.mrb[0].mxu0
      %v2066 = vadd.f32 0.0, %v2065
      %v2067 = vpop.f32.mrb[0].mxu0
      %v2068 = vpop.f32.mrb[0].mxu0
      %v2069 = vadd.f32 0.0, %v2068
      %v2070 = vpop.f32.mrb[0].mxu0
      %2071 = vmatprep.mubr.bf16.mxu0 0
      %2072 = vmatmul.mubr.bf16.gmra.mrb[0].mxu0 %v1919
      %v2073 = vpop.f32.mrb[0].mxu0
      %v2074 = vadd.f32 0.0, %v2073
      %v2075 = vpop.f32.mrb[0].mxu0
      %v2076 = vpop.f32.mrb[0].mxu0
      %v2077 = vadd.f32 0.0, %v2076
      %v2078 = vpop.f32.mrb[0].mxu0
      %2079 = vmatprep.mubr.bf16.mxu0 0
      %2080 = vmatmul.mubr.bf16.gmra.mrb[0].mxu0 %v1922
      %v2081 = vpop.f32.mrb[0].mxu0
      %v2082 = vadd.f32 0.0, %v2081
      %v2083 = vpop.f32.mrb[0].mxu0
      %v2084 = vpop.f32.mrb[0].mxu0
      %v2085 = vadd.f32 0.0, %v2084
      %v2086 = vpop.f32.mrb[0].mxu0
      %2087 = vdwg.mxu0
      %v2088 = vadd.f32 %v1794, %v1962
      %v2089 = vadd.f32 %v1795, %v1965
      %v2090 = vadd.f32 %v1796, %v1970
      %v2091 = vadd.f32 %v1797, %v1973
      %v2092 = vadd.f32 %v1798, %v1978
      %v2093 = vadd.f32 %v1799, %v1981
      %v2094 = vadd.f32 %v1800, %v1986
      %v2095 = vadd.f32 %v1801, %v1989
      %v2096 = vadd.f32 %v1802, %v1994
      %v2097 = vadd.f32 %v1803, %v1997
      %v2098 = vadd.f32 %v1804, %v2002
      %v2099 = vadd.f32 %v1805, %v2005
      %v2100 = vadd.f32 %v1806, %v2010
      %v2101 = vadd.f32 %v1807, %v2013
      %v2102 = vadd.f32 %v1808, %v2018
      %v2103 = vadd.f32 %v1809, %v2021
      %v2104 = vadd.f32 %v1810, %v2026
      %v2105 = vadd.f32 %v1811, %v2029
      %v2106 = vadd.f32 %v1812, %v2034
      %v2107 = vadd.f32 %v1813, %v2037
      %v2108 = vadd.f32 %v1814, %v2042
      %v2109 = vadd.f32 %v1815, %v2045
      %v2110 = vadd.f32 %v1816, %v2050
      %v2111 = vadd.f32 %v1817, %v2053
      %v2112 = vadd.f32 %v1818, %v2058
      %v2113 = vadd.f32 %v1819, %v2061
      %v2114 = vadd.f32 %v1820, %v2066
      %v2115 = vadd.f32 %v1821, %v2069
      %v2116 = vadd.f32 %v1822, %v2074
      %v2117 = vadd.f32 %v1823, %v2077
      %v2118 = vadd.f32 %v1824, %v2082
      %v2119 = vadd.f32 %v1825, %v2085
      %v2120 = vld [vmem:[%s678 + $0x2] sm:$0xff]
      %v2121 = vld [vmem:[%s678 + $0xa] sm:$0xff]
      %v2122 = vld [vmem:[%s678 + $0x1a] sm:$0xff]
      %v2123 = vld [vmem:[%s678 + $0x22] sm:$0xff]
      %v2124 = vld [vmem:[%s678 + $0x32] sm:$0xff]
      %v2125 = vld [vmem:[%s678 + $0x3a] sm:$0xff]
      %v2126 = vld [vmem:[%s678 + $0x4a] sm:$0xff]
      %v2127 = vld [vmem:[%s678 + $0x52] sm:$0xff]
      %v2128 = vld [vmem:[%s678 + $0x62] sm:$0xff]
      %v2129 = vld [vmem:[%s678 + $0x6a] sm:$0xff]
      %v2130 = vld [vmem:[%s678 + $0x7a] sm:$0xff]
      %v2131 = vld [vmem:[%s678 + $0x82] sm:$0xff]
      %v2132 = vld [vmem:[%s678 + $0x92] sm:$0xff]
      %v2133 = vld [vmem:[%s678 + $0x9a] sm:$0xff]
      %v2134 = vld [vmem:[%s678 + $0xaa] sm:$0xff]
      %v2135 = vld [vmem:[%s678 + $0xb2] sm:$0xff]
      %v2136 = vld [vmem:[%s678 + $0xc2] sm:$0xff]
      %v2137 = vld [vmem:[%s678 + $0xca] sm:$0xff]
      %v2138 = vld [vmem:[%s678 + $0xda] sm:$0xff]
      %v2139 = vld [vmem:[%s678 + $0xe2] sm:$0xff]
      %v2140 = vld [vmem:[%s678 + $0xf2] sm:$0xff]
      %v2141 = vld [vmem:[%s678 + $0xfa] sm:$0xff]
      %v2142 = vld [vmem:[%s678 + $0x10a] sm:$0xff]
      %v2143 = vld [vmem:[%s678 + $0x112] sm:$0xff]
      %v2144 = vld [vmem:[%s678 + $0x122] sm:$0xff]
      %v2145 = vld [vmem:[%s678 + $0x12a] sm:$0xff]
      %v2146 = vld [vmem:[%s678 + $0x13a] sm:$0xff]
      %v2147 = vld [vmem:[%s678 + $0x142] sm:$0xff]
      %v2148 = vld [vmem:[%s678 + $0x152] sm:$0xff]
      %v2149 = vld [vmem:[%s678 + $0x15a] sm:$0xff]
      %v2150 = vld [vmem:[%s678 + $0x16a] sm:$0xff]
      %v2151 = vld [vmem:[%s678 + $0x172] sm:$0xff]
      %v2152 = vpack.c.bf16 %v2121, %v2120
      %v2153 = vpack.c.bf16 %v2123, %v2122
      %v2154 = vpack.c.bf16 %v2125, %v2124
      %v2155 = vpack.c.bf16 %v2127, %v2126
      %v2156 = vpack.c.bf16 %v2129, %v2128
      %v2157 = vpack.c.bf16 %v2131, %v2130
      %v2158 = vpack.c.bf16 %v2133, %v2132
      %v2159 = vpack.c.bf16 %v2135, %v2134
      %v2160 = vpack.c.bf16 %v2137, %v2136
      %v2161 = vpack.c.bf16 %v2139, %v2138
      %v2162 = vpack.c.bf16 %v2141, %v2140
      %v2163 = vpack.c.bf16 %v2143, %v2142
      %v2164 = vpack.c.bf16 %v2145, %v2144
      %v2165 = vpack.c.bf16 %v2147, %v2146
      %v2166 = vpack.c.bf16 %v2149, %v2148
      %v2167 = vpack.c.bf16 %v2151, %v2150
      %s2168 = scalar_lea.vmem %s1, 10
      %v2169 = vld [vmem:[%s2168] sm:$0x3]
      %v2171 = vsel %vm622, %v2152, 0
      %v2174 = vsel %vm622, %v2153, 0
      %v2177 = vsel %vm622, %v2154, 0
      %v2180 = vsel %vm622, %v2155, 0
      %v2183 = vsel %vm622, %v2156, 0
      %v2186 = vsel %vm622, %v2157, 0
      %v2189 = vsel %vm622, %v2158, 0
      %v2192 = vsel %vm622, %v2159, 0
      %v2195 = vsel %vm622, %v2160, 0
      %v2198 = vsel %vm622, %v2161, 0
      %v2201 = vsel %vm622, %v2162, 0
      %v2204 = vsel %vm622, %v2163, 0
      %v2207 = vsel %vm622, %v2164, 0
      %v2210 = vsel %vm622, %v2165, 0
      %v2213 = vsel %vm622, %v2166, 0
      %v2216 = vsel %vm622, %v2167, 0
      %v2219 = vand.u32 %v2169, %v861
      %2221 = vmatprep.subr.bf16.mxu0 0
      %2222 = vmatpush1.bf16.msra.mxu0 %v2219
      %2223 = vmatprep.subr.bf16.mxu0 0
      %2224 = vmatpush1.bf16.msra.mxu0 0
      %2225 = vmatprep.subr.bf16.mxu0 0
      %2226 = vmatpush1.bf16.msra.mxu0 0
      %2227 = vmatprep.subr.bf16.mxu0 0
      %2228 = vmatpush1.bf16.msra.mxu0 0
      %2229 = vmatprep.subr.bf16.mxu0 0
      %2230 = vmatpush1.bf16.msra.mxu0 0
      %2231 = vmatprep.subr.bf16.mxu0 0
      %2232 = vmatpush1.bf16.msra.mxu0 0
      %2233 = vmatprep.subr.bf16.mxu0 0
      %2234 = vmatpush1.bf16.msra.mxu0 0
      %2235 = vmatprep.subr.bf16.mxu0 0
      %2236 = vmatpush1.bf16.msra.mxu0 0
      %2237 = vmatprep.subr.bf16.mxu0 0
      %2238 = vmatpush1.bf16.msra.mxu0 0
      %2239 = vmatprep.subr.bf16.mxu0 0
      %2240 = vmatpush1.bf16.msra.mxu0 0
      %2241 = vmatprep.subr.bf16.mxu0 0
      %2242 = vmatpush1.bf16.msra.mxu0 0
      %2243 = vmatprep.subr.bf16.mxu0 0
      %2244 = vmatpush1.bf16.msra.mxu0 0
      %2245 = vmatprep.subr.bf16.mxu0 0
      %2246 = vmatpush1.bf16.msra.mxu0 0
      %2247 = vmatprep.subr.bf16.mxu0 0
      %2248 = vmatpush1.bf16.msra.mxu0 0
      %2249 = vmatprep.subr.bf16.mxu0 0
      %2250 = vmatpush1.bf16.msra.mxu0 0
      %2251 = vmatprep.subr.bf16.mxu0 0
      %2252 = vmatpush1.bf16.msra.mxu0 0
      %2253 = vmatprep.mubr.bf16.mxu0 0
      %2254 = vmatmul.mubr.bf16.gmra.mrb[0].mxu0 %v2171
      %v2255 = vpop.f32.mrb[0].mxu0
      %v2256 = vadd.f32 0.0, %v2255
      %v2257 = vpop.f32.mrb[0].mxu0
      %v2258 = vpop.f32.mrb[0].mxu0
      %v2259 = vadd.f32 0.0, %v2258
      %v2260 = vpop.f32.mrb[0].mxu0
      %2261 = vmatprep.mubr.bf16.mxu0 0
      %2262 = vmatmul.mubr.bf16.gmra.mrb[0].mxu0 %v2174
      %v2263 = vpop.f32.mrb[0].mxu0
      %v2264 = vadd.f32 0.0, %v2263
      %v2265 = vpop.f32.mrb[0].mxu0
      %v2266 = vpop.f32.mrb[0].mxu0
      %v2267 = vadd.f32 0.0, %v2266
      %v2268 = vpop.f32.mrb[0].mxu0
      %2269 = vmatprep.mubr.bf16.mxu0 0
      %2270 = vmatmul.mubr.bf16.gmra.mrb[0].mxu0 %v2177
      %v2271 = vpop.f32.mrb[0].mxu0
      %v2272 = vadd.f32 0.0, %v2271
      %v2273 = vpop.f32.mrb[0].mxu0
      %v2274 = vpop.f32.mrb[0].mxu0
      %v2275 = vadd.f32 0.0, %v2274
      %v2276 = vpop.f32.mrb[0].mxu0
      %2277 = vmatprep.mubr.bf16.mxu0 0
      %2278 = vmatmul.mubr.bf16.gmra.mrb[0].mxu0 %v2180
      %v2279 = vpop.f32.mrb[0].mxu0
      %v2280 = vadd.f32 0.0, %v2279
      %v2281 = vpop.f32.mrb[0].mxu0
      %v2282 = vpop.f32.mrb[0].mxu0
      %v2283 = vadd.f32 0.0, %v2282
      %v2284 = vpop.f32.mrb[0].mxu0
      %2285 = vmatprep.mubr.bf16.mxu0 0
      %2286 = vmatmul.mubr.bf16.gmra.mrb[0].mxu0 %v2183
      %v2287 = vpop.f32.mrb[0].mxu0
      %v2288 = vadd.f32 0.0, %v2287
      %v2289 = vpop.f32.mrb[0].mxu0
      %v2290 = vpop.f32.mrb[0].mxu0
      %v2291 = vadd.f32 0.0, %v2290
      %v2292 = vpop.f32.mrb[0].mxu0
      %2293 = vmatprep.mubr.bf16.mxu0 0
      %2294 = vmatmul.mubr.bf16.gmra.mrb[0].mxu0 %v2186
      %v2295 = vpop.f32.mrb[0].mxu0
      %v2296 = vadd.f32 0.0, %v2295
      %v2297 = vpop.f32.mrb[0].mxu0
      %v2298 = vpop.f32.mrb[0].mxu0
      %v2299 = vadd.f32 0.0, %v2298
      %v2300 = vpop.f32.mrb[0].mxu0
      %2301 = vmatprep.mubr.bf16.mxu0 0
      %2302 = vmatmul.mubr.bf16.gmra.mrb[0].mxu0 %v2189
      %v2303 = vpop.f32.mrb[0].mxu0
      %v2304 = vadd.f32 0.0, %v2303
      %v2305 = vpop.f32.mrb[0].mxu0
      %v2306 = vpop.f32.mrb[0].mxu0
      %v2307 = vadd.f32 0.0, %v2306
      %v2308 = vpop.f32.mrb[0].mxu0
      %2309 = vmatprep.mubr.bf16.mxu0 0
      %2310 = vmatmul.mubr.bf16.gmra.mrb[0].mxu0 %v2192
      %v2311 = vpop.f32.mrb[0].mxu0
      %v2312 = vadd.f32 0.0, %v2311
      %v2313 = vpop.f32.mrb[0].mxu0
      %v2314 = vpop.f32.mrb[0].mxu0
      %v2315 = vadd.f32 0.0, %v2314
      %v2316 = vpop.f32.mrb[0].mxu0
      %2317 = vmatprep.mubr.bf16.mxu0 0
      %2318 = vmatmul.mubr.bf16.gmra.mrb[0].mxu0 %v2195
      %v2319 = vpop.f32.mrb[0].mxu0
      %v2320 = vadd.f32 0.0, %v2319
      %v2321 = vpop.f32.mrb[0].mxu0
      %v2322 = vpop.f32.mrb[0].mxu0
      %v2323 = vadd.f32 0.0, %v2322
      %v2324 = vpop.f32.mrb[0].mxu0
      %2325 = vmatprep.mubr.bf16.mxu0 0
      %2326 = vmatmul.mubr.bf16.gmra.mrb[0].mxu0 %v2198
      %v2327 = vpop.f32.mrb[0].mxu0
      %v2328 = vadd.f32 0.0, %v2327
      %v2329 = vpop.f32.mrb[0].mxu0
      %v2330 = vpop.f32.mrb[0].mxu0
      %v2331 = vadd.f32 0.0, %v2330
      %v2332 = vpop.f32.mrb[0].mxu0
      %2333 = vmatprep.mubr.bf16.mxu0 0
      %2334 = vmatmul.mubr.bf16.gmra.mrb[0].mxu0 %v2201
      %v2335 = vpop.f32.mrb[0].mxu0
      %v2336 = vadd.f32 0.0, %v2335
      %v2337 = vpop.f32.mrb[0].mxu0
      %v2338 = vpop.f32.mrb[0].mxu0
      %v2339 = vadd.f32 0.0, %v2338
      %v2340 = vpop.f32.mrb[0].mxu0
      %2341 = vmatprep.mubr.bf16.mxu0 0
      %2342 = vmatmul.mubr.bf16.gmra.mrb[0].mxu0 %v2204
      %v2343 = vpop.f32.mrb[0].mxu0
      %v2344 = vadd.f32 0.0, %v2343
      %v2345 = vpop.f32.mrb[0].mxu0
      %v2346 = vpop.f32.mrb[0].mxu0
      %v2347 = vadd.f32 0.0, %v2346
      %v2348 = vpop.f32.mrb[0].mxu0
      %2349 = vmatprep.mubr.bf16.mxu0 0
      %2350 = vmatmul.mubr.bf16.gmra.mrb[0].mxu0 %v2207
      %v2351 = vpop.f32.mrb[0].mxu0
      %v2352 = vadd.f32 0.0, %v2351
      %v2353 = vpop.f32.mrb[0].mxu0
      %v2354 = vpop.f32.mrb[0].mxu0
      %v2355 = vadd.f32 0.0, %v2354
      %v2356 = vpop.f32.mrb[0].mxu0
      %2357 = vmatprep.mubr.bf16.mxu0 0
      %2358 = vmatmul.mubr.bf16.gmra.mrb[0].mxu0 %v2210
      %v2359 = vpop.f32.mrb[0].mxu0
      %v2360 = vadd.f32 0.0, %v2359
      %v2361 = vpop.f32.mrb[0].mxu0
      %v2362 = vpop.f32.mrb[0].mxu0
      %v2363 = vadd.f32 0.0, %v2362
      %v2364 = vpop.f32.mrb[0].mxu0
      %2365 = vmatprep.mubr.bf16.mxu0 0
      %2366 = vmatmul.mubr.bf16.gmra.mrb[0].mxu0 %v2213
      %v2367 = vpop.f32.mrb[0].mxu0
      %v2368 = vadd.f32 0.0, %v2367
      %v2369 = vpop.f32.mrb[0].mxu0
      %v2370 = vpop.f32.mrb[0].mxu0
      %v2371 = vadd.f32 0.0, %v2370
      %v2372 = vpop.f32.mrb[0].mxu0
      %2373 = vmatprep.mubr.bf16.mxu0 0
      %2374 = vmatmul.mubr.bf16.gmra.mrb[0].mxu0 %v2216
      %v2375 = vpop.f32.mrb[0].mxu0
      %v2376 = vadd.f32 0.0, %v2375
      %v2377 = vpop.f32.mrb[0].mxu0
      %v2378 = vpop.f32.mrb[0].mxu0
      %v2379 = vadd.f32 0.0, %v2378
      %v2380 = vpop.f32.mrb[0].mxu0
      %2381 = vdwg.mxu0
      %v2382 = vadd.f32 %v2088, %v2256
      %v2383 = vadd.f32 %v2089, %v2259
      %v2384 = vadd.f32 %v2090, %v2264
      %v2385 = vadd.f32 %v2091, %v2267
      %v2386 = vadd.f32 %v2092, %v2272
      %v2387 = vadd.f32 %v2093, %v2275
      %v2388 = vadd.f32 %v2094, %v2280
      %v2389 = vadd.f32 %v2095, %v2283
      %v2390 = vadd.f32 %v2096, %v2288
      %v2391 = vadd.f32 %v2097, %v2291
      %v2392 = vadd.f32 %v2098, %v2296
      %v2393 = vadd.f32 %v2099, %v2299
      %v2394 = vadd.f32 %v2100, %v2304
      %v2395 = vadd.f32 %v2101, %v2307
      %v2396 = vadd.f32 %v2102, %v2312
      %v2397 = vadd.f32 %v2103, %v2315
      %v2398 = vadd.f32 %v2104, %v2320
      %v2399 = vadd.f32 %v2105, %v2323
      %v2400 = vadd.f32 %v2106, %v2328
      %v2401 = vadd.f32 %v2107, %v2331
      %v2402 = vadd.f32 %v2108, %v2336
      %v2403 = vadd.f32 %v2109, %v2339
      %v2404 = vadd.f32 %v2110, %v2344
      %v2405 = vadd.f32 %v2111, %v2347
      %v2406 = vadd.f32 %v2112, %v2352
      %v2407 = vadd.f32 %v2113, %v2355
      %v2408 = vadd.f32 %v2114, %v2360
      %v2409 = vadd.f32 %v2115, %v2363
      %v2410 = vadd.f32 %v2116, %v2368
      %v2411 = vadd.f32 %v2117, %v2371
      %v2412 = vadd.f32 %v2118, %v2376
      %v2413 = vadd.f32 %v2119, %v2379
      %s2414 = scalar_lea.vmem [#allocation2], 48
      %v2415 = vld [vmem:[%s2414] sm:$0xff]
      %v2416 = vld [vmem:[%s2414 + $0x8] sm:$0xff]
      %v2417 = vld [vmem:[%s2414 + $0x18] sm:$0xff]
      %v2418 = vld [vmem:[%s2414 + $0x20] sm:$0xff]
      %v2419 = vld [vmem:[%s2414 + $0x30] sm:$0xff]
      %v2420 = vld [vmem:[%s2414 + $0x38] sm:$0xff]
      %v2421 = vld [vmem:[%s2414 + $0x48] sm:$0xff]
      %v2422 = vld [vmem:[%s2414 + $0x50] sm:$0xff]
      %v2423 = vld [vmem:[%s2414 + $0x60] sm:$0xff]
      %v2424 = vld [vmem:[%s2414 + $0x68] sm:$0xff]
      %v2425 = vld [vmem:[%s2414 + $0x78] sm:$0xff]
      %v2426 = vld [vmem:[%s2414 + $0x80] sm:$0xff]
      %v2427 = vld [vmem:[%s2414 + $0x90] sm:$0xff]
      %v2428 = vld [vmem:[%s2414 + $0x98] sm:$0xff]
      %v2429 = vld [vmem:[%s2414 + $0xa8] sm:$0xff]
      %v2430 = vld [vmem:[%s2414 + $0xb0] sm:$0xff]
      %v2431 = vld [vmem:[%s2414 + $0xc0] sm:$0xff]
      %v2432 = vld [vmem:[%s2414 + $0xc8] sm:$0xff]
      %v2433 = vld [vmem:[%s2414 + $0xd8] sm:$0xff]
      %v2434 = vld [vmem:[%s2414 + $0xe0] sm:$0xff]
      %v2435 = vld [vmem:[%s2414 + $0xf0] sm:$0xff]
      %v2436 = vld [vmem:[%s2414 + $0xf8] sm:$0xff]
      %v2437 = vld [vmem:[%s2414 + $0x108] sm:$0xff]
      %v2438 = vld [vmem:[%s2414 + $0x110] sm:$0xff]
      %v2439 = vld [vmem:[%s2414 + $0x120] sm:$0xff]
      %v2440 = vld [vmem:[%s2414 + $0x128] sm:$0xff]
      %v2441 = vld [vmem:[%s2414 + $0x138] sm:$0xff]
      %v2442 = vld [vmem:[%s2414 + $0x140] sm:$0xff]
      %v2443 = vld [vmem:[%s2414 + $0x150] sm:$0xff]
      %v2444 = vld [vmem:[%s2414 + $0x158] sm:$0xff]
      %v2445 = vld [vmem:[%s2414 + $0x168] sm:$0xff]
      %v2446 = vld [vmem:[%s2414 + $0x170] sm:$0xff]
      %v2447 = vpack.c.bf16 %v2416, %v2415
      %v2448 = vpack.c.bf16 %v2418, %v2417
      %v2449 = vpack.c.bf16 %v2420, %v2419
      %v2450 = vpack.c.bf16 %v2422, %v2421
      %v2451 = vpack.c.bf16 %v2424, %v2423
      %v2452 = vpack.c.bf16 %v2426, %v2425
      %v2453 = vpack.c.bf16 %v2428, %v2427
      %v2454 = vpack.c.bf16 %v2430, %v2429
      %v2455 = vpack.c.bf16 %v2432, %v2431
      %v2456 = vpack.c.bf16 %v2434, %v2433
      %v2457 = vpack.c.bf16 %v2436, %v2435
      %v2458 = vpack.c.bf16 %v2438, %v2437
      %v2459 = vpack.c.bf16 %v2440, %v2439
      %v2460 = vpack.c.bf16 %v2442, %v2441
      %v2461 = vpack.c.bf16 %v2444, %v2443
      %v2462 = vpack.c.bf16 %v2446, %v2445
      %s2463 = scalar_lea.vmem %s1, 12
      %v2464 = vld [vmem:[%s2463] sm:$0x3]
      %v2466 = vsel %vm622, %v2447, 0
      %v2469 = vsel %vm622, %v2448, 0
      %v2472 = vsel %vm622, %v2449, 0
      %v2475 = vsel %vm622, %v2450, 0
      %v2478 = vsel %vm622, %v2451, 0
      %v2481 = vsel %vm622, %v2452, 0
      %v2484 = vsel %vm622, %v2453, 0
      %v2487 = vsel %vm622, %v2454, 0
      %v2490 = vsel %vm622, %v2455, 0
      %v2493 = vsel %vm622, %v2456, 0
      %v2496 = vsel %vm622, %v2457, 0
      %v2499 = vsel %vm622, %v2458, 0
      %v2502 = vsel %vm622, %v2459, 0
      %v2505 = vsel %vm622, %v2460, 0
      %v2508 = vsel %vm622, %v2461, 0
      %v2511 = vsel %vm622, %v2462, 0
      %v2514 = vand.u32 %v2464, %v861
      %2516 = vmatprep.subr.bf16.mxu0 0
      %2517 = vmatpush1.bf16.msra.mxu0 %v2514
      %2518 = vmatprep.subr.bf16.mxu0 0
      %2519 = vmatpush1.bf16.msra.mxu0 0
      %2520 = vmatprep.subr.bf16.mxu0 0
      %2521 = vmatpush1.bf16.msra.mxu0 0
      %2522 = vmatprep.subr.bf16.mxu0 0
      %2523 = vmatpush1.bf16.msra.mxu0 0
      %2524 = vmatprep.subr.bf16.mxu0 0
      %2525 = vmatpush1.bf16.msra.mxu0 0
      %2526 = vmatprep.subr.bf16.mxu0 0
      %2527 = vmatpush1.bf16.msra.mxu0 0
      %2528 = vmatprep.subr.bf16.mxu0 0
      %2529 = vmatpush1.bf16.msra.mxu0 0
      %2530 = vmatprep.subr.bf16.mxu0 0
      %2531 = vmatpush1.bf16.msra.mxu0 0
      %2532 = vmatprep.subr.bf16.mxu0 0
      %2533 = vmatpush1.bf16.msra.mxu0 0
      %2534 = vmatprep.subr.bf16.mxu0 0
      %2535 = vmatpush1.bf16.msra.mxu0 0
      %2536 = vmatprep.subr.bf16.mxu0 0
      %2537 = vmatpush1.bf16.msra.mxu0 0
      %2538 = vmatprep.subr.bf16.mxu0 0
      %2539 = vmatpush1.bf16.msra.mxu0 0
      %2540 = vmatprep.subr.bf16.mxu0 0
      %2541 = vmatpush1.bf16.msra.mxu0 0
      %2542 = vmatprep.subr.bf16.mxu0 0
      %2543 = vmatpush1.bf16.msra.mxu0 0
      %2544 = vmatprep.subr.bf16.mxu0 0
      %2545 = vmatpush1.bf16.msra.mxu0 0
      %2546 = vmatprep.subr.bf16.mxu0 0
      %2547 = vmatpush1.bf16.msra.mxu0 0
      %2548 = vmatprep.mubr.bf16.mxu0 0
      %2549 = vmatmul.mubr.bf16.gmra.mrb[0].mxu0 %v2466
      %v2550 = vpop.f32.mrb[0].mxu0
      %v2551 = vadd.f32 0.0, %v2550
      %v2552 = vpop.f32.mrb[0].mxu0
      %v2553 = vpop.f32.mrb[0].mxu0
      %v2554 = vadd.f32 0.0, %v2553
      %v2555 = vpop.f32.mrb[0].mxu0
      %2556 = vmatprep.mubr.bf16.mxu0 0
      %2557 = vmatmul.mubr.bf16.gmra.mrb[0].mxu0 %v2469
      %v2558 = vpop.f32.mrb[0].mxu0
      %v2559 = vadd.f32 0.0, %v2558
      %v2560 = vpop.f32.mrb[0].mxu0
      %v2561 = vpop.f32.mrb[0].mxu0
      %v2562 = vadd.f32 0.0, %v2561
      %v2563 = vpop.f32.mrb[0].mxu0
      %2564 = vmatprep.mubr.bf16.mxu0 0
      %2565 = vmatmul.mubr.bf16.gmra.mrb[0].mxu0 %v2472
      %v2566 = vpop.f32.mrb[0].mxu0
      %v2567 = vadd.f32 0.0, %v2566
      %v2568 = vpop.f32.mrb[0].mxu0
      %v2569 = vpop.f32.mrb[0].mxu0
      %v2570 = vadd.f32 0.0, %v2569
      %v2571 = vpop.f32.mrb[0].mxu0
      %2572 = vmatprep.mubr.bf16.mxu0 0
      %2573 = vmatmul.mubr.bf16.gmra.mrb[0].mxu0 %v2475
      %v2574 = vpop.f32.mrb[0].mxu0
      %v2575 = vadd.f32 0.0, %v2574
      %v2576 = vpop.f32.mrb[0].mxu0
      %v2577 = vpop.f32.mrb[0].mxu0
      %v2578 = vadd.f32 0.0, %v2577
      %v2579 = vpop.f32.mrb[0].mxu0
      %2580 = vmatprep.mubr.bf16.mxu0 0
      %2581 = vmatmul.mubr.bf16.gmra.mrb[0].mxu0 %v2478
      %v2582 = vpop.f32.mrb[0].mxu0
      %v2583 = vadd.f32 0.0, %v2582
      %v2584 = vpop.f32.mrb[0].mxu0
      %v2585 = vpop.f32.mrb[0].mxu0
      %v2586 = vadd.f32 0.0, %v2585
      %v2587 = vpop.f32.mrb[0].mxu0
      %2588 = vmatprep.mubr.bf16.mxu0 0
      %2589 = vmatmul.mubr.bf16.gmra.mrb[0].mxu0 %v2481
      %v2590 = vpop.f32.mrb[0].mxu0
      %v2591 = vadd.f32 0.0, %v2590
      %v2592 = vpop.f32.mrb[0].mxu0
      %v2593 = vpop.f32.mrb[0].mxu0
      %v2594 = vadd.f32 0.0, %v2593
      %v2595 = vpop.f32.mrb[0].mxu0
      %2596 = vmatprep.mubr.bf16.mxu0 0
      %2597 = vmatmul.mubr.bf16.gmra.mrb[0].mxu0 %v2484
      %v2598 = vpop.f32.mrb[0].mxu0
      %v2599 = vadd.f32 0.0, %v2598
      %v2600 = vpop.f32.mrb[0].mxu0
      %v2601 = vpop.f32.mrb[0].mxu0
      %v2602 = vadd.f32 0.0, %v2601
      %v2603 = vpop.f32.mrb[0].mxu0
      %2604 = vmatprep.mubr.bf16.mxu0 0
      %2605 = vmatmul.mubr.bf16.gmra.mrb[0].mxu0 %v2487
      %v2606 = vpop.f32.mrb[0].mxu0
      %v2607 = vadd.f32 0.0, %v2606
      %v2608 = vpop.f32.mrb[0].mxu0
      %v2609 = vpop.f32.mrb[0].mxu0
      %v2610 = vadd.f32 0.0, %v2609
      %v2611 = vpop.f32.mrb[0].mxu0
      %2612 = vmatprep.mubr.bf16.mxu0 0
      %2613 = vmatmul.mubr.bf16.gmra.mrb[0].mxu0 %v2490
      %v2614 = vpop.f32.mrb[0].mxu0
      %v2615 = vadd.f32 0.0, %v2614
      %v2616 = vpop.f32.mrb[0].mxu0
      %v2617 = vpop.f32.mrb[0].mxu0
      %v2618 = vadd.f32 0.0, %v2617
      %v2619 = vpop.f32.mrb[0].mxu0
      %2620 = vmatprep.mubr.bf16.mxu0 0
      %2621 = vmatmul.mubr.bf16.gmra.mrb[0].mxu0 %v2493
      %v2622 = vpop.f32.mrb[0].mxu0
      %v2623 = vadd.f32 0.0, %v2622
      %v2624 = vpop.f32.mrb[0].mxu0
      %v2625 = vpop.f32.mrb[0].mxu0
      %v2626 = vadd.f32 0.0, %v2625
      %v2627 = vpop.f32.mrb[0].mxu0
      %2628 = vmatprep.mubr.bf16.mxu0 0
      %2629 = vmatmul.mubr.bf16.gmra.mrb[0].mxu0 %v2496
      %v2630 = vpop.f32.mrb[0].mxu0
      %v2631 = vadd.f32 0.0, %v2630
      %v2632 = vpop.f32.mrb[0].mxu0
      %v2633 = vpop.f32.mrb[0].mxu0
      %v2634 = vadd.f32 0.0, %v2633
      %v2635 = vpop.f32.mrb[0].mxu0
      %2636 = vmatprep.mubr.bf16.mxu0 0
      %2637 = vmatmul.mubr.bf16.gmra.mrb[0].mxu0 %v2499
      %v2638 = vpop.f32.mrb[0].mxu0
      %v2639 = vadd.f32 0.0, %v2638
      %v2640 = vpop.f32.mrb[0].mxu0
      %v2641 = vpop.f32.mrb[0].mxu0
      %v2642 = vadd.f32 0.0, %v2641
      %v2643 = vpop.f32.mrb[0].mxu0
      %2644 = vmatprep.mubr.bf16.mxu0 0
      %2645 = vmatmul.mubr.bf16.gmra.mrb[0].mxu0 %v2502
      %v2646 = vpop.f32.mrb[0].mxu0
      %v2647 = vadd.f32 0.0, %v2646
      %v2648 = vpop.f32.mrb[0].mxu0
      %v2649 = vpop.f32.mrb[0].mxu0
      %v2650 = vadd.f32 0.0, %v2649
      %v2651 = vpop.f32.mrb[0].mxu0
      %2652 = vmatprep.mubr.bf16.mxu0 0
      %2653 = vmatmul.mubr.bf16.gmra.mrb[0].mxu0 %v2505
      %v2654 = vpop.f32.mrb[0].mxu0
      %v2655 = vadd.f32 0.0, %v2654
      %v2656 = vpop.f32.mrb[0].mxu0
      %v2657 = vpop.f32.mrb[0].mxu0
      %v2658 = vadd.f32 0.0, %v2657
      %v2659 = vpop.f32.mrb[0].mxu0
      %2660 = vmatprep.mubr.bf16.mxu0 0
      %2661 = vmatmul.mubr.bf16.gmra.mrb[0].mxu0 %v2508
      %v2662 = vpop.f32.mrb[0].mxu0
      %v2663 = vadd.f32 0.0, %v2662
      %v2664 = vpop.f32.mrb[0].mxu0
      %v2665 = vpop.f32.mrb[0].mxu0
      %v2666 = vadd.f32 0.0, %v2665
      %v2667 = vpop.f32.mrb[0].mxu0
      %2668 = vmatprep.mubr.bf16.mxu0 0
      %2669 = vmatmul.mubr.bf16.gmra.mrb[0].mxu0 %v2511
      %v2670 = vpop.f32.mrb[0].mxu0
      %v2671 = vadd.f32 0.0, %v2670
      %v2672 = vpop.f32.mrb[0].mxu0
      %v2673 = vpop.f32.mrb[0].mxu0
      %v2674 = vadd.f32 0.0, %v2673
      %v2675 = vpop.f32.mrb[0].mxu0
      %2676 = vdwg.mxu0
      %v2677 = vadd.f32 %v2382, %v2551
      %v2678 = vadd.f32 %v2383, %v2554
      %v2679 = vadd.f32 %v2384, %v2559
      %v2680 = vadd.f32 %v2385, %v2562
      %v2681 = vadd.f32 %v2386, %v2567
      %v2682 = vadd.f32 %v2387, %v2570
      %v2683 = vadd.f32 %v2388, %v2575
      %v2684 = vadd.f32 %v2389, %v2578
      %v2685 = vadd.f32 %v2390, %v2583
      %v2686 = vadd.f32 %v2391, %v2586
      %v2687 = vadd.f32 %v2392, %v2591
      %v2688 = vadd.f32 %v2393, %v2594
      %v2689 = vadd.f32 %v2394, %v2599
      %v2690 = vadd.f32 %v2395, %v2602
      %v2691 = vadd.f32 %v2396, %v2607
      %v2692 = vadd.f32 %v2397, %v2610
      %v2693 = vadd.f32 %v2398, %v2615
      %v2694 = vadd.f32 %v2399, %v2618
      %v2695 = vadd.f32 %v2400, %v2623
      %v2696 = vadd.f32 %v2401, %v2626
      %v2697 = vadd.f32 %v2402, %v2631
      %v2698 = vadd.f32 %v2403, %v2634
      %v2699 = vadd.f32 %v2404, %v2639
      %v2700 = vadd.f32 %v2405, %v2642
      %v2701 = vadd.f32 %v2406, %v2647
      %v2702 = vadd.f32 %v2407, %v2650
      %v2703 = vadd.f32 %v2408, %v2655
      %v2704 = vadd.f32 %v2409, %v2658
      %v2705 = vadd.f32 %v2410, %v2663
      %v2706 = vadd.f32 %v2411, %v2666
      %v2707 = vadd.f32 %v2412, %v2671
      %v2708 = vadd.f32 %v2413, %v2674
      %v2709 = vld [vmem:[%s2414 + $0x1] sm:$0xff]
      %v2710 = vld [vmem:[%s2414 + $0x9] sm:$0xff]
      %v2711 = vld [vmem:[%s2414 + $0x19] sm:$0xff]
      %v2712 = vld [vmem:[%s2414 + $0x21] sm:$0xff]
      %v2713 = vld [vmem:[%s2414 + $0x31] sm:$0xff]
      %v2714 = vld [vmem:[%s2414 + $0x39] sm:$0xff]
      %v2715 = vld [vmem:[%s2414 + $0x49] sm:$0xff]
      %v2716 = vld [vmem:[%s2414 + $0x51] sm:$0xff]
      %v2717 = vld [vmem:[%s2414 + $0x61] sm:$0xff]
      %v2718 = vld [vmem:[%s2414 + $0x69] sm:$0xff]
      %v2719 = vld [vmem:[%s2414 + $0x79] sm:$0xff]
      %v2720 = vld [vmem:[%s2414 + $0x81] sm:$0xff]
      %v2721 = vld [vmem:[%s2414 + $0x91] sm:$0xff]
      %v2722 = vld [vmem:[%s2414 + $0x99] sm:$0xff]
      %v2723 = vld [vmem:[%s2414 + $0xa9] sm:$0xff]
      %v2724 = vld [vmem:[%s2414 + $0xb1] sm:$0xff]
      %v2725 = vld [vmem:[%s2414 + $0xc1] sm:$0xff]
      %v2726 = vld [vmem:[%s2414 + $0xc9] sm:$0xff]
      %v2727 = vld [vmem:[%s2414 + $0xd9] sm:$0xff]
      %v2728 = vld [vmem:[%s2414 + $0xe1] sm:$0xff]
      %v2729 = vld [vmem:[%s2414 + $0xf1] sm:$0xff]
      %v2730 = vld [vmem:[%s2414 + $0xf9] sm:$0xff]
      %v2731 = vld [vmem:[%s2414 + $0x109] sm:$0xff]
      %v2732 = vld [vmem:[%s2414 + $0x111] sm:$0xff]
      %v2733 = vld [vmem:[%s2414 + $0x121] sm:$0xff]
      %v2734 = vld [vmem:[%s2414 + $0x129] sm:$0xff]
      %v2735 = vld [vmem:[%s2414 + $0x139] sm:$0xff]
      %v2736 = vld [vmem:[%s2414 + $0x141] sm:$0xff]
      %v2737 = vld [vmem:[%s2414 + $0x151] sm:$0xff]
      %v2738 = vld [vmem:[%s2414 + $0x159] sm:$0xff]
      %v2739 = vld [vmem:[%s2414 + $0x169] sm:$0xff]
      %v2740 = vld [vmem:[%s2414 + $0x171] sm:$0xff]
      %v2741 = vpack.c.bf16 %v2710, %v2709
      %v2742 = vpack.c.bf16 %v2712, %v2711
      %v2743 = vpack.c.bf16 %v2714, %v2713
      %v2744 = vpack.c.bf16 %v2716, %v2715
      %v2745 = vpack.c.bf16 %v2718, %v2717
      %v2746 = vpack.c.bf16 %v2720, %v2719
      %v2747 = vpack.c.bf16 %v2722, %v2721
      %v2748 = vpack.c.bf16 %v2724, %v2723
      %v2749 = vpack.c.bf16 %v2726, %v2725
      %v2750 = vpack.c.bf16 %v2728, %v2727
      %v2751 = vpack.c.bf16 %v2730, %v2729
      %v2752 = vpack.c.bf16 %v2732, %v2731
      %v2753 = vpack.c.bf16 %v2734, %v2733
      %v2754 = vpack.c.bf16 %v2736, %v2735
      %v2755 = vpack.c.bf16 %v2738, %v2737
      %v2756 = vpack.c.bf16 %v2740, %v2739
      %s2757 = scalar_lea.vmem %s1, 14
      %v2758 = vld [vmem:[%s2757] sm:$0x3]
      %v2760 = vsel %vm622, %v2741, 0
      %v2763 = vsel %vm622, %v2742, 0
      %v2766 = vsel %vm622, %v2743, 0
      %v2769 = vsel %vm622, %v2744, 0
      %v2772 = vsel %vm622, %v2745, 0
      %v2775 = vsel %vm622, %v2746, 0
      %v2778 = vsel %vm622, %v2747, 0
      %v2781 = vsel %vm622, %v2748, 0
      %v2784 = vsel %vm622, %v2749, 0
      %v2787 = vsel %vm622, %v2750, 0
      %v2790 = vsel %vm622, %v2751, 0
      %v2793 = vsel %vm622, %v2752, 0
      %v2796 = vsel %vm622, %v2753, 0
      %v2799 = vsel %vm622, %v2754, 0
      %v2802 = vsel %vm622, %v2755, 0
      %v2805 = vsel %vm622, %v2756, 0
      %v2808 = vand.u32 %v2758, %v861
      %2810 = vmatprep.subr.bf16.mxu0 0
      %2811 = vmatpush1.bf16.msra.mxu0 %v2808
      %2812 = vmatprep.subr.bf16.mxu0 0
      %2813 = vmatpush1.bf16.msra.mxu0 0
      %2814 = vmatprep.subr.bf16.mxu0 0
      %2815 = vmatpush1.bf16.msra.mxu0 0
      %2816 = vmatprep.subr.bf16.mxu0 0
      %2817 = vmatpush1.bf16.msra.mxu0 0
      %2818 = vmatprep.subr.bf16.mxu0 0
      %2819 = vmatpush1.bf16.msra.mxu0 0
      %2820 = vmatprep.subr.bf16.mxu0 0
      %2821 = vmatpush1.bf16.msra.mxu0 0
      %2822 = vmatprep.subr.bf16.mxu0 0
      %2823 = vmatpush1.bf16.msra.mxu0 0
      %2824 = vmatprep.subr.bf16.mxu0 0
      %2825 = vmatpush1.bf16.msra.mxu0 0
      %2826 = vmatprep.subr.bf16.mxu0 0
      %2827 = vmatpush1.bf16.msra.mxu0 0
      %2828 = vmatprep.subr.bf16.mxu0 0
      %2829 = vmatpush1.bf16.msra.mxu0 0
      %2830 = vmatprep.subr.bf16.mxu0 0
      %2831 = vmatpush1.bf16.msra.mxu0 0
      %2832 = vmatprep.subr.bf16.mxu0 0
      %2833 = vmatpush1.bf16.msra.mxu0 0
      %2834 = vmatprep.subr.bf16.mxu0 0
      %2835 = vmatpush1.bf16.msra.mxu0 0
      %2836 = vmatprep.subr.bf16.mxu0 0
      %2837 = vmatpush1.bf16.msra.mxu0 0
      %2838 = vmatprep.subr.bf16.mxu0 0
      %2839 = vmatpush1.bf16.msra.mxu0 0
      %2840 = vmatprep.subr.bf16.mxu0 0
      %2841 = vmatpush1.bf16.msra.mxu0 0
      %2842 = vmatprep.mubr.bf16.mxu0 0
      %2843 = vmatmul.mubr.bf16.gmra.mrb[0].mxu0 %v2760
      %v2844 = vpop.f32.mrb[0].mxu0
      %v2845 = vadd.f32 0.0, %v2844
      %v2846 = vpop.f32.mrb[0].mxu0
      %v2847 = vpop.f32.mrb[0].mxu0
      %v2848 = vadd.f32 0.0, %v2847
      %v2849 = vpop.f32.mrb[0].mxu0
      %2850 = vmatprep.mubr.bf16.mxu0 0
      %2851 = vmatmul.mubr.bf16.gmra.mrb[0].mxu0 %v2763
      %v2852 = vpop.f32.mrb[0].mxu0
      %v2853 = vadd.f32 0.0, %v2852
      %v2854 = vpop.f32.mrb[0].mxu0
      %v2855 = vpop.f32.mrb[0].mxu0
      %v2856 = vadd.f32 0.0, %v2855
      %v2857 = vpop.f32.mrb[0].mxu0
      %2858 = vmatprep.mubr.bf16.mxu0 0
      %2859 = vmatmul.mubr.bf16.gmra.mrb[0].mxu0 %v2766
      %v2860 = vpop.f32.mrb[0].mxu0
      %v2861 = vadd.f32 0.0, %v2860
      %v2862 = vpop.f32.mrb[0].mxu0
      %v2863 = vpop.f32.mrb[0].mxu0
      %v2864 = vadd.f32 0.0, %v2863
      %v2865 = vpop.f32.mrb[0].mxu0
      %2866 = vmatprep.mubr.bf16.mxu0 0
      %2867 = vmatmul.mubr.bf16.gmra.mrb[0].mxu0 %v2769
      %v2868 = vpop.f32.mrb[0].mxu0
      %v2869 = vadd.f32 0.0, %v2868
      %v2870 = vpop.f32.mrb[0].mxu0
      %v2871 = vpop.f32.mrb[0].mxu0
      %v2872 = vadd.f32 0.0, %v2871
      %v2873 = vpop.f32.mrb[0].mxu0
      %2874 = vmatprep.mubr.bf16.mxu0 0
      %2875 = vmatmul.mubr.bf16.gmra.mrb[0].mxu0 %v2772
      %v2876 = vpop.f32.mrb[0].mxu0
      %v2877 = vadd.f32 0.0, %v2876
      %v2878 = vpop.f32.mrb[0].mxu0
      %v2879 = vpop.f32.mrb[0].mxu0
      %v2880 = vadd.f32 0.0, %v2879
      %v2881 = vpop.f32.mrb[0].mxu0
      %2882 = vmatprep.mubr.bf16.mxu0 0
      %2883 = vmatmul.mubr.bf16.gmra.mrb[0].mxu0 %v2775
      %v2884 = vpop.f32.mrb[0].mxu0
      %v2885 = vadd.f32 0.0, %v2884
      %v2886 = vpop.f32.mrb[0].mxu0
      %v2887 = vpop.f32.mrb[0].mxu0
      %v2888 = vadd.f32 0.0, %v2887
      %v2889 = vpop.f32.mrb[0].mxu0
      %2890 = vmatprep.mubr.bf16.mxu0 0
      %2891 = vmatmul.mubr.bf16.gmra.mrb[0].mxu0 %v2778
      %v2892 = vpop.f32.mrb[0].mxu0
      %v2893 = vadd.f32 0.0, %v2892
      %v2894 = vpop.f32.mrb[0].mxu0
      %v2895 = vpop.f32.mrb[0].mxu0
      %v2896 = vadd.f32 0.0, %v2895
      %v2897 = vpop.f32.mrb[0].mxu0
      %2898 = vmatprep.mubr.bf16.mxu0 0
      %2899 = vmatmul.mubr.bf16.gmra.mrb[0].mxu0 %v2781
      %v2900 = vpop.f32.mrb[0].mxu0
      %v2901 = vadd.f32 0.0, %v2900
      %v2902 = vpop.f32.mrb[0].mxu0
      %v2903 = vpop.f32.mrb[0].mxu0
      %v2904 = vadd.f32 0.0, %v2903
      %v2905 = vpop.f32.mrb[0].mxu0
      %2906 = vmatprep.mubr.bf16.mxu0 0
      %2907 = vmatmul.mubr.bf16.gmra.mrb[0].mxu0 %v2784
      %v2908 = vpop.f32.mrb[0].mxu0
      %v2909 = vadd.f32 0.0, %v2908
      %v2910 = vpop.f32.mrb[0].mxu0
      %v2911 = vpop.f32.mrb[0].mxu0
      %v2912 = vadd.f32 0.0, %v2911
      %v2913 = vpop.f32.mrb[0].mxu0
      %2914 = vmatprep.mubr.bf16.mxu0 0
      %2915 = vmatmul.mubr.bf16.gmra.mrb[0].mxu0 %v2787
      %v2916 = vpop.f32.mrb[0].mxu0
      %v2917 = vadd.f32 0.0, %v2916
      %v2918 = vpop.f32.mrb[0].mxu0
      %v2919 = vpop.f32.mrb[0].mxu0
      %v2920 = vadd.f32 0.0, %v2919
      %v2921 = vpop.f32.mrb[0].mxu0
      %2922 = vmatprep.mubr.bf16.mxu0 0
      %2923 = vmatmul.mubr.bf16.gmra.mrb[0].mxu0 %v2790
      %v2924 = vpop.f32.mrb[0].mxu0
      %v2925 = vadd.f32 0.0, %v2924
      %v2926 = vpop.f32.mrb[0].mxu0
      %v2927 = vpop.f32.mrb[0].mxu0
      %v2928 = vadd.f32 0.0, %v2927
      %v2929 = vpop.f32.mrb[0].mxu0
      %2930 = vmatprep.mubr.bf16.mxu0 0
      %2931 = vmatmul.mubr.bf16.gmra.mrb[0].mxu0 %v2793
      %v2932 = vpop.f32.mrb[0].mxu0
      %v2933 = vadd.f32 0.0, %v2932
      %v2934 = vpop.f32.mrb[0].mxu0
      %v2935 = vpop.f32.mrb[0].mxu0
      %v2936 = vadd.f32 0.0, %v2935
      %v2937 = vpop.f32.mrb[0].mxu0
      %2938 = vmatprep.mubr.bf16.mxu0 0
      %2939 = vmatmul.mubr.bf16.gmra.mrb[0].mxu0 %v2796
      %v2940 = vpop.f32.mrb[0].mxu0
      %v2941 = vadd.f32 0.0, %v2940
      %v2942 = vpop.f32.mrb[0].mxu0
      %v2943 = vpop.f32.mrb[0].mxu0
      %v2944 = vadd.f32 0.0, %v2943
      %v2945 = vpop.f32.mrb[0].mxu0
      %2946 = vmatprep.mubr.bf16.mxu0 0
      %2947 = vmatmul.mubr.bf16.gmra.mrb[0].mxu0 %v2799
      %v2948 = vpop.f32.mrb[0].mxu0
      %v2949 = vadd.f32 0.0, %v2948
      %v2950 = vpop.f32.mrb[0].mxu0
      %v2951 = vpop.f32.mrb[0].mxu0
      %v2952 = vadd.f32 0.0, %v2951
      %v2953 = vpop.f32.mrb[0].mxu0
      %2954 = vmatprep.mubr.bf16.mxu0 0
      %2955 = vmatmul.mubr.bf16.gmra.mrb[0].mxu0 %v2802
      %v2956 = vpop.f32.mrb[0].mxu0
      %v2957 = vadd.f32 0.0, %v2956
      %v2958 = vpop.f32.mrb[0].mxu0
      %v2959 = vpop.f32.mrb[0].mxu0
      %v2960 = vadd.f32 0.0, %v2959
      %v2961 = vpop.f32.mrb[0].mxu0
      %2962 = vmatprep.mubr.bf16.mxu0 0
      %2963 = vmatmul.mubr.bf16.gmra.mrb[0].mxu0 %v2805
      %v2964 = vpop.f32.mrb[0].mxu0
      %v2965 = vadd.f32 0.0, %v2964
      %v2966 = vpop.f32.mrb[0].mxu0
      %v2967 = vpop.f32.mrb[0].mxu0
      %v2968 = vadd.f32 0.0, %v2967
      %v2969 = vpop.f32.mrb[0].mxu0
      %2970 = vdwg.mxu0
      %v2971 = vadd.f32 %v2677, %v2845
      %v2972 = vadd.f32 %v2678, %v2848
      %v2973 = vadd.f32 %v2679, %v2853
      %v2974 = vadd.f32 %v2680, %v2856
      %v2975 = vadd.f32 %v2681, %v2861
      %v2976 = vadd.f32 %v2682, %v2864
      %v2977 = vadd.f32 %v2683, %v2869
      %v2978 = vadd.f32 %v2684, %v2872
      %v2979 = vadd.f32 %v2685, %v2877
      %v2980 = vadd.f32 %v2686, %v2880
      %v2981 = vadd.f32 %v2687, %v2885
      %v2982 = vadd.f32 %v2688, %v2888
      %v2983 = vadd.f32 %v2689, %v2893
      %v2984 = vadd.f32 %v2690, %v2896
      %v2985 = vadd.f32 %v2691, %v2901
      %v2986 = vadd.f32 %v2692, %v2904
      %v2987 = vadd.f32 %v2693, %v2909
      %v2988 = vadd.f32 %v2694, %v2912
      %v2989 = vadd.f32 %v2695, %v2917
      %v2990 = vadd.f32 %v2696, %v2920
      %v2991 = vadd.f32 %v2697, %v2925
      %v2992 = vadd.f32 %v2698, %v2928
      %v2993 = vadd.f32 %v2699, %v2933
      %v2994 = vadd.f32 %v2700, %v2936
      %v2995 = vadd.f32 %v2701, %v2941
      %v2996 = vadd.f32 %v2702, %v2944
      %v2997 = vadd.f32 %v2703, %v2949
      %v2998 = vadd.f32 %v2704, %v2952
      %v2999 = vadd.f32 %v2705, %v2957
      %v3000 = vadd.f32 %v2706, %v2960
      %v3001 = vadd.f32 %v2707, %v2965
      %v3002 = vadd.f32 %v2708, %v2968
      %v3003 = vld [vmem:[%s2414 + $0x2] sm:$0xff]
      %v3004 = vld [vmem:[%s2414 + $0xa] sm:$0xff]
      %v3005 = vld [vmem:[%s2414 + $0x1a] sm:$0xff]
      %v3006 = vld [vmem:[%s2414 + $0x22] sm:$0xff]
      %v3007 = vld [vmem:[%s2414 + $0x32] sm:$0xff]
      %v3008 = vld [vmem:[%s2414 + $0x3a] sm:$0xff]
      %v3009 = vld [vmem:[%s2414 + $0x4a] sm:$0xff]
      %v3010 = vld [vmem:[%s2414 + $0x52] sm:$0xff]
      %v3011 = vld [vmem:[%s2414 + $0x62] sm:$0xff]
      %v3012 = vld [vmem:[%s2414 + $0x6a] sm:$0xff]
      %v3013 = vld [vmem:[%s2414 + $0x7a] sm:$0xff]
      %v3014 = vld [vmem:[%s2414 + $0x82] sm:$0xff]
      %v3015 = vld [vmem:[%s2414 + $0x92] sm:$0xff]
      %v3016 = vld [vmem:[%s2414 + $0x9a] sm:$0xff]
      %v3017 = vld [vmem:[%s2414 + $0xaa] sm:$0xff]
      %v3018 = vld [vmem:[%s2414 + $0xb2] sm:$0xff]
      %v3019 = vld [vmem:[%s2414 + $0xc2] sm:$0xff]
      %v3020 = vld [vmem:[%s2414 + $0xca] sm:$0xff]
      %v3021 = vld [vmem:[%s2414 + $0xda] sm:$0xff]
      %v3022 = vld [vmem:[%s2414 + $0xe2] sm:$0xff]
      %v3023 = vld [vmem:[%s2414 + $0xf2] sm:$0xff]
      %v3024 = vld [vmem:[%s2414 + $0xfa] sm:$0xff]
      %v3025 = vld [vmem:[%s2414 + $0x10a] sm:$0xff]
      %v3026 = vld [vmem:[%s2414 + $0x112] sm:$0xff]
      %v3027 = vld [vmem:[%s2414 + $0x122] sm:$0xff]
      %v3028 = vld [vmem:[%s2414 + $0x12a] sm:$0xff]
      %v3029 = vld [vmem:[%s2414 + $0x13a] sm:$0xff]
      %v3030 = vld [vmem:[%s2414 + $0x142] sm:$0xff]
      %v3031 = vld [vmem:[%s2414 + $0x152] sm:$0xff]
      %v3032 = vld [vmem:[%s2414 + $0x15a] sm:$0xff]
      %v3033 = vld [vmem:[%s2414 + $0x16a] sm:$0xff]
      %v3034 = vld [vmem:[%s2414 + $0x172] sm:$0xff]
      %v3035 = vpack.c.bf16 %v3004, %v3003
      %v3036 = vpack.c.bf16 %v3006, %v3005
      %v3037 = vpack.c.bf16 %v3008, %v3007
      %v3038 = vpack.c.bf16 %v3010, %v3009
      %v3039 = vpack.c.bf16 %v3012, %v3011
      %v3040 = vpack.c.bf16 %v3014, %v3013
      %v3041 = vpack.c.bf16 %v3016, %v3015
      %v3042 = vpack.c.bf16 %v3018, %v3017
      %v3043 = vpack.c.bf16 %v3020, %v3019
      %v3044 = vpack.c.bf16 %v3022, %v3021
      %v3045 = vpack.c.bf16 %v3024, %v3023
      %v3046 = vpack.c.bf16 %v3026, %v3025
      %v3047 = vpack.c.bf16 %v3028, %v3027
      %v3048 = vpack.c.bf16 %v3030, %v3029
      %v3049 = vpack.c.bf16 %v3032, %v3031
      %v3050 = vpack.c.bf16 %v3034, %v3033
      %s3051 = scalar_lea.vmem %s1, 16
      %v3052 = vld [vmem:[%s3051] sm:$0x3]
      %v3054 = vsel %vm622, %v3035, 0
      %v3057 = vsel %vm622, %v3036, 0
      %v3060 = vsel %vm622, %v3037, 0
      %v3063 = vsel %vm622, %v3038, 0
      %v3066 = vsel %vm622, %v3039, 0
      %v3069 = vsel %vm622, %v3040, 0
      %v3072 = vsel %vm622, %v3041, 0
      %v3075 = vsel %vm622, %v3042, 0
      %v3078 = vsel %vm622, %v3043, 0
      %v3081 = vsel %vm622, %v3044, 0
      %v3084 = vsel %vm622, %v3045, 0
      %v3087 = vsel %vm622, %v3046, 0
      %v3090 = vsel %vm622, %v3047, 0
      %v3093 = vsel %vm622, %v3048, 0
      %v3096 = vsel %vm622, %v3049, 0
      %v3099 = vsel %vm622, %v3050, 0
      %v3102 = vand.u32 %v3052, %v861
      %3104 = vmatprep.subr.bf16.mxu0 0
      %3105 = vmatpush1.bf16.msra.mxu0 %v3102
      %3106 = vmatprep.subr.bf16.mxu0 0
      %3107 = vmatpush1.bf16.msra.mxu0 0
      %3108 = vmatprep.subr.bf16.mxu0 0
      %3109 = vmatpush1.bf16.msra.mxu0 0
      %3110 = vmatprep.subr.bf16.mxu0 0
      %3111 = vmatpush1.bf16.msra.mxu0 0
      %3112 = vmatprep.subr.bf16.mxu0 0
      %3113 = vmatpush1.bf16.msra.mxu0 0
      %3114 = vmatprep.subr.bf16.mxu0 0
      %3115 = vmatpush1.bf16.msra.mxu0 0
      %3116 = vmatprep.subr.bf16.mxu0 0
      %3117 = vmatpush1.bf16.msra.mxu0 0
      %3118 = vmatprep.subr.bf16.mxu0 0
      %3119 = vmatpush1.bf16.msra.mxu0 0
      %3120 = vmatprep.subr.bf16.mxu0 0
      %3121 = vmatpush1.bf16.msra.mxu0 0
      %3122 = vmatprep.subr.bf16.mxu0 0
      %3123 = vmatpush1.bf16.msra.mxu0 0
      %3124 = vmatprep.subr.bf16.mxu0 0
      %3125 = vmatpush1.bf16.msra.mxu0 0
      %3126 = vmatprep.subr.bf16.mxu0 0
      %3127 = vmatpush1.bf16.msra.mxu0 0
      %3128 = vmatprep.subr.bf16.mxu0 0
      %3129 = vmatpush1.bf16.msra.mxu0 0
      %3130 = vmatprep.subr.bf16.mxu0 0
      %3131 = vmatpush1.bf16.msra.mxu0 0
      %3132 = vmatprep.subr.bf16.mxu0 0
      %3133 = vmatpush1.bf16.msra.mxu0 0
      %3134 = vmatprep.subr.bf16.mxu0 0
      %3135 = vmatpush1.bf16.msra.mxu0 0
      %3136 = vmatprep.mubr.bf16.mxu0 0
      %3137 = vmatmul.mubr.bf16.gmra.mrb[0].mxu0 %v3054
      %v3138 = vpop.f32.mrb[0].mxu0
      %v3139 = vadd.f32 0.0, %v3138
      %v3140 = vpop.f32.mrb[0].mxu0
      %v3141 = vpop.f32.mrb[0].mxu0
      %v3142 = vadd.f32 0.0, %v3141
      %v3143 = vpop.f32.mrb[0].mxu0
      %3144 = vmatprep.mubr.bf16.mxu0 0
      %3145 = vmatmul.mubr.bf16.gmra.mrb[0].mxu0 %v3057
      %v3146 = vpop.f32.mrb[0].mxu0
      %v3147 = vadd.f32 0.0, %v3146
      %v3148 = vpop.f32.mrb[0].mxu0
      %v3149 = vpop.f32.mrb[0].mxu0
      %v3150 = vadd.f32 0.0, %v3149
      %v3151 = vpop.f32.mrb[0].mxu0
      %3152 = vmatprep.mubr.bf16.mxu0 0
      %3153 = vmatmul.mubr.bf16.gmra.mrb[0].mxu0 %v3060
      %v3154 = vpop.f32.mrb[0].mxu0
      %v3155 = vadd.f32 0.0, %v3154
      %v3156 = vpop.f32.mrb[0].mxu0
      %v3157 = vpop.f32.mrb[0].mxu0
      %v3158 = vadd.f32 0.0, %v3157
      %v3159 = vpop.f32.mrb[0].mxu0
      %3160 = vmatprep.mubr.bf16.mxu0 0
      %3161 = vmatmul.mubr.bf16.gmra.mrb[0].mxu0 %v3063
      %v3162 = vpop.f32.mrb[0].mxu0
      %v3163 = vadd.f32 0.0, %v3162
      %v3164 = vpop.f32.mrb[0].mxu0
      %v3165 = vpop.f32.mrb[0].mxu0
      %v3166 = vadd.f32 0.0, %v3165
      %v3167 = vpop.f32.mrb[0].mxu0
      %3168 = vmatprep.mubr.bf16.mxu0 0
      %3169 = vmatmul.mubr.bf16.gmra.mrb[0].mxu0 %v3066
      %v3170 = vpop.f32.mrb[0].mxu0
      %v3171 = vadd.f32 0.0, %v3170
      %v3172 = vpop.f32.mrb[0].mxu0
      %v3173 = vpop.f32.mrb[0].mxu0
      %v3174 = vadd.f32 0.0, %v3173
      %v3175 = vpop.f32.mrb[0].mxu0
      %3176 = vmatprep.mubr.bf16.mxu0 0
      %3177 = vmatmul.mubr.bf16.gmra.mrb[0].mxu0 %v3069
      %v3178 = vpop.f32.mrb[0].mxu0
      %v3179 = vadd.f32 0.0, %v3178
      %v3180 = vpop.f32.mrb[0].mxu0
      %v3181 = vpop.f32.mrb[0].mxu0
      %v3182 = vadd.f32 0.0, %v3181
      %v3183 = vpop.f32.mrb[0].mxu0
      %3184 = vmatprep.mubr.bf16.mxu0 0
      %3185 = vmatmul.mubr.bf16.gmra.mrb[0].mxu0 %v3072
      %v3186 = vpop.f32.mrb[0].mxu0
      %v3187 = vadd.f32 0.0, %v3186
      %v3188 = vpop.f32.mrb[0].mxu0
      %v3189 = vpop.f32.mrb[0].mxu0
      %v3190 = vadd.f32 0.0, %v3189
      %v3191 = vpop.f32.mrb[0].mxu0
      %3192 = vmatprep.mubr.bf16.mxu0 0
      %3193 = vmatmul.mubr.bf16.gmra.mrb[0].mxu0 %v3075
      %v3194 = vpop.f32.mrb[0].mxu0
      %v3195 = vadd.f32 0.0, %v3194
      %v3196 = vpop.f32.mrb[0].mxu0
      %v3197 = vpop.f32.mrb[0].mxu0
      %v3198 = vadd.f32 0.0, %v3197
      %v3199 = vpop.f32.mrb[0].mxu0
      %3200 = vmatprep.mubr.bf16.mxu0 0
      %3201 = vmatmul.mubr.bf16.gmra.mrb[0].mxu0 %v3078
      %v3202 = vpop.f32.mrb[0].mxu0
      %v3203 = vadd.f32 0.0, %v3202
      %v3204 = vpop.f32.mrb[0].mxu0
      %v3205 = vpop.f32.mrb[0].mxu0
      %v3206 = vadd.f32 0.0, %v3205
      %v3207 = vpop.f32.mrb[0].mxu0
      %3208 = vmatprep.mubr.bf16.mxu0 0
      %3209 = vmatmul.mubr.bf16.gmra.mrb[0].mxu0 %v3081
      %v3210 = vpop.f32.mrb[0].mxu0
      %v3211 = vadd.f32 0.0, %v3210
      %v3212 = vpop.f32.mrb[0].mxu0
      %v3213 = vpop.f32.mrb[0].mxu0
      %v3214 = vadd.f32 0.0, %v3213
      %v3215 = vpop.f32.mrb[0].mxu0
      %3216 = vmatprep.mubr.bf16.mxu0 0
      %3217 = vmatmul.mubr.bf16.gmra.mrb[0].mxu0 %v3084
      %v3218 = vpop.f32.mrb[0].mxu0
      %v3219 = vadd.f32 0.0, %v3218
      %v3220 = vpop.f32.mrb[0].mxu0
      %v3221 = vpop.f32.mrb[0].mxu0
      %v3222 = vadd.f32 0.0, %v3221
      %v3223 = vpop.f32.mrb[0].mxu0
      %3224 = vmatprep.mubr.bf16.mxu0 0
      %3225 = vmatmul.mubr.bf16.gmra.mrb[0].mxu0 %v3087
      %v3226 = vpop.f32.mrb[0].mxu0
      %v3227 = vadd.f32 0.0, %v3226
      %v3228 = vpop.f32.mrb[0].mxu0
      %v3229 = vpop.f32.mrb[0].mxu0
      %v3230 = vadd.f32 0.0, %v3229
      %v3231 = vpop.f32.mrb[0].mxu0
      %3232 = vmatprep.mubr.bf16.mxu0 0
      %3233 = vmatmul.mubr.bf16.gmra.mrb[0].mxu0 %v3090
      %v3234 = vpop.f32.mrb[0].mxu0
      %v3235 = vadd.f32 0.0, %v3234
      %v3236 = vpop.f32.mrb[0].mxu0
      %v3237 = vpop.f32.mrb[0].mxu0
      %v3238 = vadd.f32 0.0, %v3237
      %v3239 = vpop.f32.mrb[0].mxu0
      %3240 = vmatprep.mubr.bf16.mxu0 0
      %3241 = vmatmul.mubr.bf16.gmra.mrb[0].mxu0 %v3093
      %v3242 = vpop.f32.mrb[0].mxu0
      %v3243 = vadd.f32 0.0, %v3242
      %v3244 = vpop.f32.mrb[0].mxu0
      %v3245 = vpop.f32.mrb[0].mxu0
      %v3246 = vadd.f32 0.0, %v3245
      %v3247 = vpop.f32.mrb[0].mxu0
      %3248 = vmatprep.mubr.bf16.mxu0 0
      %3249 = vmatmul.mubr.bf16.gmra.mrb[0].mxu0 %v3096
      %v3250 = vpop.f32.mrb[0].mxu0
      %v3251 = vadd.f32 0.0, %v3250
      %v3252 = vpop.f32.mrb[0].mxu0
      %v3253 = vpop.f32.mrb[0].mxu0
      %v3254 = vadd.f32 0.0, %v3253
      %v3255 = vpop.f32.mrb[0].mxu0
      %3256 = vmatprep.mubr.bf16.mxu0 0
      %3257 = vmatmul.mubr.bf16.gmra.mrb[0].mxu0 %v3099
      %v3258 = vpop.f32.mrb[0].mxu0
      %v3259 = vadd.f32 0.0, %v3258
      %v3260 = vpop.f32.mrb[0].mxu0
      %v3261 = vpop.f32.mrb[0].mxu0
      %v3262 = vadd.f32 0.0, %v3261
      %v3263 = vpop.f32.mrb[0].mxu0
      %3264 = vdwg.mxu0
      %v3265 = vadd.f32 %v2971, %v3139
      %v3266 = vadd.f32 %v2972, %v3142
      %v3267 = vadd.f32 %v2973, %v3147
      %v3268 = vadd.f32 %v2974, %v3150
      %v3269 = vadd.f32 %v2975, %v3155
      %v3270 = vadd.f32 %v2976, %v3158
      %v3271 = vadd.f32 %v2977, %v3163
      %v3272 = vadd.f32 %v2978, %v3166
      %v3273 = vadd.f32 %v2979, %v3171
      %v3274 = vadd.f32 %v2980, %v3174
      %v3275 = vadd.f32 %v2981, %v3179
      %v3276 = vadd.f32 %v2982, %v3182
      %v3277 = vadd.f32 %v2983, %v3187
      %v3278 = vadd.f32 %v2984, %v3190
      %v3279 = vadd.f32 %v2985, %v3195
      %v3280 = vadd.f32 %v2986, %v3198
      %v3281 = vadd.f32 %v2987, %v3203
      %v3282 = vadd.f32 %v2988, %v3206
      %v3283 = vadd.f32 %v2989, %v3211
      %v3284 = vadd.f32 %v2990, %v3214
      %v3285 = vadd.f32 %v2991, %v3219
      %v3286 = vadd.f32 %v2992, %v3222
      %v3287 = vadd.f32 %v2993, %v3227
      %v3288 = vadd.f32 %v2994, %v3230
      %v3289 = vadd.f32 %v2995, %v3235
      %v3290 = vadd.f32 %v2996, %v3238
      %v3291 = vadd.f32 %v2997, %v3243
      %v3292 = vadd.f32 %v2998, %v3246
      %v3293 = vadd.f32 %v2999, %v3251
      %v3294 = vadd.f32 %v3000, %v3254
      %v3295 = vadd.f32 %v3001, %v3259
      %v3296 = vadd.f32 %v3002, %v3262
      %v3297 = vld [vmem:[%s2] sm:$0x1]
      %v3299 = vlaneseq
      %v3300 = vshrl.u32 %v3299, 7
      %v3301 = vsub.s32 0, %v3300
      %v3302 = vrot.slane %v3297, %v3301
      %v3304 = vadd.f32 %v3265, %v3302
      %v3305 = vadd.f32 %v3266, %v3302
      %v3306 = vadd.f32 %v3267, %v3302
      %v3307 = vadd.f32 %v3268, %v3302
      %v3308 = vadd.f32 %v3269, %v3302
      %v3309 = vadd.f32 %v3270, %v3302
      %v3310 = vadd.f32 %v3271, %v3302
      %v3311 = vadd.f32 %v3272, %v3302
      %v3312 = vadd.f32 %v3273, %v3302
      %v3313 = vadd.f32 %v3274, %v3302
      %v3314 = vadd.f32 %v3275, %v3302
      %v3315 = vadd.f32 %v3276, %v3302
      %v3316 = vadd.f32 %v3277, %v3302
      %v3317 = vadd.f32 %v3278, %v3302
      %v3318 = vadd.f32 %v3279, %v3302
      %v3319 = vadd.f32 %v3280, %v3302
      %v3320 = vadd.f32 %v3281, %v3302
      %v3321 = vadd.f32 %v3282, %v3302
      %v3322 = vadd.f32 %v3283, %v3302
      %v3323 = vadd.f32 %v3284, %v3302
      %v3324 = vadd.f32 %v3285, %v3302
      %v3325 = vadd.f32 %v3286, %v3302
      %v3326 = vadd.f32 %v3287, %v3302
      %v3327 = vadd.f32 %v3288, %v3302
      %v3328 = vadd.f32 %v3289, %v3302
      %v3329 = vadd.f32 %v3290, %v3302
      %v3330 = vadd.f32 %v3291, %v3302
      %v3331 = vadd.f32 %v3292, %v3302
      %v3332 = vadd.f32 %v3293, %v3302
      %v3333 = vadd.f32 %v3294, %v3302
      %v3334 = vadd.f32 %v3295, %v3302
      %v3335 = vadd.f32 %v3296, %v3302
      %v3336 = vmax.f32 %v3304, 0.0
      %v3337 = vmax.f32 %v3305, 0.0
      %v3338 = vmax.f32 %v3306, 0.0
      %v3339 = vmax.f32 %v3307, 0.0
      %v3340 = vmax.f32 %v3308, 0.0
      %v3341 = vmax.f32 %v3309, 0.0
      %v3342 = vmax.f32 %v3310, 0.0
      %v3343 = vmax.f32 %v3311, 0.0
      %v3344 = vmax.f32 %v3312, 0.0
      %v3345 = vmax.f32 %v3313, 0.0
      %v3346 = vmax.f32 %v3314, 0.0
      %v3347 = vmax.f32 %v3315, 0.0
      %v3348 = vmax.f32 %v3316, 0.0
      %v3349 = vmax.f32 %v3317, 0.0
      %v3350 = vmax.f32 %v3318, 0.0
      %v3351 = vmax.f32 %v3319, 0.0
      %v3352 = vmax.f32 %v3320, 0.0
      %v3353 = vmax.f32 %v3321, 0.0
      %v3354 = vmax.f32 %v3322, 0.0
      %v3355 = vmax.f32 %v3323, 0.0
      %v3356 = vmax.f32 %v3324, 0.0
      %v3357 = vmax.f32 %v3325, 0.0
      %v3358 = vmax.f32 %v3326, 0.0
      %v3359 = vmax.f32 %v3327, 0.0
      %v3360 = vmax.f32 %v3328, 0.0
      %v3361 = vmax.f32 %v3329, 0.0
      %v3362 = vmax.f32 %v3330, 0.0
      %v3363 = vmax.f32 %v3331, 0.0
      %v3364 = vmax.f32 %v3332, 0.0
      %v3365 = vmax.f32 %v3333, 0.0
      %v3366 = vmax.f32 %v3334, 0.0
      %v3367 = vmax.f32 %v3335, 0.0
      %v3400 = vcombine.high %v3336, %v3336
      %v3402 = vunpack.c.l.s4 1983009808
      %v3403 = vunpack.c.0.s8 %v3402
      %v3404 = vlaneseq
      %v3405 = vshrl.u32 %v3404, 7
      %v3406 = vsub.s32 %v3403, %v3405
      %v3407 = vrot.slane %v3336, %v3406
      %v3409 = vunpack.c.l.s4 1983009808
      %v3410 = vunpack.c.0.s8 %v3409
      %v3411 = vlaneseq
      %v3412 = vshrl.u32 %v3411, 7
      %v3413 = vsub.s32 %v3410, %v3412
      %v3414 = vrot.slane %v3400, %v3413
      %v3415 = vcombine.high %v3407, %v3407
      %v3416 = vcombine.high %v3414, %v3414
      %v3417 = vcombine.high %v3337, %v3337
      %v3419 = vunpack.c.l.s4 1983009808
      %v3420 = vunpack.c.0.s8 %v3419
      %v3421 = vlaneseq
      %v3422 = vshrl.u32 %v3421, 7
      %v3423 = vsub.s32 %v3420, %v3422
      %v3424 = vrot.slane %v3337, %v3423
      %v3426 = vunpack.c.l.s4 1983009808
      %v3427 = vunpack.c.0.s8 %v3426
      %v3428 = vlaneseq
      %v3429 = vshrl.u32 %v3428, 7
      %v3430 = vsub.s32 %v3427, %v3429
      %v3431 = vrot.slane %v3417, %v3430
      %v3432 = vcombine.high %v3424, %v3424
      %v3433 = vcombine.high %v3431, %v3431
      %v3434 = vcombine.high %v3338, %v3338
      %v3436 = vunpack.c.l.s4 1983009808
      %v3437 = vunpack.c.0.s8 %v3436
      %v3438 = vlaneseq
      %v3439 = vshrl.u32 %v3438, 7
      %v3440 = vsub.s32 %v3437, %v3439
      %v3441 = vrot.slane %v3338, %v3440
      %v3443 = vunpack.c.l.s4 1983009808
      %v3444 = vunpack.c.0.s8 %v3443
      %v3445 = vlaneseq
      %v3446 = vshrl.u32 %v3445, 7
      %v3447 = vsub.s32 %v3444, %v3446
      %v3448 = vrot.slane %v3434, %v3447
      %v3449 = vcombine.high %v3441, %v3441
      %v3450 = vcombine.high %v3448, %v3448
      %v3451 = vcombine.high %v3339, %v3339
      %v3453 = vunpack.c.l.s4 1983009808
      %v3454 = vunpack.c.0.s8 %v3453
      %v3455 = vlaneseq
      %v3456 = vshrl.u32 %v3455, 7
      %v3457 = vsub.s32 %v3454, %v3456
      %v3458 = vrot.slane %v3339, %v3457
      %v3460 = vunpack.c.l.s4 1983009808
      %v3461 = vunpack.c.0.s8 %v3460
      %v3462 = vlaneseq
      %v3463 = vshrl.u32 %v3462, 7
      %v3464 = vsub.s32 %v3461, %v3463
      %v3465 = vrot.slane %v3451, %v3464
      %v3466 = vcombine.high %v3458, %v3458
      %v3467 = vcombine.high %v3465, %v3465
      %v3468 = vcombine.high %v3340, %v3340
      %v3470 = vunpack.c.l.s4 1983009808
      %v3471 = vunpack.c.0.s8 %v3470
      %v3472 = vlaneseq
      %v3473 = vshrl.u32 %v3472, 7
      %v3474 = vsub.s32 %v3471, %v3473
      %v3475 = vrot.slane %v3340, %v3474
      %v3477 = vunpack.c.l.s4 1983009808
      %v3478 = vunpack.c.0.s8 %v3477
      %v3479 = vlaneseq
      %v3480 = vshrl.u32 %v3479, 7
      %v3481 = vsub.s32 %v3478, %v3480
      %v3482 = vrot.slane %v3468, %v3481
      %v3483 = vcombine.high %v3475, %v3475
      %v3484 = vcombine.high %v3482, %v3482
      %v3485 = vcombine.high %v3341, %v3341
      %v3487 = vunpack.c.l.s4 1983009808
      %v3488 = vunpack.c.0.s8 %v3487
      %v3489 = vlaneseq
      %v3490 = vshrl.u32 %v3489, 7
      %v3491 = vsub.s32 %v3488, %v3490
      %v3492 = vrot.slane %v3341, %v3491
      %v3494 = vunpack.c.l.s4 1983009808
      %v3495 = vunpack.c.0.s8 %v3494
      %v3496 = vlaneseq
      %v3497 = vshrl.u32 %v3496, 7
      %v3498 = vsub.s32 %v3495, %v3497
      %v3499 = vrot.slane %v3485, %v3498
      %v3500 = vcombine.high %v3492, %v3492
      %v3501 = vcombine.high %v3499, %v3499
      %v3502 = vcombine.high %v3342, %v3342
      %v3504 = vunpack.c.l.s4 1983009808
      %v3505 = vunpack.c.0.s8 %v3504
      %v3506 = vlaneseq
      %v3507 = vshrl.u32 %v3506, 7
      %v3508 = vsub.s32 %v3505, %v3507
      %v3509 = vrot.slane %v3342, %v3508
      %v3511 = vunpack.c.l.s4 1983009808
      %v3512 = vunpack.c.0.s8 %v3511
      %v3513 = vlaneseq
      %v3514 = vshrl.u32 %v3513, 7
      %v3515 = vsub.s32 %v3512, %v3514
      %v3516 = vrot.slane %v3502, %v3515
      %v3517 = vcombine.high %v3509, %v3509
      %v3518 = vcombine.high %v3516, %v3516
      %v3519 = vcombine.high %v3343, %v3343
      %v3521 = vunpack.c.l.s4 1983009808
      %v3522 = vunpack.c.0.s8 %v3521
      %v3523 = vlaneseq
      %v3524 = vshrl.u32 %v3523, 7
      %v3525 = vsub.s32 %v3522, %v3524
      %v3526 = vrot.slane %v3343, %v3525
      %v3528 = vunpack.c.l.s4 1983009808
      %v3529 = vunpack.c.0.s8 %v3528
      %v3530 = vlaneseq
      %v3531 = vshrl.u32 %v3530, 7
      %v3532 = vsub.s32 %v3529, %v3531
      %v3533 = vrot.slane %v3519, %v3532
      %v3534 = vcombine.high %v3526, %v3526
      %v3535 = vcombine.high %v3533, %v3533
      %v3536 = vcombine.high %v3344, %v3344
      %v3538 = vunpack.c.l.s4 1983009808
      %v3539 = vunpack.c.0.s8 %v3538
      %v3540 = vlaneseq
      %v3541 = vshrl.u32 %v3540, 7
      %v3542 = vsub.s32 %v3539, %v3541
      %v3543 = vrot.slane %v3344, %v3542
      %v3545 = vunpack.c.l.s4 1983009808
      %v3546 = vunpack.c.0.s8 %v3545
      %v3547 = vlaneseq
      %v3548 = vshrl.u32 %v3547, 7
      %v3549 = vsub.s32 %v3546, %v3548
      %v3550 = vrot.slane %v3536, %v3549
      %v3551 = vcombine.high %v3543, %v3543
      %v3552 = vcombine.high %v3550, %v3550
      %v3553 = vcombine.high %v3345, %v3345
      %v3555 = vunpack.c.l.s4 1983009808
      %v3556 = vunpack.c.0.s8 %v3555
      %v3557 = vlaneseq
      %v3558 = vshrl.u32 %v3557, 7
      %v3559 = vsub.s32 %v3556, %v3558
      %v3560 = vrot.slane %v3345, %v3559
      %v3562 = vunpack.c.l.s4 1983009808
      %v3563 = vunpack.c.0.s8 %v3562
      %v3564 = vlaneseq
      %v3565 = vshrl.u32 %v3564, 7
      %v3566 = vsub.s32 %v3563, %v3565
      %v3567 = vrot.slane %v3553, %v3566
      %v3568 = vcombine.high %v3560, %v3560
      %v3569 = vcombine.high %v3567, %v3567
      %v3570 = vcombine.high %v3346, %v3346
      %v3572 = vunpack.c.l.s4 1983009808
      %v3573 = vunpack.c.0.s8 %v3572
      %v3574 = vlaneseq
      %v3575 = vshrl.u32 %v3574, 7
      %v3576 = vsub.s32 %v3573, %v3575
      %v3577 = vrot.slane %v3346, %v3576
      %v3579 = vunpack.c.l.s4 1983009808
      %v3580 = vunpack.c.0.s8 %v3579
      %v3581 = vlaneseq
      %v3582 = vshrl.u32 %v3581, 7
      %v3583 = vsub.s32 %v3580, %v3582
      %v3584 = vrot.slane %v3570, %v3583
      %v3585 = vcombine.high %v3577, %v3577
      %v3586 = vcombine.high %v3584, %v3584
      %v3587 = vcombine.high %v3347, %v3347
      %v3589 = vunpack.c.l.s4 1983009808
      %v3590 = vunpack.c.0.s8 %v3589
      %v3591 = vlaneseq
      %v3592 = vshrl.u32 %v3591, 7
      %v3593 = vsub.s32 %v3590, %v3592
      %v3594 = vrot.slane %v3347, %v3593
      %v3596 = vunpack.c.l.s4 1983009808
      %v3597 = vunpack.c.0.s8 %v3596
      %v3598 = vlaneseq
      %v3599 = vshrl.u32 %v3598, 7
      %v3600 = vsub.s32 %v3597, %v3599
      %v3601 = vrot.slane %v3587, %v3600
      %v3602 = vcombine.high %v3594, %v3594
      %v3603 = vcombine.high %v3601, %v3601
      %v3604 = vcombine.high %v3348, %v3348
      %v3606 = vunpack.c.l.s4 1983009808
      %v3607 = vunpack.c.0.s8 %v3606
      %v3608 = vlaneseq
      %v3609 = vshrl.u32 %v3608, 7
      %v3610 = vsub.s32 %v3607, %v3609
      %v3611 = vrot.slane %v3348, %v3610
      %v3613 = vunpack.c.l.s4 1983009808
      %v3614 = vunpack.c.0.s8 %v3613
      %v3615 = vlaneseq
      %v3616 = vshrl.u32 %v3615, 7
      %v3617 = vsub.s32 %v3614, %v3616
      %v3618 = vrot.slane %v3604, %v3617
      %v3619 = vcombine.high %v3611, %v3611
      %v3620 = vcombine.high %v3618, %v3618
      %v3621 = vcombine.high %v3349, %v3349
      %v3623 = vunpack.c.l.s4 1983009808
      %v3624 = vunpack.c.0.s8 %v3623
      %v3625 = vlaneseq
      %v3626 = vshrl.u32 %v3625, 7
      %v3627 = vsub.s32 %v3624, %v3626
      %v3628 = vrot.slane %v3349, %v3627
      %v3630 = vunpack.c.l.s4 1983009808
      %v3631 = vunpack.c.0.s8 %v3630
      %v3632 = vlaneseq
      %v3633 = vshrl.u32 %v3632, 7
      %v3634 = vsub.s32 %v3631, %v3633
      %v3635 = vrot.slane %v3621, %v3634
      %v3636 = vcombine.high %v3628, %v3628
      %v3637 = vcombine.high %v3635, %v3635
      %v3638 = vcombine.high %v3350, %v3350
      %v3640 = vunpack.c.l.s4 1983009808
      %v3641 = vunpack.c.0.s8 %v3640
      %v3642 = vlaneseq
      %v3643 = vshrl.u32 %v3642, 7
      %v3644 = vsub.s32 %v3641, %v3643
      %v3645 = vrot.slane %v3350, %v3644
      %v3647 = vunpack.c.l.s4 1983009808
      %v3648 = vunpack.c.0.s8 %v3647
      %v3649 = vlaneseq
      %v3650 = vshrl.u32 %v3649, 7
      %v3651 = vsub.s32 %v3648, %v3650
      %v3652 = vrot.slane %v3638, %v3651
      %v3653 = vcombine.high %v3645, %v3645
      %v3654 = vcombine.high %v3652, %v3652
      %v3655 = vcombine.high %v3351, %v3351
      %v3657 = vunpack.c.l.s4 1983009808
      %v3658 = vunpack.c.0.s8 %v3657
      %v3659 = vlaneseq
      %v3660 = vshrl.u32 %v3659, 7
      %v3661 = vsub.s32 %v3658, %v3660
      %v3662 = vrot.slane %v3351, %v3661
      %v3664 = vunpack.c.l.s4 1983009808
      %v3665 = vunpack.c.0.s8 %v3664
      %v3666 = vlaneseq
      %v3667 = vshrl.u32 %v3666, 7
      %v3668 = vsub.s32 %v3665, %v3667
      %v3669 = vrot.slane %v3655, %v3668
      %v3670 = vcombine.high %v3662, %v3662
      %v3671 = vcombine.high %v3669, %v3669
      %v3672 = vcombine.high %v3352, %v3352
      %v3674 = vunpack.c.l.s4 1983009808
      %v3675 = vunpack.c.0.s8 %v3674
      %v3676 = vlaneseq
      %v3677 = vshrl.u32 %v3676, 7
      %v3678 = vsub.s32 %v3675, %v3677
      %v3679 = vrot.slane %v3352, %v3678
      %v3681 = vunpack.c.l.s4 1983009808
      %v3682 = vunpack.c.0.s8 %v3681
      %v3683 = vlaneseq
      %v3684 = vshrl.u32 %v3683, 7
      %v3685 = vsub.s32 %v3682, %v3684
      %v3686 = vrot.slane %v3672, %v3685
      %v3687 = vcombine.high %v3679, %v3679
      %v3688 = vcombine.high %v3686, %v3686
      %v3689 = vcombine.high %v3353, %v3353
      %v3691 = vunpack.c.l.s4 1983009808
      %v3692 = vunpack.c.0.s8 %v3691
      %v3693 = vlaneseq
      %v3694 = vshrl.u32 %v3693, 7
      %v3695 = vsub.s32 %v3692, %v3694
      %v3696 = vrot.slane %v3353, %v3695
      %v3698 = vunpack.c.l.s4 1983009808
      %v3699 = vunpack.c.0.s8 %v3698
      %v3700 = vlaneseq
      %v3701 = vshrl.u32 %v3700, 7
      %v3702 = vsub.s32 %v3699, %v3701
      %v3703 = vrot.slane %v3689, %v3702
      %v3704 = vcombine.high %v3696, %v3696
      %v3705 = vcombine.high %v3703, %v3703
      %v3706 = vcombine.high %v3354, %v3354
      %v3708 = vunpack.c.l.s4 1983009808
      %v3709 = vunpack.c.0.s8 %v3708
      %v3710 = vlaneseq
      %v3711 = vshrl.u32 %v3710, 7
      %v3712 = vsub.s32 %v3709, %v3711
      %v3713 = vrot.slane %v3354, %v3712
      %v3715 = vunpack.c.l.s4 1983009808
      %v3716 = vunpack.c.0.s8 %v3715
      %v3717 = vlaneseq
      %v3718 = vshrl.u32 %v3717, 7
      %v3719 = vsub.s32 %v3716, %v3718
      %v3720 = vrot.slane %v3706, %v3719
      %v3721 = vcombine.high %v3713, %v3713
      %v3722 = vcombine.high %v3720, %v3720
      %v3723 = vcombine.high %v3355, %v3355
      %v3725 = vunpack.c.l.s4 1983009808
      %v3726 = vunpack.c.0.s8 %v3725
      %v3727 = vlaneseq
      %v3728 = vshrl.u32 %v3727, 7
      %v3729 = vsub.s32 %v3726, %v3728
      %v3730 = vrot.slane %v3355, %v3729
      %v3732 = vunpack.c.l.s4 1983009808
      %v3733 = vunpack.c.0.s8 %v3732
      %v3734 = vlaneseq
      %v3735 = vshrl.u32 %v3734, 7
      %v3736 = vsub.s32 %v3733, %v3735
      %v3737 = vrot.slane %v3723, %v3736
      %v3738 = vcombine.high %v3730, %v3730
      %v3739 = vcombine.high %v3737, %v3737
      %v3740 = vcombine.high %v3356, %v3356
      %v3742 = vunpack.c.l.s4 1983009808
      %v3743 = vunpack.c.0.s8 %v3742
      %v3744 = vlaneseq
      %v3745 = vshrl.u32 %v3744, 7
      %v3746 = vsub.s32 %v3743, %v3745
      %v3747 = vrot.slane %v3356, %v3746
      %v3749 = vunpack.c.l.s4 1983009808
      %v3750 = vunpack.c.0.s8 %v3749
      %v3751 = vlaneseq
      %v3752 = vshrl.u32 %v3751, 7
      %v3753 = vsub.s32 %v3750, %v3752
      %v3754 = vrot.slane %v3740, %v3753
      %v3755 = vcombine.high %v3747, %v3747
      %v3756 = vcombine.high %v3754, %v3754
      %v3757 = vcombine.high %v3357, %v3357
      %v3759 = vunpack.c.l.s4 1983009808
      %v3760 = vunpack.c.0.s8 %v3759
      %v3761 = vlaneseq
      %v3762 = vshrl.u32 %v3761, 7
      %v3763 = vsub.s32 %v3760, %v3762
      %v3764 = vrot.slane %v3357, %v3763
      %v3766 = vunpack.c.l.s4 1983009808
      %v3767 = vunpack.c.0.s8 %v3766
      %v3768 = vlaneseq
      %v3769 = vshrl.u32 %v3768, 7
      %v3770 = vsub.s32 %v3767, %v3769
      %v3771 = vrot.slane %v3757, %v3770
      %v3772 = vcombine.high %v3764, %v3764
      %v3773 = vcombine.high %v3771, %v3771
      %v3774 = vcombine.high %v3358, %v3358
      %v3776 = vunpack.c.l.s4 1983009808
      %v3777 = vunpack.c.0.s8 %v3776
      %v3778 = vlaneseq
      %v3779 = vshrl.u32 %v3778, 7
      %v3780 = vsub.s32 %v3777, %v3779
      %v3781 = vrot.slane %v3358, %v3780
      %v3783 = vunpack.c.l.s4 1983009808
      %v3784 = vunpack.c.0.s8 %v3783
      %v3785 = vlaneseq
      %v3786 = vshrl.u32 %v3785, 7
      %v3787 = vsub.s32 %v3784, %v3786
      %v3788 = vrot.slane %v3774, %v3787
      %v3789 = vcombine.high %v3781, %v3781
      %v3790 = vcombine.high %v3788, %v3788
      %v3791 = vcombine.high %v3359, %v3359
      %v3793 = vunpack.c.l.s4 1983009808
      %v3794 = vunpack.c.0.s8 %v3793
      %v3795 = vlaneseq
      %v3796 = vshrl.u32 %v3795, 7
      %v3797 = vsub.s32 %v3794, %v3796
      %v3798 = vrot.slane %v3359, %v3797
      %v3800 = vunpack.c.l.s4 1983009808
      %v3801 = vunpack.c.0.s8 %v3800
      %v3802 = vlaneseq
      %v3803 = vshrl.u32 %v3802, 7
      %v3804 = vsub.s32 %v3801, %v3803
      %v3805 = vrot.slane %v3791, %v3804
      %v3806 = vcombine.high %v3798, %v3798
      %v3807 = vcombine.high %v3805, %v3805
      %v3808 = vcombine.high %v3360, %v3360
      %v3810 = vunpack.c.l.s4 1983009808
      %v3811 = vunpack.c.0.s8 %v3810
      %v3812 = vlaneseq
      %v3813 = vshrl.u32 %v3812, 7
      %v3814 = vsub.s32 %v3811, %v3813
      %v3815 = vrot.slane %v3360, %v3814
      %v3817 = vunpack.c.l.s4 1983009808
      %v3818 = vunpack.c.0.s8 %v3817
      %v3819 = vlaneseq
      %v3820 = vshrl.u32 %v3819, 7
      %v3821 = vsub.s32 %v3818, %v3820
      %v3822 = vrot.slane %v3808, %v3821
      %v3823 = vcombine.high %v3815, %v3815
      %v3824 = vcombine.high %v3822, %v3822
      %v3825 = vcombine.high %v3361, %v3361
      %v3827 = vunpack.c.l.s4 1983009808
      %v3828 = vunpack.c.0.s8 %v3827
      %v3829 = vlaneseq
      %v3830 = vshrl.u32 %v3829, 7
      %v3831 = vsub.s32 %v3828, %v3830
      %v3832 = vrot.slane %v3361, %v3831
      %v3834 = vunpack.c.l.s4 1983009808
      %v3835 = vunpack.c.0.s8 %v3834
      %v3836 = vlaneseq
      %v3837 = vshrl.u32 %v3836, 7
      %v3838 = vsub.s32 %v3835, %v3837
      %v3839 = vrot.slane %v3825, %v3838
      %v3840 = vcombine.high %v3832, %v3832
      %v3841 = vcombine.high %v3839, %v3839
      %v3842 = vcombine.high %v3362, %v3362
      %v3844 = vunpack.c.l.s4 1983009808
      %v3845 = vunpack.c.0.s8 %v3844
      %v3846 = vlaneseq
      %v3847 = vshrl.u32 %v3846, 7
      %v3848 = vsub.s32 %v3845, %v3847
      %v3849 = vrot.slane %v3362, %v3848
      %v3851 = vunpack.c.l.s4 1983009808
      %v3852 = vunpack.c.0.s8 %v3851
      %v3853 = vlaneseq
      %v3854 = vshrl.u32 %v3853, 7
      %v3855 = vsub.s32 %v3852, %v3854
      %v3856 = vrot.slane %v3842, %v3855
      %v3857 = vcombine.high %v3849, %v3849
      %v3858 = vcombine.high %v3856, %v3856
      %v3859 = vcombine.high %v3363, %v3363
      %v3861 = vunpack.c.l.s4 1983009808
      %v3862 = vunpack.c.0.s8 %v3861
      %v3863 = vlaneseq
      %v3864 = vshrl.u32 %v3863, 7
      %v3865 = vsub.s32 %v3862, %v3864
      %v3866 = vrot.slane %v3363, %v3865
      %v3868 = vunpack.c.l.s4 1983009808
      %v3869 = vunpack.c.0.s8 %v3868
      %v3870 = vlaneseq
      %v3871 = vshrl.u32 %v3870, 7
      %v3872 = vsub.s32 %v3869, %v3871
      %v3873 = vrot.slane %v3859, %v3872
      %v3874 = vcombine.high %v3866, %v3866
      %v3875 = vcombine.high %v3873, %v3873
      %v3876 = vcombine.high %v3364, %v3364
      %v3878 = vunpack.c.l.s4 1983009808
      %v3879 = vunpack.c.0.s8 %v3878
      %v3880 = vlaneseq
      %v3881 = vshrl.u32 %v3880, 7
      %v3882 = vsub.s32 %v3879, %v3881
      %v3883 = vrot.slane %v3364, %v3882
      %v3885 = vunpack.c.l.s4 1983009808
      %v3886 = vunpack.c.0.s8 %v3885
      %v3887 = vlaneseq
      %v3888 = vshrl.u32 %v3887, 7
      %v3889 = vsub.s32 %v3886, %v3888
      %v3890 = vrot.slane %v3876, %v3889
      %v3891 = vcombine.high %v3883, %v3883
      %v3892 = vcombine.high %v3890, %v3890
      %v3893 = vcombine.high %v3365, %v3365
      %v3895 = vunpack.c.l.s4 1983009808
      %v3896 = vunpack.c.0.s8 %v3895
      %v3897 = vlaneseq
      %v3898 = vshrl.u32 %v3897, 7
      %v3899 = vsub.s32 %v3896, %v3898
      %v3900 = vrot.slane %v3365, %v3899
      %v3902 = vunpack.c.l.s4 1983009808
      %v3903 = vunpack.c.0.s8 %v3902
      %v3904 = vlaneseq
      %v3905 = vshrl.u32 %v3904, 7
      %v3906 = vsub.s32 %v3903, %v3905
      %v3907 = vrot.slane %v3893, %v3906
      %v3908 = vcombine.high %v3900, %v3900
      %v3909 = vcombine.high %v3907, %v3907
      %v3910 = vcombine.high %v3366, %v3366
      %v3912 = vunpack.c.l.s4 1983009808
      %v3913 = vunpack.c.0.s8 %v3912
      %v3914 = vlaneseq
      %v3915 = vshrl.u32 %v3914, 7
      %v3916 = vsub.s32 %v3913, %v3915
      %v3917 = vrot.slane %v3366, %v3916
      %v3919 = vunpack.c.l.s4 1983009808
      %v3920 = vunpack.c.0.s8 %v3919
      %v3921 = vlaneseq
      %v3922 = vshrl.u32 %v3921, 7
      %v3923 = vsub.s32 %v3920, %v3922
      %v3924 = vrot.slane %v3910, %v3923
      %v3925 = vcombine.high %v3917, %v3917
      %v3926 = vcombine.high %v3924, %v3924
      %v3927 = vcombine.high %v3367, %v3367
      %v3929 = vunpack.c.l.s4 1983009808
      %v3930 = vunpack.c.0.s8 %v3929
      %v3931 = vlaneseq
      %v3932 = vshrl.u32 %v3931, 7
      %v3933 = vsub.s32 %v3930, %v3932
      %v3934 = vrot.slane %v3367, %v3933
      %v3936 = vunpack.c.l.s4 1983009808
      %v3937 = vunpack.c.0.s8 %v3936
      %v3938 = vlaneseq
      %v3939 = vshrl.u32 %v3938, 7
      %v3940 = vsub.s32 %v3937, %v3939
      %v3941 = vrot.slane %v3927, %v3940
      %v3942 = vcombine.high %v3934, %v3934
      %v3943 = vcombine.high %v3941, %v3941
      %vm4072 = vcmask 123904
      %v4073 = vsel %vm4072, %v3407, -inf
      %v4074 = vrot.slane %v4073, 4
      %v4075 = vmax.f32 %v4073, %v4074
      %v4076 = vrot.slane %v4075, 2
      %v4077 = vmax.f32 %v4075, %v4076
      %v4078 = vrot.slane %v4077, 1
      %v4079 = vmax.f32 %v4077, %v4078
      %v4080 = vsel %vm4072, %v3415, -inf
      %v4081 = vrot.slane %v4080, 4
      %v4082 = vmax.f32 %v4080, %v4081
      %v4083 = vrot.slane %v4082, 2
      %v4084 = vmax.f32 %v4082, %v4083
      %v4085 = vrot.slane %v4084, 1
      %v4086 = vmax.f32 %v4084, %v4085
      %v4087 = vsel %vm4072, %v3414, -inf
      %v4088 = vrot.slane %v4087, 4
      %v4089 = vmax.f32 %v4087, %v4088
      %v4090 = vrot.slane %v4089, 2
      %v4091 = vmax.f32 %v4089, %v4090
      %v4092 = vrot.slane %v4091, 1
      %v4093 = vmax.f32 %v4091, %v4092
      %v4094 = vsel %vm4072, %v3416, -inf
      %v4095 = vrot.slane %v4094, 4
      %v4096 = vmax.f32 %v4094, %v4095
      %v4097 = vrot.slane %v4096, 2
      %v4098 = vmax.f32 %v4096, %v4097
      %v4099 = vrot.slane %v4098, 1
      %v4100 = vmax.f32 %v4098, %v4099
      %v4101 = vsel %vm4072, %v3424, -inf
      %v4102 = vrot.slane %v4101, 4
      %v4103 = vmax.f32 %v4101, %v4102
      %v4104 = vrot.slane %v4103, 2
      %v4105 = vmax.f32 %v4103, %v4104
      %v4106 = vrot.slane %v4105, 1
      %v4107 = vmax.f32 %v4105, %v4106
      %v4108 = vsel %vm4072, %v3432, -inf
      %v4109 = vrot.slane %v4108, 4
      %v4110 = vmax.f32 %v4108, %v4109
      %v4111 = vrot.slane %v4110, 2
      %v4112 = vmax.f32 %v4110, %v4111
      %v4113 = vrot.slane %v4112, 1
      %v4114 = vmax.f32 %v4112, %v4113
      %v4115 = vsel %vm4072, %v3431, -inf
      %v4116 = vrot.slane %v4115, 4
      %v4117 = vmax.f32 %v4115, %v4116
      %v4118 = vrot.slane %v4117, 2
      %v4119 = vmax.f32 %v4117, %v4118
      %v4120 = vrot.slane %v4119, 1
      %v4121 = vmax.f32 %v4119, %v4120
      %v4122 = vsel %vm4072, %v3433, -inf
      %v4123 = vrot.slane %v4122, 4
      %v4124 = vmax.f32 %v4122, %v4123
      %v4125 = vrot.slane %v4124, 2
      %v4126 = vmax.f32 %v4124, %v4125
      %v4127 = vrot.slane %v4126, 1
      %v4128 = vmax.f32 %v4126, %v4127
      %v4129 = vsel %vm4072, %v3441, -inf
      %v4130 = vrot.slane %v4129, 4
      %v4131 = vmax.f32 %v4129, %v4130
      %v4132 = vrot.slane %v4131, 2
      %v4133 = vmax.f32 %v4131, %v4132
      %v4134 = vrot.slane %v4133, 1
      %v4135 = vmax.f32 %v4133, %v4134
      %v4136 = vsel %vm4072, %v3449, -inf
      %v4137 = vrot.slane %v4136, 4
      %v4138 = vmax.f32 %v4136, %v4137
      %v4139 = vrot.slane %v4138, 2
      %v4140 = vmax.f32 %v4138, %v4139
      %v4141 = vrot.slane %v4140, 1
      %v4142 = vmax.f32 %v4140, %v4141
      %v4143 = vsel %vm4072, %v3448, -inf
      %v4144 = vrot.slane %v4143, 4
      %v4145 = vmax.f32 %v4143, %v4144
      %v4146 = vrot.slane %v4145, 2
      %v4147 = vmax.f32 %v4145, %v4146
      %v4148 = vrot.slane %v4147, 1
      %v4149 = vmax.f32 %v4147, %v4148
      %v4150 = vsel %vm4072, %v3450, -inf
      %v4151 = vrot.slane %v4150, 4
      %v4152 = vmax.f32 %v4150, %v4151
      %v4153 = vrot.slane %v4152, 2
      %v4154 = vmax.f32 %v4152, %v4153
      %v4155 = vrot.slane %v4154, 1
      %v4156 = vmax.f32 %v4154, %v4155
      %v4157 = vsel %vm4072, %v3458, -inf
      %v4158 = vrot.slane %v4157, 4
      %v4159 = vmax.f32 %v4157, %v4158
      %v4160 = vrot.slane %v4159, 2
      %v4161 = vmax.f32 %v4159, %v4160
      %v4162 = vrot.slane %v4161, 1
      %v4163 = vmax.f32 %v4161, %v4162
      %v4164 = vsel %vm4072, %v3466, -inf
      %v4165 = vrot.slane %v4164, 4
      %v4166 = vmax.f32 %v4164, %v4165
      %v4167 = vrot.slane %v4166, 2
      %v4168 = vmax.f32 %v4166, %v4167
      %v4169 = vrot.slane %v4168, 1
      %v4170 = vmax.f32 %v4168, %v4169
      %v4171 = vsel %vm4072, %v3465, -inf
      %v4172 = vrot.slane %v4171, 4
      %v4173 = vmax.f32 %v4171, %v4172
      %v4174 = vrot.slane %v4173, 2
      %v4175 = vmax.f32 %v4173, %v4174
      %v4176 = vrot.slane %v4175, 1
      %v4177 = vmax.f32 %v4175, %v4176
      %v4178 = vsel %vm4072, %v3467, -inf
      %v4179 = vrot.slane %v4178, 4
      %v4180 = vmax.f32 %v4178, %v4179
      %v4181 = vrot.slane %v4180, 2
      %v4182 = vmax.f32 %v4180, %v4181
      %v4183 = vrot.slane %v4182, 1
      %v4184 = vmax.f32 %v4182, %v4183
      %v4185 = vsel %vm4072, %v3475, -inf
      %v4186 = vrot.slane %v4185, 4
      %v4187 = vmax.f32 %v4185, %v4186
      %v4188 = vrot.slane %v4187, 2
      %v4189 = vmax.f32 %v4187, %v4188
      %v4190 = vrot.slane %v4189, 1
      %v4191 = vmax.f32 %v4189, %v4190
      %v4192 = vsel %vm4072, %v3483, -inf
      %v4193 = vrot.slane %v4192, 4
      %v4194 = vmax.f32 %v4192, %v4193
      %v4195 = vrot.slane %v4194, 2
      %v4196 = vmax.f32 %v4194, %v4195
      %v4197 = vrot.slane %v4196, 1
      %v4198 = vmax.f32 %v4196, %v4197
      %v4199 = vsel %vm4072, %v3482, -inf
      %v4200 = vrot.slane %v4199, 4
      %v4201 = vmax.f32 %v4199, %v4200
      %v4202 = vrot.slane %v4201, 2
      %v4203 = vmax.f32 %v4201, %v4202
      %v4204 = vrot.slane %v4203, 1
      %v4205 = vmax.f32 %v4203, %v4204
      %v4206 = vsel %vm4072, %v3484, -inf
      %v4207 = vrot.slane %v4206, 4
      %v4208 = vmax.f32 %v4206, %v4207
      %v4209 = vrot.slane %v4208, 2
      %v4210 = vmax.f32 %v4208, %v4209
      %v4211 = vrot.slane %v4210, 1
      %v4212 = vmax.f32 %v4210, %v4211
      %v4213 = vsel %vm4072, %v3492, -inf
      %v4214 = vrot.slane %v4213, 4
      %v4215 = vmax.f32 %v4213, %v4214
      %v4216 = vrot.slane %v4215, 2
      %v4217 = vmax.f32 %v4215, %v4216
      %v4218 = vrot.slane %v4217, 1
      %v4219 = vmax.f32 %v4217, %v4218
      %v4220 = vsel %vm4072, %v3500, -inf
      %v4221 = vrot.slane %v4220, 4
      %v4222 = vmax.f32 %v4220, %v4221
      %v4223 = vrot.slane %v4222, 2
      %v4224 = vmax.f32 %v4222, %v4223
      %v4225 = vrot.slane %v4224, 1
      %v4226 = vmax.f32 %v4224, %v4225
      %v4227 = vsel %vm4072, %v3499, -inf
      %v4228 = vrot.slane %v4227, 4
      %v4229 = vmax.f32 %v4227, %v4228
      %v4230 = vrot.slane %v4229, 2
      %v4231 = vmax.f32 %v4229, %v4230
      %v4232 = vrot.slane %v4231, 1
      %v4233 = vmax.f32 %v4231, %v4232
      %v4234 = vsel %vm4072, %v3501, -inf
      %v4235 = vrot.slane %v4234, 4
      %v4236 = vmax.f32 %v4234, %v4235
      %v4237 = vrot.slane %v4236, 2
      %v4238 = vmax.f32 %v4236, %v4237
      %v4239 = vrot.slane %v4238, 1
      %v4240 = vmax.f32 %v4238, %v4239
      %v4241 = vsel %vm4072, %v3509, -inf
      %v4242 = vrot.slane %v4241, 4
      %v4243 = vmax.f32 %v4241, %v4242
      %v4244 = vrot.slane %v4243, 2
      %v4245 = vmax.f32 %v4243, %v4244
      %v4246 = vrot.slane %v4245, 1
      %v4247 = vmax.f32 %v4245, %v4246
      %v4248 = vsel %vm4072, %v3517, -inf
      %v4249 = vrot.slane %v4248, 4
      %v4250 = vmax.f32 %v4248, %v4249
      %v4251 = vrot.slane %v4250, 2
      %v4252 = vmax.f32 %v4250, %v4251
      %v4253 = vrot.slane %v4252, 1
      %v4254 = vmax.f32 %v4252, %v4253
      %v4255 = vsel %vm4072, %v3516, -inf
      %v4256 = vrot.slane %v4255, 4
      %v4257 = vmax.f32 %v4255, %v4256
      %v4258 = vrot.slane %v4257, 2
      %v4259 = vmax.f32 %v4257, %v4258
      %v4260 = vrot.slane %v4259, 1
      %v4261 = vmax.f32 %v4259, %v4260
      %v4262 = vsel %vm4072, %v3518, -inf
      %v4263 = vrot.slane %v4262, 4
      %v4264 = vmax.f32 %v4262, %v4263
      %v4265 = vrot.slane %v4264, 2
      %v4266 = vmax.f32 %v4264, %v4265
      %v4267 = vrot.slane %v4266, 1
      %v4268 = vmax.f32 %v4266, %v4267
      %v4269 = vsel %vm4072, %v3526, -inf
      %v4270 = vrot.slane %v4269, 4
      %v4271 = vmax.f32 %v4269, %v4270
      %v4272 = vrot.slane %v4271, 2
      %v4273 = vmax.f32 %v4271, %v4272
      %v4274 = vrot.slane %v4273, 1
      %v4275 = vmax.f32 %v4273, %v4274
      %v4276 = vsel %vm4072, %v3534, -inf
      %v4277 = vrot.slane %v4276, 4
      %v4278 = vmax.f32 %v4276, %v4277
      %v4279 = vrot.slane %v4278, 2
      %v4280 = vmax.f32 %v4278, %v4279
      %v4281 = vrot.slane %v4280, 1
      %v4282 = vmax.f32 %v4280, %v4281
      %v4283 = vsel %vm4072, %v3533, -inf
      %v4284 = vrot.slane %v4283, 4
      %v4285 = vmax.f32 %v4283, %v4284
      %v4286 = vrot.slane %v4285, 2
      %v4287 = vmax.f32 %v4285, %v4286
      %v4288 = vrot.slane %v4287, 1
      %v4289 = vmax.f32 %v4287, %v4288
      %v4290 = vsel %vm4072, %v3535, -inf
      %v4291 = vrot.slane %v4290, 4
      %v4292 = vmax.f32 %v4290, %v4291
      %v4293 = vrot.slane %v4292, 2
      %v4294 = vmax.f32 %v4292, %v4293
      %v4295 = vrot.slane %v4294, 1
      %v4296 = vmax.f32 %v4294, %v4295
      %v4297 = vsel %vm4072, %v3543, -inf
      %v4298 = vrot.slane %v4297, 4
      %v4299 = vmax.f32 %v4297, %v4298
      %v4300 = vrot.slane %v4299, 2
      %v4301 = vmax.f32 %v4299, %v4300
      %v4302 = vrot.slane %v4301, 1
      %v4303 = vmax.f32 %v4301, %v4302
      %v4304 = vsel %vm4072, %v3551, -inf
      %v4305 = vrot.slane %v4304, 4
      %v4306 = vmax.f32 %v4304, %v4305
      %v4307 = vrot.slane %v4306, 2
      %v4308 = vmax.f32 %v4306, %v4307
      %v4309 = vrot.slane %v4308, 1
      %v4310 = vmax.f32 %v4308, %v4309
      %v4311 = vsel %vm4072, %v3550, -inf
      %v4312 = vrot.slane %v4311, 4
      %v4313 = vmax.f32 %v4311, %v4312
      %v4314 = vrot.slane %v4313, 2
      %v4315 = vmax.f32 %v4313, %v4314
      %v4316 = vrot.slane %v4315, 1
      %v4317 = vmax.f32 %v4315, %v4316
      %v4318 = vsel %vm4072, %v3552, -inf
      %v4319 = vrot.slane %v4318, 4
      %v4320 = vmax.f32 %v4318, %v4319
      %v4321 = vrot.slane %v4320, 2
      %v4322 = vmax.f32 %v4320, %v4321
      %v4323 = vrot.slane %v4322, 1
      %v4324 = vmax.f32 %v4322, %v4323
      %v4325 = vsel %vm4072, %v3560, -inf
      %v4326 = vrot.slane %v4325, 4
      %v4327 = vmax.f32 %v4325, %v4326
      %v4328 = vrot.slane %v4327, 2
      %v4329 = vmax.f32 %v4327, %v4328
      %v4330 = vrot.slane %v4329, 1
      %v4331 = vmax.f32 %v4329, %v4330
      %v4332 = vsel %vm4072, %v3568, -inf
      %v4333 = vrot.slane %v4332, 4
      %v4334 = vmax.f32 %v4332, %v4333
      %v4335 = vrot.slane %v4334, 2
      %v4336 = vmax.f32 %v4334, %v4335
      %v4337 = vrot.slane %v4336, 1
      %v4338 = vmax.f32 %v4336, %v4337
      %v4339 = vsel %vm4072, %v3567, -inf
      %v4340 = vrot.slane %v4339, 4
      %v4341 = vmax.f32 %v4339, %v4340
      %v4342 = vrot.slane %v4341, 2
      %v4343 = vmax.f32 %v4341, %v4342
      %v4344 = vrot.slane %v4343, 1
      %v4345 = vmax.f32 %v4343, %v4344
      %v4346 = vsel %vm4072, %v3569, -inf
      %v4347 = vrot.slane %v4346, 4
      %v4348 = vmax.f32 %v4346, %v4347
      %v4349 = vrot.slane %v4348, 2
      %v4350 = vmax.f32 %v4348, %v4349
      %v4351 = vrot.slane %v4350, 1
      %v4352 = vmax.f32 %v4350, %v4351
      %v4353 = vsel %vm4072, %v3577, -inf
      %v4354 = vrot.slane %v4353, 4
      %v4355 = vmax.f32 %v4353, %v4354
      %v4356 = vrot.slane %v4355, 2
      %v4357 = vmax.f32 %v4355, %v4356
      %v4358 = vrot.slane %v4357, 1
      %v4359 = vmax.f32 %v4357, %v4358
      %v4360 = vsel %vm4072, %v3585, -inf
      %v4361 = vrot.slane %v4360, 4
      %v4362 = vmax.f32 %v4360, %v4361
      %v4363 = vrot.slane %v4362, 2
      %v4364 = vmax.f32 %v4362, %v4363
      %v4365 = vrot.slane %v4364, 1
      %v4366 = vmax.f32 %v4364, %v4365
      %v4367 = vsel %vm4072, %v3584, -inf
      %v4368 = vrot.slane %v4367, 4
      %v4369 = vmax.f32 %v4367, %v4368
      %v4370 = vrot.slane %v4369, 2
      %v4371 = vmax.f32 %v4369, %v4370
      %v4372 = vrot.slane %v4371, 1
      %v4373 = vmax.f32 %v4371, %v4372
      %v4374 = vsel %vm4072, %v3586, -inf
      %v4375 = vrot.slane %v4374, 4
      %v4376 = vmax.f32 %v4374, %v4375
      %v4377 = vrot.slane %v4376, 2
      %v4378 = vmax.f32 %v4376, %v4377
      %v4379 = vrot.slane %v4378, 1
      %v4380 = vmax.f32 %v4378, %v4379
      %v4381 = vsel %vm4072, %v3594, -inf
      %v4382 = vrot.slane %v4381, 4
      %v4383 = vmax.f32 %v4381, %v4382
      %v4384 = vrot.slane %v4383, 2
      %v4385 = vmax.f32 %v4383, %v4384
      %v4386 = vrot.slane %v4385, 1
      %v4387 = vmax.f32 %v4385, %v4386
      %v4388 = vsel %vm4072, %v3602, -inf
      %v4389 = vrot.slane %v4388, 4
      %v4390 = vmax.f32 %v4388, %v4389
      %v4391 = vrot.slane %v4390, 2
      %v4392 = vmax.f32 %v4390, %v4391
      %v4393 = vrot.slane %v4392, 1
      %v4394 = vmax.f32 %v4392, %v4393
      %v4395 = vsel %vm4072, %v3601, -inf
      %v4396 = vrot.slane %v4395, 4
      %v4397 = vmax.f32 %v4395, %v4396
      %v4398 = vrot.slane %v4397, 2
      %v4399 = vmax.f32 %v4397, %v4398
      %v4400 = vrot.slane %v4399, 1
      %v4401 = vmax.f32 %v4399, %v4400
      %v4402 = vsel %vm4072, %v3603, -inf
      %v4403 = vrot.slane %v4402, 4
      %v4404 = vmax.f32 %v4402, %v4403
      %v4405 = vrot.slane %v4404, 2
      %v4406 = vmax.f32 %v4404, %v4405
      %v4407 = vrot.slane %v4406, 1
      %v4408 = vmax.f32 %v4406, %v4407
      %v4409 = vsel %vm4072, %v3611, -inf
      %v4410 = vrot.slane %v4409, 4
      %v4411 = vmax.f32 %v4409, %v4410
      %v4412 = vrot.slane %v4411, 2
      %v4413 = vmax.f32 %v4411, %v4412
      %v4414 = vrot.slane %v4413, 1
      %v4415 = vmax.f32 %v4413, %v4414
      %v4416 = vsel %vm4072, %v3619, -inf
      %v4417 = vrot.slane %v4416, 4
      %v4418 = vmax.f32 %v4416, %v4417
      %v4419 = vrot.slane %v4418, 2
      %v4420 = vmax.f32 %v4418, %v4419
      %v4421 = vrot.slane %v4420, 1
      %v4422 = vmax.f32 %v4420, %v4421
      %v4423 = vsel %vm4072, %v3618, -inf
      %v4424 = vrot.slane %v4423, 4
      %v4425 = vmax.f32 %v4423, %v4424
      %v4426 = vrot.slane %v4425, 2
      %v4427 = vmax.f32 %v4425, %v4426
      %v4428 = vrot.slane %v4427, 1
      %v4429 = vmax.f32 %v4427, %v4428
      %v4430 = vsel %vm4072, %v3620, -inf
      %v4431 = vrot.slane %v4430, 4
      %v4432 = vmax.f32 %v4430, %v4431
      %v4433 = vrot.slane %v4432, 2
      %v4434 = vmax.f32 %v4432, %v4433
      %v4435 = vrot.slane %v4434, 1
      %v4436 = vmax.f32 %v4434, %v4435
      %v4437 = vsel %vm4072, %v3628, -inf
      %v4438 = vrot.slane %v4437, 4
      %v4439 = vmax.f32 %v4437, %v4438
      %v4440 = vrot.slane %v4439, 2
      %v4441 = vmax.f32 %v4439, %v4440
      %v4442 = vrot.slane %v4441, 1
      %v4443 = vmax.f32 %v4441, %v4442
      %v4444 = vsel %vm4072, %v3636, -inf
      %v4445 = vrot.slane %v4444, 4
      %v4446 = vmax.f32 %v4444, %v4445
      %v4447 = vrot.slane %v4446, 2
      %v4448 = vmax.f32 %v4446, %v4447
      %v4449 = vrot.slane %v4448, 1
      %v4450 = vmax.f32 %v4448, %v4449
      %v4451 = vsel %vm4072, %v3635, -inf
      %v4452 = vrot.slane %v4451, 4
      %v4453 = vmax.f32 %v4451, %v4452
      %v4454 = vrot.slane %v4453, 2
      %v4455 = vmax.f32 %v4453, %v4454
      %v4456 = vrot.slane %v4455, 1
      %v4457 = vmax.f32 %v4455, %v4456
      %v4458 = vsel %vm4072, %v3637, -inf
      %v4459 = vrot.slane %v4458, 4
      %v4460 = vmax.f32 %v4458, %v4459
      %v4461 = vrot.slane %v4460, 2
      %v4462 = vmax.f32 %v4460, %v4461
      %v4463 = vrot.slane %v4462, 1
      %v4464 = vmax.f32 %v4462, %v4463
      %v4465 = vsel %vm4072, %v3645, -inf
      %v4466 = vrot.slane %v4465, 4
      %v4467 = vmax.f32 %v4465, %v4466
      %v4468 = vrot.slane %v4467, 2
      %v4469 = vmax.f32 %v4467, %v4468
      %v4470 = vrot.slane %v4469, 1
      %v4471 = vmax.f32 %v4469, %v4470
      %v4472 = vsel %vm4072, %v3653, -inf
      %v4473 = vrot.slane %v4472, 4
      %v4474 = vmax.f32 %v4472, %v4473
      %v4475 = vrot.slane %v4474, 2
      %v4476 = vmax.f32 %v4474, %v4475
      %v4477 = vrot.slane %v4476, 1
      %v4478 = vmax.f32 %v4476, %v4477
      %v4479 = vsel %vm4072, %v3652, -inf
      %v4480 = vrot.slane %v4479, 4
      %v4481 = vmax.f32 %v4479, %v4480
      %v4482 = vrot.slane %v4481, 2
      %v4483 = vmax.f32 %v4481, %v4482
      %v4484 = vrot.slane %v4483, 1
      %v4485 = vmax.f32 %v4483, %v4484
      %v4486 = vsel %vm4072, %v3654, -inf
      %v4487 = vrot.slane %v4486, 4
      %v4488 = vmax.f32 %v4486, %v4487
      %v4489 = vrot.slane %v4488, 2
      %v4490 = vmax.f32 %v4488, %v4489
      %v4491 = vrot.slane %v4490, 1
      %v4492 = vmax.f32 %v4490, %v4491
      %v4493 = vsel %vm4072, %v3662, -inf
      %v4494 = vrot.slane %v4493, 4
      %v4495 = vmax.f32 %v4493, %v4494
      %v4496 = vrot.slane %v4495, 2
      %v4497 = vmax.f32 %v4495, %v4496
      %v4498 = vrot.slane %v4497, 1
      %v4499 = vmax.f32 %v4497, %v4498
      %v4500 = vsel %vm4072, %v3670, -inf
      %v4501 = vrot.slane %v4500, 4
      %v4502 = vmax.f32 %v4500, %v4501
      %v4503 = vrot.slane %v4502, 2
      %v4504 = vmax.f32 %v4502, %v4503
      %v4505 = vrot.slane %v4504, 1
      %v4506 = vmax.f32 %v4504, %v4505
      %v4507 = vsel %vm4072, %v3669, -inf
      %v4508 = vrot.slane %v4507, 4
      %v4509 = vmax.f32 %v4507, %v4508
      %v4510 = vrot.slane %v4509, 2
      %v4511 = vmax.f32 %v4509, %v4510
      %v4512 = vrot.slane %v4511, 1
      %v4513 = vmax.f32 %v4511, %v4512
      %v4514 = vsel %vm4072, %v3671, -inf
      %v4515 = vrot.slane %v4514, 4
      %v4516 = vmax.f32 %v4514, %v4515
      %v4517 = vrot.slane %v4516, 2
      %v4518 = vmax.f32 %v4516, %v4517
      %v4519 = vrot.slane %v4518, 1
      %v4520 = vmax.f32 %v4518, %v4519
      %v4521 = vsel %vm4072, %v3679, -inf
      %v4522 = vrot.slane %v4521, 4
      %v4523 = vmax.f32 %v4521, %v4522
      %v4524 = vrot.slane %v4523, 2
      %v4525 = vmax.f32 %v4523, %v4524
      %v4526 = vrot.slane %v4525, 1
      %v4527 = vmax.f32 %v4525, %v4526
      %v4528 = vsel %vm4072, %v3687, -inf
      %v4529 = vrot.slane %v4528, 4
      %v4530 = vmax.f32 %v4528, %v4529
      %v4531 = vrot.slane %v4530, 2
      %v4532 = vmax.f32 %v4530, %v4531
      %v4533 = vrot.slane %v4532, 1
      %v4534 = vmax.f32 %v4532, %v4533
      %v4535 = vsel %vm4072, %v3686, -inf
      %v4536 = vrot.slane %v4535, 4
      %v4537 = vmax.f32 %v4535, %v4536
      %v4538 = vrot.slane %v4537, 2
      %v4539 = vmax.f32 %v4537, %v4538
      %v4540 = vrot.slane %v4539, 1
      %v4541 = vmax.f32 %v4539, %v4540
      %v4542 = vsel %vm4072, %v3688, -inf
      %v4543 = vrot.slane %v4542, 4
      %v4544 = vmax.f32 %v4542, %v4543
      %v4545 = vrot.slane %v4544, 2
      %v4546 = vmax.f32 %v4544, %v4545
      %v4547 = vrot.slane %v4546, 1
      %v4548 = vmax.f32 %v4546, %v4547
      %v4549 = vsel %vm4072, %v3696, -inf
      %v4550 = vrot.slane %v4549, 4
      %v4551 = vmax.f32 %v4549, %v4550
      %v4552 = vrot.slane %v4551, 2
      %v4553 = vmax.f32 %v4551, %v4552
      %v4554 = vrot.slane %v4553, 1
      %v4555 = vmax.f32 %v4553, %v4554
      %v4556 = vsel %vm4072, %v3704, -inf
      %v4557 = vrot.slane %v4556, 4
      %v4558 = vmax.f32 %v4556, %v4557
      %v4559 = vrot.slane %v4558, 2
      %v4560 = vmax.f32 %v4558, %v4559
      %v4561 = vrot.slane %v4560, 1
      %v4562 = vmax.f32 %v4560, %v4561
      %v4563 = vsel %vm4072, %v3703, -inf
      %v4564 = vrot.slane %v4563, 4
      %v4565 = vmax.f32 %v4563, %v4564
      %v4566 = vrot.slane %v4565, 2
      %v4567 = vmax.f32 %v4565, %v4566
      %v4568 = vrot.slane %v4567, 1
      %v4569 = vmax.f32 %v4567, %v4568
      %v4570 = vsel %vm4072, %v3705, -inf
      %v4571 = vrot.slane %v4570, 4
      %v4572 = vmax.f32 %v4570, %v4571
      %v4573 = vrot.slane %v4572, 2
      %v4574 = vmax.f32 %v4572, %v4573
      %v4575 = vrot.slane %v4574, 1
      %v4576 = vmax.f32 %v4574, %v4575
      %v4577 = vsel %vm4072, %v3713, -inf
      %v4578 = vrot.slane %v4577, 4
      %v4579 = vmax.f32 %v4577, %v4578
      %v4580 = vrot.slane %v4579, 2
      %v4581 = vmax.f32 %v4579, %v4580
      %v4582 = vrot.slane %v4581, 1
      %v4583 = vmax.f32 %v4581, %v4582
      %v4584 = vsel %vm4072, %v3721, -inf
      %v4585 = vrot.slane %v4584, 4
      %v4586 = vmax.f32 %v4584, %v4585
      %v4587 = vrot.slane %v4586, 2
      %v4588 = vmax.f32 %v4586, %v4587
      %v4589 = vrot.slane %v4588, 1
      %v4590 = vmax.f32 %v4588, %v4589
      %v4591 = vsel %vm4072, %v3720, -inf
      %v4592 = vrot.slane %v4591, 4
      %v4593 = vmax.f32 %v4591, %v4592
      %v4594 = vrot.slane %v4593, 2
      %v4595 = vmax.f32 %v4593, %v4594
      %v4596 = vrot.slane %v4595, 1
      %v4597 = vmax.f32 %v4595, %v4596
      %v4598 = vsel %vm4072, %v3722, -inf
      %v4599 = vrot.slane %v4598, 4
      %v4600 = vmax.f32 %v4598, %v4599
      %v4601 = vrot.slane %v4600, 2
      %v4602 = vmax.f32 %v4600, %v4601
      %v4603 = vrot.slane %v4602, 1
      %v4604 = vmax.f32 %v4602, %v4603
      %v4605 = vsel %vm4072, %v3730, -inf
      %v4606 = vrot.slane %v4605, 4
      %v4607 = vmax.f32 %v4605, %v4606
      %v4608 = vrot.slane %v4607, 2
      %v4609 = vmax.f32 %v4607, %v4608
      %v4610 = vrot.slane %v4609, 1
      %v4611 = vmax.f32 %v4609, %v4610
      %v4612 = vsel %vm4072, %v3738, -inf
      %v4613 = vrot.slane %v4612, 4
      %v4614 = vmax.f32 %v4612, %v4613
      %v4615 = vrot.slane %v4614, 2
      %v4616 = vmax.f32 %v4614, %v4615
      %v4617 = vrot.slane %v4616, 1
      %v4618 = vmax.f32 %v4616, %v4617
      %v4619 = vsel %vm4072, %v3737, -inf
      %v4620 = vrot.slane %v4619, 4
      %v4621 = vmax.f32 %v4619, %v4620
      %v4622 = vrot.slane %v4621, 2
      %v4623 = vmax.f32 %v4621, %v4622
      %v4624 = vrot.slane %v4623, 1
      %v4625 = vmax.f32 %v4623, %v4624
      %v4626 = vsel %vm4072, %v3739, -inf
      %v4627 = vrot.slane %v4626, 4
      %v4628 = vmax.f32 %v4626, %v4627
      %v4629 = vrot.slane %v4628, 2
      %v4630 = vmax.f32 %v4628, %v4629
      %v4631 = vrot.slane %v4630, 1
      %v4632 = vmax.f32 %v4630, %v4631
      %v4633 = vsel %vm4072, %v3747, -inf
      %v4634 = vrot.slane %v4633, 4
      %v4635 = vmax.f32 %v4633, %v4634
      %v4636 = vrot.slane %v4635, 2
      %v4637 = vmax.f32 %v4635, %v4636
      %v4638 = vrot.slane %v4637, 1
      %v4639 = vmax.f32 %v4637, %v4638
      %v4640 = vsel %vm4072, %v3755, -inf
      %v4641 = vrot.slane %v4640, 4
      %v4642 = vmax.f32 %v4640, %v4641
      %v4643 = vrot.slane %v4642, 2
      %v4644 = vmax.f32 %v4642, %v4643
      %v4645 = vrot.slane %v4644, 1
      %v4646 = vmax.f32 %v4644, %v4645
      %v4647 = vsel %vm4072, %v3754, -inf
      %v4648 = vrot.slane %v4647, 4
      %v4649 = vmax.f32 %v4647, %v4648
      %v4650 = vrot.slane %v4649, 2
      %v4651 = vmax.f32 %v4649, %v4650
      %v4652 = vrot.slane %v4651, 1
      %v4653 = vmax.f32 %v4651, %v4652
      %v4654 = vsel %vm4072, %v3756, -inf
      %v4655 = vrot.slane %v4654, 4
      %v4656 = vmax.f32 %v4654, %v4655
      %v4657 = vrot.slane %v4656, 2
      %v4658 = vmax.f32 %v4656, %v4657
      %v4659 = vrot.slane %v4658, 1
      %v4660 = vmax.f32 %v4658, %v4659
      %v4661 = vsel %vm4072, %v3764, -inf
      %v4662 = vrot.slane %v4661, 4
      %v4663 = vmax.f32 %v4661, %v4662
      %v4664 = vrot.slane %v4663, 2
      %v4665 = vmax.f32 %v4663, %v4664
      %v4666 = vrot.slane %v4665, 1
      %v4667 = vmax.f32 %v4665, %v4666
      %v4668 = vsel %vm4072, %v3772, -inf
      %v4669 = vrot.slane %v4668, 4
      %v4670 = vmax.f32 %v4668, %v4669
      %v4671 = vrot.slane %v4670, 2
      %v4672 = vmax.f32 %v4670, %v4671
      %v4673 = vrot.slane %v4672, 1
      %v4674 = vmax.f32 %v4672, %v4673
      %v4675 = vsel %vm4072, %v3771, -inf
      %v4676 = vrot.slane %v4675, 4
      %v4677 = vmax.f32 %v4675, %v4676
      %v4678 = vrot.slane %v4677, 2
      %v4679 = vmax.f32 %v4677, %v4678
      %v4680 = vrot.slane %v4679, 1
      %v4681 = vmax.f32 %v4679, %v4680
      %v4682 = vsel %vm4072, %v3773, -inf
      %v4683 = vrot.slane %v4682, 4
      %v4684 = vmax.f32 %v4682, %v4683
      %v4685 = vrot.slane %v4684, 2
      %v4686 = vmax.f32 %v4684, %v4685
      %v4687 = vrot.slane %v4686, 1
      %v4688 = vmax.f32 %v4686, %v4687
      %v4689 = vsel %vm4072, %v3781, -inf
      %v4690 = vrot.slane %v4689, 4
      %v4691 = vmax.f32 %v4689, %v4690
      %v4692 = vrot.slane %v4691, 2
      %v4693 = vmax.f32 %v4691, %v4692
      %v4694 = vrot.slane %v4693, 1
      %v4695 = vmax.f32 %v4693, %v4694
      %v4696 = vsel %vm4072, %v3789, -inf
      %v4697 = vrot.slane %v4696, 4
      %v4698 = vmax.f32 %v4696, %v4697
      %v4699 = vrot.slane %v4698, 2
      %v4700 = vmax.f32 %v4698, %v4699
      %v4701 = vrot.slane %v4700, 1
      %v4702 = vmax.f32 %v4700, %v4701
      %v4703 = vsel %vm4072, %v3788, -inf
      %v4704 = vrot.slane %v4703, 4
      %v4705 = vmax.f32 %v4703, %v4704
      %v4706 = vrot.slane %v4705, 2
      %v4707 = vmax.f32 %v4705, %v4706
      %v4708 = vrot.slane %v4707, 1
      %v4709 = vmax.f32 %v4707, %v4708
      %v4710 = vsel %vm4072, %v3790, -inf
      %v4711 = vrot.slane %v4710, 4
      %v4712 = vmax.f32 %v4710, %v4711
      %v4713 = vrot.slane %v4712, 2
      %v4714 = vmax.f32 %v4712, %v4713
      %v4715 = vrot.slane %v4714, 1
      %v4716 = vmax.f32 %v4714, %v4715
      %v4717 = vsel %vm4072, %v3798, -inf
      %v4718 = vrot.slane %v4717, 4
      %v4719 = vmax.f32 %v4717, %v4718
      %v4720 = vrot.slane %v4719, 2
      %v4721 = vmax.f32 %v4719, %v4720
      %v4722 = vrot.slane %v4721, 1
      %v4723 = vmax.f32 %v4721, %v4722
      %v4724 = vsel %vm4072, %v3806, -inf
      %v4725 = vrot.slane %v4724, 4
      %v4726 = vmax.f32 %v4724, %v4725
      %v4727 = vrot.slane %v4726, 2
      %v4728 = vmax.f32 %v4726, %v4727
      %v4729 = vrot.slane %v4728, 1
      %v4730 = vmax.f32 %v4728, %v4729
      %v4731 = vsel %vm4072, %v3805, -inf
      %v4732 = vrot.slane %v4731, 4
      %v4733 = vmax.f32 %v4731, %v4732
      %v4734 = vrot.slane %v4733, 2
      %v4735 = vmax.f32 %v4733, %v4734
      %v4736 = vrot.slane %v4735, 1
      %v4737 = vmax.f32 %v4735, %v4736
      %v4738 = vsel %vm4072, %v3807, -inf
      %v4739 = vrot.slane %v4738, 4
      %v4740 = vmax.f32 %v4738, %v4739
      %v4741 = vrot.slane %v4740, 2
      %v4742 = vmax.f32 %v4740, %v4741
      %v4743 = vrot.slane %v4742, 1
      %v4744 = vmax.f32 %v4742, %v4743
      %v4745 = vsel %vm4072, %v3815, -inf
      %v4746 = vrot.slane %v4745, 4
      %v4747 = vmax.f32 %v4745, %v4746
      %v4748 = vrot.slane %v4747, 2
      %v4749 = vmax.f32 %v4747, %v4748
      %v4750 = vrot.slane %v4749, 1
      %v4751 = vmax.f32 %v4749, %v4750
      %v4752 = vsel %vm4072, %v3823, -inf
      %v4753 = vrot.slane %v4752, 4
      %v4754 = vmax.f32 %v4752, %v4753
      %v4755 = vrot.slane %v4754, 2
      %v4756 = vmax.f32 %v4754, %v4755
      %v4757 = vrot.slane %v4756, 1
      %v4758 = vmax.f32 %v4756, %v4757
      %v4759 = vsel %vm4072, %v3822, -inf
      %v4760 = vrot.slane %v4759, 4
      %v4761 = vmax.f32 %v4759, %v4760
      %v4762 = vrot.slane %v4761, 2
      %v4763 = vmax.f32 %v4761, %v4762
      %v4764 = vrot.slane %v4763, 1
      %v4765 = vmax.f32 %v4763, %v4764
      %v4766 = vsel %vm4072, %v3824, -inf
      %v4767 = vrot.slane %v4766, 4
      %v4768 = vmax.f32 %v4766, %v4767
      %v4769 = vrot.slane %v4768, 2
      %v4770 = vmax.f32 %v4768, %v4769
      %v4771 = vrot.slane %v4770, 1
      %v4772 = vmax.f32 %v4770, %v4771
      %v4773 = vsel %vm4072, %v3832, -inf
      %v4774 = vrot.slane %v4773, 4
      %v4775 = vmax.f32 %v4773, %v4774
      %v4776 = vrot.slane %v4775, 2
      %v4777 = vmax.f32 %v4775, %v4776
      %v4778 = vrot.slane %v4777, 1
      %v4779 = vmax.f32 %v4777, %v4778
      %v4780 = vsel %vm4072, %v3840, -inf
      %v4781 = vrot.slane %v4780, 4
      %v4782 = vmax.f32 %v4780, %v4781
      %v4783 = vrot.slane %v4782, 2
      %v4784 = vmax.f32 %v4782, %v4783
      %v4785 = vrot.slane %v4784, 1
      %v4786 = vmax.f32 %v4784, %v4785
      %v4787 = vsel %vm4072, %v3839, -inf
      %v4788 = vrot.slane %v4787, 4
      %v4789 = vmax.f32 %v4787, %v4788
      %v4790 = vrot.slane %v4789, 2
      %v4791 = vmax.f32 %v4789, %v4790
      %v4792 = vrot.slane %v4791, 1
      %v4793 = vmax.f32 %v4791, %v4792
      %v4794 = vsel %vm4072, %v3841, -inf
      %v4795 = vrot.slane %v4794, 4
      %v4796 = vmax.f32 %v4794, %v4795
      %v4797 = vrot.slane %v4796, 2
      %v4798 = vmax.f32 %v4796, %v4797
      %v4799 = vrot.slane %v4798, 1
      %v4800 = vmax.f32 %v4798, %v4799
      %v4801 = vsel %vm4072, %v3849, -inf
      %v4802 = vrot.slane %v4801, 4
      %v4803 = vmax.f32 %v4801, %v4802
      %v4804 = vrot.slane %v4803, 2
      %v4805 = vmax.f32 %v4803, %v4804
      %v4806 = vrot.slane %v4805, 1
      %v4807 = vmax.f32 %v4805, %v4806
      %v4808 = vsel %vm4072, %v3857, -inf
      %v4809 = vrot.slane %v4808, 4
      %v4810 = vmax.f32 %v4808, %v4809
      %v4811 = vrot.slane %v4810, 2
      %v4812 = vmax.f32 %v4810, %v4811
      %v4813 = vrot.slane %v4812, 1
      %v4814 = vmax.f32 %v4812, %v4813
      %v4815 = vsel %vm4072, %v3856, -inf
      %v4816 = vrot.slane %v4815, 4
      %v4817 = vmax.f32 %v4815, %v4816
      %v4818 = vrot.slane %v4817, 2
      %v4819 = vmax.f32 %v4817, %v4818
      %v4820 = vrot.slane %v4819, 1
      %v4821 = vmax.f32 %v4819, %v4820
      %v4822 = vsel %vm4072, %v3858, -inf
      %v4823 = vrot.slane %v4822, 4
      %v4824 = vmax.f32 %v4822, %v4823
      %v4825 = vrot.slane %v4824, 2
      %v4826 = vmax.f32 %v4824, %v4825
      %v4827 = vrot.slane %v4826, 1
      %v4828 = vmax.f32 %v4826, %v4827
      %v4829 = vsel %vm4072, %v3866, -inf
      %v4830 = vrot.slane %v4829, 4
      %v4831 = vmax.f32 %v4829, %v4830
      %v4832 = vrot.slane %v4831, 2
      %v4833 = vmax.f32 %v4831, %v4832
      %v4834 = vrot.slane %v4833, 1
      %v4835 = vmax.f32 %v4833, %v4834
      %v4836 = vsel %vm4072, %v3874, -inf
      %v4837 = vrot.slane %v4836, 4
      %v4838 = vmax.f32 %v4836, %v4837
      %v4839 = vrot.slane %v4838, 2
      %v4840 = vmax.f32 %v4838, %v4839
      %v4841 = vrot.slane %v4840, 1
      %v4842 = vmax.f32 %v4840, %v4841
      %v4843 = vsel %vm4072, %v3873, -inf
      %v4844 = vrot.slane %v4843, 4
      %v4845 = vmax.f32 %v4843, %v4844
      %v4846 = vrot.slane %v4845, 2
      %v4847 = vmax.f32 %v4845, %v4846
      %v4848 = vrot.slane %v4847, 1
      %v4849 = vmax.f32 %v4847, %v4848
      %v4850 = vsel %vm4072, %v3875, -inf
      %v4851 = vrot.slane %v4850, 4
      %v4852 = vmax.f32 %v4850, %v4851
      %v4853 = vrot.slane %v4852, 2
      %v4854 = vmax.f32 %v4852, %v4853
      %v4855 = vrot.slane %v4854, 1
      %v4856 = vmax.f32 %v4854, %v4855
      %v4857 = vsel %vm4072, %v3883, -inf
      %v4858 = vrot.slane %v4857, 4
      %v4859 = vmax.f32 %v4857, %v4858
      %v4860 = vrot.slane %v4859, 2
      %v4861 = vmax.f32 %v4859, %v4860
      %v4862 = vrot.slane %v4861, 1
      %v4863 = vmax.f32 %v4861, %v4862
      %v4864 = vsel %vm4072, %v3891, -inf
      %v4865 = vrot.slane %v4864, 4
      %v4866 = vmax.f32 %v4864, %v4865
      %v4867 = vrot.slane %v4866, 2
      %v4868 = vmax.f32 %v4866, %v4867
      %v4869 = vrot.slane %v4868, 1
      %v4870 = vmax.f32 %v4868, %v4869
      %v4871 = vsel %vm4072, %v3890, -inf
      %v4872 = vrot.slane %v4871, 4
      %v4873 = vmax.f32 %v4871, %v4872
      %v4874 = vrot.slane %v4873, 2
      %v4875 = vmax.f32 %v4873, %v4874
      %v4876 = vrot.slane %v4875, 1
      %v4877 = vmax.f32 %v4875, %v4876
      %v4878 = vsel %vm4072, %v3892, -inf
      %v4879 = vrot.slane %v4878, 4
      %v4880 = vmax.f32 %v4878, %v4879
      %v4881 = vrot.slane %v4880, 2
      %v4882 = vmax.f32 %v4880, %v4881
      %v4883 = vrot.slane %v4882, 1
      %v4884 = vmax.f32 %v4882, %v4883
      %v4885 = vsel %vm4072, %v3900, -inf
      %v4886 = vrot.slane %v4885, 4
      %v4887 = vmax.f32 %v4885, %v4886
      %v4888 = vrot.slane %v4887, 2
      %v4889 = vmax.f32 %v4887, %v4888
      %v4890 = vrot.slane %v4889, 1
      %v4891 = vmax.f32 %v4889, %v4890
      %v4892 = vsel %vm4072, %v3908, -inf
      %v4893 = vrot.slane %v4892, 4
      %v4894 = vmax.f32 %v4892, %v4893
      %v4895 = vrot.slane %v4894, 2
      %v4896 = vmax.f32 %v4894, %v4895
      %v4897 = vrot.slane %v4896, 1
      %v4898 = vmax.f32 %v4896, %v4897
      %v4899 = vsel %vm4072, %v3907, -inf
      %v4900 = vrot.slane %v4899, 4
      %v4901 = vmax.f32 %v4899, %v4900
      %v4902 = vrot.slane %v4901, 2
      %v4903 = vmax.f32 %v4901, %v4902
      %v4904 = vrot.slane %v4903, 1
      %v4905 = vmax.f32 %v4903, %v4904
      %v4906 = vsel %vm4072, %v3909, -inf
      %v4907 = vrot.slane %v4906, 4
      %v4908 = vmax.f32 %v4906, %v4907
      %v4909 = vrot.slane %v4908, 2
      %v4910 = vmax.f32 %v4908, %v4909
      %v4911 = vrot.slane %v4910, 1
      %v4912 = vmax.f32 %v4910, %v4911
      %v4913 = vsel %vm4072, %v3917, -inf
      %v4914 = vrot.slane %v4913, 4
      %v4915 = vmax.f32 %v4913, %v4914
      %v4916 = vrot.slane %v4915, 2
      %v4917 = vmax.f32 %v4915, %v4916
      %v4918 = vrot.slane %v4917, 1
      %v4919 = vmax.f32 %v4917, %v4918
      %v4920 = vsel %vm4072, %v3925, -inf
      %v4921 = vrot.slane %v4920, 4
      %v4922 = vmax.f32 %v4920, %v4921
      %v4923 = vrot.slane %v4922, 2
      %v4924 = vmax.f32 %v4922, %v4923
      %v4925 = vrot.slane %v4924, 1
      %v4926 = vmax.f32 %v4924, %v4925
      %v4927 = vsel %vm4072, %v3924, -inf
      %v4928 = vrot.slane %v4927, 4
      %v4929 = vmax.f32 %v4927, %v4928
      %v4930 = vrot.slane %v4929, 2
      %v4931 = vmax.f32 %v4929, %v4930
      %v4932 = vrot.slane %v4931, 1
      %v4933 = vmax.f32 %v4931, %v4932
      %v4934 = vsel %vm4072, %v3926, -inf
      %v4935 = vrot.slane %v4934, 4
      %v4936 = vmax.f32 %v4934, %v4935
      %v4937 = vrot.slane %v4936, 2
      %v4938 = vmax.f32 %v4936, %v4937
      %v4939 = vrot.slane %v4938, 1
      %v4940 = vmax.f32 %v4938, %v4939
      %v4941 = vsel %vm4072, %v3934, -inf
      %v4942 = vrot.slane %v4941, 4
      %v4943 = vmax.f32 %v4941, %v4942
      %v4944 = vrot.slane %v4943, 2
      %v4945 = vmax.f32 %v4943, %v4944
      %v4946 = vrot.slane %v4945, 1
      %v4947 = vmax.f32 %v4945, %v4946
      %v4948 = vsel %vm4072, %v3942, -inf
      %v4949 = vrot.slane %v4948, 4
      %v4950 = vmax.f32 %v4948, %v4949
      %v4951 = vrot.slane %v4950, 2
      %v4952 = vmax.f32 %v4950, %v4951
      %v4953 = vrot.slane %v4952, 1
      %v4954 = vmax.f32 %v4952, %v4953
      %v4955 = vsel %vm4072, %v3941, -inf
      %v4956 = vrot.slane %v4955, 4
      %v4957 = vmax.f32 %v4955, %v4956
      %v4958 = vrot.slane %v4957, 2
      %v4959 = vmax.f32 %v4957, %v4958
      %v4960 = vrot.slane %v4959, 1
      %v4961 = vmax.f32 %v4959, %v4960
      %v4962 = vsel %vm4072, %v3943, -inf
      %v4963 = vrot.slane %v4962, 4
      %v4964 = vmax.f32 %v4962, %v4963
      %v4965 = vrot.slane %v4964, 2
      %v4966 = vmax.f32 %v4964, %v4965
      %v4967 = vrot.slane %v4966, 1
      %v4968 = vmax.f32 %v4966, %v4967
      %vm4969 = vcmask 130048
      %v4970 = vsel %vm4969, %v4079, -inf
      %v4971 = vsel %vm4969, %v4135, -inf
      %v4972 = vmax.f32 %v4970, %v4971
      %v4973 = vsel %vm4969, %v4086, -inf
      %v4974 = vsel %vm4969, %v4142, -inf
      %v4975 = vmax.f32 %v4973, %v4974
      %v4976 = vsel %vm4969, %v4093, -inf
      %v4977 = vsel %vm4969, %v4149, -inf
      %v4978 = vmax.f32 %v4976, %v4977
      %v4979 = vsel %vm4969, %v4100, -inf
      %v4980 = vsel %vm4969, %v4156, -inf
      %v4981 = vmax.f32 %v4979, %v4980
      %v4982 = vsel %vm4969, %v4107, -inf
      %v4983 = vsel %vm4969, %v4163, -inf
      %v4984 = vmax.f32 %v4982, %v4983
      %v4985 = vsel %vm4969, %v4114, -inf
      %v4986 = vsel %vm4969, %v4170, -inf
      %v4987 = vmax.f32 %v4985, %v4986
      %v4988 = vsel %vm4969, %v4121, -inf
      %v4989 = vsel %vm4969, %v4177, -inf
      %v4990 = vmax.f32 %v4988, %v4989
      %v4991 = vsel %vm4969, %v4128, -inf
      %v4992 = vsel %vm4969, %v4184, -inf
      %v4993 = vmax.f32 %v4991, %v4992
      %v4994 = vsel %vm4969, %v4191, -inf
      %v4995 = vsel %vm4969, %v4247, -inf
      %v4996 = vmax.f32 %v4994, %v4995
      %v4997 = vsel %vm4969, %v4198, -inf
      %v4998 = vsel %vm4969, %v4254, -inf
      %v4999 = vmax.f32 %v4997, %v4998
      %v5000 = vsel %vm4969, %v4205, -inf
      %v5001 = vsel %vm4969, %v4261, -inf
      %v5002 = vmax.f32 %v5000, %v5001
      %v5003 = vsel %vm4969, %v4212, -inf
      %v5004 = vsel %vm4969, %v4268, -inf
      %v5005 = vmax.f32 %v5003, %v5004
      %v5006 = vsel %vm4969, %v4219, -inf
      %v5007 = vsel %vm4969, %v4275, -inf
      %v5008 = vmax.f32 %v5006, %v5007
      %v5009 = vsel %vm4969, %v4226, -inf
      %v5010 = vsel %vm4969, %v4282, -inf
      %v5011 = vmax.f32 %v5009, %v5010
      %v5012 = vsel %vm4969, %v4233, -inf
      %v5013 = vsel %vm4969, %v4289, -inf
      %v5014 = vmax.f32 %v5012, %v5013
      %v5015 = vsel %vm4969, %v4240, -inf
      %v5016 = vsel %vm4969, %v4296, -inf
      %v5017 = vmax.f32 %v5015, %v5016
      %v5018 = vsel %vm4969, %v4303, -inf
      %v5019 = vsel %vm4969, %v4359, -inf
      %v5020 = vmax.f32 %v5018, %v5019
      %v5021 = vsel %vm4969, %v4310, -inf
      %v5022 = vsel %vm4969, %v4366, -inf
      %v5023 = vmax.f32 %v5021, %v5022
      %v5024 = vsel %vm4969, %v4317, -inf
      %v5025 = vsel %vm4969, %v4373, -inf
      %v5026 = vmax.f32 %v5024, %v5025
      %v5027 = vsel %vm4969, %v4324, -inf
      %v5028 = vsel %vm4969, %v4380, -inf
      %v5029 = vmax.f32 %v5027, %v5028
      %v5030 = vsel %vm4969, %v4331, -inf
      %v5031 = vsel %vm4969, %v4387, -inf
      %v5032 = vmax.f32 %v5030, %v5031
      %v5033 = vsel %vm4969, %v4338, -inf
      %v5034 = vsel %vm4969, %v4394, -inf
      %v5035 = vmax.f32 %v5033, %v5034
      %v5036 = vsel %vm4969, %v4345, -inf
      %v5037 = vsel %vm4969, %v4401, -inf
      %v5038 = vmax.f32 %v5036, %v5037
      %v5039 = vsel %vm4969, %v4352, -inf
      %v5040 = vsel %vm4969, %v4408, -inf
      %v5041 = vmax.f32 %v5039, %v5040
      %v5042 = vsel %vm4969, %v4415, -inf
      %v5043 = vsel %vm4969, %v4471, -inf
      %v5044 = vmax.f32 %v5042, %v5043
      %v5045 = vsel %vm4969, %v4422, -inf
      %v5046 = vsel %vm4969, %v4478, -inf
      %v5047 = vmax.f32 %v5045, %v5046
      %v5048 = vsel %vm4969, %v4429, -inf
      %v5049 = vsel %vm4969, %v4485, -inf
      %v5050 = vmax.f32 %v5048, %v5049
      %v5051 = vsel %vm4969, %v4436, -inf
      %v5052 = vsel %vm4969, %v4492, -inf
      %v5053 = vmax.f32 %v5051, %v5052
      %v5054 = vsel %vm4969, %v4443, -inf
      %v5055 = vsel %vm4969, %v4499, -inf
      %v5056 = vmax.f32 %v5054, %v5055
      %v5057 = vsel %vm4969, %v4450, -inf
      %v5058 = vsel %vm4969, %v4506, -inf
      %v5059 = vmax.f32 %v5057, %v5058
      %v5060 = vsel %vm4969, %v4457, -inf
      %v5061 = vsel %vm4969, %v4513, -inf
      %v5062 = vmax.f32 %v5060, %v5061
      %v5063 = vsel %vm4969, %v4464, -inf
      %v5064 = vsel %vm4969, %v4520, -inf
      %v5065 = vmax.f32 %v5063, %v5064
      %v5066 = vsel %vm4969, %v4527, -inf
      %v5067 = vsel %vm4969, %v4583, -inf
      %v5068 = vmax.f32 %v5066, %v5067
      %v5069 = vsel %vm4969, %v4534, -inf
      %v5070 = vsel %vm4969, %v4590, -inf
      %v5071 = vmax.f32 %v5069, %v5070
      %v5072 = vsel %vm4969, %v4541, -inf
      %v5073 = vsel %vm4969, %v4597, -inf
      %v5074 = vmax.f32 %v5072, %v5073
      %v5075 = vsel %vm4969, %v4548, -inf
      %v5076 = vsel %vm4969, %v4604, -inf
      %v5077 = vmax.f32 %v5075, %v5076
      %v5078 = vsel %vm4969, %v4555, -inf
      %v5079 = vsel %vm4969, %v4611, -inf
      %v5080 = vmax.f32 %v5078, %v5079
      %v5081 = vsel %vm4969, %v4562, -inf
      %v5082 = vsel %vm4969, %v4618, -inf
      %v5083 = vmax.f32 %v5081, %v5082
      %v5084 = vsel %vm4969, %v4569, -inf
      %v5085 = vsel %vm4969, %v4625, -inf
      %v5086 = vmax.f32 %v5084, %v5085
      %v5087 = vsel %vm4969, %v4576, -inf
      %v5088 = vsel %vm4969, %v4632, -inf
      %v5089 = vmax.f32 %v5087, %v5088
      %v5090 = vsel %vm4969, %v4639, -inf
      %v5091 = vsel %vm4969, %v4695, -inf
      %v5092 = vmax.f32 %v5090, %v5091
      %v5093 = vsel %vm4969, %v4646, -inf
      %v5094 = vsel %vm4969, %v4702, -inf
      %v5095 = vmax.f32 %v5093, %v5094
      %v5096 = vsel %vm4969, %v4653, -inf
      %v5097 = vsel %vm4969, %v4709, -inf
      %v5098 = vmax.f32 %v5096, %v5097
      %v5099 = vsel %vm4969, %v4660, -inf
      %v5100 = vsel %vm4969, %v4716, -inf
      %v5101 = vmax.f32 %v5099, %v5100
      %v5102 = vsel %vm4969, %v4667, -inf
      %v5103 = vsel %vm4969, %v4723, -inf
      %v5104 = vmax.f32 %v5102, %v5103
      %v5105 = vsel %vm4969, %v4674, -inf
      %v5106 = vsel %vm4969, %v4730, -inf
      %v5107 = vmax.f32 %v5105, %v5106
      %v5108 = vsel %vm4969, %v4681, -inf
      %v5109 = vsel %vm4969, %v4737, -inf
      %v5110 = vmax.f32 %v5108, %v5109
      %v5111 = vsel %vm4969, %v4688, -inf
      %v5112 = vsel %vm4969, %v4744, -inf
      %v5113 = vmax.f32 %v5111, %v5112
      %v5114 = vsel %vm4969, %v4751, -inf
      %v5115 = vsel %vm4969, %v4807, -inf
      %v5116 = vmax.f32 %v5114, %v5115
      %v5117 = vsel %vm4969, %v4758, -inf
      %v5118 = vsel %vm4969, %v4814, -inf
      %v5119 = vmax.f32 %v5117, %v5118
      %v5120 = vsel %vm4969, %v4765, -inf
      %v5121 = vsel %vm4969, %v4821, -inf
      %v5122 = vmax.f32 %v5120, %v5121
      %v5123 = vsel %vm4969, %v4772, -inf
      %v5124 = vsel %vm4969, %v4828, -inf
      %v5125 = vmax.f32 %v5123, %v5124
      %v5126 = vsel %vm4969, %v4779, -inf
      %v5127 = vsel %vm4969, %v4835, -inf
      %v5128 = vmax.f32 %v5126, %v5127
      %v5129 = vsel %vm4969, %v4786, -inf
      %v5130 = vsel %vm4969, %v4842, -inf
      %v5131 = vmax.f32 %v5129, %v5130
      %v5132 = vsel %vm4969, %v4793, -inf
      %v5133 = vsel %vm4969, %v4849, -inf
      %v5134 = vmax.f32 %v5132, %v5133
      %v5135 = vsel %vm4969, %v4800, -inf
      %v5136 = vsel %vm4969, %v4856, -inf
      %v5137 = vmax.f32 %v5135, %v5136
      %v5138 = vsel %vm4969, %v4863, -inf
      %v5139 = vsel %vm4969, %v4919, -inf
      %v5140 = vmax.f32 %v5138, %v5139
      %v5141 = vsel %vm4969, %v4870, -inf
      %v5142 = vsel %vm4969, %v4926, -inf
      %v5143 = vmax.f32 %v5141, %v5142
      %v5144 = vsel %vm4969, %v4877, -inf
      %v5145 = vsel %vm4969, %v4933, -inf
      %v5146 = vmax.f32 %v5144, %v5145
      %v5147 = vsel %vm4969, %v4884, -inf
      %v5148 = vsel %vm4969, %v4940, -inf
      %v5149 = vmax.f32 %v5147, %v5148
      %v5150 = vsel %vm4969, %v4891, -inf
      %v5151 = vsel %vm4969, %v4947, -inf
      %v5152 = vmax.f32 %v5150, %v5151
      %v5153 = vsel %vm4969, %v4898, -inf
      %v5154 = vsel %vm4969, %v4954, -inf
      %v5155 = vmax.f32 %v5153, %v5154
      %v5156 = vsel %vm4969, %v4905, -inf
      %v5157 = vsel %vm4969, %v4961, -inf
      %v5158 = vmax.f32 %v5156, %v5157
      %v5159 = vsel %vm4969, %v4912, -inf
      %v5160 = vsel %vm4969, %v4968, -inf
      %v5161 = vmax.f32 %v5159, %v5160
      %5162 = vst.msk [vmem:[#allocation3] sm:$0xff] %vm4969, 0.0
      %5163 = vst.msk [vmem:[#allocation3 + $0x8] sm:$0x3] %vm4072, 0.0
      %5164 = vst.msk [vmem:[#allocation3 + $0x10] sm:$0xff] %vm4969, 0.0
      %5165 = vst.msk [vmem:[#allocation3 + $0x18] sm:$0x3] %vm4072, 0.0
      %5166 = vst.msk [vmem:[#allocation3 + $0x20] sm:$0xff] %vm4969, 0.0
      %5167 = vst.msk [vmem:[#allocation3 + $0x28] sm:$0x3] %vm4072, 0.0
      %5168 = vst.msk [vmem:[#allocation3 + $0x30] sm:$0xff] %vm4969, 0.0
      %5169 = vst.msk [vmem:[#allocation3 + $0x38] sm:$0x3] %vm4072, 0.0
      %5170 = vst.msk [vmem:[#allocation3 + $0x40] sm:$0xff] %vm4969, 0.0
      %5171 = vst.msk [vmem:[#allocation3 + $0x48] sm:$0x3] %vm4072, 0.0
      %5172 = vst.msk [vmem:[#allocation3 + $0x50] sm:$0xff] %vm4969, 0.0
      %5173 = vst.msk [vmem:[#allocation3 + $0x58] sm:$0x3] %vm4072, 0.0
      %5174 = vst.msk [vmem:[#allocation3 + $0x60] sm:$0xff] %vm4969, 0.0
      %5175 = vst.msk [vmem:[#allocation3 + $0x68] sm:$0x3] %vm4072, 0.0
      %5176 = vst.msk [vmem:[#allocation3 + $0x70] sm:$0xff] %vm4969, 0.0
      %5177 = vst.msk [vmem:[#allocation3 + $0x78] sm:$0x3] %vm4072, 0.0
      %5178 = vst.msk [vmem:[#allocation3 + $0x80] sm:$0xff] %vm4969, 0.0
      %5179 = vst.msk [vmem:[#allocation3 + $0x88] sm:$0x3] %vm4072, 0.0
      %5180 = vst.msk [vmem:[#allocation3 + $0x90] sm:$0xff] %vm4969, 0.0
      %5181 = vst.msk [vmem:[#allocation3 + $0x98] sm:$0x3] %vm4072, 0.0
      %vm5246 = vcmask 1041409
      %v5247 = vsel %vm5246, %v4975, %v4972
      %vm5248 = vcmask 1042434
      %v5249 = vsel %vm5248, %v4978, %v5247
      %vm5250 = vcmask 1043459
      %v5251 = vsel %vm5250, %v4981, %v5249
      %vm5252 = vcmask 1044484
      %v5253 = vsel %vm5252, %v4984, %v5251
      %vm5254 = vcmask 1045509
      %v5255 = vsel %vm5254, %v4987, %v5253
      %vm5256 = vcmask 1046534
      %v5257 = vsel %vm5256, %v4990, %v5255
      %vm5258 = vcmask 1047559
      %v5259 = vsel %vm5258, %v4993, %v5257
      %v5260 = vsel %vm5246, %v4999, %v4996
      %v5261 = vsel %vm5248, %v5002, %v5260
      %v5262 = vsel %vm5250, %v5005, %v5261
      %v5263 = vsel %vm5252, %v5008, %v5262
      %v5264 = vsel %vm5254, %v5011, %v5263
      %v5265 = vsel %vm5256, %v5014, %v5264
      %v5266 = vsel %vm5258, %v5017, %v5265
      %v5267 = vsel %vm5246, %v5023, %v5020
      %v5268 = vsel %vm5248, %v5026, %v5267
      %v5269 = vsel %vm5250, %v5029, %v5268
      %v5270 = vsel %vm5252, %v5032, %v5269
      %v5271 = vsel %vm5254, %v5035, %v5270
      %v5272 = vsel %vm5256, %v5038, %v5271
      %v5273 = vsel %vm5258, %v5041, %v5272
      %v5274 = vsel %vm5246, %v5047, %v5044
      %v5275 = vsel %vm5248, %v5050, %v5274
      %v5276 = vsel %vm5250, %v5053, %v5275
      %v5277 = vsel %vm5252, %v5056, %v5276
      %v5278 = vsel %vm5254, %v5059, %v5277
      %v5279 = vsel %vm5256, %v5062, %v5278
      %v5280 = vsel %vm5258, %v5065, %v5279
      %v5281 = vsel %vm5246, %v5071, %v5068
      %v5282 = vsel %vm5248, %v5074, %v5281
      %v5283 = vsel %vm5250, %v5077, %v5282
      %v5284 = vsel %vm5252, %v5080, %v5283
      %v5285 = vsel %vm5254, %v5083, %v5284
      %v5286 = vsel %vm5256, %v5086, %v5285
      %v5287 = vsel %vm5258, %v5089, %v5286
      %v5288 = vsel %vm5246, %v5095, %v5092
      %v5289 = vsel %vm5248, %v5098, %v5288
      %v5290 = vsel %vm5250, %v5101, %v5289
      %v5291 = vsel %vm5252, %v5104, %v5290
      %v5292 = vsel %vm5254, %v5107, %v5291
      %v5293 = vsel %vm5256, %v5110, %v5292
      %v5294 = vsel %vm5258, %v5113, %v5293
      %v5295 = vsel %vm5246, %v5119, %v5116
      %v5296 = vsel %vm5248, %v5122, %v5295
      %v5297 = vsel %vm5250, %v5125, %v5296
      %v5298 = vsel %vm5252, %v5128, %v5297
      %v5299 = vsel %vm5254, %v5131, %v5298
      %v5300 = vsel %vm5256, %v5134, %v5299
      %v5301 = vsel %vm5258, %v5137, %v5300
      %v5302 = vsel %vm5246, %v5143, %v5140
      %v5303 = vsel %vm5248, %v5146, %v5302
      %v5304 = vsel %vm5250, %v5149, %v5303
      %v5305 = vsel %vm5252, %v5152, %v5304
      %v5306 = vsel %vm5254, %v5155, %v5305
      %v5307 = vsel %vm5256, %v5158, %v5306
      %v5308 = vsel %vm5258, %v5161, %v5307
      %s5317 = scalar_lea.vmem [#allocation3], 16
      %5318 = vst.msk [vmem:[%s5317 + $0x1] sm:$0xff] %vm4969, %v5259
      %5319 = vst.msk [vmem:[%s5317 + $0x11] sm:$0xff] %vm4969, %v5266
      %5320 = vst.msk [vmem:[%s5317 + $0x21] sm:$0xff] %vm4969, %v5273
      %5321 = vst.msk [vmem:[%s5317 + $0x31] sm:$0xff] %vm4969, %v5280
      %5322 = vst.msk [vmem:[%s5317 + $0x41] sm:$0xff] %vm4969, %v5287
      %5323 = vst.msk [vmem:[%s5317 + $0x51] sm:$0xff] %vm4969, %v5294
      %5324 = vst.msk [vmem:[%s5317 + $0x61] sm:$0xff] %vm4969, %v5301
      %5325 = vst.msk [vmem:[%s5317 + $0x71] sm:$0xff] %vm4969, %v5308
      %v5326 = vld [vmem:[#allocation3] sm:$0xff]
      %v5327 = vld [vmem:[#allocation3 + $0x10] sm:$0xff]
      %v5328 = vld [vmem:[#allocation3 + $0x20] sm:$0xff]
      %v5329 = vld [vmem:[#allocation3 + $0x30] sm:$0xff]
      %v5330 = vld [vmem:[#allocation3 + $0x40] sm:$0xff]
      %v5331 = vld [vmem:[#allocation3 + $0x50] sm:$0xff]
      %v5332 = vld [vmem:[#allocation3 + $0x60] sm:$0xff]
      %v5333 = vld [vmem:[#allocation3 + $0x70] sm:$0xff]
      %v5334 = vpack.c.bf16 %v5327, %v5326
      %v5335 = vpack.c.bf16 %v5329, %v5328
      %v5336 = vpack.c.bf16 %v5331, %v5330
      %v5337 = vpack.c.bf16 %v5333, %v5332
      %v5338 = vld [vmem:[%s3] sm:$0xf]
      %v5339 = vld [vmem:[%s3 + $0x4] sm:$0xf]
      %v5340 = vld [vmem:[#allocation3 + $0x1] sm:$0xff]
      %v5341 = vld [vmem:[#allocation3 + $0x11] sm:$0xff]
      %v5342 = vld [vmem:[#allocation3 + $0x21] sm:$0xff]
      %v5343 = vld [vmem:[#allocation3 + $0x31] sm:$0xff]
      %v5344 = vld [vmem:[#allocation3 + $0x41] sm:$0xff]
      %v5345 = vld [vmem:[#allocation3 + $0x51] sm:$0xff]
      %v5346 = vld [vmem:[#allocation3 + $0x61] sm:$0xff]
      %v5347 = vld [vmem:[#allocation3 + $0x71] sm:$0xff]
      %v5348 = vpack.c.bf16 %v5341, %v5340
      %v5349 = vpack.c.bf16 %v5343, %v5342
      %v5350 = vpack.c.bf16 %v5345, %v5344
      %v5351 = vpack.c.bf16 %v5347, %v5346
      %s5352 = scalar_lea.vmem %s3, 8
      %v5353 = vld [vmem:[%s5352] sm:$0xf]
      %v5354 = vld [vmem:[%s5352 + $0x4] sm:$0xf]
      %v5357 = vunpack.c.l.b16 %v5353
      %v5358 = vunpack.c.l.b16 %v5354
      %v5359 = vpack.c.b16 %v5358, %v5357
      %v5362 = vsel %vm4969, %v5348, 0
      %v5365 = vsel %vm4969, %v5349, 0
      %v5368 = vsel %vm4969, %v5350, 0
      %v5371 = vsel %vm4969, %v5351, 0
      %5373 = vmatprep.subr.bf16.mxu0 0
      %5374 = vmatpush1.bf16.msra.mxu0 %v5359
      %5375 = vmatprep.subr.bf16.mxu0 0
      %5376 = vmatpush1.bf16.msra.mxu0 0
      %5377 = vmatprep.subr.bf16.mxu0 0
      %5378 = vmatpush1.bf16.msra.mxu0 0
      %5379 = vmatprep.subr.bf16.mxu0 0
      %5380 = vmatpush1.bf16.msra.mxu0 0
      %5381 = vmatprep.subr.bf16.mxu0 0
      %5382 = vmatpush1.bf16.msra.mxu0 0
      %5383 = vmatprep.subr.bf16.mxu0 0
      %5384 = vmatpush1.bf16.msra.mxu0 0
      %5385 = vmatprep.subr.bf16.mxu0 0
      %5386 = vmatpush1.bf16.msra.mxu0 0
      %5387 = vmatprep.subr.bf16.mxu0 0
      %5388 = vmatpush1.bf16.msra.mxu0 0
      %5389 = vmatprep.subr.bf16.mxu0 0
      %5390 = vmatpush1.bf16.msra.mxu0 0
      %5391 = vmatprep.subr.bf16.mxu0 0
      %5392 = vmatpush1.bf16.msra.mxu0 0
      %5393 = vmatprep.subr.bf16.mxu0 0
      %5394 = vmatpush1.bf16.msra.mxu0 0
      %5395 = vmatprep.subr.bf16.mxu0 0
      %5396 = vmatpush1.bf16.msra.mxu0 0
      %5397 = vmatprep.subr.bf16.mxu0 0
      %5398 = vmatpush1.bf16.msra.mxu0 0
      %5399 = vmatprep.subr.bf16.mxu0 0
      %5400 = vmatpush1.bf16.msra.mxu0 0
      %5401 = vmatprep.subr.bf16.mxu0 0
      %5402 = vmatpush1.bf16.msra.mxu0 0
      %5403 = vmatprep.subr.bf16.mxu0 0
      %5404 = vmatpush1.bf16.msra.mxu0 0
      %5405 = vmatprep.mubr.bf16.mxu0 0
      %5406 = vmatmul.mubr.bf16.gmra.mrb[0].mxu0 %v5362
      %v5407 = vpop.f32.mrb[0].mxu0
      %v5408 = vadd.f32 0.0, %v5407
      %v5409 = vpop.f32.mrb[0].mxu0
      %v5410 = vpop.f32.mrb[0].mxu0
      %v5411 = vadd.f32 0.0, %v5410
      %v5412 = vpop.f32.mrb[0].mxu0
      %5413 = vmatprep.mubr.bf16.mxu0 0
      %5414 = vmatmul.mubr.bf16.gmra.mrb[0].mxu0 %v5365
      %v5415 = vpop.f32.mrb[0].mxu0
      %v5416 = vadd.f32 0.0, %v5415
      %v5417 = vpop.f32.mrb[0].mxu0
      %v5418 = vpop.f32.mrb[0].mxu0
      %v5419 = vadd.f32 0.0, %v5418
      %v5420 = vpop.f32.mrb[0].mxu0
      %5421 = vmatprep.mubr.bf16.mxu0 0
      %5422 = vmatmul.mubr.bf16.gmra.mrb[0].mxu0 %v5368
      %v5423 = vpop.f32.mrb[0].mxu0
      %v5424 = vadd.f32 0.0, %v5423
      %v5425 = vpop.f32.mrb[0].mxu0
      %v5426 = vpop.f32.mrb[0].mxu0
      %v5427 = vadd.f32 0.0, %v5426
      %v5428 = vpop.f32.mrb[0].mxu0
      %5429 = vmatprep.mubr.bf16.mxu0 0
      %5430 = vmatmul.mubr.bf16.gmra.mrb[0].mxu0 %v5371
      %v5431 = vpop.f32.mrb[0].mxu0
      %v5432 = vadd.f32 0.0, %v5431
      %v5433 = vpop.f32.mrb[0].mxu0
      %v5434 = vpop.f32.mrb[0].mxu0
      %v5435 = vadd.f32 0.0, %v5434
      %v5436 = vpop.f32.mrb[0].mxu0
      %5437 = vdwg.mxu0
      %v5440 = vunpack.c.l.b16 %v5338
      %v5441 = vunpack.c.l.b16 %v5339
      %v5442 = vpack.c.b16 %v5441, %v5440
      %v5445 = vsel %vm4969, %v5334, 0
      %v5448 = vsel %vm4969, %v5335, 0
      %v5451 = vsel %vm4969, %v5336, 0
      %v5454 = vsel %vm4969, %v5337, 0
      %5456 = vmatprep.subr.bf16.mxu0 0
      %5457 = vmatpush1.bf16.msra.mxu0 %v5442
      %5458 = vmatprep.subr.bf16.mxu0 0
      %5459 = vmatpush1.bf16.msra.mxu0 0
      %5460 = vmatprep.subr.bf16.mxu0 0
      %5461 = vmatpush1.bf16.msra.mxu0 0
      %5462 = vmatprep.subr.bf16.mxu0 0
      %5463 = vmatpush1.bf16.msra.mxu0 0
      %5464 = vmatprep.subr.bf16.mxu0 0
      %5465 = vmatpush1.bf16.msra.mxu0 0
      %5466 = vmatprep.subr.bf16.mxu0 0
      %5467 = vmatpush1.bf16.msra.mxu0 0
      %5468 = vmatprep.subr.bf16.mxu0 0
      %5469 = vmatpush1.bf16.msra.mxu0 0
      %5470 = vmatprep.subr.bf16.mxu0 0
      %5471 = vmatpush1.bf16.msra.mxu0 0
      %5472 = vmatprep.subr.bf16.mxu0 0
      %5473 = vmatpush1.bf16.msra.mxu0 0
      %5474 = vmatprep.subr.bf16.mxu0 0
      %5475 = vmatpush1.bf16.msra.mxu0 0
      %5476 = vmatprep.subr.bf16.mxu0 0
      %5477 = vmatpush1.bf16.msra.mxu0 0
      %5478 = vmatprep.subr.bf16.mxu0 0
      %5479 = vmatpush1.bf16.msra.mxu0 0
      %5480 = vmatprep.subr.bf16.mxu0 0
      %5481 = vmatpush1.bf16.msra.mxu0 0
      %5482 = vmatprep.subr.bf16.mxu0 0
      %5483 = vmatpush1.bf16.msra.mxu0 0
      %5484 = vmatprep.subr.bf16.mxu0 0
      %5485 = vmatpush1.bf16.msra.mxu0 0
      %5486 = vmatprep.subr.bf16.mxu0 0
      %5487 = vmatpush1.bf16.msra.mxu0 0
      %5488 = vmatprep.mubr.bf16.mxu0 0
      %5489 = vmatmul.mubr.bf16.gmra.mrb[0].mxu0 %v5445
      %v5490 = vpop.f32.mrb[0].mxu0
      %v5491 = vadd.f32 %v5408, %v5490
      %v5492 = vpop.f32.mrb[0].mxu0
      %v5493 = vpop.f32.mrb[0].mxu0
      %v5494 = vadd.f32 %v5411, %v5493
      %v5495 = vpop.f32.mrb[0].mxu0
      %5496 = vmatprep.mubr.bf16.mxu0 0
      %5497 = vmatmul.mubr.bf16.gmra.mrb[0].mxu0 %v5448
      %v5498 = vpop.f32.mrb[0].mxu0
      %v5499 = vadd.f32 %v5416, %v5498
      %v5500 = vpop.f32.mrb[0].mxu0
      %v5501 = vpop.f32.mrb[0].mxu0
      %v5502 = vadd.f32 %v5419, %v5501
      %v5503 = vpop.f32.mrb[0].mxu0
      %5504 = vmatprep.mubr.bf16.mxu0 0
      %5505 = vmatmul.mubr.bf16.gmra.mrb[0].mxu0 %v5451
      %v5506 = vpop.f32.mrb[0].mxu0
      %v5507 = vadd.f32 %v5424, %v5506
      %v5508 = vpop.f32.mrb[0].mxu0
      %v5509 = vpop.f32.mrb[0].mxu0
      %v5510 = vadd.f32 %v5427, %v5509
      %v5511 = vpop.f32.mrb[0].mxu0
      %5512 = vmatprep.mubr.bf16.mxu0 0
      %5513 = vmatmul.mubr.bf16.gmra.mrb[0].mxu0 %v5454
      %v5514 = vpop.f32.mrb[0].mxu0
      %v5515 = vadd.f32 %v5432, %v5514
      %v5516 = vpop.f32.mrb[0].mxu0
      %v5517 = vpop.f32.mrb[0].mxu0
      %v5518 = vadd.f32 %v5435, %v5517
      %v5519 = vpop.f32.mrb[0].mxu0
      %5520 = vdwg.mxu0
      %v5521 = vld [vmem:[#allocation3 + $0x2] sm:$0xff]
      %v5522 = vld [vmem:[#allocation3 + $0x12] sm:$0xff]
      %v5523 = vld [vmem:[#allocation3 + $0x22] sm:$0xff]
      %v5524 = vld [vmem:[#allocation3 + $0x32] sm:$0xff]
      %v5525 = vld [vmem:[#allocation3 + $0x42] sm:$0xff]
      %v5526 = vld [vmem:[#allocation3 + $0x52] sm:$0xff]
      %v5527 = vld [vmem:[#allocation3 + $0x62] sm:$0xff]
      %v5528 = vld [vmem:[#allocation3 + $0x72] sm:$0xff]
      %v5529 = vpack.c.bf16 %v5522, %v5521
      %v5530 = vpack.c.bf16 %v5524, %v5523
      %v5531 = vpack.c.bf16 %v5526, %v5525
      %v5532 = vpack.c.bf16 %v5528, %v5527
      %s5533 = scalar_lea.vmem %s3, 16
      %v5534 = vld [vmem:[%s5533] sm:$0xf]
      %v5535 = vld [vmem:[%s5533 + $0x4] sm:$0xf]
      %v5538 = vunpack.c.l.b16 %v5534
      %v5539 = vunpack.c.l.b16 %v5535
      %v5540 = vpack.c.b16 %v5539, %v5538
      %v5543 = vsel %vm4969, %v5529, 0
      %v5546 = vsel %vm4969, %v5530, 0
      %v5549 = vsel %vm4969, %v5531, 0
      %v5552 = vsel %vm4969, %v5532, 0
      %5554 = vmatprep.subr.bf16.mxu0 0
      %5555 = vmatpush1.bf16.msra.mxu0 %v5540
      %5556 = vmatprep.subr.bf16.mxu0 0
      %5557 = vmatpush1.bf16.msra.mxu0 0
      %5558 = vmatprep.subr.bf16.mxu0 0
      %5559 = vmatpush1.bf16.msra.mxu0 0
      %5560 = vmatprep.subr.bf16.mxu0 0
      %5561 = vmatpush1.bf16.msra.mxu0 0
      %5562 = vmatprep.subr.bf16.mxu0 0
      %5563 = vmatpush1.bf16.msra.mxu0 0
      %5564 = vmatprep.subr.bf16.mxu0 0
      %5565 = vmatpush1.bf16.msra.mxu0 0
      %5566 = vmatprep.subr.bf16.mxu0 0
      %5567 = vmatpush1.bf16.msra.mxu0 0
      %5568 = vmatprep.subr.bf16.mxu0 0
      %5569 = vmatpush1.bf16.msra.mxu0 0
      %5570 = vmatprep.subr.bf16.mxu0 0
      %5571 = vmatpush1.bf16.msra.mxu0 0
      %5572 = vmatprep.subr.bf16.mxu0 0
      %5573 = vmatpush1.bf16.msra.mxu0 0
      %5574 = vmatprep.subr.bf16.mxu0 0
      %5575 = vmatpush1.bf16.msra.mxu0 0
      %5576 = vmatprep.subr.bf16.mxu0 0
      %5577 = vmatpush1.bf16.msra.mxu0 0
      %5578 = vmatprep.subr.bf16.mxu0 0
      %5579 = vmatpush1.bf16.msra.mxu0 0
      %5580 = vmatprep.subr.bf16.mxu0 0
      %5581 = vmatpush1.bf16.msra.mxu0 0
      %5582 = vmatprep.subr.bf16.mxu0 0
      %5583 = vmatpush1.bf16.msra.mxu0 0
      %5584 = vmatprep.subr.bf16.mxu0 0
      %5585 = vmatpush1.bf16.msra.mxu0 0
      %5586 = vmatprep.mubr.bf16.mxu0 0
      %5587 = vmatmul.mubr.bf16.gmra.mrb[0].mxu0 %v5543
      %v5588 = vpop.f32.mrb[0].mxu0
      %v5589 = vadd.f32 0.0, %v5588
      %v5590 = vpop.f32.mrb[0].mxu0
      %v5591 = vpop.f32.mrb[0].mxu0
      %v5592 = vadd.f32 0.0, %v5591
      %v5593 = vpop.f32.mrb[0].mxu0
      %5594 = vmatprep.mubr.bf16.mxu0 0
      %5595 = vmatmul.mubr.bf16.gmra.mrb[0].mxu0 %v5546
      %v5596 = vpop.f32.mrb[0].mxu0
      %v5597 = vadd.f32 0.0, %v5596
      %v5598 = vpop.f32.mrb[0].mxu0
      %v5599 = vpop.f32.mrb[0].mxu0
      %v5600 = vadd.f32 0.0, %v5599
      %v5601 = vpop.f32.mrb[0].mxu0
      %5602 = vmatprep.mubr.bf16.mxu0 0
      %5603 = vmatmul.mubr.bf16.gmra.mrb[0].mxu0 %v5549
      %v5604 = vpop.f32.mrb[0].mxu0
      %v5605 = vadd.f32 0.0, %v5604
      %v5606 = vpop.f32.mrb[0].mxu0
      %v5607 = vpop.f32.mrb[0].mxu0
      %v5608 = vadd.f32 0.0, %v5607
      %v5609 = vpop.f32.mrb[0].mxu0
      %5610 = vmatprep.mubr.bf16.mxu0 0
      %5611 = vmatmul.mubr.bf16.gmra.mrb[0].mxu0 %v5552
      %v5612 = vpop.f32.mrb[0].mxu0
      %v5613 = vadd.f32 0.0, %v5612
      %v5614 = vpop.f32.mrb[0].mxu0
      %v5615 = vpop.f32.mrb[0].mxu0
      %v5616 = vadd.f32 0.0, %v5615
      %v5617 = vpop.f32.mrb[0].mxu0
      %5618 = vdwg.mxu0
      %v5619 = vadd.f32 %v5491, %v5589
      %v5620 = vadd.f32 %v5494, %v5592
      %v5621 = vadd.f32 %v5499, %v5597
      %v5622 = vadd.f32 %v5502, %v5600
      %v5623 = vadd.f32 %v5507, %v5605
      %v5624 = vadd.f32 %v5510, %v5608
      %v5625 = vadd.f32 %v5515, %v5613
      %v5626 = vadd.f32 %v5518, %v5616
      %v5627 = vld [vmem:[%s5317] sm:$0xff]
      %v5628 = vld [vmem:[%s5317 + $0x10] sm:$0xff]
      %v5629 = vld [vmem:[%s5317 + $0x20] sm:$0xff]
      %v5630 = vld [vmem:[%s5317 + $0x30] sm:$0xff]
      %v5631 = vld [vmem:[%s5317 + $0x40] sm:$0xff]
      %v5632 = vld [vmem:[%s5317 + $0x50] sm:$0xff]
      %v5633 = vld [vmem:[%s5317 + $0x60] sm:$0xff]
      %v5634 = vld [vmem:[%s5317 + $0x70] sm:$0xff]
      %v5635 = vpack.c.bf16 %v5628, %v5627
      %v5636 = vpack.c.bf16 %v5630, %v5629
      %v5637 = vpack.c.bf16 %v5632, %v5631
      %v5638 = vpack.c.bf16 %v5634, %v5633
      %s5639 = scalar_lea.vmem %s3, 24
      %v5640 = vld [vmem:[%s5639] sm:$0xf]
      %v5641 = vld [vmem:[%s5639 + $0x4] sm:$0xf]
      %v5644 = vunpack.c.l.b16 %v5640
      %v5645 = vunpack.c.l.b16 %v5641
      %v5646 = vpack.c.b16 %v5645, %v5644
      %v5649 = vsel %vm4969, %v5635, 0
      %v5652 = vsel %vm4969, %v5636, 0
      %v5655 = vsel %vm4969, %v5637, 0
      %v5658 = vsel %vm4969, %v5638, 0
      %5660 = vmatprep.subr.bf16.mxu0 0
      %5661 = vmatpush1.bf16.msra.mxu0 %v5646
      %5662 = vmatprep.subr.bf16.mxu0 0
      %5663 = vmatpush1.bf16.msra.mxu0 0
      %5664 = vmatprep.subr.bf16.mxu0 0
      %5665 = vmatpush1.bf16.msra.mxu0 0
      %5666 = vmatprep.subr.bf16.mxu0 0
      %5667 = vmatpush1.bf16.msra.mxu0 0
      %5668 = vmatprep.subr.bf16.mxu0 0
      %5669 = vmatpush1.bf16.msra.mxu0 0
      %5670 = vmatprep.subr.bf16.mxu0 0
      %5671 = vmatpush1.bf16.msra.mxu0 0
      %5672 = vmatprep.subr.bf16.mxu0 0
      %5673 = vmatpush1.bf16.msra.mxu0 0
      %5674 = vmatprep.subr.bf16.mxu0 0
      %5675 = vmatpush1.bf16.msra.mxu0 0
      %5676 = vmatprep.subr.bf16.mxu0 0
      %5677 = vmatpush1.bf16.msra.mxu0 0
      %5678 = vmatprep.subr.bf16.mxu0 0
      %5679 = vmatpush1.bf16.msra.mxu0 0
      %5680 = vmatprep.subr.bf16.mxu0 0
      %5681 = vmatpush1.bf16.msra.mxu0 0
      %5682 = vmatprep.subr.bf16.mxu0 0
      %5683 = vmatpush1.bf16.msra.mxu0 0
      %5684 = vmatprep.subr.bf16.mxu0 0
      %5685 = vmatpush1.bf16.msra.mxu0 0
      %5686 = vmatprep.subr.bf16.mxu0 0
      %5687 = vmatpush1.bf16.msra.mxu0 0
      %5688 = vmatprep.subr.bf16.mxu0 0
      %5689 = vmatpush1.bf16.msra.mxu0 0
      %5690 = vmatprep.subr.bf16.mxu0 0
      %5691 = vmatpush1.bf16.msra.mxu0 0
      %5692 = vmatprep.mubr.bf16.mxu0 0
      %5693 = vmatmul.mubr.bf16.gmra.mrb[0].mxu0 %v5649
      %v5694 = vpop.f32.mrb[0].mxu0
      %v5695 = vadd.f32 0.0, %v5694
      %v5696 = vpop.f32.mrb[0].mxu0
      %v5697 = vpop.f32.mrb[0].mxu0
      %v5698 = vadd.f32 0.0, %v5697
      %v5699 = vpop.f32.mrb[0].mxu0
      %5700 = vmatprep.mubr.bf16.mxu0 0
      %5701 = vmatmul.mubr.bf16.gmra.mrb[0].mxu0 %v5652
      %v5702 = vpop.f32.mrb[0].mxu0
      %v5703 = vadd.f32 0.0, %v5702
      %v5704 = vpop.f32.mrb[0].mxu0
      %v5705 = vpop.f32.mrb[0].mxu0
      %v5706 = vadd.f32 0.0, %v5705
      %v5707 = vpop.f32.mrb[0].mxu0
      %5708 = vmatprep.mubr.bf16.mxu0 0
      %5709 = vmatmul.mubr.bf16.gmra.mrb[0].mxu0 %v5655
      %v5710 = vpop.f32.mrb[0].mxu0
      %v5711 = vadd.f32 0.0, %v5710
      %v5712 = vpop.f32.mrb[0].mxu0
      %v5713 = vpop.f32.mrb[0].mxu0
      %v5714 = vadd.f32 0.0, %v5713
      %v5715 = vpop.f32.mrb[0].mxu0
      %5716 = vmatprep.mubr.bf16.mxu0 0
      %5717 = vmatmul.mubr.bf16.gmra.mrb[0].mxu0 %v5658
      %v5718 = vpop.f32.mrb[0].mxu0
      %v5719 = vadd.f32 0.0, %v5718
      %v5720 = vpop.f32.mrb[0].mxu0
      %v5721 = vpop.f32.mrb[0].mxu0
      %v5722 = vadd.f32 0.0, %v5721
      %v5723 = vpop.f32.mrb[0].mxu0
      %5724 = vdwg.mxu0
      %v5725 = vadd.f32 %v5619, %v5695
      %v5726 = vadd.f32 %v5620, %v5698
      %v5727 = vadd.f32 %v5621, %v5703
      %v5728 = vadd.f32 %v5622, %v5706
      %v5729 = vadd.f32 %v5623, %v5711
      %v5730 = vadd.f32 %v5624, %v5714
      %v5731 = vadd.f32 %v5625, %v5719
      %v5732 = vadd.f32 %v5626, %v5722
      %v5733 = vld [vmem:[%s5317 + $0x1] sm:$0xff]
      %v5734 = vld [vmem:[%s5317 + $0x11] sm:$0xff]
      %v5735 = vld [vmem:[%s5317 + $0x21] sm:$0xff]
      %v5736 = vld [vmem:[%s5317 + $0x31] sm:$0xff]
      %v5737 = vld [vmem:[%s5317 + $0x41] sm:$0xff]
      %v5738 = vld [vmem:[%s5317 + $0x51] sm:$0xff]
      %v5739 = vld [vmem:[%s5317 + $0x61] sm:$0xff]
      %v5740 = vld [vmem:[%s5317 + $0x71] sm:$0xff]
      %v5741 = vpack.c.bf16 %v5734, %v5733
      %v5742 = vpack.c.bf16 %v5736, %v5735
      %v5743 = vpack.c.bf16 %v5738, %v5737
      %v5744 = vpack.c.bf16 %v5740, %v5739
      %s5745 = scalar_lea.vmem %s3, 32
      %v5746 = vld [vmem:[%s5745] sm:$0xf]
      %v5747 = vld [vmem:[%s5745 + $0x4] sm:$0xf]
      %v5750 = vunpack.c.l.b16 %v5746
      %v5751 = vunpack.c.l.b16 %v5747
      %v5752 = vpack.c.b16 %v5751, %v5750
      %v5755 = vsel %vm4969, %v5741, 0
      %v5758 = vsel %vm4969, %v5742, 0
      %v5761 = vsel %vm4969, %v5743, 0
      %v5764 = vsel %vm4969, %v5744, 0
      %5766 = vmatprep.subr.bf16.mxu0 0
      %5767 = vmatpush1.bf16.msra.mxu0 %v5752
      %5768 = vmatprep.subr.bf16.mxu0 0
      %5769 = vmatpush1.bf16.msra.mxu0 0
      %5770 = vmatprep.subr.bf16.mxu0 0
      %5771 = vmatpush1.bf16.msra.mxu0 0
      %5772 = vmatprep.subr.bf16.mxu0 0
      %5773 = vmatpush1.bf16.msra.mxu0 0
      %5774 = vmatprep.subr.bf16.mxu0 0
      %5775 = vmatpush1.bf16.msra.mxu0 0
      %5776 = vmatprep.subr.bf16.mxu0 0
      %5777 = vmatpush1.bf16.msra.mxu0 0
      %5778 = vmatprep.subr.bf16.mxu0 0
      %5779 = vmatpush1.bf16.msra.mxu0 0
      %5780 = vmatprep.subr.bf16.mxu0 0
      %5781 = vmatpush1.bf16.msra.mxu0 0
      %5782 = vmatprep.subr.bf16.mxu0 0
      %5783 = vmatpush1.bf16.msra.mxu0 0
      %5784 = vmatprep.subr.bf16.mxu0 0
      %5785 = vmatpush1.bf16.msra.mxu0 0
      %5786 = vmatprep.subr.bf16.mxu0 0
      %5787 = vmatpush1.bf16.msra.mxu0 0
      %5788 = vmatprep.subr.bf16.mxu0 0
      %5789 = vmatpush1.bf16.msra.mxu0 0
      %5790 = vmatprep.subr.bf16.mxu0 0
      %5791 = vmatpush1.bf16.msra.mxu0 0
      %5792 = vmatprep.subr.bf16.mxu0 0
      %5793 = vmatpush1.bf16.msra.mxu0 0
      %5794 = vmatprep.subr.bf16.mxu0 0
      %5795 = vmatpush1.bf16.msra.mxu0 0
      %5796 = vmatprep.subr.bf16.mxu0 0
      %5797 = vmatpush1.bf16.msra.mxu0 0
      %5798 = vmatprep.mubr.bf16.mxu0 0
      %5799 = vmatmul.mubr.bf16.gmra.mrb[0].mxu0 %v5755
      %v5800 = vpop.f32.mrb[0].mxu0
      %v5801 = vadd.f32 0.0, %v5800
      %v5802 = vpop.f32.mrb[0].mxu0
      %v5803 = vpop.f32.mrb[0].mxu0
      %v5804 = vadd.f32 0.0, %v5803
      %v5805 = vpop.f32.mrb[0].mxu0
      %5806 = vmatprep.mubr.bf16.mxu0 0
      %5807 = vmatmul.mubr.bf16.gmra.mrb[0].mxu0 %v5758
      %v5808 = vpop.f32.mrb[0].mxu0
      %v5809 = vadd.f32 0.0, %v5808
      %v5810 = vpop.f32.mrb[0].mxu0
      %v5811 = vpop.f32.mrb[0].mxu0
      %v5812 = vadd.f32 0.0, %v5811
      %v5813 = vpop.f32.mrb[0].mxu0
      %5814 = vmatprep.mubr.bf16.mxu0 0
      %5815 = vmatmul.mubr.bf16.gmra.mrb[0].mxu0 %v5761
      %v5816 = vpop.f32.mrb[0].mxu0
      %v5817 = vadd.f32 0.0, %v5816
      %v5818 = vpop.f32.mrb[0].mxu0
      %v5819 = vpop.f32.mrb[0].mxu0
      %v5820 = vadd.f32 0.0, %v5819
      %v5821 = vpop.f32.mrb[0].mxu0
      %5822 = vmatprep.mubr.bf16.mxu0 0
      %5823 = vmatmul.mubr.bf16.gmra.mrb[0].mxu0 %v5764
      %v5824 = vpop.f32.mrb[0].mxu0
      %v5825 = vadd.f32 0.0, %v5824
      %v5826 = vpop.f32.mrb[0].mxu0
      %v5827 = vpop.f32.mrb[0].mxu0
      %v5828 = vadd.f32 0.0, %v5827
      %v5829 = vpop.f32.mrb[0].mxu0
      %5830 = vdwg.mxu0
      %v5831 = vadd.f32 %v5725, %v5801
      %v5832 = vadd.f32 %v5726, %v5804
      %v5833 = vadd.f32 %v5727, %v5809
      %v5834 = vadd.f32 %v5728, %v5812
      %v5835 = vadd.f32 %v5729, %v5817
      %v5836 = vadd.f32 %v5730, %v5820
      %v5837 = vadd.f32 %v5731, %v5825
      %v5838 = vadd.f32 %v5732, %v5828
      %v5839 = vld [vmem:[%s5317 + $0x2] sm:$0xff]
      %v5840 = vld [vmem:[%s5317 + $0x12] sm:$0xff]
      %v5841 = vld [vmem:[%s5317 + $0x22] sm:$0xff]
      %v5842 = vld [vmem:[%s5317 + $0x32] sm:$0xff]
      %v5843 = vld [vmem:[%s5317 + $0x42] sm:$0xff]
      %v5844 = vld [vmem:[%s5317 + $0x52] sm:$0xff]
      %v5845 = vld [vmem:[%s5317 + $0x62] sm:$0xff]
      %v5846 = vld [vmem:[%s5317 + $0x72] sm:$0xff]
      %v5847 = vpack.c.bf16 %v5840, %v5839
      %v5848 = vpack.c.bf16 %v5842, %v5841
      %v5849 = vpack.c.bf16 %v5844, %v5843
      %v5850 = vpack.c.bf16 %v5846, %v5845
      %s5851 = scalar_lea.vmem %s3, 40
      %v5852 = vld [vmem:[%s5851] sm:$0xf]
      %v5853 = vld [vmem:[%s5851 + $0x4] sm:$0xf]
      %v5856 = vunpack.c.l.b16 %v5852
      %v5857 = vunpack.c.l.b16 %v5853
      %v5858 = vpack.c.b16 %v5857, %v5856
      %v5861 = vsel %vm4969, %v5847, 0
      %v5864 = vsel %vm4969, %v5848, 0
      %v5867 = vsel %vm4969, %v5849, 0
      %v5870 = vsel %vm4969, %v5850, 0
      %5872 = vmatprep.subr.bf16.mxu0 0
      %5873 = vmatpush1.bf16.msra.mxu0 %v5858
      %5874 = vmatprep.subr.bf16.mxu0 0
      %5875 = vmatpush1.bf16.msra.mxu0 0
      %5876 = vmatprep.subr.bf16.mxu0 0
      %5877 = vmatpush1.bf16.msra.mxu0 0
      %5878 = vmatprep.subr.bf16.mxu0 0
      %5879 = vmatpush1.bf16.msra.mxu0 0
      %5880 = vmatprep.subr.bf16.mxu0 0
      %5881 = vmatpush1.bf16.msra.mxu0 0
      %5882 = vmatprep.subr.bf16.mxu0 0
      %5883 = vmatpush1.bf16.msra.mxu0 0
      %5884 = vmatprep.subr.bf16.mxu0 0
      %5885 = vmatpush1.bf16.msra.mxu0 0
      %5886 = vmatprep.subr.bf16.mxu0 0
      %5887 = vmatpush1.bf16.msra.mxu0 0
      %5888 = vmatprep.subr.bf16.mxu0 0
      %5889 = vmatpush1.bf16.msra.mxu0 0
      %5890 = vmatprep.subr.bf16.mxu0 0
      %5891 = vmatpush1.bf16.msra.mxu0 0
      %5892 = vmatprep.subr.bf16.mxu0 0
      %5893 = vmatpush1.bf16.msra.mxu0 0
      %5894 = vmatprep.subr.bf16.mxu0 0
      %5895 = vmatpush1.bf16.msra.mxu0 0
      %5896 = vmatprep.subr.bf16.mxu0 0
      %5897 = vmatpush1.bf16.msra.mxu0 0
      %5898 = vmatprep.subr.bf16.mxu0 0
      %5899 = vmatpush1.bf16.msra.mxu0 0
      %5900 = vmatprep.subr.bf16.mxu0 0
      %5901 = vmatpush1.bf16.msra.mxu0 0
      %5902 = vmatprep.subr.bf16.mxu0 0
      %5903 = vmatpush1.bf16.msra.mxu0 0
      %5904 = vmatprep.mubr.bf16.mxu0 0
      %5905 = vmatmul.mubr.bf16.gmra.mrb[0].mxu0 %v5861
      %v5906 = vpop.f32.mrb[0].mxu0
      %v5907 = vadd.f32 0.0, %v5906
      %v5908 = vpop.f32.mrb[0].mxu0
      %v5909 = vpop.f32.mrb[0].mxu0
      %v5910 = vadd.f32 0.0, %v5909
      %v5911 = vpop.f32.mrb[0].mxu0
      %5912 = vmatprep.mubr.bf16.mxu0 0
      %5913 = vmatmul.mubr.bf16.gmra.mrb[0].mxu0 %v5864
      %v5914 = vpop.f32.mrb[0].mxu0
      %v5915 = vadd.f32 0.0, %v5914
      %v5916 = vpop.f32.mrb[0].mxu0
      %v5917 = vpop.f32.mrb[0].mxu0
      %v5918 = vadd.f32 0.0, %v5917
      %v5919 = vpop.f32.mrb[0].mxu0
      %5920 = vmatprep.mubr.bf16.mxu0 0
      %5921 = vmatmul.mubr.bf16.gmra.mrb[0].mxu0 %v5867
      %v5922 = vpop.f32.mrb[0].mxu0
      %v5923 = vadd.f32 0.0, %v5922
      %v5924 = vpop.f32.mrb[0].mxu0
      %v5925 = vpop.f32.mrb[0].mxu0
      %v5926 = vadd.f32 0.0, %v5925
      %v5927 = vpop.f32.mrb[0].mxu0
      %5928 = vmatprep.mubr.bf16.mxu0 0
      %5929 = vmatmul.mubr.bf16.gmra.mrb[0].mxu0 %v5870
      %v5930 = vpop.f32.mrb[0].mxu0
      %v5931 = vadd.f32 0.0, %v5930
      %v5932 = vpop.f32.mrb[0].mxu0
      %v5933 = vpop.f32.mrb[0].mxu0
      %v5934 = vadd.f32 0.0, %v5933
      %v5935 = vpop.f32.mrb[0].mxu0
      %5936 = vdwg.mxu0
      %v5937 = vadd.f32 %v5831, %v5907
      %v5938 = vadd.f32 %v5832, %v5910
      %v5939 = vadd.f32 %v5833, %v5915
      %v5940 = vadd.f32 %v5834, %v5918
      %v5941 = vadd.f32 %v5835, %v5923
      %v5942 = vadd.f32 %v5836, %v5926
      %v5943 = vadd.f32 %v5837, %v5931
      %v5944 = vadd.f32 %v5838, %v5934
      %s5945 = scalar_lea.vmem [#allocation3], 32
      %v5946 = vld [vmem:[%s5945] sm:$0xff]
      %v5947 = vld [vmem:[%s5945 + $0x10] sm:$0xff]
      %v5948 = vld [vmem:[%s5945 + $0x20] sm:$0xff]
      %v5949 = vld [vmem:[%s5945 + $0x30] sm:$0xff]
      %v5950 = vld [vmem:[%s5945 + $0x40] sm:$0xff]
      %v5951 = vld [vmem:[%s5945 + $0x50] sm:$0xff]
      %v5952 = vld [vmem:[%s5945 + $0x60] sm:$0xff]
      %v5953 = vld [vmem:[%s5945 + $0x70] sm:$0xff]
      %v5954 = vpack.c.bf16 %v5947, %v5946
      %v5955 = vpack.c.bf16 %v5949, %v5948
      %v5956 = vpack.c.bf16 %v5951, %v5950
      %v5957 = vpack.c.bf16 %v5953, %v5952
      %s5958 = scalar_lea.vmem %s3, 48
      %v5959 = vld [vmem:[%s5958] sm:$0xf]
      %v5960 = vld [vmem:[%s5958 + $0x4] sm:$0xf]
      %v5963 = vunpack.c.l.b16 %v5959
      %v5964 = vunpack.c.l.b16 %v5960
      %v5965 = vpack.c.b16 %v5964, %v5963
      %v5968 = vsel %vm4969, %v5954, 0
      %v5971 = vsel %vm4969, %v5955, 0
      %v5974 = vsel %vm4969, %v5956, 0
      %v5977 = vsel %vm4969, %v5957, 0
      %5979 = vmatprep.subr.bf16.mxu0 0
      %5980 = vmatpush1.bf16.msra.mxu0 %v5965
      %5981 = vmatprep.subr.bf16.mxu0 0
      %5982 = vmatpush1.bf16.msra.mxu0 0
      %5983 = vmatprep.subr.bf16.mxu0 0
      %5984 = vmatpush1.bf16.msra.mxu0 0
      %5985 = vmatprep.subr.bf16.mxu0 0
      %5986 = vmatpush1.bf16.msra.mxu0 0
      %5987 = vmatprep.subr.bf16.mxu0 0
      %5988 = vmatpush1.bf16.msra.mxu0 0
      %5989 = vmatprep.subr.bf16.mxu0 0
      %5990 = vmatpush1.bf16.msra.mxu0 0
      %5991 = vmatprep.subr.bf16.mxu0 0
      %5992 = vmatpush1.bf16.msra.mxu0 0
      %5993 = vmatprep.subr.bf16.mxu0 0
      %5994 = vmatpush1.bf16.msra.mxu0 0
      %5995 = vmatprep.subr.bf16.mxu0 0
      %5996 = vmatpush1.bf16.msra.mxu0 0
      %5997 = vmatprep.subr.bf16.mxu0 0
      %5998 = vmatpush1.bf16.msra.mxu0 0
      %5999 = vmatprep.subr.bf16.mxu0 0
      %6000 = vmatpush1.bf16.msra.mxu0 0
      %6001 = vmatprep.subr.bf16.mxu0 0
      %6002 = vmatpush1.bf16.msra.mxu0 0
      %6003 = vmatprep.subr.bf16.mxu0 0
      %6004 = vmatpush1.bf16.msra.mxu0 0
      %6005 = vmatprep.subr.bf16.mxu0 0
      %6006 = vmatpush1.bf16.msra.mxu0 0
      %6007 = vmatprep.subr.bf16.mxu0 0
      %6008 = vmatpush1.bf16.msra.mxu0 0
      %6009 = vmatprep.subr.bf16.mxu0 0
      %6010 = vmatpush1.bf16.msra.mxu0 0
      %6011 = vmatprep.mubr.bf16.mxu0 0
      %6012 = vmatmul.mubr.bf16.gmra.mrb[0].mxu0 %v5968
      %v6013 = vpop.f32.mrb[0].mxu0
      %v6014 = vadd.f32 0.0, %v6013
      %v6015 = vpop.f32.mrb[0].mxu0
      %v6016 = vpop.f32.mrb[0].mxu0
      %v6017 = vadd.f32 0.0, %v6016
      %v6018 = vpop.f32.mrb[0].mxu0
      %6019 = vmatprep.mubr.bf16.mxu0 0
      %6020 = vmatmul.mubr.bf16.gmra.mrb[0].mxu0 %v5971
      %v6021 = vpop.f32.mrb[0].mxu0
      %v6022 = vadd.f32 0.0, %v6021
      %v6023 = vpop.f32.mrb[0].mxu0
      %v6024 = vpop.f32.mrb[0].mxu0
      %v6025 = vadd.f32 0.0, %v6024
      %v6026 = vpop.f32.mrb[0].mxu0
      %6027 = vmatprep.mubr.bf16.mxu0 0
      %6028 = vmatmul.mubr.bf16.gmra.mrb[0].mxu0 %v5974
      %v6029 = vpop.f32.mrb[0].mxu0
      %v6030 = vadd.f32 0.0, %v6029
      %v6031 = vpop.f32.mrb[0].mxu0
      %v6032 = vpop.f32.mrb[0].mxu0
      %v6033 = vadd.f32 0.0, %v6032
      %v6034 = vpop.f32.mrb[0].mxu0
      %6035 = vmatprep.mubr.bf16.mxu0 0
      %6036 = vmatmul.mubr.bf16.gmra.mrb[0].mxu0 %v5977
      %v6037 = vpop.f32.mrb[0].mxu0
      %v6038 = vadd.f32 0.0, %v6037
      %v6039 = vpop.f32.mrb[0].mxu0
      %v6040 = vpop.f32.mrb[0].mxu0
      %v6041 = vadd.f32 0.0, %v6040
      %v6042 = vpop.f32.mrb[0].mxu0
      %6043 = vdwg.mxu0
      %v6044 = vadd.f32 %v5937, %v6014
      %v6045 = vadd.f32 %v5938, %v6017
      %v6046 = vadd.f32 %v5939, %v6022
      %v6047 = vadd.f32 %v5940, %v6025
      %v6048 = vadd.f32 %v5941, %v6030
      %v6049 = vadd.f32 %v5942, %v6033
      %v6050 = vadd.f32 %v5943, %v6038
      %v6051 = vadd.f32 %v5944, %v6041
      %v6052 = vld [vmem:[%s5945 + $0x1] sm:$0xff]
      %v6053 = vld [vmem:[%s5945 + $0x11] sm:$0xff]
      %v6054 = vld [vmem:[%s5945 + $0x21] sm:$0xff]
      %v6055 = vld [vmem:[%s5945 + $0x31] sm:$0xff]
      %v6056 = vld [vmem:[%s5945 + $0x41] sm:$0xff]
      %v6057 = vld [vmem:[%s5945 + $0x51] sm:$0xff]
      %v6058 = vld [vmem:[%s5945 + $0x61] sm:$0xff]
      %v6059 = vld [vmem:[%s5945 + $0x71] sm:$0xff]
      %v6060 = vpack.c.bf16 %v6053, %v6052
      %v6061 = vpack.c.bf16 %v6055, %v6054
      %v6062 = vpack.c.bf16 %v6057, %v6056
      %v6063 = vpack.c.bf16 %v6059, %v6058
      %s6064 = scalar_lea.vmem %s3, 56
      %v6065 = vld [vmem:[%s6064] sm:$0xf]
      %v6066 = vld [vmem:[%s6064 + $0x4] sm:$0xf]
      %v6069 = vunpack.c.l.b16 %v6065
      %v6070 = vunpack.c.l.b16 %v6066
      %v6071 = vpack.c.b16 %v6070, %v6069
      %v6074 = vsel %vm4969, %v6060, 0
      %v6077 = vsel %vm4969, %v6061, 0
      %v6080 = vsel %vm4969, %v6062, 0
      %v6083 = vsel %vm4969, %v6063, 0
      %6085 = vmatprep.subr.bf16.mxu0 0
      %6086 = vmatpush1.bf16.msra.mxu0 %v6071
      %6087 = vmatprep.subr.bf16.mxu0 0
      %6088 = vmatpush1.bf16.msra.mxu0 0
      %6089 = vmatprep.subr.bf16.mxu0 0
      %6090 = vmatpush1.bf16.msra.mxu0 0
      %6091 = vmatprep.subr.bf16.mxu0 0
      %6092 = vmatpush1.bf16.msra.mxu0 0
      %6093 = vmatprep.subr.bf16.mxu0 0
      %6094 = vmatpush1.bf16.msra.mxu0 0
      %6095 = vmatprep.subr.bf16.mxu0 0
      %6096 = vmatpush1.bf16.msra.mxu0 0
      %6097 = vmatprep.subr.bf16.mxu0 0
      %6098 = vmatpush1.bf16.msra.mxu0 0
      %6099 = vmatprep.subr.bf16.mxu0 0
      %6100 = vmatpush1.bf16.msra.mxu0 0
      %6101 = vmatprep.subr.bf16.mxu0 0
      %6102 = vmatpush1.bf16.msra.mxu0 0
      %6103 = vmatprep.subr.bf16.mxu0 0
      %6104 = vmatpush1.bf16.msra.mxu0 0
      %6105 = vmatprep.subr.bf16.mxu0 0
      %6106 = vmatpush1.bf16.msra.mxu0 0
      %6107 = vmatprep.subr.bf16.mxu0 0
      %6108 = vmatpush1.bf16.msra.mxu0 0
      %6109 = vmatprep.subr.bf16.mxu0 0
      %6110 = vmatpush1.bf16.msra.mxu0 0
      %6111 = vmatprep.subr.bf16.mxu0 0
      %6112 = vmatpush1.bf16.msra.mxu0 0
      %6113 = vmatprep.subr.bf16.mxu0 0
      %6114 = vmatpush1.bf16.msra.mxu0 0
      %6115 = vmatprep.subr.bf16.mxu0 0
      %6116 = vmatpush1.bf16.msra.mxu0 0
      %6117 = vmatprep.mubr.bf16.mxu0 0
      %6118 = vmatmul.mubr.bf16.gmra.mrb[0].mxu0 %v6074
      %v6119 = vpop.f32.mrb[0].mxu0
      %v6120 = vadd.f32 0.0, %v6119
      %v6121 = vpop.f32.mrb[0].mxu0
      %v6122 = vpop.f32.mrb[0].mxu0
      %v6123 = vadd.f32 0.0, %v6122
      %v6124 = vpop.f32.mrb[0].mxu0
      %6125 = vmatprep.mubr.bf16.mxu0 0
      %6126 = vmatmul.mubr.bf16.gmra.mrb[0].mxu0 %v6077
      %v6127 = vpop.f32.mrb[0].mxu0
      %v6128 = vadd.f32 0.0, %v6127
      %v6129 = vpop.f32.mrb[0].mxu0
      %v6130 = vpop.f32.mrb[0].mxu0
      %v6131 = vadd.f32 0.0, %v6130
      %v6132 = vpop.f32.mrb[0].mxu0
      %6133 = vmatprep.mubr.bf16.mxu0 0
      %6134 = vmatmul.mubr.bf16.gmra.mrb[0].mxu0 %v6080
      %v6135 = vpop.f32.mrb[0].mxu0
      %v6136 = vadd.f32 0.0, %v6135
      %v6137 = vpop.f32.mrb[0].mxu0
      %v6138 = vpop.f32.mrb[0].mxu0
      %v6139 = vadd.f32 0.0, %v6138
      %v6140 = vpop.f32.mrb[0].mxu0
      %6141 = vmatprep.mubr.bf16.mxu0 0
      %6142 = vmatmul.mubr.bf16.gmra.mrb[0].mxu0 %v6083
      %v6143 = vpop.f32.mrb[0].mxu0
      %v6144 = vadd.f32 0.0, %v6143
      %v6145 = vpop.f32.mrb[0].mxu0
      %v6146 = vpop.f32.mrb[0].mxu0
      %v6147 = vadd.f32 0.0, %v6146
      %v6148 = vpop.f32.mrb[0].mxu0
      %6149 = vdwg.mxu0
      %v6150 = vadd.f32 %v6044, %v6120
      %v6151 = vadd.f32 %v6045, %v6123
      %v6152 = vadd.f32 %v6046, %v6128
      %v6153 = vadd.f32 %v6047, %v6131
      %v6154 = vadd.f32 %v6048, %v6136
      %v6155 = vadd.f32 %v6049, %v6139
      %v6156 = vadd.f32 %v6050, %v6144
      %v6157 = vadd.f32 %v6051, %v6147
      %v6158 = vld [vmem:[%s5945 + $0x2] sm:$0xff]
      %v6159 = vld [vmem:[%s5945 + $0x12] sm:$0xff]
      %v6160 = vld [vmem:[%s5945 + $0x22] sm:$0xff]
      %v6161 = vld [vmem:[%s5945 + $0x32] sm:$0xff]
      %v6162 = vld [vmem:[%s5945 + $0x42] sm:$0xff]
      %v6163 = vld [vmem:[%s5945 + $0x52] sm:$0xff]
      %v6164 = vld [vmem:[%s5945 + $0x62] sm:$0xff]
      %v6165 = vld [vmem:[%s5945 + $0x72] sm:$0xff]
      %v6166 = vpack.c.bf16 %v6159, %v6158
      %v6167 = vpack.c.bf16 %v6161, %v6160
      %v6168 = vpack.c.bf16 %v6163, %v6162
      %v6169 = vpack.c.bf16 %v6165, %v6164
      %s6170 = scalar_lea.vmem %s3, 64
      %v6171 = vld [vmem:[%s6170] sm:$0xf]
      %v6172 = vld [vmem:[%s6170 + $0x4] sm:$0xf]
      %v6175 = vunpack.c.l.b16 %v6171
      %v6176 = vunpack.c.l.b16 %v6172
      %v6177 = vpack.c.b16 %v6176, %v6175
      %v6180 = vsel %vm4969, %v6166, 0
      %v6183 = vsel %vm4969, %v6167, 0
      %v6186 = vsel %vm4969, %v6168, 0
      %v6189 = vsel %vm4969, %v6169, 0
      %6191 = vmatprep.subr.bf16.mxu0 0
      %6192 = vmatpush1.bf16.msra.mxu0 %v6177
      %6193 = vmatprep.subr.bf16.mxu0 0
      %6194 = vmatpush1.bf16.msra.mxu0 0
      %6195 = vmatprep.subr.bf16.mxu0 0
      %6196 = vmatpush1.bf16.msra.mxu0 0
      %6197 = vmatprep.subr.bf16.mxu0 0
      %6198 = vmatpush1.bf16.msra.mxu0 0
      %6199 = vmatprep.subr.bf16.mxu0 0
      %6200 = vmatpush1.bf16.msra.mxu0 0
      %6201 = vmatprep.subr.bf16.mxu0 0
      %6202 = vmatpush1.bf16.msra.mxu0 0
      %6203 = vmatprep.subr.bf16.mxu0 0
      %6204 = vmatpush1.bf16.msra.mxu0 0
      %6205 = vmatprep.subr.bf16.mxu0 0
      %6206 = vmatpush1.bf16.msra.mxu0 0
      %6207 = vmatprep.subr.bf16.mxu0 0
      %6208 = vmatpush1.bf16.msra.mxu0 0
      %6209 = vmatprep.subr.bf16.mxu0 0
      %6210 = vmatpush1.bf16.msra.mxu0 0
      %6211 = vmatprep.subr.bf16.mxu0 0
      %6212 = vmatpush1.bf16.msra.mxu0 0
      %6213 = vmatprep.subr.bf16.mxu0 0
      %6214 = vmatpush1.bf16.msra.mxu0 0
      %6215 = vmatprep.subr.bf16.mxu0 0
      %6216 = vmatpush1.bf16.msra.mxu0 0
      %6217 = vmatprep.subr.bf16.mxu0 0
      %6218 = vmatpush1.bf16.msra.mxu0 0
      %6219 = vmatprep.subr.bf16.mxu0 0
      %6220 = vmatpush1.bf16.msra.mxu0 0
      %6221 = vmatprep.subr.bf16.mxu0 0
      %6222 = vmatpush1.bf16.msra.mxu0 0
      %6223 = vmatprep.mubr.bf16.mxu0 0
      %6224 = vmatmul.mubr.bf16.gmra.mrb[0].mxu0 %v6180
      %v6225 = vpop.f32.mrb[0].mxu0
      %v6226 = vadd.f32 0.0, %v6225
      %v6227 = vpop.f32.mrb[0].mxu0
      %v6228 = vpop.f32.mrb[0].mxu0
      %v6229 = vadd.f32 0.0, %v6228
      %v6230 = vpop.f32.mrb[0].mxu0
      %6231 = vmatprep.mubr.bf16.mxu0 0
      %6232 = vmatmul.mubr.bf16.gmra.mrb[0].mxu0 %v6183
      %v6233 = vpop.f32.mrb[0].mxu0
      %v6234 = vadd.f32 0.0, %v6233
      %v6235 = vpop.f32.mrb[0].mxu0
      %v6236 = vpop.f32.mrb[0].mxu0
      %v6237 = vadd.f32 0.0, %v6236
      %v6238 = vpop.f32.mrb[0].mxu0
      %6239 = vmatprep.mubr.bf16.mxu0 0
      %6240 = vmatmul.mubr.bf16.gmra.mrb[0].mxu0 %v6186
      %v6241 = vpop.f32.mrb[0].mxu0
      %v6242 = vadd.f32 0.0, %v6241
      %v6243 = vpop.f32.mrb[0].mxu0
      %v6244 = vpop.f32.mrb[0].mxu0
      %v6245 = vadd.f32 0.0, %v6244
      %v6246 = vpop.f32.mrb[0].mxu0
      %6247 = vmatprep.mubr.bf16.mxu0 0
      %6248 = vmatmul.mubr.bf16.gmra.mrb[0].mxu0 %v6189
      %v6249 = vpop.f32.mrb[0].mxu0
      %v6250 = vadd.f32 0.0, %v6249
      %v6251 = vpop.f32.mrb[0].mxu0
      %v6252 = vpop.f32.mrb[0].mxu0
      %v6253 = vadd.f32 0.0, %v6252
      %v6254 = vpop.f32.mrb[0].mxu0
      %6255 = vdwg.mxu0
      %v6256 = vadd.f32 %v6150, %v6226
      %v6257 = vadd.f32 %v6151, %v6229
      %v6258 = vadd.f32 %v6152, %v6234
      %v6259 = vadd.f32 %v6153, %v6237
      %v6260 = vadd.f32 %v6154, %v6242
      %v6261 = vadd.f32 %v6155, %v6245
      %v6262 = vadd.f32 %v6156, %v6250
      %v6263 = vadd.f32 %v6157, %v6253
      %v6264 = vld [vmem:[%s4] sm:$0x1]
      %v6266 = vlaneseq
      %v6267 = vshrl.u32 %v6266, 7
      %v6268 = vsub.s32 0, %v6267
      %v6269 = vrot.slane %v6264, %v6268
      %v6271 = vadd.f32 %v6256, %v6269
      %v6272 = vadd.f32 %v6257, %v6269
      %v6273 = vadd.f32 %v6258, %v6269
      %v6274 = vadd.f32 %v6259, %v6269
      %v6275 = vadd.f32 %v6260, %v6269
      %v6276 = vadd.f32 %v6261, %v6269
      %v6277 = vadd.f32 %v6262, %v6269
      %v6278 = vadd.f32 %v6263, %v6269
      %v6279 = vmax.f32 %v6271, 0.0
      %v6280 = vmax.f32 %v6272, 0.0
      %v6281 = vmax.f32 %v6273, 0.0
      %v6282 = vmax.f32 %v6274, 0.0
      %v6283 = vmax.f32 %v6275, 0.0
      %v6284 = vmax.f32 %v6276, 0.0
      %v6285 = vmax.f32 %v6277, 0.0
      %v6286 = vmax.f32 %v6278, 0.0
      %6287 = vst.msk [vmem:[#allocation4] sm:$0xff] %vm4969, 0.0
      %6288 = vst.msk [vmem:[#allocation4 + $0x8] sm:$0x3] %vm4072, 0.0
      %6289 = vst.msk [vmem:[#allocation4 + $0x10] sm:$0xff] %vm4969, 0.0
      %6290 = vst.msk [vmem:[#allocation4 + $0x18] sm:$0x3] %vm4072, 0.0
      %6291 = vst.msk [vmem:[#allocation4 + $0x20] sm:$0xff] %vm4969, 0.0
      %6292 = vst.msk [vmem:[#allocation4 + $0x28] sm:$0x3] %vm4072, 0.0
      %6293 = vst.msk [vmem:[#allocation4 + $0x30] sm:$0xff] %vm4969, 0.0
      %6294 = vst.msk [vmem:[#allocation4 + $0x38] sm:$0x3] %vm4072, 0.0
      %6295 = vst.msk [vmem:[#allocation4 + $0x40] sm:$0xff] %vm4969, 0.0
      %6296 = vst.msk [vmem:[#allocation4 + $0x48] sm:$0x3] %vm4072, 0.0
      %6297 = vst.msk [vmem:[#allocation4 + $0x50] sm:$0xff] %vm4969, 0.0
      %6298 = vst.msk [vmem:[#allocation4 + $0x58] sm:$0x3] %vm4072, 0.0
      %6299 = vst.msk [vmem:[#allocation4 + $0x60] sm:$0xff] %vm4969, 0.0
      %6300 = vst.msk [vmem:[#allocation4 + $0x68] sm:$0x3] %vm4072, 0.0
      %6301 = vst.msk [vmem:[#allocation4 + $0x70] sm:$0xff] %vm4969, 0.0
      %6302 = vst.msk [vmem:[#allocation4 + $0x78] sm:$0x3] %vm4072, 0.0
      %6303 = vst.msk [vmem:[#allocation4 + $0x80] sm:$0xff] %vm4969, 0.0
      %6304 = vst.msk [vmem:[#allocation4 + $0x88] sm:$0x3] %vm4072, 0.0
      %6305 = vst.msk [vmem:[#allocation4 + $0x90] sm:$0xff] %vm4969, 0.0
      %6306 = vst.msk [vmem:[#allocation4 + $0x98] sm:$0x3] %vm4072, 0.0
      %s6307 = scalar_lea.vmem [#allocation4], 16
      %6308 = vst.msk [vmem:[%s6307 + $0x1] sm:$0xff] %vm4969, %v6279
      %6309 = vst.msk [vmem:[%s6307 + $0x11] sm:$0xff] %vm4969, %v6280
      %6310 = vst.msk [vmem:[%s6307 + $0x21] sm:$0xff] %vm4969, %v6281
      %6311 = vst.msk [vmem:[%s6307 + $0x31] sm:$0xff] %vm4969, %v6282
      %6312 = vst.msk [vmem:[%s6307 + $0x41] sm:$0xff] %vm4969, %v6283
      %6313 = vst.msk [vmem:[%s6307 + $0x51] sm:$0xff] %vm4969, %v6284
      %6314 = vst.msk [vmem:[%s6307 + $0x61] sm:$0xff] %vm4969, %v6285
      %6315 = vst.msk [vmem:[%s6307 + $0x71] sm:$0xff] %vm4969, %v6286
      %v6316 = vld [vmem:[#allocation4] sm:$0xff]
      %v6317 = vld [vmem:[#allocation4 + $0x10] sm:$0xff]
      %v6318 = vld [vmem:[#allocation4 + $0x20] sm:$0xff]
      %v6319 = vld [vmem:[#allocation4 + $0x30] sm:$0xff]
      %v6320 = vld [vmem:[#allocation4 + $0x40] sm:$0xff]
      %v6321 = vld [vmem:[#allocation4 + $0x50] sm:$0xff]
      %v6322 = vld [vmem:[#allocation4 + $0x60] sm:$0xff]
      %v6323 = vld [vmem:[#allocation4 + $0x70] sm:$0xff]
      %v6324 = vpack.c.bf16 %v6317, %v6316
      %v6325 = vpack.c.bf16 %v6319, %v6318
      %v6326 = vpack.c.bf16 %v6321, %v6320
      %v6327 = vpack.c.bf16 %v6323, %v6322
      %v6328 = vld [vmem:[%s5] sm:$0xf]
      %v6329 = vld [vmem:[%s5 + $0x4] sm:$0xf]
      %v6330 = vld [vmem:[#allocation4 + $0x1] sm:$0xff]
      %v6331 = vld [vmem:[#allocation4 + $0x11] sm:$0xff]
      %v6332 = vld [vmem:[#allocation4 + $0x21] sm:$0xff]
      %v6333 = vld [vmem:[#allocation4 + $0x31] sm:$0xff]
      %v6334 = vld [vmem:[#allocation4 + $0x41] sm:$0xff]
      %v6335 = vld [vmem:[#allocation4 + $0x51] sm:$0xff]
      %v6336 = vld [vmem:[#allocation4 + $0x61] sm:$0xff]
      %v6337 = vld [vmem:[#allocation4 + $0x71] sm:$0xff]
      %v6338 = vpack.c.bf16 %v6331, %v6330
      %v6339 = vpack.c.bf16 %v6333, %v6332
      %v6340 = vpack.c.bf16 %v6335, %v6334
      %v6341 = vpack.c.bf16 %v6337, %v6336
      %s6342 = scalar_lea.vmem %s5, 8
      %v6343 = vld [vmem:[%s6342] sm:$0xf]
      %v6344 = vld [vmem:[%s6342 + $0x4] sm:$0xf]
      %v6347 = vunpack.c.l.b16 %v6343
      %v6348 = vunpack.c.l.b16 %v6344
      %v6349 = vpack.c.b16 %v6348, %v6347
      %v6352 = vsel %vm4969, %v6338, 0
      %v6355 = vsel %vm4969, %v6339, 0
      %v6358 = vsel %vm4969, %v6340, 0
      %v6361 = vsel %vm4969, %v6341, 0
      %6363 = vmatprep.subr.bf16.mxu0 0
      %6364 = vmatpush1.bf16.msra.mxu0 %v6349
      %6365 = vmatprep.subr.bf16.mxu0 0
      %6366 = vmatpush1.bf16.msra.mxu0 0
      %6367 = vmatprep.subr.bf16.mxu0 0
      %6368 = vmatpush1.bf16.msra.mxu0 0
      %6369 = vmatprep.subr.bf16.mxu0 0
      %6370 = vmatpush1.bf16.msra.mxu0 0
      %6371 = vmatprep.subr.bf16.mxu0 0
      %6372 = vmatpush1.bf16.msra.mxu0 0
      %6373 = vmatprep.subr.bf16.mxu0 0
      %6374 = vmatpush1.bf16.msra.mxu0 0
      %6375 = vmatprep.subr.bf16.mxu0 0
      %6376 = vmatpush1.bf16.msra.mxu0 0
      %6377 = vmatprep.subr.bf16.mxu0 0
      %6378 = vmatpush1.bf16.msra.mxu0 0
      %6379 = vmatprep.subr.bf16.mxu0 0
      %6380 = vmatpush1.bf16.msra.mxu0 0
      %6381 = vmatprep.subr.bf16.mxu0 0
      %6382 = vmatpush1.bf16.msra.mxu0 0
      %6383 = vmatprep.subr.bf16.mxu0 0
      %6384 = vmatpush1.bf16.msra.mxu0 0
      %6385 = vmatprep.subr.bf16.mxu0 0
      %6386 = vmatpush1.bf16.msra.mxu0 0
      %6387 = vmatprep.subr.bf16.mxu0 0
      %6388 = vmatpush1.bf16.msra.mxu0 0
      %6389 = vmatprep.subr.bf16.mxu0 0
      %6390 = vmatpush1.bf16.msra.mxu0 0
      %6391 = vmatprep.subr.bf16.mxu0 0
      %6392 = vmatpush1.bf16.msra.mxu0 0
      %6393 = vmatprep.subr.bf16.mxu0 0
      %6394 = vmatpush1.bf16.msra.mxu0 0
      %6395 = vmatprep.mubr.bf16.mxu0 0
      %6396 = vmatmul.mubr.bf16.gmra.mrb[0].mxu0 %v6352
      %v6397 = vpop.f32.mrb[0].mxu0
      %v6398 = vadd.f32 0.0, %v6397
      %v6399 = vpop.f32.mrb[0].mxu0
      %v6400 = vpop.f32.mrb[0].mxu0
      %v6401 = vadd.f32 0.0, %v6400
      %v6402 = vpop.f32.mrb[0].mxu0
      %6403 = vmatprep.mubr.bf16.mxu0 0
      %6404 = vmatmul.mubr.bf16.gmra.mrb[0].mxu0 %v6355
      %v6405 = vpop.f32.mrb[0].mxu0
      %v6406 = vadd.f32 0.0, %v6405
      %v6407 = vpop.f32.mrb[0].mxu0
      %v6408 = vpop.f32.mrb[0].mxu0
      %v6409 = vadd.f32 0.0, %v6408
      %v6410 = vpop.f32.mrb[0].mxu0
      %6411 = vmatprep.mubr.bf16.mxu0 0
      %6412 = vmatmul.mubr.bf16.gmra.mrb[0].mxu0 %v6358
      %v6413 = vpop.f32.mrb[0].mxu0
      %v6414 = vadd.f32 0.0, %v6413
      %v6415 = vpop.f32.mrb[0].mxu0
      %v6416 = vpop.f32.mrb[0].mxu0
      %v6417 = vadd.f32 0.0, %v6416
      %v6418 = vpop.f32.mrb[0].mxu0
      %6419 = vmatprep.mubr.bf16.mxu0 0
      %6420 = vmatmul.mubr.bf16.gmra.mrb[0].mxu0 %v6361
      %v6421 = vpop.f32.mrb[0].mxu0
      %v6422 = vadd.f32 0.0, %v6421
      %v6423 = vpop.f32.mrb[0].mxu0
      %v6424 = vpop.f32.mrb[0].mxu0
      %v6425 = vadd.f32 0.0, %v6424
      %v6426 = vpop.f32.mrb[0].mxu0
      %6427 = vdwg.mxu0
      %v6430 = vunpack.c.l.b16 %v6328
      %v6431 = vunpack.c.l.b16 %v6329
      %v6432 = vpack.c.b16 %v6431, %v6430
      %v6435 = vsel %vm4969, %v6324, 0
      %v6438 = vsel %vm4969, %v6325, 0
      %v6441 = vsel %vm4969, %v6326, 0
      %v6444 = vsel %vm4969, %v6327, 0
      %6446 = vmatprep.subr.bf16.mxu0 0
      %6447 = vmatpush1.bf16.msra.mxu0 %v6432
      %6448 = vmatprep.subr.bf16.mxu0 0
      %6449 = vmatpush1.bf16.msra.mxu0 0
      %6450 = vmatprep.subr.bf16.mxu0 0
      %6451 = vmatpush1.bf16.msra.mxu0 0
      %6452 = vmatprep.subr.bf16.mxu0 0
      %6453 = vmatpush1.bf16.msra.mxu0 0
      %6454 = vmatprep.subr.bf16.mxu0 0
      %6455 = vmatpush1.bf16.msra.mxu0 0
      %6456 = vmatprep.subr.bf16.mxu0 0
      %6457 = vmatpush1.bf16.msra.mxu0 0
      %6458 = vmatprep.subr.bf16.mxu0 0
      %6459 = vmatpush1.bf16.msra.mxu0 0
      %6460 = vmatprep.subr.bf16.mxu0 0
      %6461 = vmatpush1.bf16.msra.mxu0 0
      %6462 = vmatprep.subr.bf16.mxu0 0
      %6463 = vmatpush1.bf16.msra.mxu0 0
      %6464 = vmatprep.subr.bf16.mxu0 0
      %6465 = vmatpush1.bf16.msra.mxu0 0
      %6466 = vmatprep.subr.bf16.mxu0 0
      %6467 = vmatpush1.bf16.msra.mxu0 0
      %6468 = vmatprep.subr.bf16.mxu0 0
      %6469 = vmatpush1.bf16.msra.mxu0 0
      %6470 = vmatprep.subr.bf16.mxu0 0
      %6471 = vmatpush1.bf16.msra.mxu0 0
      %6472 = vmatprep.subr.bf16.mxu0 0
      %6473 = vmatpush1.bf16.msra.mxu0 0
      %6474 = vmatprep.subr.bf16.mxu0 0
      %6475 = vmatpush1.bf16.msra.mxu0 0
      %6476 = vmatprep.subr.bf16.mxu0 0
      %6477 = vmatpush1.bf16.msra.mxu0 0
      %6478 = vmatprep.mubr.bf16.mxu0 0
      %6479 = vmatmul.mubr.bf16.gmra.mrb[0].mxu0 %v6435
      %v6480 = vpop.f32.mrb[0].mxu0
      %v6481 = vadd.f32 %v6398, %v6480
      %v6482 = vpop.f32.mrb[0].mxu0
      %v6483 = vpop.f32.mrb[0].mxu0
      %v6484 = vadd.f32 %v6401, %v6483
      %v6485 = vpop.f32.mrb[0].mxu0
      %6486 = vmatprep.mubr.bf16.mxu0 0
      %6487 = vmatmul.mubr.bf16.gmra.mrb[0].mxu0 %v6438
      %v6488 = vpop.f32.mrb[0].mxu0
      %v6489 = vadd.f32 %v6406, %v6488
      %v6490 = vpop.f32.mrb[0].mxu0
      %v6491 = vpop.f32.mrb[0].mxu0
      %v6492 = vadd.f32 %v6409, %v6491
      %v6493 = vpop.f32.mrb[0].mxu0
      %6494 = vmatprep.mubr.bf16.mxu0 0
      %6495 = vmatmul.mubr.bf16.gmra.mrb[0].mxu0 %v6441
      %v6496 = vpop.f32.mrb[0].mxu0
      %v6497 = vadd.f32 %v6414, %v6496
      %v6498 = vpop.f32.mrb[0].mxu0
      %v6499 = vpop.f32.mrb[0].mxu0
      %v6500 = vadd.f32 %v6417, %v6499
      %v6501 = vpop.f32.mrb[0].mxu0
      %6502 = vmatprep.mubr.bf16.mxu0 0
      %6503 = vmatmul.mubr.bf16.gmra.mrb[0].mxu0 %v6444
      %v6504 = vpop.f32.mrb[0].mxu0
      %v6505 = vadd.f32 %v6422, %v6504
      %v6506 = vpop.f32.mrb[0].mxu0
      %v6507 = vpop.f32.mrb[0].mxu0
      %v6508 = vadd.f32 %v6425, %v6507
      %v6509 = vpop.f32.mrb[0].mxu0
      %6510 = vdwg.mxu0
      %v6511 = vld [vmem:[#allocation4 + $0x2] sm:$0xff]
      %v6512 = vld [vmem:[#allocation4 + $0x12] sm:$0xff]
      %v6513 = vld [vmem:[#allocation4 + $0x22] sm:$0xff]
      %v6514 = vld [vmem:[#allocation4 + $0x32] sm:$0xff]
      %v6515 = vld [vmem:[#allocation4 + $0x42] sm:$0xff]
      %v6516 = vld [vmem:[#allocation4 + $0x52] sm:$0xff]
      %v6517 = vld [vmem:[#allocation4 + $0x62] sm:$0xff]
      %v6518 = vld [vmem:[#allocation4 + $0x72] sm:$0xff]
      %v6519 = vpack.c.bf16 %v6512, %v6511
      %v6520 = vpack.c.bf16 %v6514, %v6513
      %v6521 = vpack.c.bf16 %v6516, %v6515
      %v6522 = vpack.c.bf16 %v6518, %v6517
      %s6523 = scalar_lea.vmem %s5, 16
      %v6524 = vld [vmem:[%s6523] sm:$0xf]
      %v6525 = vld [vmem:[%s6523 + $0x4] sm:$0xf]
      %v6528 = vunpack.c.l.b16 %v6524
      %v6529 = vunpack.c.l.b16 %v6525
      %v6530 = vpack.c.b16 %v6529, %v6528
      %v6533 = vsel %vm4969, %v6519, 0
      %v6536 = vsel %vm4969, %v6520, 0
      %v6539 = vsel %vm4969, %v6521, 0
      %v6542 = vsel %vm4969, %v6522, 0
      %6544 = vmatprep.subr.bf16.mxu0 0
      %6545 = vmatpush1.bf16.msra.mxu0 %v6530
      %6546 = vmatprep.subr.bf16.mxu0 0
      %6547 = vmatpush1.bf16.msra.mxu0 0
      %6548 = vmatprep.subr.bf16.mxu0 0
      %6549 = vmatpush1.bf16.msra.mxu0 0
      %6550 = vmatprep.subr.bf16.mxu0 0
      %6551 = vmatpush1.bf16.msra.mxu0 0
      %6552 = vmatprep.subr.bf16.mxu0 0
      %6553 = vmatpush1.bf16.msra.mxu0 0
      %6554 = vmatprep.subr.bf16.mxu0 0
      %6555 = vmatpush1.bf16.msra.mxu0 0
      %6556 = vmatprep.subr.bf16.mxu0 0
      %6557 = vmatpush1.bf16.msra.mxu0 0
      %6558 = vmatprep.subr.bf16.mxu0 0
      %6559 = vmatpush1.bf16.msra.mxu0 0
      %6560 = vmatprep.subr.bf16.mxu0 0
      %6561 = vmatpush1.bf16.msra.mxu0 0
      %6562 = vmatprep.subr.bf16.mxu0 0
      %6563 = vmatpush1.bf16.msra.mxu0 0
      %6564 = vmatprep.subr.bf16.mxu0 0
      %6565 = vmatpush1.bf16.msra.mxu0 0
      %6566 = vmatprep.subr.bf16.mxu0 0
      %6567 = vmatpush1.bf16.msra.mxu0 0
      %6568 = vmatprep.subr.bf16.mxu0 0
      %6569 = vmatpush1.bf16.msra.mxu0 0
      %6570 = vmatprep.subr.bf16.mxu0 0
      %6571 = vmatpush1.bf16.msra.mxu0 0
      %6572 = vmatprep.subr.bf16.mxu0 0
      %6573 = vmatpush1.bf16.msra.mxu0 0
      %6574 = vmatprep.subr.bf16.mxu0 0
      %6575 = vmatpush1.bf16.msra.mxu0 0
      %6576 = vmatprep.mubr.bf16.mxu0 0
      %6577 = vmatmul.mubr.bf16.gmra.mrb[0].mxu0 %v6533
      %v6578 = vpop.f32.mrb[0].mxu0
      %v6579 = vadd.f32 0.0, %v6578
      %v6580 = vpop.f32.mrb[0].mxu0
      %v6581 = vpop.f32.mrb[0].mxu0
      %v6582 = vadd.f32 0.0, %v6581
      %v6583 = vpop.f32.mrb[0].mxu0
      %6584 = vmatprep.mubr.bf16.mxu0 0
      %6585 = vmatmul.mubr.bf16.gmra.mrb[0].mxu0 %v6536
      %v6586 = vpop.f32.mrb[0].mxu0
      %v6587 = vadd.f32 0.0, %v6586
      %v6588 = vpop.f32.mrb[0].mxu0
      %v6589 = vpop.f32.mrb[0].mxu0
      %v6590 = vadd.f32 0.0, %v6589
      %v6591 = vpop.f32.mrb[0].mxu0
      %6592 = vmatprep.mubr.bf16.mxu0 0
      %6593 = vmatmul.mubr.bf16.gmra.mrb[0].mxu0 %v6539
      %v6594 = vpop.f32.mrb[0].mxu0
      %v6595 = vadd.f32 0.0, %v6594
      %v6596 = vpop.f32.mrb[0].mxu0
      %v6597 = vpop.f32.mrb[0].mxu0
      %v6598 = vadd.f32 0.0, %v6597
      %v6599 = vpop.f32.mrb[0].mxu0
      %6600 = vmatprep.mubr.bf16.mxu0 0
      %6601 = vmatmul.mubr.bf16.gmra.mrb[0].mxu0 %v6542
      %v6602 = vpop.f32.mrb[0].mxu0
      %v6603 = vadd.f32 0.0, %v6602
      %v6604 = vpop.f32.mrb[0].mxu0
      %v6605 = vpop.f32.mrb[0].mxu0
      %v6606 = vadd.f32 0.0, %v6605
      %v6607 = vpop.f32.mrb[0].mxu0
      %6608 = vdwg.mxu0
      %v6609 = vadd.f32 %v6481, %v6579
      %v6610 = vadd.f32 %v6484, %v6582
      %v6611 = vadd.f32 %v6489, %v6587
      %v6612 = vadd.f32 %v6492, %v6590
      %v6613 = vadd.f32 %v6497, %v6595
      %v6614 = vadd.f32 %v6500, %v6598
      %v6615 = vadd.f32 %v6505, %v6603
      %v6616 = vadd.f32 %v6508, %v6606
      %v6617 = vld [vmem:[%s6307] sm:$0xff]
      %v6618 = vld [vmem:[%s6307 + $0x10] sm:$0xff]
      %v6619 = vld [vmem:[%s6307 + $0x20] sm:$0xff]
      %v6620 = vld [vmem:[%s6307 + $0x30] sm:$0xff]
      %v6621 = vld [vmem:[%s6307 + $0x40] sm:$0xff]
      %v6622 = vld [vmem:[%s6307 + $0x50] sm:$0xff]
      %v6623 = vld [vmem:[%s6307 + $0x60] sm:$0xff]
      %v6624 = vld [vmem:[%s6307 + $0x70] sm:$0xff]
      %v6625 = vpack.c.bf16 %v6618, %v6617
      %v6626 = vpack.c.bf16 %v6620, %v6619
      %v6627 = vpack.c.bf16 %v6622, %v6621
      %v6628 = vpack.c.bf16 %v6624, %v6623
      %s6629 = scalar_lea.vmem %s5, 24
      %v6630 = vld [vmem:[%s6629] sm:$0xf]
      %v6631 = vld [vmem:[%s6629 + $0x4] sm:$0xf]
      %v6634 = vunpack.c.l.b16 %v6630
      %v6635 = vunpack.c.l.b16 %v6631
      %v6636 = vpack.c.b16 %v6635, %v6634
      %v6639 = vsel %vm4969, %v6625, 0
      %v6642 = vsel %vm4969, %v6626, 0
      %v6645 = vsel %vm4969, %v6627, 0
      %v6648 = vsel %vm4969, %v6628, 0
      %6650 = vmatprep.subr.bf16.mxu0 0
      %6651 = vmatpush1.bf16.msra.mxu0 %v6636
      %6652 = vmatprep.subr.bf16.mxu0 0
      %6653 = vmatpush1.bf16.msra.mxu0 0
      %6654 = vmatprep.subr.bf16.mxu0 0
      %6655 = vmatpush1.bf16.msra.mxu0 0
      %6656 = vmatprep.subr.bf16.mxu0 0
      %6657 = vmatpush1.bf16.msra.mxu0 0
      %6658 = vmatprep.subr.bf16.mxu0 0
      %6659 = vmatpush1.bf16.msra.mxu0 0
      %6660 = vmatprep.subr.bf16.mxu0 0
      %6661 = vmatpush1.bf16.msra.mxu0 0
      %6662 = vmatprep.subr.bf16.mxu0 0
      %6663 = vmatpush1.bf16.msra.mxu0 0
      %6664 = vmatprep.subr.bf16.mxu0 0
      %6665 = vmatpush1.bf16.msra.mxu0 0
      %6666 = vmatprep.subr.bf16.mxu0 0
      %6667 = vmatpush1.bf16.msra.mxu0 0
      %6668 = vmatprep.subr.bf16.mxu0 0
      %6669 = vmatpush1.bf16.msra.mxu0 0
      %6670 = vmatprep.subr.bf16.mxu0 0
      %6671 = vmatpush1.bf16.msra.mxu0 0
      %6672 = vmatprep.subr.bf16.mxu0 0
      %6673 = vmatpush1.bf16.msra.mxu0 0
      %6674 = vmatprep.subr.bf16.mxu0 0
      %6675 = vmatpush1.bf16.msra.mxu0 0
      %6676 = vmatprep.subr.bf16.mxu0 0
      %6677 = vmatpush1.bf16.msra.mxu0 0
      %6678 = vmatprep.subr.bf16.mxu0 0
      %6679 = vmatpush1.bf16.msra.mxu0 0
      %6680 = vmatprep.subr.bf16.mxu0 0
      %6681 = vmatpush1.bf16.msra.mxu0 0
      %6682 = vmatprep.mubr.bf16.mxu0 0
      %6683 = vmatmul.mubr.bf16.gmra.mrb[0].mxu0 %v6639
      %v6684 = vpop.f32.mrb[0].mxu0
      %v6685 = vadd.f32 0.0, %v6684
      %v6686 = vpop.f32.mrb[0].mxu0
      %v6687 = vpop.f32.mrb[0].mxu0
      %v6688 = vadd.f32 0.0, %v6687
      %v6689 = vpop.f32.mrb[0].mxu0
      %6690 = vmatprep.mubr.bf16.mxu0 0
      %6691 = vmatmul.mubr.bf16.gmra.mrb[0].mxu0 %v6642
      %v6692 = vpop.f32.mrb[0].mxu0
      %v6693 = vadd.f32 0.0, %v6692
      %v6694 = vpop.f32.mrb[0].mxu0
      %v6695 = vpop.f32.mrb[0].mxu0
      %v6696 = vadd.f32 0.0, %v6695
      %v6697 = vpop.f32.mrb[0].mxu0
      %6698 = vmatprep.mubr.bf16.mxu0 0
      %6699 = vmatmul.mubr.bf16.gmra.mrb[0].mxu0 %v6645
      %v6700 = vpop.f32.mrb[0].mxu0
      %v6701 = vadd.f32 0.0, %v6700
      %v6702 = vpop.f32.mrb[0].mxu0
      %v6703 = vpop.f32.mrb[0].mxu0
      %v6704 = vadd.f32 0.0, %v6703
      %v6705 = vpop.f32.mrb[0].mxu0
      %6706 = vmatprep.mubr.bf16.mxu0 0
      %6707 = vmatmul.mubr.bf16.gmra.mrb[0].mxu0 %v6648
      %v6708 = vpop.f32.mrb[0].mxu0
      %v6709 = vadd.f32 0.0, %v6708
      %v6710 = vpop.f32.mrb[0].mxu0
      %v6711 = vpop.f32.mrb[0].mxu0
      %v6712 = vadd.f32 0.0, %v6711
      %v6713 = vpop.f32.mrb[0].mxu0
      %6714 = vdwg.mxu0
      %v6715 = vadd.f32 %v6609, %v6685
      %v6716 = vadd.f32 %v6610, %v6688
      %v6717 = vadd.f32 %v6611, %v6693
      %v6718 = vadd.f32 %v6612, %v6696
      %v6719 = vadd.f32 %v6613, %v6701
      %v6720 = vadd.f32 %v6614, %v6704
      %v6721 = vadd.f32 %v6615, %v6709
      %v6722 = vadd.f32 %v6616, %v6712
      %v6723 = vld [vmem:[%s6307 + $0x1] sm:$0xff]
      %v6724 = vld [vmem:[%s6307 + $0x11] sm:$0xff]
      %v6725 = vld [vmem:[%s6307 + $0x21] sm:$0xff]
      %v6726 = vld [vmem:[%s6307 + $0x31] sm:$0xff]
      %v6727 = vld [vmem:[%s6307 + $0x41] sm:$0xff]
      %v6728 = vld [vmem:[%s6307 + $0x51] sm:$0xff]
      %v6729 = vld [vmem:[%s6307 + $0x61] sm:$0xff]
      %v6730 = vld [vmem:[%s6307 + $0x71] sm:$0xff]
      %v6731 = vpack.c.bf16 %v6724, %v6723
      %v6732 = vpack.c.bf16 %v6726, %v6725
      %v6733 = vpack.c.bf16 %v6728, %v6727
      %v6734 = vpack.c.bf16 %v6730, %v6729
      %s6735 = scalar_lea.vmem %s5, 32
      %v6736 = vld [vmem:[%s6735] sm:$0xf]
      %v6737 = vld [vmem:[%s6735 + $0x4] sm:$0xf]
      %v6740 = vunpack.c.l.b16 %v6736
      %v6741 = vunpack.c.l.b16 %v6737
      %v6742 = vpack.c.b16 %v6741, %v6740
      %v6745 = vsel %vm4969, %v6731, 0
      %v6748 = vsel %vm4969, %v6732, 0
      %v6751 = vsel %vm4969, %v6733, 0
      %v6754 = vsel %vm4969, %v6734, 0
      %6756 = vmatprep.subr.bf16.mxu0 0
      %6757 = vmatpush1.bf16.msra.mxu0 %v6742
      %6758 = vmatprep.subr.bf16.mxu0 0
      %6759 = vmatpush1.bf16.msra.mxu0 0
      %6760 = vmatprep.subr.bf16.mxu0 0
      %6761 = vmatpush1.bf16.msra.mxu0 0
      %6762 = vmatprep.subr.bf16.mxu0 0
      %6763 = vmatpush1.bf16.msra.mxu0 0
      %6764 = vmatprep.subr.bf16.mxu0 0
      %6765 = vmatpush1.bf16.msra.mxu0 0
      %6766 = vmatprep.subr.bf16.mxu0 0
      %6767 = vmatpush1.bf16.msra.mxu0 0
      %6768 = vmatprep.subr.bf16.mxu0 0
      %6769 = vmatpush1.bf16.msra.mxu0 0
      %6770 = vmatprep.subr.bf16.mxu0 0
      %6771 = vmatpush1.bf16.msra.mxu0 0
      %6772 = vmatprep.subr.bf16.mxu0 0
      %6773 = vmatpush1.bf16.msra.mxu0 0
      %6774 = vmatprep.subr.bf16.mxu0 0
      %6775 = vmatpush1.bf16.msra.mxu0 0
      %6776 = vmatprep.subr.bf16.mxu0 0
      %6777 = vmatpush1.bf16.msra.mxu0 0
      %6778 = vmatprep.subr.bf16.mxu0 0
      %6779 = vmatpush1.bf16.msra.mxu0 0
      %6780 = vmatprep.subr.bf16.mxu0 0
      %6781 = vmatpush1.bf16.msra.mxu0 0
      %6782 = vmatprep.subr.bf16.mxu0 0
      %6783 = vmatpush1.bf16.msra.mxu0 0
      %6784 = vmatprep.subr.bf16.mxu0 0
      %6785 = vmatpush1.bf16.msra.mxu0 0
      %6786 = vmatprep.subr.bf16.mxu0 0
      %6787 = vmatpush1.bf16.msra.mxu0 0
      %6788 = vmatprep.mubr.bf16.mxu0 0
      %6789 = vmatmul.mubr.bf16.gmra.mrb[0].mxu0 %v6745
      %v6790 = vpop.f32.mrb[0].mxu0
      %v6791 = vadd.f32 0.0, %v6790
      %v6792 = vpop.f32.mrb[0].mxu0
      %v6793 = vpop.f32.mrb[0].mxu0
      %v6794 = vadd.f32 0.0, %v6793
      %v6795 = vpop.f32.mrb[0].mxu0
      %6796 = vmatprep.mubr.bf16.mxu0 0
      %6797 = vmatmul.mubr.bf16.gmra.mrb[0].mxu0 %v6748
      %v6798 = vpop.f32.mrb[0].mxu0
      %v6799 = vadd.f32 0.0, %v6798
      %v6800 = vpop.f32.mrb[0].mxu0
      %v6801 = vpop.f32.mrb[0].mxu0
      %v6802 = vadd.f32 0.0, %v6801
      %v6803 = vpop.f32.mrb[0].mxu0
      %6804 = vmatprep.mubr.bf16.mxu0 0
      %6805 = vmatmul.mubr.bf16.gmra.mrb[0].mxu0 %v6751
      %v6806 = vpop.f32.mrb[0].mxu0
      %v6807 = vadd.f32 0.0, %v6806
      %v6808 = vpop.f32.mrb[0].mxu0
      %v6809 = vpop.f32.mrb[0].mxu0
      %v6810 = vadd.f32 0.0, %v6809
      %v6811 = vpop.f32.mrb[0].mxu0
      %6812 = vmatprep.mubr.bf16.mxu0 0
      %6813 = vmatmul.mubr.bf16.gmra.mrb[0].mxu0 %v6754
      %v6814 = vpop.f32.mrb[0].mxu0
      %v6815 = vadd.f32 0.0, %v6814
      %v6816 = vpop.f32.mrb[0].mxu0
      %v6817 = vpop.f32.mrb[0].mxu0
      %v6818 = vadd.f32 0.0, %v6817
      %v6819 = vpop.f32.mrb[0].mxu0
      %6820 = vdwg.mxu0
      %v6821 = vadd.f32 %v6715, %v6791
      %v6822 = vadd.f32 %v6716, %v6794
      %v6823 = vadd.f32 %v6717, %v6799
      %v6824 = vadd.f32 %v6718, %v6802
      %v6825 = vadd.f32 %v6719, %v6807
      %v6826 = vadd.f32 %v6720, %v6810
      %v6827 = vadd.f32 %v6721, %v6815
      %v6828 = vadd.f32 %v6722, %v6818
      %v6829 = vld [vmem:[%s6307 + $0x2] sm:$0xff]
      %v6830 = vld [vmem:[%s6307 + $0x12] sm:$0xff]
      %v6831 = vld [vmem:[%s6307 + $0x22] sm:$0xff]
      %v6832 = vld [vmem:[%s6307 + $0x32] sm:$0xff]
      %v6833 = vld [vmem:[%s6307 + $0x42] sm:$0xff]
      %v6834 = vld [vmem:[%s6307 + $0x52] sm:$0xff]
      %v6835 = vld [vmem:[%s6307 + $0x62] sm:$0xff]
      %v6836 = vld [vmem:[%s6307 + $0x72] sm:$0xff]
      %v6837 = vpack.c.bf16 %v6830, %v6829
      %v6838 = vpack.c.bf16 %v6832, %v6831
      %v6839 = vpack.c.bf16 %v6834, %v6833
      %v6840 = vpack.c.bf16 %v6836, %v6835
      %s6841 = scalar_lea.vmem %s5, 40
      %v6842 = vld [vmem:[%s6841] sm:$0xf]
      %v6843 = vld [vmem:[%s6841 + $0x4] sm:$0xf]
      %v6846 = vunpack.c.l.b16 %v6842
      %v6847 = vunpack.c.l.b16 %v6843
      %v6848 = vpack.c.b16 %v6847, %v6846
      %v6851 = vsel %vm4969, %v6837, 0
      %v6854 = vsel %vm4969, %v6838, 0
      %v6857 = vsel %vm4969, %v6839, 0
      %v6860 = vsel %vm4969, %v6840, 0
      %6862 = vmatprep.subr.bf16.mxu0 0
      %6863 = vmatpush1.bf16.msra.mxu0 %v6848
      %6864 = vmatprep.subr.bf16.mxu0 0
      %6865 = vmatpush1.bf16.msra.mxu0 0
      %6866 = vmatprep.subr.bf16.mxu0 0
      %6867 = vmatpush1.bf16.msra.mxu0 0
      %6868 = vmatprep.subr.bf16.mxu0 0
      %6869 = vmatpush1.bf16.msra.mxu0 0
      %6870 = vmatprep.subr.bf16.mxu0 0
      %6871 = vmatpush1.bf16.msra.mxu0 0
      %6872 = vmatprep.subr.bf16.mxu0 0
      %6873 = vmatpush1.bf16.msra.mxu0 0
      %6874 = vmatprep.subr.bf16.mxu0 0
      %6875 = vmatpush1.bf16.msra.mxu0 0
      %6876 = vmatprep.subr.bf16.mxu0 0
      %6877 = vmatpush1.bf16.msra.mxu0 0
      %6878 = vmatprep.subr.bf16.mxu0 0
      %6879 = vmatpush1.bf16.msra.mxu0 0
      %6880 = vmatprep.subr.bf16.mxu0 0
      %6881 = vmatpush1.bf16.msra.mxu0 0
      %6882 = vmatprep.subr.bf16.mxu0 0
      %6883 = vmatpush1.bf16.msra.mxu0 0
      %6884 = vmatprep.subr.bf16.mxu0 0
      %6885 = vmatpush1.bf16.msra.mxu0 0
      %6886 = vmatprep.subr.bf16.mxu0 0
      %6887 = vmatpush1.bf16.msra.mxu0 0
      %6888 = vmatprep.subr.bf16.mxu0 0
      %6889 = vmatpush1.bf16.msra.mxu0 0
      %6890 = vmatprep.subr.bf16.mxu0 0
      %6891 = vmatpush1.bf16.msra.mxu0 0
      %6892 = vmatprep.subr.bf16.mxu0 0
      %6893 = vmatpush1.bf16.msra.mxu0 0
      %6894 = vmatprep.mubr.bf16.mxu0 0
      %6895 = vmatmul.mubr.bf16.gmra.mrb[0].mxu0 %v6851
      %v6896 = vpop.f32.mrb[0].mxu0
      %v6897 = vadd.f32 0.0, %v6896
      %v6898 = vpop.f32.mrb[0].mxu0
      %v6899 = vpop.f32.mrb[0].mxu0
      %v6900 = vadd.f32 0.0, %v6899
      %v6901 = vpop.f32.mrb[0].mxu0
      %6902 = vmatprep.mubr.bf16.mxu0 0
      %6903 = vmatmul.mubr.bf16.gmra.mrb[0].mxu0 %v6854
      %v6904 = vpop.f32.mrb[0].mxu0
      %v6905 = vadd.f32 0.0, %v6904
      %v6906 = vpop.f32.mrb[0].mxu0
      %v6907 = vpop.f32.mrb[0].mxu0
      %v6908 = vadd.f32 0.0, %v6907
      %v6909 = vpop.f32.mrb[0].mxu0
      %6910 = vmatprep.mubr.bf16.mxu0 0
      %6911 = vmatmul.mubr.bf16.gmra.mrb[0].mxu0 %v6857
      %v6912 = vpop.f32.mrb[0].mxu0
      %v6913 = vadd.f32 0.0, %v6912
      %v6914 = vpop.f32.mrb[0].mxu0
      %v6915 = vpop.f32.mrb[0].mxu0
      %v6916 = vadd.f32 0.0, %v6915
      %v6917 = vpop.f32.mrb[0].mxu0
      %6918 = vmatprep.mubr.bf16.mxu0 0
      %6919 = vmatmul.mubr.bf16.gmra.mrb[0].mxu0 %v6860
      %v6920 = vpop.f32.mrb[0].mxu0
      %v6921 = vadd.f32 0.0, %v6920
      %v6922 = vpop.f32.mrb[0].mxu0
      %v6923 = vpop.f32.mrb[0].mxu0
      %v6924 = vadd.f32 0.0, %v6923
      %v6925 = vpop.f32.mrb[0].mxu0
      %6926 = vdwg.mxu0
      %v6927 = vadd.f32 %v6821, %v6897
      %v6928 = vadd.f32 %v6822, %v6900
      %v6929 = vadd.f32 %v6823, %v6905
      %v6930 = vadd.f32 %v6824, %v6908
      %v6931 = vadd.f32 %v6825, %v6913
      %v6932 = vadd.f32 %v6826, %v6916
      %v6933 = vadd.f32 %v6827, %v6921
      %v6934 = vadd.f32 %v6828, %v6924
      %s6935 = scalar_lea.vmem [#allocation4], 32
      %v6936 = vld [vmem:[%s6935] sm:$0xff]
      %v6937 = vld [vmem:[%s6935 + $0x10] sm:$0xff]
      %v6938 = vld [vmem:[%s6935 + $0x20] sm:$0xff]
      %v6939 = vld [vmem:[%s6935 + $0x30] sm:$0xff]
      %v6940 = vld [vmem:[%s6935 + $0x40] sm:$0xff]
      %v6941 = vld [vmem:[%s6935 + $0x50] sm:$0xff]
      %v6942 = vld [vmem:[%s6935 + $0x60] sm:$0xff]
      %v6943 = vld [vmem:[%s6935 + $0x70] sm:$0xff]
      %v6944 = vpack.c.bf16 %v6937, %v6936
      %v6945 = vpack.c.bf16 %v6939, %v6938
      %v6946 = vpack.c.bf16 %v6941, %v6940
      %v6947 = vpack.c.bf16 %v6943, %v6942
      %s6948 = scalar_lea.vmem %s5, 48
      %v6949 = vld [vmem:[%s6948] sm:$0xf]
      %v6950 = vld [vmem:[%s6948 + $0x4] sm:$0xf]
      %v6953 = vunpack.c.l.b16 %v6949
      %v6954 = vunpack.c.l.b16 %v6950
      %v6955 = vpack.c.b16 %v6954, %v6953
      %v6958 = vsel %vm4969, %v6944, 0
      %v6961 = vsel %vm4969, %v6945, 0
      %v6964 = vsel %vm4969, %v6946, 0
      %v6967 = vsel %vm4969, %v6947, 0
      %6969 = vmatprep.subr.bf16.mxu0 0
      %6970 = vmatpush1.bf16.msra.mxu0 %v6955
      %6971 = vmatprep.subr.bf16.mxu0 0
      %6972 = vmatpush1.bf16.msra.mxu0 0
      %6973 = vmatprep.subr.bf16.mxu0 0
      %6974 = vmatpush1.bf16.msra.mxu0 0
      %6975 = vmatprep.subr.bf16.mxu0 0
      %6976 = vmatpush1.bf16.msra.mxu0 0
      %6977 = vmatprep.subr.bf16.mxu0 0
      %6978 = vmatpush1.bf16.msra.mxu0 0
      %6979 = vmatprep.subr.bf16.mxu0 0
      %6980 = vmatpush1.bf16.msra.mxu0 0
      %6981 = vmatprep.subr.bf16.mxu0 0
      %6982 = vmatpush1.bf16.msra.mxu0 0
      %6983 = vmatprep.subr.bf16.mxu0 0
      %6984 = vmatpush1.bf16.msra.mxu0 0
      %6985 = vmatprep.subr.bf16.mxu0 0
      %6986 = vmatpush1.bf16.msra.mxu0 0
      %6987 = vmatprep.subr.bf16.mxu0 0
      %6988 = vmatpush1.bf16.msra.mxu0 0
      %6989 = vmatprep.subr.bf16.mxu0 0
      %6990 = vmatpush1.bf16.msra.mxu0 0
      %6991 = vmatprep.subr.bf16.mxu0 0
      %6992 = vmatpush1.bf16.msra.mxu0 0
      %6993 = vmatprep.subr.bf16.mxu0 0
      %6994 = vmatpush1.bf16.msra.mxu0 0
      %6995 = vmatprep.subr.bf16.mxu0 0
      %6996 = vmatpush1.bf16.msra.mxu0 0
      %6997 = vmatprep.subr.bf16.mxu0 0
      %6998 = vmatpush1.bf16.msra.mxu0 0
      %6999 = vmatprep.subr.bf16.mxu0 0
      %7000 = vmatpush1.bf16.msra.mxu0 0
      %7001 = vmatprep.mubr.bf16.mxu0 0
      %7002 = vmatmul.mubr.bf16.gmra.mrb[0].mxu0 %v6958
      %v7003 = vpop.f32.mrb[0].mxu0
      %v7004 = vadd.f32 0.0, %v7003
      %v7005 = vpop.f32.mrb[0].mxu0
      %v7006 = vpop.f32.mrb[0].mxu0
      %v7007 = vadd.f32 0.0, %v7006
      %v7008 = vpop.f32.mrb[0].mxu0
      %7009 = vmatprep.mubr.bf16.mxu0 0
      %7010 = vmatmul.mubr.bf16.gmra.mrb[0].mxu0 %v6961
      %v7011 = vpop.f32.mrb[0].mxu0
      %v7012 = vadd.f32 0.0, %v7011
      %v7013 = vpop.f32.mrb[0].mxu0
      %v7014 = vpop.f32.mrb[0].mxu0
      %v7015 = vadd.f32 0.0, %v7014
      %v7016 = vpop.f32.mrb[0].mxu0
      %7017 = vmatprep.mubr.bf16.mxu0 0
      %7018 = vmatmul.mubr.bf16.gmra.mrb[0].mxu0 %v6964
      %v7019 = vpop.f32.mrb[0].mxu0
      %v7020 = vadd.f32 0.0, %v7019
      %v7021 = vpop.f32.mrb[0].mxu0
      %v7022 = vpop.f32.mrb[0].mxu0
      %v7023 = vadd.f32 0.0, %v7022
      %v7024 = vpop.f32.mrb[0].mxu0
      %7025 = vmatprep.mubr.bf16.mxu0 0
      %7026 = vmatmul.mubr.bf16.gmra.mrb[0].mxu0 %v6967
      %v7027 = vpop.f32.mrb[0].mxu0
      %v7028 = vadd.f32 0.0, %v7027
      %v7029 = vpop.f32.mrb[0].mxu0
      %v7030 = vpop.f32.mrb[0].mxu0
      %v7031 = vadd.f32 0.0, %v7030
      %v7032 = vpop.f32.mrb[0].mxu0
      %7033 = vdwg.mxu0
      %v7034 = vadd.f32 %v6927, %v7004
      %v7035 = vadd.f32 %v6928, %v7007
      %v7036 = vadd.f32 %v6929, %v7012
      %v7037 = vadd.f32 %v6930, %v7015
      %v7038 = vadd.f32 %v6931, %v7020
      %v7039 = vadd.f32 %v6932, %v7023
      %v7040 = vadd.f32 %v6933, %v7028
      %v7041 = vadd.f32 %v6934, %v7031
      %v7042 = vld [vmem:[%s6935 + $0x1] sm:$0xff]
      %v7043 = vld [vmem:[%s6935 + $0x11] sm:$0xff]
      %v7044 = vld [vmem:[%s6935 + $0x21] sm:$0xff]
      %v7045 = vld [vmem:[%s6935 + $0x31] sm:$0xff]
      %v7046 = vld [vmem:[%s6935 + $0x41] sm:$0xff]
      %v7047 = vld [vmem:[%s6935 + $0x51] sm:$0xff]
      %v7048 = vld [vmem:[%s6935 + $0x61] sm:$0xff]
      %v7049 = vld [vmem:[%s6935 + $0x71] sm:$0xff]
      %v7050 = vpack.c.bf16 %v7043, %v7042
      %v7051 = vpack.c.bf16 %v7045, %v7044
      %v7052 = vpack.c.bf16 %v7047, %v7046
      %v7053 = vpack.c.bf16 %v7049, %v7048
      %s7054 = scalar_lea.vmem %s5, 56
      %v7055 = vld [vmem:[%s7054] sm:$0xf]
      %v7056 = vld [vmem:[%s7054 + $0x4] sm:$0xf]
      %v7059 = vunpack.c.l.b16 %v7055
      %v7060 = vunpack.c.l.b16 %v7056
      %v7061 = vpack.c.b16 %v7060, %v7059
      %v7064 = vsel %vm4969, %v7050, 0
      %v7067 = vsel %vm4969, %v7051, 0
      %v7070 = vsel %vm4969, %v7052, 0
      %v7073 = vsel %vm4969, %v7053, 0
      %7075 = vmatprep.subr.bf16.mxu0 0
      %7076 = vmatpush1.bf16.msra.mxu0 %v7061
      %7077 = vmatprep.subr.bf16.mxu0 0
      %7078 = vmatpush1.bf16.msra.mxu0 0
      %7079 = vmatprep.subr.bf16.mxu0 0
      %7080 = vmatpush1.bf16.msra.mxu0 0
      %7081 = vmatprep.subr.bf16.mxu0 0
      %7082 = vmatpush1.bf16.msra.mxu0 0
      %7083 = vmatprep.subr.bf16.mxu0 0
      %7084 = vmatpush1.bf16.msra.mxu0 0
      %7085 = vmatprep.subr.bf16.mxu0 0
      %7086 = vmatpush1.bf16.msra.mxu0 0
      %7087 = vmatprep.subr.bf16.mxu0 0
      %7088 = vmatpush1.bf16.msra.mxu0 0
      %7089 = vmatprep.subr.bf16.mxu0 0
      %7090 = vmatpush1.bf16.msra.mxu0 0
      %7091 = vmatprep.subr.bf16.mxu0 0
      %7092 = vmatpush1.bf16.msra.mxu0 0
      %7093 = vmatprep.subr.bf16.mxu0 0
      %7094 = vmatpush1.bf16.msra.mxu0 0
      %7095 = vmatprep.subr.bf16.mxu0 0
      %7096 = vmatpush1.bf16.msra.mxu0 0
      %7097 = vmatprep.subr.bf16.mxu0 0
      %7098 = vmatpush1.bf16.msra.mxu0 0
      %7099 = vmatprep.subr.bf16.mxu0 0
      %7100 = vmatpush1.bf16.msra.mxu0 0
      %7101 = vmatprep.subr.bf16.mxu0 0
      %7102 = vmatpush1.bf16.msra.mxu0 0
      %7103 = vmatprep.subr.bf16.mxu0 0
      %7104 = vmatpush1.bf16.msra.mxu0 0
      %7105 = vmatprep.subr.bf16.mxu0 0
      %7106 = vmatpush1.bf16.msra.mxu0 0
      %7107 = vmatprep.mubr.bf16.mxu0 0
      %7108 = vmatmul.mubr.bf16.gmra.mrb[0].mxu0 %v7064
      %v7109 = vpop.f32.mrb[0].mxu0
      %v7110 = vadd.f32 0.0, %v7109
      %v7111 = vpop.f32.mrb[0].mxu0
      %v7112 = vpop.f32.mrb[0].mxu0
      %v7113 = vadd.f32 0.0, %v7112
      %v7114 = vpop.f32.mrb[0].mxu0
      %7115 = vmatprep.mubr.bf16.mxu0 0
      %7116 = vmatmul.mubr.bf16.gmra.mrb[0].mxu0 %v7067
      %v7117 = vpop.f32.mrb[0].mxu0
      %v7118 = vadd.f32 0.0, %v7117
      %v7119 = vpop.f32.mrb[0].mxu0
      %v7120 = vpop.f32.mrb[0].mxu0
      %v7121 = vadd.f32 0.0, %v7120
      %v7122 = vpop.f32.mrb[0].mxu0
      %7123 = vmatprep.mubr.bf16.mxu0 0
      %7124 = vmatmul.mubr.bf16.gmra.mrb[0].mxu0 %v7070
      %v7125 = vpop.f32.mrb[0].mxu0
      %v7126 = vadd.f32 0.0, %v7125
      %v7127 = vpop.f32.mrb[0].mxu0
      %v7128 = vpop.f32.mrb[0].mxu0
      %v7129 = vadd.f32 0.0, %v7128
      %v7130 = vpop.f32.mrb[0].mxu0
      %7131 = vmatprep.mubr.bf16.mxu0 0
      %7132 = vmatmul.mubr.bf16.gmra.mrb[0].mxu0 %v7073
      %v7133 = vpop.f32.mrb[0].mxu0
      %v7134 = vadd.f32 0.0, %v7133
      %v7135 = vpop.f32.mrb[0].mxu0
      %v7136 = vpop.f32.mrb[0].mxu0
      %v7137 = vadd.f32 0.0, %v7136
      %v7138 = vpop.f32.mrb[0].mxu0
      %7139 = vdwg.mxu0
      %v7140 = vadd.f32 %v7034, %v7110
      %v7141 = vadd.f32 %v7035, %v7113
      %v7142 = vadd.f32 %v7036, %v7118
      %v7143 = vadd.f32 %v7037, %v7121
      %v7144 = vadd.f32 %v7038, %v7126
      %v7145 = vadd.f32 %v7039, %v7129
      %v7146 = vadd.f32 %v7040, %v7134
      %v7147 = vadd.f32 %v7041, %v7137
      %v7148 = vld [vmem:[%s6935 + $0x2] sm:$0xff]
      %v7149 = vld [vmem:[%s6935 + $0x12] sm:$0xff]
      %v7150 = vld [vmem:[%s6935 + $0x22] sm:$0xff]
      %v7151 = vld [vmem:[%s6935 + $0x32] sm:$0xff]
      %v7152 = vld [vmem:[%s6935 + $0x42] sm:$0xff]
      %v7153 = vld [vmem:[%s6935 + $0x52] sm:$0xff]
      %v7154 = vld [vmem:[%s6935 + $0x62] sm:$0xff]
      %v7155 = vld [vmem:[%s6935 + $0x72] sm:$0xff]
      %v7156 = vpack.c.bf16 %v7149, %v7148
      %v7157 = vpack.c.bf16 %v7151, %v7150
      %v7158 = vpack.c.bf16 %v7153, %v7152
      %v7159 = vpack.c.bf16 %v7155, %v7154
      %s7160 = scalar_lea.vmem %s5, 64
      %v7161 = vld [vmem:[%s7160] sm:$0xf]
      %v7162 = vld [vmem:[%s7160 + $0x4] sm:$0xf]
      %v7165 = vunpack.c.l.b16 %v7161
      %v7166 = vunpack.c.l.b16 %v7162
      %v7167 = vpack.c.b16 %v7166, %v7165
      %v7170 = vsel %vm4969, %v7156, 0
      %v7173 = vsel %vm4969, %v7157, 0
      %v7176 = vsel %vm4969, %v7158, 0
      %v7179 = vsel %vm4969, %v7159, 0
      %7181 = vmatprep.subr.bf16.mxu0 0
      %7182 = vmatpush1.bf16.msra.mxu0 %v7167
      %7183 = vmatprep.subr.bf16.mxu0 0
      %7184 = vmatpush1.bf16.msra.mxu0 0
      %7185 = vmatprep.subr.bf16.mxu0 0
      %7186 = vmatpush1.bf16.msra.mxu0 0
      %7187 = vmatprep.subr.bf16.mxu0 0
      %7188 = vmatpush1.bf16.msra.mxu0 0
      %7189 = vmatprep.subr.bf16.mxu0 0
      %7190 = vmatpush1.bf16.msra.mxu0 0
      %7191 = vmatprep.subr.bf16.mxu0 0
      %7192 = vmatpush1.bf16.msra.mxu0 0
      %7193 = vmatprep.subr.bf16.mxu0 0
      %7194 = vmatpush1.bf16.msra.mxu0 0
      %7195 = vmatprep.subr.bf16.mxu0 0
      %7196 = vmatpush1.bf16.msra.mxu0 0
      %7197 = vmatprep.subr.bf16.mxu0 0
      %7198 = vmatpush1.bf16.msra.mxu0 0
      %7199 = vmatprep.subr.bf16.mxu0 0
      %7200 = vmatpush1.bf16.msra.mxu0 0
      %7201 = vmatprep.subr.bf16.mxu0 0
      %7202 = vmatpush1.bf16.msra.mxu0 0
      %7203 = vmatprep.subr.bf16.mxu0 0
      %7204 = vmatpush1.bf16.msra.mxu0 0
      %7205 = vmatprep.subr.bf16.mxu0 0
      %7206 = vmatpush1.bf16.msra.mxu0 0
      %7207 = vmatprep.subr.bf16.mxu0 0
      %7208 = vmatpush1.bf16.msra.mxu0 0
      %7209 = vmatprep.subr.bf16.mxu0 0
      %7210 = vmatpush1.bf16.msra.mxu0 0
      %7211 = vmatprep.subr.bf16.mxu0 0
      %7212 = vmatpush1.bf16.msra.mxu0 0
      %7213 = vmatprep.mubr.bf16.mxu0 0
      %7214 = vmatmul.mubr.bf16.gmra.mrb[0].mxu0 %v7170
      %v7215 = vpop.f32.mrb[0].mxu0
      %v7216 = vadd.f32 0.0, %v7215
      %v7217 = vpop.f32.mrb[0].mxu0
      %v7218 = vpop.f32.mrb[0].mxu0
      %v7219 = vadd.f32 0.0, %v7218
      %v7220 = vpop.f32.mrb[0].mxu0
      %7221 = vmatprep.mubr.bf16.mxu0 0
      %7222 = vmatmul.mubr.bf16.gmra.mrb[0].mxu0 %v7173
      %v7223 = vpop.f32.mrb[0].mxu0
      %v7224 = vadd.f32 0.0, %v7223
      %v7225 = vpop.f32.mrb[0].mxu0
      %v7226 = vpop.f32.mrb[0].mxu0
      %v7227 = vadd.f32 0.0, %v7226
      %v7228 = vpop.f32.mrb[0].mxu0
      %7229 = vmatprep.mubr.bf16.mxu0 0
      %7230 = vmatmul.mubr.bf16.gmra.mrb[0].mxu0 %v7176
      %v7231 = vpop.f32.mrb[0].mxu0
      %v7232 = vadd.f32 0.0, %v7231
      %v7233 = vpop.f32.mrb[0].mxu0
      %v7234 = vpop.f32.mrb[0].mxu0
      %v7235 = vadd.f32 0.0, %v7234
      %v7236 = vpop.f32.mrb[0].mxu0
      %7237 = vmatprep.mubr.bf16.mxu0 0
      %7238 = vmatmul.mubr.bf16.gmra.mrb[0].mxu0 %v7179
      %v7239 = vpop.f32.mrb[0].mxu0
      %v7240 = vadd.f32 0.0, %v7239
      %v7241 = vpop.f32.mrb[0].mxu0
      %v7242 = vpop.f32.mrb[0].mxu0
      %v7243 = vadd.f32 0.0, %v7242
      %v7244 = vpop.f32.mrb[0].mxu0
      %7245 = vdwg.mxu0
      %v7246 = vadd.f32 %v7140, %v7216
      %v7247 = vadd.f32 %v7141, %v7219
      %v7248 = vadd.f32 %v7142, %v7224
      %v7249 = vadd.f32 %v7143, %v7227
      %v7250 = vadd.f32 %v7144, %v7232
      %v7251 = vadd.f32 %v7145, %v7235
      %v7252 = vadd.f32 %v7146, %v7240
      %v7253 = vadd.f32 %v7147, %v7243
      %v7254 = vld [vmem:[%s6] sm:$0x1]
      %v7256 = vlaneseq
      %v7257 = vshrl.u32 %v7256, 7
      %v7258 = vsub.s32 0, %v7257
      %v7259 = vrot.slane %v7254, %v7258
      %v7261 = vadd.f32 %v7246, %v7259
      %v7262 = vadd.f32 %v7247, %v7259
      %v7263 = vadd.f32 %v7248, %v7259
      %v7264 = vadd.f32 %v7249, %v7259
      %v7265 = vadd.f32 %v7250, %v7259
      %v7266 = vadd.f32 %v7251, %v7259
      %v7267 = vadd.f32 %v7252, %v7259
      %v7268 = vadd.f32 %v7253, %v7259
      %v7269 = vmax.f32 %v7261, 0.0
      %v7270 = vmax.f32 %v7262, 0.0
      %v7271 = vmax.f32 %v7263, 0.0
      %v7272 = vmax.f32 %v7264, 0.0
      %v7273 = vmax.f32 %v7265, 0.0
      %v7274 = vmax.f32 %v7266, 0.0
      %v7275 = vmax.f32 %v7267, 0.0
      %v7276 = vmax.f32 %v7268, 0.0
      %v7285 = vcombine.high %v7269, %v7269
      %v7287 = vunpack.c.l.s4 1983009808
      %v7288 = vunpack.c.0.s8 %v7287
      %v7289 = vlaneseq
      %v7290 = vshrl.u32 %v7289, 7
      %v7291 = vsub.s32 %v7288, %v7290
      %v7292 = vrot.slane %v7269, %v7291
      %v7294 = vunpack.c.l.s4 1983009808
      %v7295 = vunpack.c.0.s8 %v7294
      %v7296 = vlaneseq
      %v7297 = vshrl.u32 %v7296, 7
      %v7298 = vsub.s32 %v7295, %v7297
      %v7299 = vrot.slane %v7285, %v7298
      %v7300 = vcombine.high %v7292, %v7292
      %v7301 = vcombine.high %v7299, %v7299
      %v7302 = vcombine.high %v7270, %v7270
      %v7304 = vunpack.c.l.s4 1983009808
      %v7305 = vunpack.c.0.s8 %v7304
      %v7306 = vlaneseq
      %v7307 = vshrl.u32 %v7306, 7
      %v7308 = vsub.s32 %v7305, %v7307
      %v7309 = vrot.slane %v7270, %v7308
      %v7311 = vunpack.c.l.s4 1983009808
      %v7312 = vunpack.c.0.s8 %v7311
      %v7313 = vlaneseq
      %v7314 = vshrl.u32 %v7313, 7
      %v7315 = vsub.s32 %v7312, %v7314
      %v7316 = vrot.slane %v7302, %v7315
      %v7317 = vcombine.high %v7309, %v7309
      %v7318 = vcombine.high %v7316, %v7316
      %v7319 = vcombine.high %v7271, %v7271
      %v7321 = vunpack.c.l.s4 1983009808
      %v7322 = vunpack.c.0.s8 %v7321
      %v7323 = vlaneseq
      %v7324 = vshrl.u32 %v7323, 7
      %v7325 = vsub.s32 %v7322, %v7324
      %v7326 = vrot.slane %v7271, %v7325
      %v7328 = vunpack.c.l.s4 1983009808
      %v7329 = vunpack.c.0.s8 %v7328
      %v7330 = vlaneseq
      %v7331 = vshrl.u32 %v7330, 7
      %v7332 = vsub.s32 %v7329, %v7331
      %v7333 = vrot.slane %v7319, %v7332
      %v7334 = vcombine.high %v7326, %v7326
      %v7335 = vcombine.high %v7333, %v7333
      %v7336 = vcombine.high %v7272, %v7272
      %v7338 = vunpack.c.l.s4 1983009808
      %v7339 = vunpack.c.0.s8 %v7338
      %v7340 = vlaneseq
      %v7341 = vshrl.u32 %v7340, 7
      %v7342 = vsub.s32 %v7339, %v7341
      %v7343 = vrot.slane %v7272, %v7342
      %v7345 = vunpack.c.l.s4 1983009808
      %v7346 = vunpack.c.0.s8 %v7345
      %v7347 = vlaneseq
      %v7348 = vshrl.u32 %v7347, 7
      %v7349 = vsub.s32 %v7346, %v7348
      %v7350 = vrot.slane %v7336, %v7349
      %v7351 = vcombine.high %v7343, %v7343
      %v7352 = vcombine.high %v7350, %v7350
      %v7353 = vcombine.high %v7273, %v7273
      %v7355 = vunpack.c.l.s4 1983009808
      %v7356 = vunpack.c.0.s8 %v7355
      %v7357 = vlaneseq
      %v7358 = vshrl.u32 %v7357, 7
      %v7359 = vsub.s32 %v7356, %v7358
      %v7360 = vrot.slane %v7273, %v7359
      %v7362 = vunpack.c.l.s4 1983009808
      %v7363 = vunpack.c.0.s8 %v7362
      %v7364 = vlaneseq
      %v7365 = vshrl.u32 %v7364, 7
      %v7366 = vsub.s32 %v7363, %v7365
      %v7367 = vrot.slane %v7353, %v7366
      %v7368 = vcombine.high %v7360, %v7360
      %v7369 = vcombine.high %v7367, %v7367
      %v7370 = vcombine.high %v7274, %v7274
      %v7372 = vunpack.c.l.s4 1983009808
      %v7373 = vunpack.c.0.s8 %v7372
      %v7374 = vlaneseq
      %v7375 = vshrl.u32 %v7374, 7
      %v7376 = vsub.s32 %v7373, %v7375
      %v7377 = vrot.slane %v7274, %v7376
      %v7379 = vunpack.c.l.s4 1983009808
      %v7380 = vunpack.c.0.s8 %v7379
      %v7381 = vlaneseq
      %v7382 = vshrl.u32 %v7381, 7
      %v7383 = vsub.s32 %v7380, %v7382
      %v7384 = vrot.slane %v7370, %v7383
      %v7385 = vcombine.high %v7377, %v7377
      %v7386 = vcombine.high %v7384, %v7384
      %v7387 = vcombine.high %v7275, %v7275
      %v7389 = vunpack.c.l.s4 1983009808
      %v7390 = vunpack.c.0.s8 %v7389
      %v7391 = vlaneseq
      %v7392 = vshrl.u32 %v7391, 7
      %v7393 = vsub.s32 %v7390, %v7392
      %v7394 = vrot.slane %v7275, %v7393
      %v7396 = vunpack.c.l.s4 1983009808
      %v7397 = vunpack.c.0.s8 %v7396
      %v7398 = vlaneseq
      %v7399 = vshrl.u32 %v7398, 7
      %v7400 = vsub.s32 %v7397, %v7399
      %v7401 = vrot.slane %v7387, %v7400
      %v7402 = vcombine.high %v7394, %v7394
      %v7403 = vcombine.high %v7401, %v7401
      %v7404 = vcombine.high %v7276, %v7276
      %v7406 = vunpack.c.l.s4 1983009808
      %v7407 = vunpack.c.0.s8 %v7406
      %v7408 = vlaneseq
      %v7409 = vshrl.u32 %v7408, 7
      %v7410 = vsub.s32 %v7407, %v7409
      %v7411 = vrot.slane %v7276, %v7410
      %v7413 = vunpack.c.l.s4 1983009808
      %v7414 = vunpack.c.0.s8 %v7413
      %v7415 = vlaneseq
      %v7416 = vshrl.u32 %v7415, 7
      %v7417 = vsub.s32 %v7414, %v7416
      %v7418 = vrot.slane %v7404, %v7417
      %v7419 = vcombine.high %v7411, %v7411
      %v7420 = vcombine.high %v7418, %v7418
      %vm7453 = vcmask 254976
      %v7454 = vsel %vm7453, %v7292, -inf
      %v7455 = vrot.slane %v7454, 4
      %v7456 = vmax.f32 %v7454, %v7455
      %v7457 = vrot.slane %v7456, 2
      %v7458 = vmax.f32 %v7456, %v7457
      %v7459 = vrot.slane %v7458, 1
      %v7460 = vmax.f32 %v7458, %v7459
      %v7461 = vsel %vm7453, %v7300, -inf
      %v7462 = vrot.slane %v7461, 4
      %v7463 = vmax.f32 %v7461, %v7462
      %v7464 = vrot.slane %v7463, 2
      %v7465 = vmax.f32 %v7463, %v7464
      %v7466 = vrot.slane %v7465, 1
      %v7467 = vmax.f32 %v7465, %v7466
      %v7468 = vsel %vm7453, %v7299, -inf
      %v7469 = vrot.slane %v7468, 4
      %v7470 = vmax.f32 %v7468, %v7469
      %v7471 = vrot.slane %v7470, 2
      %v7472 = vmax.f32 %v7470, %v7471
      %v7473 = vrot.slane %v7472, 1
      %v7474 = vmax.f32 %v7472, %v7473
      %v7475 = vsel %vm7453, %v7301, -inf
      %v7476 = vrot.slane %v7475, 4
      %v7477 = vmax.f32 %v7475, %v7476
      %v7478 = vrot.slane %v7477, 2
      %v7479 = vmax.f32 %v7477, %v7478
      %v7480 = vrot.slane %v7479, 1
      %v7481 = vmax.f32 %v7479, %v7480
      %v7482 = vsel %vm7453, %v7309, -inf
      %v7483 = vrot.slane %v7482, 4
      %v7484 = vmax.f32 %v7482, %v7483
      %v7485 = vrot.slane %v7484, 2
      %v7486 = vmax.f32 %v7484, %v7485
      %v7487 = vrot.slane %v7486, 1
      %v7488 = vmax.f32 %v7486, %v7487
      %v7489 = vsel %vm7453, %v7317, -inf
      %v7490 = vrot.slane %v7489, 4
      %v7491 = vmax.f32 %v7489, %v7490
      %v7492 = vrot.slane %v7491, 2
      %v7493 = vmax.f32 %v7491, %v7492
      %v7494 = vrot.slane %v7493, 1
      %v7495 = vmax.f32 %v7493, %v7494
      %v7496 = vsel %vm7453, %v7316, -inf
      %v7497 = vrot.slane %v7496, 4
      %v7498 = vmax.f32 %v7496, %v7497
      %v7499 = vrot.slane %v7498, 2
      %v7500 = vmax.f32 %v7498, %v7499
      %v7501 = vrot.slane %v7500, 1
      %v7502 = vmax.f32 %v7500, %v7501
      %v7503 = vsel %vm7453, %v7318, -inf
      %v7504 = vrot.slane %v7503, 4
      %v7505 = vmax.f32 %v7503, %v7504
      %v7506 = vrot.slane %v7505, 2
      %v7507 = vmax.f32 %v7505, %v7506
      %v7508 = vrot.slane %v7507, 1
      %v7509 = vmax.f32 %v7507, %v7508
      %v7510 = vsel %vm7453, %v7326, -inf
      %v7511 = vrot.slane %v7510, 4
      %v7512 = vmax.f32 %v7510, %v7511
      %v7513 = vrot.slane %v7512, 2
      %v7514 = vmax.f32 %v7512, %v7513
      %v7515 = vrot.slane %v7514, 1
      %v7516 = vmax.f32 %v7514, %v7515
      %v7517 = vsel %vm7453, %v7334, -inf
      %v7518 = vrot.slane %v7517, 4
      %v7519 = vmax.f32 %v7517, %v7518
      %v7520 = vrot.slane %v7519, 2
      %v7521 = vmax.f32 %v7519, %v7520
      %v7522 = vrot.slane %v7521, 1
      %v7523 = vmax.f32 %v7521, %v7522
      %v7524 = vsel %vm7453, %v7333, -inf
      %v7525 = vrot.slane %v7524, 4
      %v7526 = vmax.f32 %v7524, %v7525
      %v7527 = vrot.slane %v7526, 2
      %v7528 = vmax.f32 %v7526, %v7527
      %v7529 = vrot.slane %v7528, 1
      %v7530 = vmax.f32 %v7528, %v7529
      %v7531 = vsel %vm7453, %v7335, -inf
      %v7532 = vrot.slane %v7531, 4
      %v7533 = vmax.f32 %v7531, %v7532
      %v7534 = vrot.slane %v7533, 2
      %v7535 = vmax.f32 %v7533, %v7534
      %v7536 = vrot.slane %v7535, 1
      %v7537 = vmax.f32 %v7535, %v7536
      %v7538 = vsel %vm7453, %v7343, -inf
      %v7539 = vrot.slane %v7538, 4
      %v7540 = vmax.f32 %v7538, %v7539
      %v7541 = vrot.slane %v7540, 2
      %v7542 = vmax.f32 %v7540, %v7541
      %v7543 = vrot.slane %v7542, 1
      %v7544 = vmax.f32 %v7542, %v7543
      %v7545 = vsel %vm7453, %v7351, -inf
      %v7546 = vrot.slane %v7545, 4
      %v7547 = vmax.f32 %v7545, %v7546
      %v7548 = vrot.slane %v7547, 2
      %v7549 = vmax.f32 %v7547, %v7548
      %v7550 = vrot.slane %v7549, 1
      %v7551 = vmax.f32 %v7549, %v7550
      %v7552 = vsel %vm7453, %v7350, -inf
      %v7553 = vrot.slane %v7552, 4
      %v7554 = vmax.f32 %v7552, %v7553
      %v7555 = vrot.slane %v7554, 2
      %v7556 = vmax.f32 %v7554, %v7555
      %v7557 = vrot.slane %v7556, 1
      %v7558 = vmax.f32 %v7556, %v7557
      %v7559 = vsel %vm7453, %v7352, -inf
      %v7560 = vrot.slane %v7559, 4
      %v7561 = vmax.f32 %v7559, %v7560
      %v7562 = vrot.slane %v7561, 2
      %v7563 = vmax.f32 %v7561, %v7562
      %v7564 = vrot.slane %v7563, 1
      %v7565 = vmax.f32 %v7563, %v7564
      %v7566 = vsel %vm7453, %v7360, -inf
      %v7567 = vrot.slane %v7566, 4
      %v7568 = vmax.f32 %v7566, %v7567
      %v7569 = vrot.slane %v7568, 2
      %v7570 = vmax.f32 %v7568, %v7569
      %v7571 = vrot.slane %v7570, 1
      %v7572 = vmax.f32 %v7570, %v7571
      %v7573 = vsel %vm7453, %v7368, -inf
      %v7574 = vrot.slane %v7573, 4
      %v7575 = vmax.f32 %v7573, %v7574
      %v7576 = vrot.slane %v7575, 2
      %v7577 = vmax.f32 %v7575, %v7576
      %v7578 = vrot.slane %v7577, 1
      %v7579 = vmax.f32 %v7577, %v7578
      %v7580 = vsel %vm7453, %v7367, -inf
      %v7581 = vrot.slane %v7580, 4
      %v7582 = vmax.f32 %v7580, %v7581
      %v7583 = vrot.slane %v7582, 2
      %v7584 = vmax.f32 %v7582, %v7583
      %v7585 = vrot.slane %v7584, 1
      %v7586 = vmax.f32 %v7584, %v7585
      %v7587 = vsel %vm7453, %v7369, -inf
      %v7588 = vrot.slane %v7587, 4
      %v7589 = vmax.f32 %v7587, %v7588
      %v7590 = vrot.slane %v7589, 2
      %v7591 = vmax.f32 %v7589, %v7590
      %v7592 = vrot.slane %v7591, 1
      %v7593 = vmax.f32 %v7591, %v7592
      %v7594 = vsel %vm7453, %v7377, -inf
      %v7595 = vrot.slane %v7594, 4
      %v7596 = vmax.f32 %v7594, %v7595
      %v7597 = vrot.slane %v7596, 2
      %v7598 = vmax.f32 %v7596, %v7597
      %v7599 = vrot.slane %v7598, 1
      %v7600 = vmax.f32 %v7598, %v7599
      %v7601 = vsel %vm7453, %v7385, -inf
      %v7602 = vrot.slane %v7601, 4
      %v7603 = vmax.f32 %v7601, %v7602
      %v7604 = vrot.slane %v7603, 2
      %v7605 = vmax.f32 %v7603, %v7604
      %v7606 = vrot.slane %v7605, 1
      %v7607 = vmax.f32 %v7605, %v7606
      %v7608 = vsel %vm7453, %v7384, -inf
      %v7609 = vrot.slane %v7608, 4
      %v7610 = vmax.f32 %v7608, %v7609
      %v7611 = vrot.slane %v7610, 2
      %v7612 = vmax.f32 %v7610, %v7611
      %v7613 = vrot.slane %v7612, 1
      %v7614 = vmax.f32 %v7612, %v7613
      %v7615 = vsel %vm7453, %v7386, -inf
      %v7616 = vrot.slane %v7615, 4
      %v7617 = vmax.f32 %v7615, %v7616
      %v7618 = vrot.slane %v7617, 2
      %v7619 = vmax.f32 %v7617, %v7618
      %v7620 = vrot.slane %v7619, 1
      %v7621 = vmax.f32 %v7619, %v7620
      %v7622 = vsel %vm7453, %v7394, -inf
      %v7623 = vrot.slane %v7622, 4
      %v7624 = vmax.f32 %v7622, %v7623
      %v7625 = vrot.slane %v7624, 2
      %v7626 = vmax.f32 %v7624, %v7625
      %v7627 = vrot.slane %v7626, 1
      %v7628 = vmax.f32 %v7626, %v7627
      %v7629 = vsel %vm7453, %v7402, -inf
      %v7630 = vrot.slane %v7629, 4
      %v7631 = vmax.f32 %v7629, %v7630
      %v7632 = vrot.slane %v7631, 2
      %v7633 = vmax.f32 %v7631, %v7632
      %v7634 = vrot.slane %v7633, 1
      %v7635 = vmax.f32 %v7633, %v7634
      %v7636 = vsel %vm7453, %v7401, -inf
      %v7637 = vrot.slane %v7636, 4
      %v7638 = vmax.f32 %v7636, %v7637
      %v7639 = vrot.slane %v7638, 2
      %v7640 = vmax.f32 %v7638, %v7639
      %v7641 = vrot.slane %v7640, 1
      %v7642 = vmax.f32 %v7640, %v7641
      %v7643 = vsel %vm7453, %v7403, -inf
      %v7644 = vrot.slane %v7643, 4
      %v7645 = vmax.f32 %v7643, %v7644
      %v7646 = vrot.slane %v7645, 2
      %v7647 = vmax.f32 %v7645, %v7646
      %v7648 = vrot.slane %v7647, 1
      %v7649 = vmax.f32 %v7647, %v7648
      %v7650 = vsel %vm7453, %v7411, -inf
      %v7651 = vrot.slane %v7650, 4
      %v7652 = vmax.f32 %v7650, %v7651
      %v7653 = vrot.slane %v7652, 2
      %v7654 = vmax.f32 %v7652, %v7653
      %v7655 = vrot.slane %v7654, 1
      %v7656 = vmax.f32 %v7654, %v7655
      %v7657 = vsel %vm7453, %v7419, -inf
      %v7658 = vrot.slane %v7657, 4
      %v7659 = vmax.f32 %v7657, %v7658
      %v7660 = vrot.slane %v7659, 2
      %v7661 = vmax.f32 %v7659, %v7660
      %v7662 = vrot.slane %v7661, 1
      %v7663 = vmax.f32 %v7661, %v7662
      %v7664 = vsel %vm7453, %v7418, -inf
      %v7665 = vrot.slane %v7664, 4
      %v7666 = vmax.f32 %v7664, %v7665
      %v7667 = vrot.slane %v7666, 2
      %v7668 = vmax.f32 %v7666, %v7667
      %v7669 = vrot.slane %v7668, 1
      %v7670 = vmax.f32 %v7668, %v7669
      %v7671 = vsel %vm7453, %v7420, -inf
      %v7672 = vrot.slane %v7671, 4
      %v7673 = vmax.f32 %v7671, %v7672
      %v7674 = vrot.slane %v7673, 2
      %v7675 = vmax.f32 %v7673, %v7674
      %v7676 = vrot.slane %v7675, 1
      %v7677 = vmax.f32 %v7675, %v7676
      %vm7678 = vcmask 261120
      %v7679 = vsel %vm7678, %v7460, -inf
      %v7680 = vsel %vm7678, %v7488, -inf
      %v7681 = vmax.f32 %v7679, %v7680
      %v7682 = vsel %vm7678, %v7467, -inf
      %v7683 = vsel %vm7678, %v7495, -inf
      %v7684 = vmax.f32 %v7682, %v7683
      %v7685 = vsel %vm7678, %v7474, -inf
      %v7686 = vsel %vm7678, %v7502, -inf
      %v7687 = vmax.f32 %v7685, %v7686
      %v7688 = vsel %vm7678, %v7481, -inf
      %v7689 = vsel %vm7678, %v7509, -inf
      %v7690 = vmax.f32 %v7688, %v7689
      %v7691 = vsel %vm7678, %v7516, -inf
      %v7692 = vsel %vm7678, %v7544, -inf
      %v7693 = vmax.f32 %v7691, %v7692
      %v7694 = vsel %vm7678, %v7523, -inf
      %v7695 = vsel %vm7678, %v7551, -inf
      %v7696 = vmax.f32 %v7694, %v7695
      %v7697 = vsel %vm7678, %v7530, -inf
      %v7698 = vsel %vm7678, %v7558, -inf
      %v7699 = vmax.f32 %v7697, %v7698
      %v7700 = vsel %vm7678, %v7537, -inf
      %v7701 = vsel %vm7678, %v7565, -inf
      %v7702 = vmax.f32 %v7700, %v7701
      %v7703 = vsel %vm7678, %v7572, -inf
      %v7704 = vsel %vm7678, %v7600, -inf
      %v7705 = vmax.f32 %v7703, %v7704
      %v7706 = vsel %vm7678, %v7579, -inf
      %v7707 = vsel %vm7678, %v7607, -inf
      %v7708 = vmax.f32 %v7706, %v7707
      %v7709 = vsel %vm7678, %v7586, -inf
      %v7710 = vsel %vm7678, %v7614, -inf
      %v7711 = vmax.f32 %v7709, %v7710
      %v7712 = vsel %vm7678, %v7593, -inf
      %v7713 = vsel %vm7678, %v7621, -inf
      %v7714 = vmax.f32 %v7712, %v7713
      %v7715 = vsel %vm7678, %v7628, -inf
      %v7716 = vsel %vm7678, %v7656, -inf
      %v7717 = vmax.f32 %v7715, %v7716
      %v7718 = vsel %vm7678, %v7635, -inf
      %v7719 = vsel %vm7678, %v7663, -inf
      %v7720 = vmax.f32 %v7718, %v7719
      %v7721 = vsel %vm7678, %v7642, -inf
      %v7722 = vsel %vm7678, %v7670, -inf
      %v7723 = vmax.f32 %v7721, %v7722
      %v7724 = vsel %vm7678, %v7649, -inf
      %v7725 = vsel %vm7678, %v7677, -inf
      %v7726 = vmax.f32 %v7724, %v7725
      %vm7727 = vcmask 259072
      %7728 = vst.msk [vmem:[#allocation5] sm:$0x3f] %vm7727, 0.0
      %7729 = vst.msk [vmem:[#allocation5 + $0x8] sm:$0x3f] %vm7727, 0.0
      %7730 = vst.msk [vmem:[#allocation5 + $0x10] sm:$0x3f] %vm7727, 0.0
      %7731 = vst.msk [vmem:[#allocation5 + $0x18] sm:$0x3f] %vm7727, 0.0
      %7732 = vst.msk [vmem:[#allocation5 + $0x20] sm:$0x3f] %vm7727, 0.0
      %7733 = vst.msk [vmem:[#allocation5 + $0x28] sm:$0x3f] %vm7727, 0.0
      %v7750 = vsel %vm5246, %v7684, %v7681
      %v7751 = vsel %vm5248, %v7687, %v7750
      %v7752 = vsel %vm5250, %v7690, %v7751
      %v7753 = vsel %vm5246, %v7696, %v7693
      %v7754 = vsel %vm5248, %v7699, %v7753
      %v7755 = vsel %vm5250, %v7702, %v7754
      %v7756 = vsel %vm5246, %v7708, %v7705
      %v7757 = vsel %vm5248, %v7711, %v7756
      %v7758 = vsel %vm5250, %v7714, %v7757
      %v7759 = vsel %vm5246, %v7720, %v7717
      %v7760 = vsel %vm5248, %v7723, %v7759
      %v7761 = vsel %vm5250, %v7726, %v7760
      %s7766 = scalar_lea.vmem [#allocation5], 8
      %vm7767 = vcmask 257024
      %7768 = vst.msk [vmem:[%s7766 + $0x1] sm:$0xf] %vm7767, %v7752
      %7769 = vst.msk [vmem:[%s7766 + $0x9] sm:$0xf] %vm7767, %v7755
      %7770 = vst.msk [vmem:[%s7766 + $0x11] sm:$0xf] %vm7767, %v7758
      %7771 = vst.msk [vmem:[%s7766 + $0x19] sm:$0xf] %vm7767, %v7761
      %v7772 = vld [vmem:[#allocation5] sm:$0xf]
      %v7773 = vld [vmem:[#allocation5 + $0x8] sm:$0xf]
      %v7774 = vld [vmem:[#allocation5 + $0x10] sm:$0xf]
      %v7775 = vld [vmem:[#allocation5 + $0x18] sm:$0xf]
      %v7780 = vcombine.low %v7772, %v7773
      %v7781 = vcombine.low %v7774, %v7775
      %v7784 = vpack.c.bf16 %v7781, %v7780
      %v7785 = vld [vmem:[%s7] sm:$0xf]
      %v7786 = vld [vmem:[%s7 + $0x4] sm:$0xf]
      %v7787 = vld [vmem:[%s7 + $0x8] sm:$0xf]
      %v7788 = vld [vmem:[%s7 + $0xc] sm:$0xf]
      %v7789 = vld [vmem:[#allocation5 + $0x1] sm:$0xf]
      %v7790 = vld [vmem:[#allocation5 + $0x9] sm:$0xf]
      %v7791 = vld [vmem:[#allocation5 + $0x11] sm:$0xf]
      %v7792 = vld [vmem:[#allocation5 + $0x19] sm:$0xf]
      %v7797 = vcombine.low %v7789, %v7790
      %v7798 = vcombine.low %v7791, %v7792
      %v7801 = vpack.c.bf16 %v7798, %v7797
      %s7802 = scalar_lea.vmem %s7, 16
      %v7803 = vld [vmem:[%s7802] sm:$0xf]
      %v7804 = vld [vmem:[%s7802 + $0x4] sm:$0xf]
      %v7805 = vld [vmem:[%s7802 + $0x8] sm:$0xf]
      %v7806 = vld [vmem:[%s7802 + $0xc] sm:$0xf]
      %v7811 = vunpack.c.l.b16 %v7803
      %v7812 = vunpack.c.l.b16 %v7804
      %v7813 = vunpack.c.l.b16 %v7805
      %v7814 = vunpack.c.l.b16 %v7806
      %v7815 = vpack.c.b16 %v7812, %v7811
      %v7816 = vpack.c.b16 %v7814, %v7813
      %v7820 = vsel %vm7678, %v7801, 0
      %7822 = vmatprep.subr.bf16.mxu0 0
      %7823 = vmatpush1.bf16.msra.mxu0 %v7815
      %7824 = vmatprep.subr.bf16.mxu0 0
      %7825 = vmatpush1.bf16.msra.mxu0 %v7816
      %7826 = vmatprep.subr.bf16.mxu0 0
      %7827 = vmatpush1.bf16.msra.mxu0 0
      %7828 = vmatprep.subr.bf16.mxu0 0
      %7829 = vmatpush1.bf16.msra.mxu0 0
      %7830 = vmatprep.subr.bf16.mxu0 0
      %7831 = vmatpush1.bf16.msra.mxu0 0
      %7832 = vmatprep.subr.bf16.mxu0 0
      %7833 = vmatpush1.bf16.msra.mxu0 0
      %7834 = vmatprep.subr.bf16.mxu0 0
      %7835 = vmatpush1.bf16.msra.mxu0 0
      %7836 = vmatprep.subr.bf16.mxu0 0
      %7837 = vmatpush1.bf16.msra.mxu0 0
      %7838 = vmatprep.subr.bf16.mxu0 0
      %7839 = vmatpush1.bf16.msra.mxu0 0
      %7840 = vmatprep.subr.bf16.mxu0 0
      %7841 = vmatpush1.bf16.msra.mxu0 0
      %7842 = vmatprep.subr.bf16.mxu0 0
      %7843 = vmatpush1.bf16.msra.mxu0 0
      %7844 = vmatprep.subr.bf16.mxu0 0
      %7845 = vmatpush1.bf16.msra.mxu0 0
      %7846 = vmatprep.subr.bf16.mxu0 0
      %7847 = vmatpush1.bf16.msra.mxu0 0
      %7848 = vmatprep.subr.bf16.mxu0 0
      %7849 = vmatpush1.bf16.msra.mxu0 0
      %7850 = vmatprep.subr.bf16.mxu0 0
      %7851 = vmatpush1.bf16.msra.mxu0 0
      %7852 = vmatprep.subr.bf16.mxu0 0
      %7853 = vmatpush1.bf16.msra.mxu0 0
      %7854 = vmatprep.mubr.bf16.mxu0 0
      %7855 = vmatmul.mubr.bf16.gmra.mrb[0].mxu0 %v7820
      %v7856 = vpop.f32.mrb[0].mxu0
      %v7857 = vadd.f32 0.0, %v7856
      %v7858 = vpop.f32.mrb[0].mxu0
      %v7859 = vpop.f32.mrb[0].mxu0
      %v7860 = vadd.f32 0.0, %v7859
      %v7861 = vpop.f32.mrb[0].mxu0
      %7862 = vdwg.mxu0
      %v7867 = vunpack.c.l.b16 %v7785
      %v7868 = vunpack.c.l.b16 %v7786
      %v7869 = vunpack.c.l.b16 %v7787
      %v7870 = vunpack.c.l.b16 %v7788
      %v7871 = vpack.c.b16 %v7868, %v7867
      %v7872 = vpack.c.b16 %v7870, %v7869
      %v7876 = vsel %vm7678, %v7784, 0
      %7878 = vmatprep.subr.bf16.mxu0 0
      %7879 = vmatpush1.bf16.msra.mxu0 %v7871
      %7880 = vmatprep.subr.bf16.mxu0 0
      %7881 = vmatpush1.bf16.msra.mxu0 %v7872
      %7882 = vmatprep.subr.bf16.mxu0 0
      %7883 = vmatpush1.bf16.msra.mxu0 0
      %7884 = vmatprep.subr.bf16.mxu0 0
      %7885 = vmatpush1.bf16.msra.mxu0 0
      %7886 = vmatprep.subr.bf16.mxu0 0
      %7887 = vmatpush1.bf16.msra.mxu0 0
      %7888 = vmatprep.subr.bf16.mxu0 0
      %7889 = vmatpush1.bf16.msra.mxu0 0
      %7890 = vmatprep.subr.bf16.mxu0 0
      %7891 = vmatpush1.bf16.msra.mxu0 0
      %7892 = vmatprep.subr.bf16.mxu0 0
      %7893 = vmatpush1.bf16.msra.mxu0 0
      %7894 = vmatprep.subr.bf16.mxu0 0
      %7895 = vmatpush1.bf16.msra.mxu0 0
      %7896 = vmatprep.subr.bf16.mxu0 0
      %7897 = vmatpush1.bf16.msra.mxu0 0
      %7898 = vmatprep.subr.bf16.mxu0 0
      %7899 = vmatpush1.bf16.msra.mxu0 0
      %7900 = vmatprep.subr.bf16.mxu0 0
      %7901 = vmatpush1.bf16.msra.mxu0 0
      %7902 = vmatprep.subr.bf16.mxu0 0
      %7903 = vmatpush1.bf16.msra.mxu0 0
      %7904 = vmatprep.subr.bf16.mxu0 0
      %7905 = vmatpush1.bf16.msra.mxu0 0
      %7906 = vmatprep.subr.bf16.mxu0 0
      %7907 = vmatpush1.bf16.msra.mxu0 0
      %7908 = vmatprep.subr.bf16.mxu0 0
      %7909 = vmatpush1.bf16.msra.mxu0 0
      %7910 = vmatprep.mubr.bf16.mxu0 0
      %7911 = vmatmul.mubr.bf16.gmra.mrb[0].mxu0 %v7876
      %v7912 = vpop.f32.mrb[0].mxu0
      %v7913 = vadd.f32 %v7857, %v7912
      %v7914 = vpop.f32.mrb[0].mxu0
      %v7915 = vpop.f32.mrb[0].mxu0
      %v7916 = vadd.f32 %v7860, %v7915
      %v7917 = vpop.f32.mrb[0].mxu0
      %7918 = vdwg.mxu0
      %v7919 = vld [vmem:[#allocation5 + $0x2] sm:$0xf]
      %v7920 = vld [vmem:[#allocation5 + $0xa] sm:$0xf]
      %v7921 = vld [vmem:[#allocation5 + $0x12] sm:$0xf]
      %v7922 = vld [vmem:[#allocation5 + $0x1a] sm:$0xf]
      %v7927 = vcombine.low %v7919, %v7920
      %v7928 = vcombine.low %v7921, %v7922
      %v7931 = vpack.c.bf16 %v7928, %v7927
      %s7932 = scalar_lea.vmem %s7, 32
      %v7933 = vld [vmem:[%s7932] sm:$0xf]
      %v7934 = vld [vmem:[%s7932 + $0x4] sm:$0xf]
      %v7935 = vld [vmem:[%s7932 + $0x8] sm:$0xf]
      %v7936 = vld [vmem:[%s7932 + $0xc] sm:$0xf]
      %v7941 = vunpack.c.l.b16 %v7933
      %v7942 = vunpack.c.l.b16 %v7934
      %v7943 = vunpack.c.l.b16 %v7935
      %v7944 = vunpack.c.l.b16 %v7936
      %v7945 = vpack.c.b16 %v7942, %v7941
      %v7946 = vpack.c.b16 %v7944, %v7943
      %v7950 = vsel %vm7678, %v7931, 0
      %7952 = vmatprep.subr.bf16.mxu0 0
      %7953 = vmatpush1.bf16.msra.mxu0 %v7945
      %7954 = vmatprep.subr.bf16.mxu0 0
      %7955 = vmatpush1.bf16.msra.mxu0 %v7946
      %7956 = vmatprep.subr.bf16.mxu0 0
      %7957 = vmatpush1.bf16.msra.mxu0 0
      %7958 = vmatprep.subr.bf16.mxu0 0
      %7959 = vmatpush1.bf16.msra.mxu0 0
      %7960 = vmatprep.subr.bf16.mxu0 0
      %7961 = vmatpush1.bf16.msra.mxu0 0
      %7962 = vmatprep.subr.bf16.mxu0 0
      %7963 = vmatpush1.bf16.msra.mxu0 0
      %7964 = vmatprep.subr.bf16.mxu0 0
      %7965 = vmatpush1.bf16.msra.mxu0 0
      %7966 = vmatprep.subr.bf16.mxu0 0
      %7967 = vmatpush1.bf16.msra.mxu0 0
      %7968 = vmatprep.subr.bf16.mxu0 0
      %7969 = vmatpush1.bf16.msra.mxu0 0
      %7970 = vmatprep.subr.bf16.mxu0 0
      %7971 = vmatpush1.bf16.msra.mxu0 0
      %7972 = vmatprep.subr.bf16.mxu0 0
      %7973 = vmatpush1.bf16.msra.mxu0 0
      %7974 = vmatprep.subr.bf16.mxu0 0
      %7975 = vmatpush1.bf16.msra.mxu0 0
      %7976 = vmatprep.subr.bf16.mxu0 0
      %7977 = vmatpush1.bf16.msra.mxu0 0
      %7978 = vmatprep.subr.bf16.mxu0 0
      %7979 = vmatpush1.bf16.msra.mxu0 0
      %7980 = vmatprep.subr.bf16.mxu0 0
      %7981 = vmatpush1.bf16.msra.mxu0 0
      %7982 = vmatprep.subr.bf16.mxu0 0
      %7983 = vmatpush1.bf16.msra.mxu0 0
      %7984 = vmatprep.mubr.bf16.mxu0 0
      %7985 = vmatmul.mubr.bf16.gmra.mrb[0].mxu0 %v7950
      %v7986 = vpop.f32.mrb[0].mxu0
      %v7987 = vadd.f32 0.0, %v7986
      %v7988 = vpop.f32.mrb[0].mxu0
      %v7989 = vpop.f32.mrb[0].mxu0
      %v7990 = vadd.f32 0.0, %v7989
      %v7991 = vpop.f32.mrb[0].mxu0
      %7992 = vdwg.mxu0
      %v7993 = vadd.f32 %v7913, %v7987
      %v7994 = vadd.f32 %v7916, %v7990
      %v7995 = vld [vmem:[%s7766] sm:$0xf]
      %v7996 = vld [vmem:[%s7766 + $0x8] sm:$0xf]
      %v7997 = vld [vmem:[%s7766 + $0x10] sm:$0xf]
      %v7998 = vld [vmem:[%s7766 + $0x18] sm:$0xf]
      %v8003 = vcombine.low %v7995, %v7996
      %v8004 = vcombine.low %v7997, %v7998
      %v8007 = vpack.c.bf16 %v8004, %v8003
      %s8008 = scalar_lea.vmem %s7, 48
      %v8009 = vld [vmem:[%s8008] sm:$0xf]
      %v8010 = vld [vmem:[%s8008 + $0x4] sm:$0xf]
      %v8011 = vld [vmem:[%s8008 + $0x8] sm:$0xf]
      %v8012 = vld [vmem:[%s8008 + $0xc] sm:$0xf]
      %v8017 = vunpack.c.l.b16 %v8009
      %v8018 = vunpack.c.l.b16 %v8010
      %v8019 = vunpack.c.l.b16 %v8011
      %v8020 = vunpack.c.l.b16 %v8012
      %v8021 = vpack.c.b16 %v8018, %v8017
      %v8022 = vpack.c.b16 %v8020, %v8019
      %v8026 = vsel %vm7678, %v8007, 0
      %8028 = vmatprep.subr.bf16.mxu0 0
      %8029 = vmatpush1.bf16.msra.mxu0 %v8021
      %8030 = vmatprep.subr.bf16.mxu0 0
      %8031 = vmatpush1.bf16.msra.mxu0 %v8022
      %8032 = vmatprep.subr.bf16.mxu0 0
      %8033 = vmatpush1.bf16.msra.mxu0 0
      %8034 = vmatprep.subr.bf16.mxu0 0
      %8035 = vmatpush1.bf16.msra.mxu0 0
      %8036 = vmatprep.subr.bf16.mxu0 0
      %8037 = vmatpush1.bf16.msra.mxu0 0
      %8038 = vmatprep.subr.bf16.mxu0 0
      %8039 = vmatpush1.bf16.msra.mxu0 0
      %8040 = vmatprep.subr.bf16.mxu0 0
      %8041 = vmatpush1.bf16.msra.mxu0 0
      %8042 = vmatprep.subr.bf16.mxu0 0
      %8043 = vmatpush1.bf16.msra.mxu0 0
      %8044 = vmatprep.subr.bf16.mxu0 0
      %8045 = vmatpush1.bf16.msra.mxu0 0
      %8046 = vmatprep.subr.bf16.mxu0 0
      %8047 = vmatpush1.bf16.msra.mxu0 0
      %8048 = vmatprep.subr.bf16.mxu0 0
      %8049 = vmatpush1.bf16.msra.mxu0 0
      %8050 = vmatprep.subr.bf16.mxu0 0
      %8051 = vmatpush1.bf16.msra.mxu0 0
      %8052 = vmatprep.subr.bf16.mxu0 0
      %8053 = vmatpush1.bf16.msra.mxu0 0
      %8054 = vmatprep.subr.bf16.mxu0 0
      %8055 = vmatpush1.bf16.msra.mxu0 0
      %8056 = vmatprep.subr.bf16.mxu0 0
      %8057 = vmatpush1.bf16.msra.mxu0 0
      %8058 = vmatprep.subr.bf16.mxu0 0
      %8059 = vmatpush1.bf16.msra.mxu0 0
      %8060 = vmatprep.mubr.bf16.mxu0 0
      %8061 = vmatmul.mubr.bf16.gmra.mrb[0].mxu0 %v8026
      %v8062 = vpop.f32.mrb[0].mxu0
      %v8063 = vadd.f32 0.0, %v8062
      %v8064 = vpop.f32.mrb[0].mxu0
      %v8065 = vpop.f32.mrb[0].mxu0
      %v8066 = vadd.f32 0.0, %v8065
      %v8067 = vpop.f32.mrb[0].mxu0
      %8068 = vdwg.mxu0
      %v8069 = vadd.f32 %v7993, %v8063
      %v8070 = vadd.f32 %v7994, %v8066
      %v8071 = vld [vmem:[%s7766 + $0x1] sm:$0xf]
      %v8072 = vld [vmem:[%s7766 + $0x9] sm:$0xf]
      %v8073 = vld [vmem:[%s7766 + $0x11] sm:$0xf]
      %v8074 = vld [vmem:[%s7766 + $0x19] sm:$0xf]
      %v8079 = vcombine.low %v8071, %v8072
      %v8080 = vcombine.low %v8073, %v8074
      %v8083 = vpack.c.bf16 %v8080, %v8079
      %s8084 = scalar_lea.vmem %s7, 64
      %v8085 = vld [vmem:[%s8084] sm:$0xf]
      %v8086 = vld [vmem:[%s8084 + $0x4] sm:$0xf]
      %v8087 = vld [vmem:[%s8084 + $0x8] sm:$0xf]
      %v8088 = vld [vmem:[%s8084 + $0xc] sm:$0xf]
      %v8093 = vunpack.c.l.b16 %v8085
      %v8094 = vunpack.c.l.b16 %v8086
      %v8095 = vunpack.c.l.b16 %v8087
      %v8096 = vunpack.c.l.b16 %v8088
      %v8097 = vpack.c.b16 %v8094, %v8093
      %v8098 = vpack.c.b16 %v8096, %v8095
      %v8102 = vsel %vm7678, %v8083, 0
      %8104 = vmatprep.subr.bf16.mxu0 0
      %8105 = vmatpush1.bf16.msra.mxu0 %v8097
      %8106 = vmatprep.subr.bf16.mxu0 0
      %8107 = vmatpush1.bf16.msra.mxu0 %v8098
      %8108 = vmatprep.subr.bf16.mxu0 0
      %8109 = vmatpush1.bf16.msra.mxu0 0
      %8110 = vmatprep.subr.bf16.mxu0 0
      %8111 = vmatpush1.bf16.msra.mxu0 0
      %8112 = vmatprep.subr.bf16.mxu0 0
      %8113 = vmatpush1.bf16.msra.mxu0 0
      %8114 = vmatprep.subr.bf16.mxu0 0
      %8115 = vmatpush1.bf16.msra.mxu0 0
      %8116 = vmatprep.subr.bf16.mxu0 0
      %8117 = vmatpush1.bf16.msra.mxu0 0
      %8118 = vmatprep.subr.bf16.mxu0 0
      %8119 = vmatpush1.bf16.msra.mxu0 0
      %8120 = vmatprep.subr.bf16.mxu0 0
      %8121 = vmatpush1.bf16.msra.mxu0 0
      %8122 = vmatprep.subr.bf16.mxu0 0
      %8123 = vmatpush1.bf16.msra.mxu0 0
      %8124 = vmatprep.subr.bf16.mxu0 0
      %8125 = vmatpush1.bf16.msra.mxu0 0
      %8126 = vmatprep.subr.bf16.mxu0 0
      %8127 = vmatpush1.bf16.msra.mxu0 0
      %8128 = vmatprep.subr.bf16.mxu0 0
      %8129 = vmatpush1.bf16.msra.mxu0 0
      %8130 = vmatprep.subr.bf16.mxu0 0
      %8131 = vmatpush1.bf16.msra.mxu0 0
      %8132 = vmatprep.subr.bf16.mxu0 0
      %8133 = vmatpush1.bf16.msra.mxu0 0
      %8134 = vmatprep.subr.bf16.mxu0 0
      %8135 = vmatpush1.bf16.msra.mxu0 0
      %8136 = vmatprep.mubr.bf16.mxu0 0
      %8137 = vmatmul.mubr.bf16.gmra.mrb[0].mxu0 %v8102
      %v8138 = vpop.f32.mrb[0].mxu0
      %v8139 = vadd.f32 0.0, %v8138
      %v8140 = vpop.f32.mrb[0].mxu0
      %v8141 = vpop.f32.mrb[0].mxu0
      %v8142 = vadd.f32 0.0, %v8141
      %v8143 = vpop.f32.mrb[0].mxu0
      %8144 = vdwg.mxu0
      %v8145 = vadd.f32 %v8069, %v8139
      %v8146 = vadd.f32 %v8070, %v8142
      %v8147 = vld [vmem:[%s7766 + $0x2] sm:$0xf]
      %v8148 = vld [vmem:[%s7766 + $0xa] sm:$0xf]
      %v8149 = vld [vmem:[%s7766 + $0x12] sm:$0xf]
      %v8150 = vld [vmem:[%s7766 + $0x1a] sm:$0xf]
      %v8155 = vcombine.low %v8147, %v8148
      %v8156 = vcombine.low %v8149, %v8150
      %v8159 = vpack.c.bf16 %v8156, %v8155
      %s8160 = scalar_lea.vmem %s7, 80
      %v8161 = vld [vmem:[%s8160] sm:$0xf]
      %v8162 = vld [vmem:[%s8160 + $0x4] sm:$0xf]
      %v8163 = vld [vmem:[%s8160 + $0x8] sm:$0xf]
      %v8164 = vld [vmem:[%s8160 + $0xc] sm:$0xf]
      %v8169 = vunpack.c.l.b16 %v8161
      %v8170 = vunpack.c.l.b16 %v8162
      %v8171 = vunpack.c.l.b16 %v8163
      %v8172 = vunpack.c.l.b16 %v8164
      %v8173 = vpack.c.b16 %v8170, %v8169
      %v8174 = vpack.c.b16 %v8172, %v8171
      %v8178 = vsel %vm7678, %v8159, 0
      %8180 = vmatprep.subr.bf16.mxu0 0
      %8181 = vmatpush1.bf16.msra.mxu0 %v8173
      %8182 = vmatprep.subr.bf16.mxu0 0
      %8183 = vmatpush1.bf16.msra.mxu0 %v8174
      %8184 = vmatprep.subr.bf16.mxu0 0
      %8185 = vmatpush1.bf16.msra.mxu0 0
      %8186 = vmatprep.subr.bf16.mxu0 0
      %8187 = vmatpush1.bf16.msra.mxu0 0
      %8188 = vmatprep.subr.bf16.mxu0 0
      %8189 = vmatpush1.bf16.msra.mxu0 0
      %8190 = vmatprep.subr.bf16.mxu0 0
      %8191 = vmatpush1.bf16.msra.mxu0 0
      %8192 = vmatprep.subr.bf16.mxu0 0
      %8193 = vmatpush1.bf16.msra.mxu0 0
      %8194 = vmatprep.subr.bf16.mxu0 0
      %8195 = vmatpush1.bf16.msra.mxu0 0
      %8196 = vmatprep.subr.bf16.mxu0 0
      %8197 = vmatpush1.bf16.msra.mxu0 0
      %8198 = vmatprep.subr.bf16.mxu0 0
      %8199 = vmatpush1.bf16.msra.mxu0 0
      %8200 = vmatprep.subr.bf16.mxu0 0
      %8201 = vmatpush1.bf16.msra.mxu0 0
      %8202 = vmatprep.subr.bf16.mxu0 0
      %8203 = vmatpush1.bf16.msra.mxu0 0
      %8204 = vmatprep.subr.bf16.mxu0 0
      %8205 = vmatpush1.bf16.msra.mxu0 0
      %8206 = vmatprep.subr.bf16.mxu0 0
      %8207 = vmatpush1.bf16.msra.mxu0 0
      %8208 = vmatprep.subr.bf16.mxu0 0
      %8209 = vmatpush1.bf16.msra.mxu0 0
      %8210 = vmatprep.subr.bf16.mxu0 0
      %8211 = vmatpush1.bf16.msra.mxu0 0
      %8212 = vmatprep.mubr.bf16.mxu0 0
      %8213 = vmatmul.mubr.bf16.gmra.mrb[0].mxu0 %v8178
      %v8214 = vpop.f32.mrb[0].mxu0
      %v8215 = vadd.f32 0.0, %v8214
      %v8216 = vpop.f32.mrb[0].mxu0
      %v8217 = vpop.f32.mrb[0].mxu0
      %v8218 = vadd.f32 0.0, %v8217
      %v8219 = vpop.f32.mrb[0].mxu0
      %8220 = vdwg.mxu0
      %v8221 = vadd.f32 %v8145, %v8215
      %v8222 = vadd.f32 %v8146, %v8218
      %s8223 = scalar_lea.vmem [#allocation5], 16
      %v8224 = vld [vmem:[%s8223] sm:$0xf]
      %v8225 = vld [vmem:[%s8223 + $0x8] sm:$0xf]
      %v8226 = vld [vmem:[%s8223 + $0x10] sm:$0xf]
      %v8227 = vld [vmem:[%s8223 + $0x18] sm:$0xf]
      %v8232 = vcombine.low %v8224, %v8225
      %v8233 = vcombine.low %v8226, %v8227
      %v8236 = vpack.c.bf16 %v8233, %v8232
      %s8237 = scalar_lea.vmem %s7, 96
      %v8238 = vld [vmem:[%s8237] sm:$0xf]
      %v8239 = vld [vmem:[%s8237 + $0x4] sm:$0xf]
      %v8240 = vld [vmem:[%s8237 + $0x8] sm:$0xf]
      %v8241 = vld [vmem:[%s8237 + $0xc] sm:$0xf]
      %v8246 = vunpack.c.l.b16 %v8238
      %v8247 = vunpack.c.l.b16 %v8239
      %v8248 = vunpack.c.l.b16 %v8240
      %v8249 = vunpack.c.l.b16 %v8241
      %v8250 = vpack.c.b16 %v8247, %v8246
      %v8251 = vpack.c.b16 %v8249, %v8248
      %v8255 = vsel %vm7678, %v8236, 0
      %8257 = vmatprep.subr.bf16.mxu0 0
      %8258 = vmatpush1.bf16.msra.mxu0 %v8250
      %8259 = vmatprep.subr.bf16.mxu0 0
      %8260 = vmatpush1.bf16.msra.mxu0 %v8251
      %8261 = vmatprep.subr.bf16.mxu0 0
      %8262 = vmatpush1.bf16.msra.mxu0 0
      %8263 = vmatprep.subr.bf16.mxu0 0
      %8264 = vmatpush1.bf16.msra.mxu0 0
      %8265 = vmatprep.subr.bf16.mxu0 0
      %8266 = vmatpush1.bf16.msra.mxu0 0
      %8267 = vmatprep.subr.bf16.mxu0 0
      %8268 = vmatpush1.bf16.msra.mxu0 0
      %8269 = vmatprep.subr.bf16.mxu0 0
      %8270 = vmatpush1.bf16.msra.mxu0 0
      %8271 = vmatprep.subr.bf16.mxu0 0
      %8272 = vmatpush1.bf16.msra.mxu0 0
      %8273 = vmatprep.subr.bf16.mxu0 0
      %8274 = vmatpush1.bf16.msra.mxu0 0
      %8275 = vmatprep.subr.bf16.mxu0 0
      %8276 = vmatpush1.bf16.msra.mxu0 0
      %8277 = vmatprep.subr.bf16.mxu0 0
      %8278 = vmatpush1.bf16.msra.mxu0 0
      %8279 = vmatprep.subr.bf16.mxu0 0
      %8280 = vmatpush1.bf16.msra.mxu0 0
      %8281 = vmatprep.subr.bf16.mxu0 0
      %8282 = vmatpush1.bf16.msra.mxu0 0
      %8283 = vmatprep.subr.bf16.mxu0 0
      %8284 = vmatpush1.bf16.msra.mxu0 0
      %8285 = vmatprep.subr.bf16.mxu0 0
      %8286 = vmatpush1.bf16.msra.mxu0 0
      %8287 = vmatprep.subr.bf16.mxu0 0
      %8288 = vmatpush1.bf16.msra.mxu0 0
      %8289 = vmatprep.mubr.bf16.mxu0 0
      %8290 = vmatmul.mubr.bf16.gmra.mrb[0].mxu0 %v8255
      %v8291 = vpop.f32.mrb[0].mxu0
      %v8292 = vadd.f32 0.0, %v8291
      %v8293 = vpop.f32.mrb[0].mxu0
      %v8294 = vpop.f32.mrb[0].mxu0
      %v8295 = vadd.f32 0.0, %v8294
      %v8296 = vpop.f32.mrb[0].mxu0
      %8297 = vdwg.mxu0
      %v8298 = vadd.f32 %v8221, %v8292
      %v8299 = vadd.f32 %v8222, %v8295
      %v8300 = vld [vmem:[%s8223 + $0x1] sm:$0xf]
      %v8301 = vld [vmem:[%s8223 + $0x9] sm:$0xf]
      %v8302 = vld [vmem:[%s8223 + $0x11] sm:$0xf]
      %v8303 = vld [vmem:[%s8223 + $0x19] sm:$0xf]
      %v8308 = vcombine.low %v8300, %v8301
      %v8309 = vcombine.low %v8302, %v8303
      %v8312 = vpack.c.bf16 %v8309, %v8308
      %s8313 = scalar_lea.vmem %s7, 112
      %v8314 = vld [vmem:[%s8313] sm:$0xf]
      %v8315 = vld [vmem:[%s8313 + $0x4] sm:$0xf]
      %v8316 = vld [vmem:[%s8313 + $0x8] sm:$0xf]
      %v8317 = vld [vmem:[%s8313 + $0xc] sm:$0xf]
      %v8322 = vunpack.c.l.b16 %v8314
      %v8323 = vunpack.c.l.b16 %v8315
      %v8324 = vunpack.c.l.b16 %v8316
      %v8325 = vunpack.c.l.b16 %v8317
      %v8326 = vpack.c.b16 %v8323, %v8322
      %v8327 = vpack.c.b16 %v8325, %v8324
      %v8331 = vsel %vm7678, %v8312, 0
      %8333 = vmatprep.subr.bf16.mxu0 0
      %8334 = vmatpush1.bf16.msra.mxu0 %v8326
      %8335 = vmatprep.subr.bf16.mxu0 0
      %8336 = vmatpush1.bf16.msra.mxu0 %v8327
      %8337 = vmatprep.subr.bf16.mxu0 0
      %8338 = vmatpush1.bf16.msra.mxu0 0
      %8339 = vmatprep.subr.bf16.mxu0 0
      %8340 = vmatpush1.bf16.msra.mxu0 0
      %8341 = vmatprep.subr.bf16.mxu0 0
      %8342 = vmatpush1.bf16.msra.mxu0 0
      %8343 = vmatprep.subr.bf16.mxu0 0
      %8344 = vmatpush1.bf16.msra.mxu0 0
      %8345 = vmatprep.subr.bf16.mxu0 0
      %8346 = vmatpush1.bf16.msra.mxu0 0
      %8347 = vmatprep.subr.bf16.mxu0 0
      %8348 = vmatpush1.bf16.msra.mxu0 0
      %8349 = vmatprep.subr.bf16.mxu0 0
      %8350 = vmatpush1.bf16.msra.mxu0 0
      %8351 = vmatprep.subr.bf16.mxu0 0
      %8352 = vmatpush1.bf16.msra.mxu0 0
      %8353 = vmatprep.subr.bf16.mxu0 0
      %8354 = vmatpush1.bf16.msra.mxu0 0
      %8355 = vmatprep.subr.bf16.mxu0 0
      %8356 = vmatpush1.bf16.msra.mxu0 0
      %8357 = vmatprep.subr.bf16.mxu0 0
      %8358 = vmatpush1.bf16.msra.mxu0 0
      %8359 = vmatprep.subr.bf16.mxu0 0
      %8360 = vmatpush1.bf16.msra.mxu0 0
      %8361 = vmatprep.subr.bf16.mxu0 0
      %8362 = vmatpush1.bf16.msra.mxu0 0
      %8363 = vmatprep.subr.bf16.mxu0 0
      %8364 = vmatpush1.bf16.msra.mxu0 0
      %8365 = vmatprep.mubr.bf16.mxu0 0
      %8366 = vmatmul.mubr.bf16.gmra.mrb[0].mxu0 %v8331
      %v8367 = vpop.f32.mrb[0].mxu0
      %v8368 = vadd.f32 0.0, %v8367
      %v8369 = vpop.f32.mrb[0].mxu0
      %v8370 = vpop.f32.mrb[0].mxu0
      %v8371 = vadd.f32 0.0, %v8370
      %v8372 = vpop.f32.mrb[0].mxu0
      %8373 = vdwg.mxu0
      %v8374 = vadd.f32 %v8298, %v8368
      %v8375 = vadd.f32 %v8299, %v8371
      %v8376 = vld [vmem:[%s8223 + $0x2] sm:$0xf]
      %v8377 = vld [vmem:[%s8223 + $0xa] sm:$0xf]
      %v8378 = vld [vmem:[%s8223 + $0x12] sm:$0xf]
      %v8379 = vld [vmem:[%s8223 + $0x1a] sm:$0xf]
      %v8384 = vcombine.low %v8376, %v8377
      %v8385 = vcombine.low %v8378, %v8379
      %v8388 = vpack.c.bf16 %v8385, %v8384
      %s8389 = scalar_lea.vmem %s7, 128
      %v8390 = vld [vmem:[%s8389] sm:$0xf]
      %v8391 = vld [vmem:[%s8389 + $0x4] sm:$0xf]
      %v8392 = vld [vmem:[%s8389 + $0x8] sm:$0xf]
      %v8393 = vld [vmem:[%s8389 + $0xc] sm:$0xf]
      %v8398 = vunpack.c.l.b16 %v8390
      %v8399 = vunpack.c.l.b16 %v8391
      %v8400 = vunpack.c.l.b16 %v8392
      %v8401 = vunpack.c.l.b16 %v8393
      %v8402 = vpack.c.b16 %v8399, %v8398
      %v8403 = vpack.c.b16 %v8401, %v8400
      %v8407 = vsel %vm7678, %v8388, 0
      %8409 = vmatprep.subr.bf16.mxu0 0
      %8410 = vmatpush1.bf16.msra.mxu0 %v8402
      %8411 = vmatprep.subr.bf16.mxu0 0
      %8412 = vmatpush1.bf16.msra.mxu0 %v8403
      %8413 = vmatprep.subr.bf16.mxu0 0
      %8414 = vmatpush1.bf16.msra.mxu0 0
      %8415 = vmatprep.subr.bf16.mxu0 0
      %8416 = vmatpush1.bf16.msra.mxu0 0
      %8417 = vmatprep.subr.bf16.mxu0 0
      %8418 = vmatpush1.bf16.msra.mxu0 0
      %8419 = vmatprep.subr.bf16.mxu0 0
      %8420 = vmatpush1.bf16.msra.mxu0 0
      %8421 = vmatprep.subr.bf16.mxu0 0
      %8422 = vmatpush1.bf16.msra.mxu0 0
      %8423 = vmatprep.subr.bf16.mxu0 0
      %8424 = vmatpush1.bf16.msra.mxu0 0
      %8425 = vmatprep.subr.bf16.mxu0 0
      %8426 = vmatpush1.bf16.msra.mxu0 0
      %8427 = vmatprep.subr.bf16.mxu0 0
      %8428 = vmatpush1.bf16.msra.mxu0 0
      %8429 = vmatprep.subr.bf16.mxu0 0
      %8430 = vmatpush1.bf16.msra.mxu0 0
      %8431 = vmatprep.subr.bf16.mxu0 0
      %8432 = vmatpush1.bf16.msra.mxu0 0
      %8433 = vmatprep.subr.bf16.mxu0 0
      %8434 = vmatpush1.bf16.msra.mxu0 0
      %8435 = vmatprep.subr.bf16.mxu0 0
      %8436 = vmatpush1.bf16.msra.mxu0 0
      %8437 = vmatprep.subr.bf16.mxu0 0
      %8438 = vmatpush1.bf16.msra.mxu0 0
      %8439 = vmatprep.subr.bf16.mxu0 0
      %8440 = vmatpush1.bf16.msra.mxu0 0
      %8441 = vmatprep.mubr.bf16.mxu0 0
      %8442 = vmatmul.mubr.bf16.gmra.mrb[0].mxu0 %v8407
      %v8443 = vpop.f32.mrb[0].mxu0
      %v8444 = vadd.f32 0.0, %v8443
      %v8445 = vpop.f32.mrb[0].mxu0
      %v8446 = vpop.f32.mrb[0].mxu0
      %v8447 = vadd.f32 0.0, %v8446
      %v8448 = vpop.f32.mrb[0].mxu0
      %8449 = vdwg.mxu0
      %v8450 = vadd.f32 %v8374, %v8444
      %v8451 = vadd.f32 %v8375, %v8447
      %v8452 = vld [vmem:[%s8] sm:$0x1]
      %v8454 = vlaneseq
      %v8455 = vshrl.u32 %v8454, 7
      %v8456 = vsub.s32 0, %v8455
      %v8457 = vrot.slane %v8452, %v8456
      %v8459 = vadd.f32 %v8450, %v8457
      %v8460 = vadd.f32 %v8451, %v8457
      %v8461 = vmax.f32 %v8459, 0.0
      %v8462 = vmax.f32 %v8460, 0.0
      %v8465 = vcombine.high %v8461, %v8461
      %v8467 = vunpack.c.l.s4 1983009808
      %v8468 = vunpack.c.0.s8 %v8467
      %v8469 = vlaneseq
      %v8470 = vshrl.u32 %v8469, 7
      %v8471 = vsub.s32 %v8468, %v8470
      %v8472 = vrot.slane %v8461, %v8471
      %v8474 = vunpack.c.l.s4 1983009808
      %v8475 = vunpack.c.0.s8 %v8474
      %v8476 = vlaneseq
      %v8477 = vshrl.u32 %v8476, 7
      %v8478 = vsub.s32 %v8475, %v8477
      %v8479 = vrot.slane %v8465, %v8478
      %v8480 = vcombine.high %v8472, %v8472
      %v8481 = vcombine.high %v8479, %v8479
      %v8482 = vcombine.high %v8462, %v8462
      %v8484 = vunpack.c.l.s4 1983009808
      %v8485 = vunpack.c.0.s8 %v8484
      %v8486 = vlaneseq
      %v8487 = vshrl.u32 %v8486, 7
      %v8488 = vsub.s32 %v8485, %v8487
      %v8489 = vrot.slane %v8462, %v8488
      %v8491 = vunpack.c.l.s4 1983009808
      %v8492 = vunpack.c.0.s8 %v8491
      %v8493 = vlaneseq
      %v8494 = vshrl.u32 %v8493, 7
      %v8495 = vsub.s32 %v8492, %v8494
      %v8496 = vrot.slane %v8482, %v8495
      %v8497 = vcombine.high %v8489, %v8489
      %v8498 = vcombine.high %v8496, %v8496
      %v8507 = vsel %vm7453, %v8472, -inf
      %v8508 = vrot.slane %v8507, 4
      %v8509 = vmax.f32 %v8507, %v8508
      %v8510 = vrot.slane %v8509, 2
      %v8511 = vmax.f32 %v8509, %v8510
      %v8512 = vrot.slane %v8511, 1
      %v8513 = vmax.f32 %v8511, %v8512
      %v8514 = vsel %vm7453, %v8480, -inf
      %v8515 = vrot.slane %v8514, 4
      %v8516 = vmax.f32 %v8514, %v8515
      %v8517 = vrot.slane %v8516, 2
      %v8518 = vmax.f32 %v8516, %v8517
      %v8519 = vrot.slane %v8518, 1
      %v8520 = vmax.f32 %v8518, %v8519
      %v8521 = vsel %vm7453, %v8479, -inf
      %v8522 = vrot.slane %v8521, 4
      %v8523 = vmax.f32 %v8521, %v8522
      %v8524 = vrot.slane %v8523, 2
      %v8525 = vmax.f32 %v8523, %v8524
      %v8526 = vrot.slane %v8525, 1
      %v8527 = vmax.f32 %v8525, %v8526
      %v8528 = vsel %vm7453, %v8481, -inf
      %v8529 = vrot.slane %v8528, 4
      %v8530 = vmax.f32 %v8528, %v8529
      %v8531 = vrot.slane %v8530, 2
      %v8532 = vmax.f32 %v8530, %v8531
      %v8533 = vrot.slane %v8532, 1
      %v8534 = vmax.f32 %v8532, %v8533
      %v8535 = vsel %vm7453, %v8489, -inf
      %v8536 = vrot.slane %v8535, 4
      %v8537 = vmax.f32 %v8535, %v8536
      %v8538 = vrot.slane %v8537, 2
      %v8539 = vmax.f32 %v8537, %v8538
      %v8540 = vrot.slane %v8539, 1
      %v8541 = vmax.f32 %v8539, %v8540
      %v8542 = vsel %vm7453, %v8497, -inf
      %v8543 = vrot.slane %v8542, 4
      %v8544 = vmax.f32 %v8542, %v8543
      %v8545 = vrot.slane %v8544, 2
      %v8546 = vmax.f32 %v8544, %v8545
      %v8547 = vrot.slane %v8546, 1
      %v8548 = vmax.f32 %v8546, %v8547
      %v8549 = vsel %vm7453, %v8496, -inf
      %v8550 = vrot.slane %v8549, 4
      %v8551 = vmax.f32 %v8549, %v8550
      %v8552 = vrot.slane %v8551, 2
      %v8553 = vmax.f32 %v8551, %v8552
      %v8554 = vrot.slane %v8553, 1
      %v8555 = vmax.f32 %v8553, %v8554
      %v8556 = vsel %vm7453, %v8498, -inf
      %v8557 = vrot.slane %v8556, 4
      %v8558 = vmax.f32 %v8556, %v8557
      %v8559 = vrot.slane %v8558, 2
      %v8560 = vmax.f32 %v8558, %v8559
      %v8561 = vrot.slane %v8560, 1
      %v8562 = vmax.f32 %v8560, %v8561
      %v8563 = vsel %vm7678, %v8513, -inf
      %v8564 = vsel %vm7678, %v8527, -inf
      %v8565 = vmax.f32 %v8563, %v8564
      %v8566 = vsel %vm7678, %v8520, -inf
      %v8567 = vsel %vm7678, %v8534, -inf
      %v8568 = vmax.f32 %v8566, %v8567
      %v8569 = vsel %vm7678, %v8541, -inf
      %v8570 = vsel %vm7678, %v8555, -inf
      %v8571 = vmax.f32 %v8569, %v8570
      %v8572 = vsel %vm7678, %v8548, -inf
      %v8573 = vsel %vm7678, %v8562, -inf
      %v8574 = vmax.f32 %v8572, %v8573
      %8575 = vst.msk [vmem:[#allocation6] sm:$0xf] %vm7767, 0.0
      %8576 = vst.msk [vmem:[#allocation6 + $0x4] sm:$0xf] %vm7767, 0.0
      %8577 = vst.msk [vmem:[#allocation6 + $0x8] sm:$0xf] %vm7767, 0.0
      %8578 = vst.msk [vmem:[#allocation6 + $0xc] sm:$0xf] %vm7767, 0.0
      %v8583 = vsel %vm5246, %v8568, %v8565
      %v8584 = vsel %vm5246, %v8574, %v8571
      %s8587 = scalar_lea.vmem [#allocation6], 4
      %8588 = vst.msk [vmem:[%s8587 + $0x1] sm:$0x3] %vm7453, %v8583
      %8589 = vst.msk [vmem:[%s8587 + $0x5] sm:$0x3] %vm7453, %v8584
      %v8590 = vld [vmem:[#allocation6] sm:$0x3]
      %v8591 = vld [vmem:[#allocation6 + $0x4] sm:$0x3]
      %v8594 = vcombine.low %v8590, %v8591
      %v8596 = vunpack.c.l.s4 1983009808
      %v8597 = vunpack.c.0.s8 %v8596
      %v8598 = vlaneseq
      %v8599 = vshrl.u32 %v8598, 7
      %v8600 = vsub.s32 %v8597, %v8599
      %v8601 = vrot.slane %v8594, %v8600
      %v8603 = vpack.c.bf16 %v8601, %v8601
      %v8604 = vld [vmem:[%s9] sm:$0xf]
      %v8605 = vld [vmem:[%s9 + $0x4] sm:$0xf]
      %v8606 = vld [vmem:[%s9 + $0x8] sm:$0xf]
      %v8607 = vld [vmem:[%s9 + $0xc] sm:$0xf]
      %v8608 = vld [vmem:[#allocation6 + $0x1] sm:$0x3]
      %v8609 = vld [vmem:[#allocation6 + $0x5] sm:$0x3]
      %v8612 = vcombine.low %v8608, %v8609
      %v8614 = vunpack.c.l.s4 1983009808
      %v8615 = vunpack.c.0.s8 %v8614
      %v8616 = vlaneseq
      %v8617 = vshrl.u32 %v8616, 7
      %v8618 = vsub.s32 %v8615, %v8617
      %v8619 = vrot.slane %v8612, %v8618
      %v8621 = vpack.c.bf16 %v8619, %v8619
      %s8622 = scalar_lea.vmem %s9, 16
      %v8623 = vld [vmem:[%s8622] sm:$0xf]
      %v8624 = vld [vmem:[%s8622 + $0x4] sm:$0xf]
      %v8625 = vld [vmem:[%s8622 + $0x8] sm:$0xf]
      %v8626 = vld [vmem:[%s8622 + $0xc] sm:$0xf]
      %v8631 = vunpack.c.l.b16 %v8623
      %v8632 = vunpack.c.l.b16 %v8624
      %v8633 = vunpack.c.l.b16 %v8625
      %v8634 = vunpack.c.l.b16 %v8626
      %v8635 = vpack.c.b16 %v8632, %v8631
      %v8636 = vpack.c.b16 %v8634, %v8633
      %v8640 = vsel %vm7678, %v8621, 0
      %8642 = vmatprep.subr.bf16.mxu0 0
      %8643 = vmatpush1.bf16.msra.mxu0 %v8635
      %8644 = vmatprep.subr.bf16.mxu0 0
      %8645 = vmatpush1.bf16.msra.mxu0 %v8636
      %8646 = vmatprep.subr.bf16.mxu0 0
      %8647 = vmatpush1.bf16.msra.mxu0 0
      %8648 = vmatprep.subr.bf16.mxu0 0
      %8649 = vmatpush1.bf16.msra.mxu0 0
      %8650 = vmatprep.subr.bf16.mxu0 0
      %8651 = vmatpush1.bf16.msra.mxu0 0
      %8652 = vmatprep.subr.bf16.mxu0 0
      %8653 = vmatpush1.bf16.msra.mxu0 0
      %8654 = vmatprep.subr.bf16.mxu0 0
      %8655 = vmatpush1.bf16.msra.mxu0 0
      %8656 = vmatprep.subr.bf16.mxu0 0
      %8657 = vmatpush1.bf16.msra.mxu0 0
      %8658 = vmatprep.subr.bf16.mxu0 0
      %8659 = vmatpush1.bf16.msra.mxu0 0
      %8660 = vmatprep.subr.bf16.mxu0 0
      %8661 = vmatpush1.bf16.msra.mxu0 0
      %8662 = vmatprep.subr.bf16.mxu0 0
      %8663 = vmatpush1.bf16.msra.mxu0 0
      %8664 = vmatprep.subr.bf16.mxu0 0
      %8665 = vmatpush1.bf16.msra.mxu0 0
      %8666 = vmatprep.subr.bf16.mxu0 0
      %8667 = vmatpush1.bf16.msra.mxu0 0
      %8668 = vmatprep.subr.bf16.mxu0 0
      %8669 = vmatpush1.bf16.msra.mxu0 0
      %8670 = vmatprep.subr.bf16.mxu0 0
      %8671 = vmatpush1.bf16.msra.mxu0 0
      %8672 = vmatprep.subr.bf16.mxu0 0
      %8673 = vmatpush1.bf16.msra.mxu0 0
      %8674 = vmatprep.mubr.bf16.mxu0 0
      %8675 = vmatmul.mubr.bf16.gmra.mrb[0].mxu0 %v8640
      %v8676 = vpop.f32.mrb[0].mxu0
      %v8677 = vadd.f32 0.0, %v8676
      %v8678 = vpop.f32.mrb[0].mxu0
      %v8679 = vpop.f32.mrb[0].mxu0
      %v8680 = vpop.f32.mrb[0].mxu0
      %8681 = vdwg.mxu0
      %v8686 = vunpack.c.l.b16 %v8604
      %v8687 = vunpack.c.l.b16 %v8605
      %v8688 = vunpack.c.l.b16 %v8606
      %v8689 = vunpack.c.l.b16 %v8607
      %v8690 = vpack.c.b16 %v8687, %v8686
      %v8691 = vpack.c.b16 %v8689, %v8688
      %v8695 = vsel %vm7678, %v8603, 0
      %8697 = vmatprep.subr.bf16.mxu0 0
      %8698 = vmatpush1.bf16.msra.mxu0 %v8690
      %8699 = vmatprep.subr.bf16.mxu0 0
      %8700 = vmatpush1.bf16.msra.mxu0 %v8691
      %8701 = vmatprep.subr.bf16.mxu0 0
      %8702 = vmatpush1.bf16.msra.mxu0 0
      %8703 = vmatprep.subr.bf16.mxu0 0
      %8704 = vmatpush1.bf16.msra.mxu0 0
      %8705 = vmatprep.subr.bf16.mxu0 0
      %8706 = vmatpush1.bf16.msra.mxu0 0
      %8707 = vmatprep.subr.bf16.mxu0 0
      %8708 = vmatpush1.bf16.msra.mxu0 0
      %8709 = vmatprep.subr.bf16.mxu0 0
      %8710 = vmatpush1.bf16.msra.mxu0 0
      %8711 = vmatprep.subr.bf16.mxu0 0
      %8712 = vmatpush1.bf16.msra.mxu0 0
      %8713 = vmatprep.subr.bf16.mxu0 0
      %8714 = vmatpush1.bf16.msra.mxu0 0
      %8715 = vmatprep.subr.bf16.mxu0 0
      %8716 = vmatpush1.bf16.msra.mxu0 0
      %8717 = vmatprep.subr.bf16.mxu0 0
      %8718 = vmatpush1.bf16.msra.mxu0 0
      %8719 = vmatprep.subr.bf16.mxu0 0
      %8720 = vmatpush1.bf16.msra.mxu0 0
      %8721 = vmatprep.subr.bf16.mxu0 0
      %8722 = vmatpush1.bf16.msra.mxu0 0
      %8723 = vmatprep.subr.bf16.mxu0 0
      %8724 = vmatpush1.bf16.msra.mxu0 0
      %8725 = vmatprep.subr.bf16.mxu0 0
      %8726 = vmatpush1.bf16.msra.mxu0 0
      %8727 = vmatprep.subr.bf16.mxu0 0
      %8728 = vmatpush1.bf16.msra.mxu0 0
      %8729 = vmatprep.mubr.bf16.mxu0 0
      %8730 = vmatmul.mubr.bf16.gmra.mrb[0].mxu0 %v8695
      %v8731 = vpop.f32.mrb[0].mxu0
      %v8732 = vadd.f32 %v8677, %v8731
      %v8733 = vpop.f32.mrb[0].mxu0
      %v8734 = vpop.f32.mrb[0].mxu0
      %v8735 = vpop.f32.mrb[0].mxu0
      %8736 = vdwg.mxu0
      %v8737 = vld [vmem:[#allocation6 + $0x2] sm:$0x3]
      %v8738 = vld [vmem:[#allocation6 + $0x6] sm:$0x3]
      %v8741 = vcombine.low %v8737, %v8738
      %v8743 = vunpack.c.l.s4 1983009808
      %v8744 = vunpack.c.0.s8 %v8743
      %v8745 = vlaneseq
      %v8746 = vshrl.u32 %v8745, 7
      %v8747 = vsub.s32 %v8744, %v8746
      %v8748 = vrot.slane %v8741, %v8747
      %v8750 = vpack.c.bf16 %v8748, %v8748
      %s8751 = scalar_lea.vmem %s9, 32
      %v8752 = vld [vmem:[%s8751] sm:$0xf]
      %v8753 = vld [vmem:[%s8751 + $0x4] sm:$0xf]
      %v8754 = vld [vmem:[%s8751 + $0x8] sm:$0xf]
      %v8755 = vld [vmem:[%s8751 + $0xc] sm:$0xf]
      %v8760 = vunpack.c.l.b16 %v8752
      %v8761 = vunpack.c.l.b16 %v8753
      %v8762 = vunpack.c.l.b16 %v8754
      %v8763 = vunpack.c.l.b16 %v8755
      %v8764 = vpack.c.b16 %v8761, %v8760
      %v8765 = vpack.c.b16 %v8763, %v8762
      %v8769 = vsel %vm7678, %v8750, 0
      %8771 = vmatprep.subr.bf16.mxu0 0
      %8772 = vmatpush1.bf16.msra.mxu0 %v8764
      %8773 = vmatprep.subr.bf16.mxu0 0
      %8774 = vmatpush1.bf16.msra.mxu0 %v8765
      %8775 = vmatprep.subr.bf16.mxu0 0
      %8776 = vmatpush1.bf16.msra.mxu0 0
      %8777 = vmatprep.subr.bf16.mxu0 0
      %8778 = vmatpush1.bf16.msra.mxu0 0
      %8779 = vmatprep.subr.bf16.mxu0 0
      %8780 = vmatpush1.bf16.msra.mxu0 0
      %8781 = vmatprep.subr.bf16.mxu0 0
      %8782 = vmatpush1.bf16.msra.mxu0 0
      %8783 = vmatprep.subr.bf16.mxu0 0
      %8784 = vmatpush1.bf16.msra.mxu0 0
      %8785 = vmatprep.subr.bf16.mxu0 0
      %8786 = vmatpush1.bf16.msra.mxu0 0
      %8787 = vmatprep.subr.bf16.mxu0 0
      %8788 = vmatpush1.bf16.msra.mxu0 0
      %8789 = vmatprep.subr.bf16.mxu0 0
      %8790 = vmatpush1.bf16.msra.mxu0 0
      %8791 = vmatprep.subr.bf16.mxu0 0
      %8792 = vmatpush1.bf16.msra.mxu0 0
      %8793 = vmatprep.subr.bf16.mxu0 0
      %8794 = vmatpush1.bf16.msra.mxu0 0
      %8795 = vmatprep.subr.bf16.mxu0 0
      %8796 = vmatpush1.bf16.msra.mxu0 0
      %8797 = vmatprep.subr.bf16.mxu0 0
      %8798 = vmatpush1.bf16.msra.mxu0 0
      %8799 = vmatprep.subr.bf16.mxu0 0
      %8800 = vmatpush1.bf16.msra.mxu0 0
      %8801 = vmatprep.subr.bf16.mxu0 0
      %8802 = vmatpush1.bf16.msra.mxu0 0
      %8803 = vmatprep.mubr.bf16.mxu0 0
      %8804 = vmatmul.mubr.bf16.gmra.mrb[0].mxu0 %v8769
      %v8805 = vpop.f32.mrb[0].mxu0
      %v8806 = vadd.f32 0.0, %v8805
      %v8807 = vpop.f32.mrb[0].mxu0
      %v8808 = vpop.f32.mrb[0].mxu0
      %v8809 = vpop.f32.mrb[0].mxu0
      %8810 = vdwg.mxu0
      %v8811 = vadd.f32 %v8732, %v8806
      %v8812 = vld [vmem:[%s8587] sm:$0x3]
      %v8813 = vld [vmem:[%s8587 + $0x4] sm:$0x3]
      %v8816 = vcombine.low %v8812, %v8813
      %v8818 = vunpack.c.l.s4 1983009808
      %v8819 = vunpack.c.0.s8 %v8818
      %v8820 = vlaneseq
      %v8821 = vshrl.u32 %v8820, 7
      %v8822 = vsub.s32 %v8819, %v8821
      %v8823 = vrot.slane %v8816, %v8822
      %v8825 = vpack.c.bf16 %v8823, %v8823
      %s8826 = scalar_lea.vmem %s9, 48
      %v8827 = vld [vmem:[%s8826] sm:$0xf]
      %v8828 = vld [vmem:[%s8826 + $0x4] sm:$0xf]
      %v8829 = vld [vmem:[%s8826 + $0x8] sm:$0xf]
      %v8830 = vld [vmem:[%s8826 + $0xc] sm:$0xf]
      %v8835 = vunpack.c.l.b16 %v8827
      %v8836 = vunpack.c.l.b16 %v8828
      %v8837 = vunpack.c.l.b16 %v8829
      %v8838 = vunpack.c.l.b16 %v8830
      %v8839 = vpack.c.b16 %v8836, %v8835
      %v8840 = vpack.c.b16 %v8838, %v8837
      %v8844 = vsel %vm7678, %v8825, 0
      %8846 = vmatprep.subr.bf16.mxu0 0
      %8847 = vmatpush1.bf16.msra.mxu0 %v8839
      %8848 = vmatprep.subr.bf16.mxu0 0
      %8849 = vmatpush1.bf16.msra.mxu0 %v8840
      %8850 = vmatprep.subr.bf16.mxu0 0
      %8851 = vmatpush1.bf16.msra.mxu0 0
      %8852 = vmatprep.subr.bf16.mxu0 0
      %8853 = vmatpush1.bf16.msra.mxu0 0
      %8854 = vmatprep.subr.bf16.mxu0 0
      %8855 = vmatpush1.bf16.msra.mxu0 0
      %8856 = vmatprep.subr.bf16.mxu0 0
      %8857 = vmatpush1.bf16.msra.mxu0 0
      %8858 = vmatprep.subr.bf16.mxu0 0
      %8859 = vmatpush1.bf16.msra.mxu0 0
      %8860 = vmatprep.subr.bf16.mxu0 0
      %8861 = vmatpush1.bf16.msra.mxu0 0
      %8862 = vmatprep.subr.bf16.mxu0 0
      %8863 = vmatpush1.bf16.msra.mxu0 0
      %8864 = vmatprep.subr.bf16.mxu0 0
      %8865 = vmatpush1.bf16.msra.mxu0 0
      %8866 = vmatprep.subr.bf16.mxu0 0
      %8867 = vmatpush1.bf16.msra.mxu0 0
      %8868 = vmatprep.subr.bf16.mxu0 0
      %8869 = vmatpush1.bf16.msra.mxu0 0
      %8870 = vmatprep.subr.bf16.mxu0 0
      %8871 = vmatpush1.bf16.msra.mxu0 0
      %8872 = vmatprep.subr.bf16.mxu0 0
      %8873 = vmatpush1.bf16.msra.mxu0 0
      %8874 = vmatprep.subr.bf16.mxu0 0
      %8875 = vmatpush1.bf16.msra.mxu0 0
      %8876 = vmatprep.subr.bf16.mxu0 0
      %8877 = vmatpush1.bf16.msra.mxu0 0
      %8878 = vmatprep.mubr.bf16.mxu0 0
      %8879 = vmatmul.mubr.bf16.gmra.mrb[0].mxu0 %v8844
      %v8880 = vpop.f32.mrb[0].mxu0
      %v8881 = vadd.f32 0.0, %v8880
      %v8882 = vpop.f32.mrb[0].mxu0
      %v8883 = vpop.f32.mrb[0].mxu0
      %v8884 = vpop.f32.mrb[0].mxu0
      %8885 = vdwg.mxu0
      %v8886 = vadd.f32 %v8811, %v8881
      %v8887 = vld [vmem:[%s8587 + $0x1] sm:$0x3]
      %v8888 = vld [vmem:[%s8587 + $0x5] sm:$0x3]
      %v8891 = vcombine.low %v8887, %v8888
      %v8893 = vunpack.c.l.s4 1983009808
      %v8894 = vunpack.c.0.s8 %v8893
      %v8895 = vlaneseq
      %v8896 = vshrl.u32 %v8895, 7
      %v8897 = vsub.s32 %v8894, %v8896
      %v8898 = vrot.slane %v8891, %v8897
      %v8900 = vpack.c.bf16 %v8898, %v8898
      %s8901 = scalar_lea.vmem %s9, 64
      %v8902 = vld [vmem:[%s8901] sm:$0xf]
      %v8903 = vld [vmem:[%s8901 + $0x4] sm:$0xf]
      %v8904 = vld [vmem:[%s8901 + $0x8] sm:$0xf]
      %v8905 = vld [vmem:[%s8901 + $0xc] sm:$0xf]
      %v8910 = vunpack.c.l.b16 %v8902
      %v8911 = vunpack.c.l.b16 %v8903
      %v8912 = vunpack.c.l.b16 %v8904
      %v8913 = vunpack.c.l.b16 %v8905
      %v8914 = vpack.c.b16 %v8911, %v8910
      %v8915 = vpack.c.b16 %v8913, %v8912
      %v8919 = vsel %vm7678, %v8900, 0
      %8921 = vmatprep.subr.bf16.mxu0 0
      %8922 = vmatpush1.bf16.msra.mxu0 %v8914
      %8923 = vmatprep.subr.bf16.mxu0 0
      %8924 = vmatpush1.bf16.msra.mxu0 %v8915
      %8925 = vmatprep.subr.bf16.mxu0 0
      %8926 = vmatpush1.bf16.msra.mxu0 0
      %8927 = vmatprep.subr.bf16.mxu0 0
      %8928 = vmatpush1.bf16.msra.mxu0 0
      %8929 = vmatprep.subr.bf16.mxu0 0
      %8930 = vmatpush1.bf16.msra.mxu0 0
      %8931 = vmatprep.subr.bf16.mxu0 0
      %8932 = vmatpush1.bf16.msra.mxu0 0
      %8933 = vmatprep.subr.bf16.mxu0 0
      %8934 = vmatpush1.bf16.msra.mxu0 0
      %8935 = vmatprep.subr.bf16.mxu0 0
      %8936 = vmatpush1.bf16.msra.mxu0 0
      %8937 = vmatprep.subr.bf16.mxu0 0
      %8938 = vmatpush1.bf16.msra.mxu0 0
      %8939 = vmatprep.subr.bf16.mxu0 0
      %8940 = vmatpush1.bf16.msra.mxu0 0
      %8941 = vmatprep.subr.bf16.mxu0 0
      %8942 = vmatpush1.bf16.msra.mxu0 0
      %8943 = vmatprep.subr.bf16.mxu0 0
      %8944 = vmatpush1.bf16.msra.mxu0 0
      %8945 = vmatprep.subr.bf16.mxu0 0
      %8946 = vmatpush1.bf16.msra.mxu0 0
      %8947 = vmatprep.subr.bf16.mxu0 0
      %8948 = vmatpush1.bf16.msra.mxu0 0
      %8949 = vmatprep.subr.bf16.mxu0 0
      %8950 = vmatpush1.bf16.msra.mxu0 0
      %8951 = vmatprep.subr.bf16.mxu0 0
      %8952 = vmatpush1.bf16.msra.mxu0 0
      %8953 = vmatprep.mubr.bf16.mxu0 0
      %8954 = vmatmul.mubr.bf16.gmra.mrb[0].mxu0 %v8919
      %v8955 = vpop.f32.mrb[0].mxu0
      %v8956 = vadd.f32 0.0, %v8955
      %v8957 = vpop.f32.mrb[0].mxu0
      %v8958 = vpop.f32.mrb[0].mxu0
      %v8959 = vpop.f32.mrb[0].mxu0
      %8960 = vdwg.mxu0
      %v8961 = vadd.f32 %v8886, %v8956
      %v8962 = vld [vmem:[%s8587 + $0x2] sm:$0x3]
      %v8963 = vld [vmem:[%s8587 + $0x6] sm:$0x3]
      %v8966 = vcombine.low %v8962, %v8963
      %v8968 = vunpack.c.l.s4 1983009808
      %v8969 = vunpack.c.0.s8 %v8968
      %v8970 = vlaneseq
      %v8971 = vshrl.u32 %v8970, 7
      %v8972 = vsub.s32 %v8969, %v8971
      %v8973 = vrot.slane %v8966, %v8972
      %v8975 = vpack.c.bf16 %v8973, %v8973
      %s8976 = scalar_lea.vmem %s9, 80
      %v8977 = vld [vmem:[%s8976] sm:$0xf]
      %v8978 = vld [vmem:[%s8976 + $0x4] sm:$0xf]
      %v8979 = vld [vmem:[%s8976 + $0x8] sm:$0xf]
      %v8980 = vld [vmem:[%s8976 + $0xc] sm:$0xf]
      %v8985 = vunpack.c.l.b16 %v8977
      %v8986 = vunpack.c.l.b16 %v8978
      %v8987 = vunpack.c.l.b16 %v8979
      %v8988 = vunpack.c.l.b16 %v8980
      %v8989 = vpack.c.b16 %v8986, %v8985
      %v8990 = vpack.c.b16 %v8988, %v8987
      %v8994 = vsel %vm7678, %v8975, 0
      %8996 = vmatprep.subr.bf16.mxu0 0
      %8997 = vmatpush1.bf16.msra.mxu0 %v8989
      %8998 = vmatprep.subr.bf16.mxu0 0
      %8999 = vmatpush1.bf16.msra.mxu0 %v8990
      %9000 = vmatprep.subr.bf16.mxu0 0
      %9001 = vmatpush1.bf16.msra.mxu0 0
      %9002 = vmatprep.subr.bf16.mxu0 0
      %9003 = vmatpush1.bf16.msra.mxu0 0
      %9004 = vmatprep.subr.bf16.mxu0 0
      %9005 = vmatpush1.bf16.msra.mxu0 0
      %9006 = vmatprep.subr.bf16.mxu0 0
      %9007 = vmatpush1.bf16.msra.mxu0 0
      %9008 = vmatprep.subr.bf16.mxu0 0
      %9009 = vmatpush1.bf16.msra.mxu0 0
      %9010 = vmatprep.subr.bf16.mxu0 0
      %9011 = vmatpush1.bf16.msra.mxu0 0
      %9012 = vmatprep.subr.bf16.mxu0 0
      %9013 = vmatpush1.bf16.msra.mxu0 0
      %9014 = vmatprep.subr.bf16.mxu0 0
      %9015 = vmatpush1.bf16.msra.mxu0 0
      %9016 = vmatprep.subr.bf16.mxu0 0
      %9017 = vmatpush1.bf16.msra.mxu0 0
      %9018 = vmatprep.subr.bf16.mxu0 0
      %9019 = vmatpush1.bf16.msra.mxu0 0
      %9020 = vmatprep.subr.bf16.mxu0 0
      %9021 = vmatpush1.bf16.msra.mxu0 0
      %9022 = vmatprep.subr.bf16.mxu0 0
      %9023 = vmatpush1.bf16.msra.mxu0 0
      %9024 = vmatprep.subr.bf16.mxu0 0
      %9025 = vmatpush1.bf16.msra.mxu0 0
      %9026 = vmatprep.subr.bf16.mxu0 0
      %9027 = vmatpush1.bf16.msra.mxu0 0
      %9028 = vmatprep.mubr.bf16.mxu0 0
      %9029 = vmatmul.mubr.bf16.gmra.mrb[0].mxu0 %v8994
      %v9030 = vpop.f32.mrb[0].mxu0
      %v9031 = vadd.f32 0.0, %v9030
      %v9032 = vpop.f32.mrb[0].mxu0
      %v9033 = vpop.f32.mrb[0].mxu0
      %v9034 = vpop.f32.mrb[0].mxu0
      %9035 = vdwg.mxu0
      %v9036 = vadd.f32 %v8961, %v9031
      %s9037 = scalar_lea.vmem [#allocation6], 8
      %v9038 = vld [vmem:[%s9037] sm:$0x3]
      %v9039 = vld [vmem:[%s9037 + $0x4] sm:$0x3]
      %v9042 = vcombine.low %v9038, %v9039
      %v9044 = vunpack.c.l.s4 1983009808
      %v9045 = vunpack.c.0.s8 %v9044
      %v9046 = vlaneseq
      %v9047 = vshrl.u32 %v9046, 7
      %v9048 = vsub.s32 %v9045, %v9047
      %v9049 = vrot.slane %v9042, %v9048
      %v9051 = vpack.c.bf16 %v9049, %v9049
      %s9052 = scalar_lea.vmem %s9, 96
      %v9053 = vld [vmem:[%s9052] sm:$0xf]
      %v9054 = vld [vmem:[%s9052 + $0x4] sm:$0xf]
      %v9055 = vld [vmem:[%s9052 + $0x8] sm:$0xf]
      %v9056 = vld [vmem:[%s9052 + $0xc] sm:$0xf]
      %v9061 = vunpack.c.l.b16 %v9053
      %v9062 = vunpack.c.l.b16 %v9054
      %v9063 = vunpack.c.l.b16 %v9055
      %v9064 = vunpack.c.l.b16 %v9056
      %v9065 = vpack.c.b16 %v9062, %v9061
      %v9066 = vpack.c.b16 %v9064, %v9063
      %v9070 = vsel %vm7678, %v9051, 0
      %9072 = vmatprep.subr.bf16.mxu0 0
      %9073 = vmatpush1.bf16.msra.mxu0 %v9065
      %9074 = vmatprep.subr.bf16.mxu0 0
      %9075 = vmatpush1.bf16.msra.mxu0 %v9066
      %9076 = vmatprep.subr.bf16.mxu0 0
      %9077 = vmatpush1.bf16.msra.mxu0 0
      %9078 = vmatprep.subr.bf16.mxu0 0
      %9079 = vmatpush1.bf16.msra.mxu0 0
      %9080 = vmatprep.subr.bf16.mxu0 0
      %9081 = vmatpush1.bf16.msra.mxu0 0
      %9082 = vmatprep.subr.bf16.mxu0 0
      %9083 = vmatpush1.bf16.msra.mxu0 0
      %9084 = vmatprep.subr.bf16.mxu0 0
      %9085 = vmatpush1.bf16.msra.mxu0 0
      %9086 = vmatprep.subr.bf16.mxu0 0
      %9087 = vmatpush1.bf16.msra.mxu0 0
      %9088 = vmatprep.subr.bf16.mxu0 0
      %9089 = vmatpush1.bf16.msra.mxu0 0
      %9090 = vmatprep.subr.bf16.mxu0 0
      %9091 = vmatpush1.bf16.msra.mxu0 0
      %9092 = vmatprep.subr.bf16.mxu0 0
      %9093 = vmatpush1.bf16.msra.mxu0 0
      %9094 = vmatprep.subr.bf16.mxu0 0
      %9095 = vmatpush1.bf16.msra.mxu0 0
      %9096 = vmatprep.subr.bf16.mxu0 0
      %9097 = vmatpush1.bf16.msra.mxu0 0
      %9098 = vmatprep.subr.bf16.mxu0 0
      %9099 = vmatpush1.bf16.msra.mxu0 0
      %9100 = vmatprep.subr.bf16.mxu0 0
      %9101 = vmatpush1.bf16.msra.mxu0 0
      %9102 = vmatprep.subr.bf16.mxu0 0
      %9103 = vmatpush1.bf16.msra.mxu0 0
      %9104 = vmatprep.mubr.bf16.mxu0 0
      %9105 = vmatmul.mubr.bf16.gmra.mrb[0].mxu0 %v9070
      %v9106 = vpop.f32.mrb[0].mxu0
      %v9107 = vadd.f32 0.0, %v9106
      %v9108 = vpop.f32.mrb[0].mxu0
      %v9109 = vpop.f32.mrb[0].mxu0
      %v9110 = vpop.f32.mrb[0].mxu0
      %9111 = vdwg.mxu0
      %v9112 = vadd.f32 %v9036, %v9107
      %v9113 = vld [vmem:[%s9037 + $0x1] sm:$0x3]
      %v9114 = vld [vmem:[%s9037 + $0x5] sm:$0x3]
      %v9117 = vcombine.low %v9113, %v9114
      %v9119 = vunpack.c.l.s4 1983009808
      %v9120 = vunpack.c.0.s8 %v9119
      %v9121 = vlaneseq
      %v9122 = vshrl.u32 %v9121, 7
      %v9123 = vsub.s32 %v9120, %v9122
      %v9124 = vrot.slane %v9117, %v9123
      %v9126 = vpack.c.bf16 %v9124, %v9124
      %s9127 = scalar_lea.vmem %s9, 112
      %v9128 = vld [vmem:[%s9127] sm:$0xf]
      %v9129 = vld [vmem:[%s9127 + $0x4] sm:$0xf]
      %v9130 = vld [vmem:[%s9127 + $0x8] sm:$0xf]
      %v9131 = vld [vmem:[%s9127 + $0xc] sm:$0xf]
      %v9136 = vunpack.c.l.b16 %v9128
      %v9137 = vunpack.c.l.b16 %v9129
      %v9138 = vunpack.c.l.b16 %v9130
      %v9139 = vunpack.c.l.b16 %v9131
      %v9140 = vpack.c.b16 %v9137, %v9136
      %v9141 = vpack.c.b16 %v9139, %v9138
      %v9145 = vsel %vm7678, %v9126, 0
      %9147 = vmatprep.subr.bf16.mxu0 0
      %9148 = vmatpush1.bf16.msra.mxu0 %v9140
      %9149 = vmatprep.subr.bf16.mxu0 0
      %9150 = vmatpush1.bf16.msra.mxu0 %v9141
      %9151 = vmatprep.subr.bf16.mxu0 0
      %9152 = vmatpush1.bf16.msra.mxu0 0
      %9153 = vmatprep.subr.bf16.mxu0 0
      %9154 = vmatpush1.bf16.msra.mxu0 0
      %9155 = vmatprep.subr.bf16.mxu0 0
      %9156 = vmatpush1.bf16.msra.mxu0 0
      %9157 = vmatprep.subr.bf16.mxu0 0
      %9158 = vmatpush1.bf16.msra.mxu0 0
      %9159 = vmatprep.subr.bf16.mxu0 0
      %9160 = vmatpush1.bf16.msra.mxu0 0
      %9161 = vmatprep.subr.bf16.mxu0 0
      %9162 = vmatpush1.bf16.msra.mxu0 0
      %9163 = vmatprep.subr.bf16.mxu0 0
      %9164 = vmatpush1.bf16.msra.mxu0 0
      %9165 = vmatprep.subr.bf16.mxu0 0
      %9166 = vmatpush1.bf16.msra.mxu0 0
      %9167 = vmatprep.subr.bf16.mxu0 0
      %9168 = vmatpush1.bf16.msra.mxu0 0
      %9169 = vmatprep.subr.bf16.mxu0 0
      %9170 = vmatpush1.bf16.msra.mxu0 0
      %9171 = vmatprep.subr.bf16.mxu0 0
      %9172 = vmatpush1.bf16.msra.mxu0 0
      %9173 = vmatprep.subr.bf16.mxu0 0
      %9174 = vmatpush1.bf16.msra.mxu0 0
      %9175 = vmatprep.subr.bf16.mxu0 0
      %9176 = vmatpush1.bf16.msra.mxu0 0
      %9177 = vmatprep.subr.bf16.mxu0 0
      %9178 = vmatpush1.bf16.msra.mxu0 0
      %9179 = vmatprep.mubr.bf16.mxu0 0
      %9180 = vmatmul.mubr.bf16.gmra.mrb[0].mxu0 %v9145
      %v9181 = vpop.f32.mrb[0].mxu0
      %v9182 = vadd.f32 0.0, %v9181
      %v9183 = vpop.f32.mrb[0].mxu0
      %v9184 = vpop.f32.mrb[0].mxu0
      %v9185 = vpop.f32.mrb[0].mxu0
      %9186 = vdwg.mxu0
      %v9187 = vadd.f32 %v9112, %v9182
      %v9188 = vld [vmem:[%s9037 + $0x2] sm:$0x3]
      %v9189 = vld [vmem:[%s9037 + $0x6] sm:$0x3]
      %v9192 = vcombine.low %v9188, %v9189
      %v9194 = vunpack.c.l.s4 1983009808
      %v9195 = vunpack.c.0.s8 %v9194
      %v9196 = vlaneseq
      %v9197 = vshrl.u32 %v9196, 7
      %v9198 = vsub.s32 %v9195, %v9197
      %v9199 = vrot.slane %v9192, %v9198
      %v9201 = vpack.c.bf16 %v9199, %v9199
      %s9202 = scalar_lea.vmem %s9, 128
      %v9203 = vld [vmem:[%s9202] sm:$0xf]
      %v9204 = vld [vmem:[%s9202 + $0x4] sm:$0xf]
      %v9205 = vld [vmem:[%s9202 + $0x8] sm:$0xf]
      %v9206 = vld [vmem:[%s9202 + $0xc] sm:$0xf]
      %v9211 = vunpack.c.l.b16 %v9203
      %v9212 = vunpack.c.l.b16 %v9204
      %v9213 = vunpack.c.l.b16 %v9205
      %v9214 = vunpack.c.l.b16 %v9206
      %v9215 = vpack.c.b16 %v9212, %v9211
      %v9216 = vpack.c.b16 %v9214, %v9213
      %v9220 = vsel %vm7678, %v9201, 0
      %9222 = vmatprep.subr.bf16.mxu0 0
      %9223 = vmatpush1.bf16.msra.mxu0 %v9215
      %9224 = vmatprep.subr.bf16.mxu0 0
      %9225 = vmatpush1.bf16.msra.mxu0 %v9216
      %9226 = vmatprep.subr.bf16.mxu0 0
      %9227 = vmatpush1.bf16.msra.mxu0 0
      %9228 = vmatprep.subr.bf16.mxu0 0
      %9229 = vmatpush1.bf16.msra.mxu0 0
      %9230 = vmatprep.subr.bf16.mxu0 0
      %9231 = vmatpush1.bf16.msra.mxu0 0
      %9232 = vmatprep.subr.bf16.mxu0 0
      %9233 = vmatpush1.bf16.msra.mxu0 0
      %9234 = vmatprep.subr.bf16.mxu0 0
      %9235 = vmatpush1.bf16.msra.mxu0 0
      %9236 = vmatprep.subr.bf16.mxu0 0
      %9237 = vmatpush1.bf16.msra.mxu0 0
      %9238 = vmatprep.subr.bf16.mxu0 0
      %9239 = vmatpush1.bf16.msra.mxu0 0
      %9240 = vmatprep.subr.bf16.mxu0 0
      %9241 = vmatpush1.bf16.msra.mxu0 0
      %9242 = vmatprep.subr.bf16.mxu0 0
      %9243 = vmatpush1.bf16.msra.mxu0 0
      %9244 = vmatprep.subr.bf16.mxu0 0
      %9245 = vmatpush1.bf16.msra.mxu0 0
      %9246 = vmatprep.subr.bf16.mxu0 0
      %9247 = vmatpush1.bf16.msra.mxu0 0
      %9248 = vmatprep.subr.bf16.mxu0 0
      %9249 = vmatpush1.bf16.msra.mxu0 0
      %9250 = vmatprep.subr.bf16.mxu0 0
      %9251 = vmatpush1.bf16.msra.mxu0 0
      %9252 = vmatprep.subr.bf16.mxu0 0
      %9253 = vmatpush1.bf16.msra.mxu0 0
      %9254 = vmatprep.mubr.bf16.mxu0 0
      %9255 = vmatmul.mubr.bf16.gmra.mrb[0].mxu0 %v9220
      %v9256 = vpop.f32.mrb[0].mxu0
      %v9257 = vadd.f32 0.0, %v9256
      %v9258 = vpop.f32.mrb[0].mxu0
      %v9259 = vpop.f32.mrb[0].mxu0
      %v9260 = vpop.f32.mrb[0].mxu0
      %9261 = vdwg.mxu0
      %v9262 = vadd.f32 %v9187, %v9257
      %v9263 = vld [vmem:[%s10] sm:$0x1]
      %v9265 = vlaneseq
      %v9266 = vshrl.u32 %v9265, 7
      %v9267 = vsub.s32 0, %v9266
      %v9268 = vrot.slane %v9263, %v9267
      %v9270 = vadd.f32 %v9262, %v9268
      %v9271 = vmax.f32 %v9270, 0.0
      %v9272 = vpack.c.bf16 %v9271, %v9271
      %v9273 = vld [vmem:[%s11] sm:$0xf]
      %v9274 = vld [vmem:[%s11 + $0x4] sm:$0xf]
      %v9275 = vld [vmem:[%s11 + $0x8] sm:$0xf]
      %v9276 = vld [vmem:[%s11 + $0xc] sm:$0xf]
      %v9277 = vld [vmem:[%s11 + $0x10] sm:$0xf]
      %v9278 = vld [vmem:[%s11 + $0x14] sm:$0xf]
      %v9279 = vld [vmem:[%s11 + $0x18] sm:$0xf]
      %v9280 = vld [vmem:[%s11 + $0x1c] sm:$0xf]
      %v9281 = vld [vmem:[%s12] sm:$0x1]
      %v9283 = vlaneseq
      %v9284 = vshrl.u32 %v9283, 7
      %v9285 = vsub.s32 0, %v9284
      %v9286 = vrot.slane %v9281, %v9285
      %v9296 = vunpack.c.l.b16 %v9273
      %v9297 = vunpack.c.l.b16 %v9274
      %v9298 = vunpack.c.l.b16 %v9275
      %v9299 = vunpack.c.l.b16 %v9276
      %v9300 = vunpack.c.l.b16 %v9277
      %v9301 = vunpack.c.l.b16 %v9278
      %v9302 = vunpack.c.l.b16 %v9279
      %v9303 = vunpack.c.l.b16 %v9280
      %v9304 = vpack.c.b16 %v9297, %v9296
      %v9305 = vpack.c.b16 %v9299, %v9298
      %v9306 = vpack.c.b16 %v9301, %v9300
      %v9307 = vpack.c.b16 %v9303, %v9302
      %vm9312 = vcmask 523264
      %v9314 = vsel %vm9312, %v9272, 0
      %9316 = vmatprep.subr.bf16.mxu0 0
      %9317 = vmatpush1.bf16.msra.mxu0 %v9304
      %9318 = vmatprep.subr.bf16.mxu0 0
      %9319 = vmatpush1.bf16.msra.mxu0 %v9305
      %9320 = vmatprep.subr.bf16.mxu0 0
      %9321 = vmatpush1.bf16.msra.mxu0 %v9306
      %9322 = vmatprep.subr.bf16.mxu0 0
      %9323 = vmatpush1.bf16.msra.mxu0 %v9307
      %9324 = vmatprep.subr.bf16.mxu0 0
      %9325 = vmatpush1.bf16.msra.mxu0 0
      %9326 = vmatprep.subr.bf16.mxu0 0
      %9327 = vmatpush1.bf16.msra.mxu0 0
      %9328 = vmatprep.subr.bf16.mxu0 0
      %9329 = vmatpush1.bf16.msra.mxu0 0
      %9330 = vmatprep.subr.bf16.mxu0 0
      %9331 = vmatpush1.bf16.msra.mxu0 0
      %9332 = vmatprep.subr.bf16.mxu0 0
      %9333 = vmatpush1.bf16.msra.mxu0 0
      %9334 = vmatprep.subr.bf16.mxu0 0
      %9335 = vmatpush1.bf16.msra.mxu0 0
      %9336 = vmatprep.subr.bf16.mxu0 0
      %9337 = vmatpush1.bf16.msra.mxu0 0
      %9338 = vmatprep.subr.bf16.mxu0 0
      %9339 = vmatpush1.bf16.msra.mxu0 0
      %9340 = vmatprep.subr.bf16.mxu0 0
      %9341 = vmatpush1.bf16.msra.mxu0 0
      %9342 = vmatprep.subr.bf16.mxu0 0
      %9343 = vmatpush1.bf16.msra.mxu0 0
      %9344 = vmatprep.subr.bf16.mxu0 0
      %9345 = vmatpush1.bf16.msra.mxu0 0
      %9346 = vmatprep.subr.bf16.mxu0 0
      %9347 = vmatpush1.bf16.msra.mxu0 0
      %9348 = vmatprep.mubr.bf16.mxu0 0
      %9349 = vmatmul.mubr.bf16.gmra.mrb[0].mxu0 %v9314
      %v9350 = vpop.f32.mrb[0].mxu0
      %v9351 = vadd.f32 %v9286, %v9350
      %v9352 = vpop.f32.mrb[0].mxu0
      %v9353 = vpop.f32.mrb[0].mxu0
      %v9354 = vpop.f32.mrb[0].mxu0
      %9355 = vdwg.mxu0
      %v9356 = vmax.f32 %v9351, 0.0
      %v9357 = vpack.c.bf16 %v9356, %v9356
      %v9358 = vld [vmem:[%s13] sm:$0xf]
      %v9359 = vld [vmem:[%s13 + $0x4] sm:$0xf]
      %v9360 = vld [vmem:[%s13 + $0x8] sm:$0xf]
      %v9361 = vld [vmem:[%s13 + $0xc] sm:$0xf]
      %v9362 = vld [vmem:[%s13 + $0x10] sm:$0xf]
      %v9363 = vld [vmem:[%s13 + $0x14] sm:$0xf]
      %v9364 = vld [vmem:[%s13 + $0x18] sm:$0xf]
      %v9365 = vld [vmem:[%s13 + $0x1c] sm:$0xf]
      %v9366 = vld [vmem:[%s13 + $0x20] sm:$0xf]
      %v9367 = vld [vmem:[%s13 + $0x24] sm:$0xf]
      %v9368 = vld [vmem:[%s13 + $0x28] sm:$0xf]
      %v9369 = vld [vmem:[%s13 + $0x2c] sm:$0xf]
      %v9370 = vld [vmem:[%s13 + $0x30] sm:$0xf]
      %v9371 = vld [vmem:[%s13 + $0x34] sm:$0xf]
      %v9372 = vld [vmem:[%s13 + $0x38] sm:$0xf]
      %v9373 = vld [vmem:[%s13 + $0x3c] sm:$0xf]
      %v9374 = vld [vmem:[%s14] sm:$0x1]
      %v9376 = vlaneseq
      %v9377 = vshrl.u32 %v9376, 7
      %v9378 = vsub.s32 0, %v9377
      %v9379 = vrot.slane %v9374, %v9378
      %v9397 = vunpack.c.l.b16 %v9358
      %v9398 = vunpack.c.l.b16 %v9359
      %v9399 = vunpack.c.l.b16 %v9360
      %v9400 = vunpack.c.l.b16 %v9361
      %v9401 = vunpack.c.l.b16 %v9362
      %v9402 = vunpack.c.l.b16 %v9363
      %v9403 = vunpack.c.l.b16 %v9364
      %v9404 = vunpack.c.l.b16 %v9365
      %v9405 = vunpack.c.l.b16 %v9366
      %v9406 = vunpack.c.l.b16 %v9367
      %v9407 = vunpack.c.l.b16 %v9368
      %v9408 = vunpack.c.l.b16 %v9369
      %v9409 = vunpack.c.l.b16 %v9370
      %v9410 = vunpack.c.l.b16 %v9371
      %v9411 = vunpack.c.l.b16 %v9372
      %v9412 = vunpack.c.l.b16 %v9373
      %v9413 = vpack.c.b16 %v9398, %v9397
      %v9414 = vpack.c.b16 %v9400, %v9399
      %v9415 = vpack.c.b16 %v9402, %v9401
      %v9416 = vpack.c.b16 %v9404, %v9403
      %v9417 = vpack.c.b16 %v9406, %v9405
      %v9418 = vpack.c.b16 %v9408, %v9407
      %v9419 = vpack.c.b16 %v9410, %v9409
      %v9420 = vpack.c.b16 %v9412, %v9411
      %9429 = vmatprep.subr.bf16.mxu0 0
      %9430 = vmatpush1.bf16.msra.mxu0 %v9413
      %9431 = vmatprep.subr.bf16.mxu0 0
      %9432 = vmatpush1.bf16.msra.mxu0 %v9414
      %9433 = vmatprep.subr.bf16.mxu0 0
      %9434 = vmatpush1.bf16.msra.mxu0 %v9415
      %9435 = vmatprep.subr.bf16.mxu0 0
      %9436 = vmatpush1.bf16.msra.mxu0 %v9416
      %9437 = vmatprep.subr.bf16.mxu0 0
      %9438 = vmatpush1.bf16.msra.mxu0 %v9417
      %9439 = vmatprep.subr.bf16.mxu0 0
      %9440 = vmatpush1.bf16.msra.mxu0 %v9418
      %9441 = vmatprep.subr.bf16.mxu0 0
      %9442 = vmatpush1.bf16.msra.mxu0 %v9419
      %9443 = vmatprep.subr.bf16.mxu0 0
      %9444 = vmatpush1.bf16.msra.mxu0 %v9420
      %9445 = vmatprep.subr.bf16.mxu0 0
      %9446 = vmatpush1.bf16.msra.mxu0 0
      %9447 = vmatprep.subr.bf16.mxu0 0
      %9448 = vmatpush1.bf16.msra.mxu0 0
      %9449 = vmatprep.subr.bf16.mxu0 0
      %9450 = vmatpush1.bf16.msra.mxu0 0
      %9451 = vmatprep.subr.bf16.mxu0 0
      %9452 = vmatpush1.bf16.msra.mxu0 0
      %9453 = vmatprep.subr.bf16.mxu0 0
      %9454 = vmatpush1.bf16.msra.mxu0 0
      %9455 = vmatprep.subr.bf16.mxu0 0
      %9456 = vmatpush1.bf16.msra.mxu0 0
      %9457 = vmatprep.subr.bf16.mxu0 0
      %9458 = vmatpush1.bf16.msra.mxu0 0
      %9459 = vmatprep.subr.bf16.mxu0 0
      %9460 = vmatpush1.bf16.msra.mxu0 0
      %9461 = vmatprep.mubr.bf16.mxu0 0
      %9462 = vmatmul.mubr.bf16.gmra.mrb[0].mxu0 %v9357
      %v9463 = vpop.f32.mrb[0].mxu0
      %v9464 = vadd.f32 %v9379, %v9463
      %v9465 = vpop.f32.mrb[0].mxu0
      %v9466 = vpop.f32.mrb[0].mxu0
      %v9467 = vpop.f32.mrb[0].mxu0
      %9468 = vdwg.mxu0
      %v9469 = vmax.f32 %v9464, 0.0
      %v9470 = vpack.c.bf16 %v9469, %v9469
      %v9471 = vld [vmem:[%s15] sm:$0xf]
      %v9472 = vld [vmem:[%s15 + $0x4] sm:$0xf]
      %v9473 = vld [vmem:[%s15 + $0x8] sm:$0xf]
      %v9474 = vld [vmem:[%s15 + $0xc] sm:$0xf]
      %v9475 = vld [vmem:[%s15 + $0x10] sm:$0xf]
      %v9476 = vld [vmem:[%s15 + $0x14] sm:$0xf]
      %v9477 = vld [vmem:[%s15 + $0x18] sm:$0xf]
      %v9478 = vld [vmem:[%s15 + $0x1c] sm:$0xf]
      %v9479 = vld [vmem:[%s15 + $0x20] sm:$0xf]
      %v9480 = vld [vmem:[%s15 + $0x24] sm:$0xf]
      %v9481 = vld [vmem:[%s15 + $0x28] sm:$0xf]
      %v9482 = vld [vmem:[%s15 + $0x2c] sm:$0xf]
      %v9483 = vld [vmem:[%s15 + $0x30] sm:$0xf]
      %v9484 = vld [vmem:[%s15 + $0x34] sm:$0xf]
      %v9485 = vld [vmem:[%s15 + $0x38] sm:$0xf]
      %v9486 = vld [vmem:[%s15 + $0x3c] sm:$0xf]
      %v9487 = vld [vmem:[%s16] sm:$0x1]
      %v9489 = vlaneseq
      %v9490 = vshrl.u32 %v9489, 7
      %v9491 = vsub.s32 0, %v9490
      %v9492 = vrot.slane %v9487, %v9491
      %v9510 = vunpack.c.l.b16 %v9471
      %v9511 = vunpack.c.l.b16 %v9472
      %v9512 = vunpack.c.l.b16 %v9473
      %v9513 = vunpack.c.l.b16 %v9474
      %v9514 = vunpack.c.l.b16 %v9475
      %v9515 = vunpack.c.l.b16 %v9476
      %v9516 = vunpack.c.l.b16 %v9477
      %v9517 = vunpack.c.l.b16 %v9478
      %v9518 = vunpack.c.l.b16 %v9479
      %v9519 = vunpack.c.l.b16 %v9480
      %v9520 = vunpack.c.l.b16 %v9481
      %v9521 = vunpack.c.l.b16 %v9482
      %v9522 = vunpack.c.l.b16 %v9483
      %v9523 = vunpack.c.l.b16 %v9484
      %v9524 = vunpack.c.l.b16 %v9485
      %v9525 = vunpack.c.l.b16 %v9486
      %v9526 = vpack.c.b16 %v9511, %v9510
      %v9527 = vpack.c.b16 %v9513, %v9512
      %v9528 = vpack.c.b16 %v9515, %v9514
      %v9529 = vpack.c.b16 %v9517, %v9516
      %v9530 = vpack.c.b16 %v9519, %v9518
      %v9531 = vpack.c.b16 %v9521, %v9520
      %v9532 = vpack.c.b16 %v9523, %v9522
      %v9533 = vpack.c.b16 %v9525, %v9524
      %9542 = vmatprep.subr.bf16.mxu0 0
      %9543 = vmatpush1.bf16.msra.mxu0 %v9526
      %9544 = vmatprep.subr.bf16.mxu0 0
      %9545 = vmatpush1.bf16.msra.mxu0 %v9527
      %9546 = vmatprep.subr.bf16.mxu0 0
      %9547 = vmatpush1.bf16.msra.mxu0 %v9528
      %9548 = vmatprep.subr.bf16.mxu0 0
      %9549 = vmatpush1.bf16.msra.mxu0 %v9529
      %9550 = vmatprep.subr.bf16.mxu0 0
      %9551 = vmatpush1.bf16.msra.mxu0 %v9530
      %9552 = vmatprep.subr.bf16.mxu0 0
      %9553 = vmatpush1.bf16.msra.mxu0 %v9531
      %9554 = vmatprep.subr.bf16.mxu0 0
      %9555 = vmatpush1.bf16.msra.mxu0 %v9532
      %9556 = vmatprep.subr.bf16.mxu0 0
      %9557 = vmatpush1.bf16.msra.mxu0 %v9533
      %9558 = vmatprep.subr.bf16.mxu0 0
      %9559 = vmatpush1.bf16.msra.mxu0 0
      %9560 = vmatprep.subr.bf16.mxu0 0
      %9561 = vmatpush1.bf16.msra.mxu0 0
      %9562 = vmatprep.subr.bf16.mxu0 0
      %9563 = vmatpush1.bf16.msra.mxu0 0
      %9564 = vmatprep.subr.bf16.mxu0 0
      %9565 = vmatpush1.bf16.msra.mxu0 0
      %9566 = vmatprep.subr.bf16.mxu0 0
      %9567 = vmatpush1.bf16.msra.mxu0 0
      %9568 = vmatprep.subr.bf16.mxu0 0
      %9569 = vmatpush1.bf16.msra.mxu0 0
      %9570 = vmatprep.subr.bf16.mxu0 0
      %9571 = vmatpush1.bf16.msra.mxu0 0
      %9572 = vmatprep.subr.bf16.mxu0 0
      %9573 = vmatpush1.bf16.msra.mxu0 0
      %9574 = vmatprep.mubr.bf16.mxu0 0
      %9575 = vmatmul.mubr.bf16.gmra.mrb[0].mxu0 %v9470
      %v9576 = vpop.f32.mrb[0].mxu0
      %v9577 = vadd.f32 %v9492, %v9576
      %v9578 = vpop.f32.mrb[0].mxu0
      %v9579 = vpop.f32.mrb[0].mxu0
      %v9580 = vpop.f32.mrb[0].mxu0
      %9581 = vdwg.mxu0
      %vm9582 = vcmask 11264
      %v9583 = vsel %vm9582, %v9577, -inf
      %9584 = vmax.xlane.f32.xlu0 %v9583
      %v9585 = vpop.xlane.xlu0 %9584
      %v9586 = vsub.f32 %v9577, %v9585
      %v9587 = vmul.f32 %v9586, 1.442695
      %v9588 = vpow.pop %v9587
      %v9589 = vsel %vm9582, %v9588, 0.0
      %9590 = vadd.xlane.f32.xlu0 %v9589
      %v9591 = vpop.xlane.xlu0 %9590
      %v9592 = vrcp.pop %v9591
      %v9593 = vmul.f32 %v9588, %v9592
      %v9596 = vunpack.c.l.s4 1983009808
      %v9597 = vunpack.c.0.s8 %v9596
      %v9598 = vlaneseq
      %v9599 = vshrl.u32 %v9598, 7
      %v9600 = vsub.s32 %v9597, %v9599
      %v9601 = vrot.slane %v9593, %v9600
      %v9602 = vcombine.high %v9601, %v9601
      %vm9605 = vcmask 9216
      %9606 = vst.msk [vmem:[%s583] sm:$0x3] %vm9605, %v9601
      %9607 = vst.msk [vmem:[%s583 + $0x2] sm:$0x3] %vm9605, %v9602
      %v9608 = vlog2.pop %v9591
      %v9609 = vmul.f32 %v9608, 0.6931472
      %v9610 = vsub.f32 %v9586, %v9609
      %v9613 = vunpack.c.l.s4 1983009808
      %v9614 = vunpack.c.0.s8 %v9613
      %v9615 = vlaneseq
      %v9616 = vshrl.u32 %v9615, 7
      %v9617 = vsub.s32 %v9614, %v9616
      %v9618 = vrot.slane %v9610, %v9617
      %v9619 = vcombine.high %v9618, %v9618
      %9622 = vst.msk [vmem:[%s588] sm:$0x3] %vm9605, %v9618
      %9623 = vst.msk [vmem:[%s588 + $0x2] sm:$0x3] %vm9605, %v9619
      %p9624 = scmp.lt.s32.totalorder %s30, 1
      %s9625 = scalar_select %p9624, %s30, 1
      %s9626 = smul.addr %s9625, 2
      %s9627 = smul.addr %s9626, 2
      %s9628 = scalar_lea.vmem %s17, %s9627
      %p9629 = scmp.lt.s32.totalorder %s30, 1
      %s9630 = scalar_select %p9629, %s30, 1
      %s9631 = smul.addr %s9630, 2
      %s9632 = smul.addr %s9631, 2
      %s9633 = scalar_lea.vmem %s18, %s9632
      // Predicated region
      $region89: #{_lambda_.1} parent=87 // pred_check
        %p9634 = pneg %p410
      $region90: #{_lambda_.1} parent=87 // pred_check_branch
        %9636 = sbr.rel (%p9634) target = $region92
      $region91: #{_lambda_.1} parent=87 // pred_region
        _
      $region92: #{_lambda_.1} parent=87 // pred_fallthru
        _
      // Predicated region
      $region93: #{_lambda_.1} parent=87 // pred_check
        %p9637 = pneg %p436
      $region94: #{_lambda_.1} parent=87 // pred_check_branch
        %9639 = sbr.rel (%p9637) target = $region96
      $region95: #{_lambda_.1} parent=87 // pred_region
        _
      $region96: #{_lambda_.1} parent=87 // pred_fallthru
        _
    $region88: #{_lambda_.1} parent=5 // pred_fallthru
      _
    %p9640 = scmp.le.s32.totalorder 2, %s25
    // Predicated region
    $region97: #{_lambda_.1} parent=5 // pred_check
      %p9641 = pneg %p9640
    $region98: #{_lambda_.1} parent=5 // pred_check_branch
      %9643 = sbr.rel (%p9641) target = $region100
    $region99: #{_lambda_.1} parent=5 // pred_region
      %s9644 = ssub.s32 %s25, 2
      // Predicated region
      $region101: #{_lambda_.1} parent=99 // pred_check
        %p9645 = pneg %p416
      $region102: #{_lambda_.1} parent=99 // pred_check_branch
        %9647 = sbr.rel (%p9645) target = $region104
      $region103: #{_lambda_.1} parent=99 // pred_region
        %p9648 = scmp.lt.s32.totalorder %s31, 1
        %s9649 = scalar_select %p9648, %s31, 1
        %s9650 = smul.addr %s9649, 2
        %s9651 = smul.addr %s9650, 2
        %s9652 = scalar_lea.vmem %s17, %s9651
      $region104: #{_lambda_.1} parent=99 // pred_fallthru
        _
      // Predicated region
      $region105: #{_lambda_.1} parent=99 // pred_check
        %p9653 = pneg %p442
      $region106: #{_lambda_.1} parent=99 // pred_check_branch
        %9655 = sbr.rel (%p9653) target = $region108
      $region107: #{_lambda_.1} parent=99 // pred_region
        %p9656 = scmp.lt.s32.totalorder %s31, 1
        %s9657 = scalar_select %p9656, %s31, 1
        %s9658 = smul.addr %s9657, 2
        %s9659 = smul.addr %s9658, 2
        %s9660 = scalar_lea.vmem %s18, %s9659
      $region108: #{_lambda_.1} parent=99 // pred_fallthru
        _
    $region100: #{_lambda_.1} parent=5 // pred_fallthru
      _
  $region6: #{_lambda_.1} parent=0 // loop_footer
    %s29 = sadd.s32 1, %s25
  $region7: #{_lambda_.1} parent=0 // loop_footer_branch
    %24 = sbr.rel target = $region3
  $region8: #{_lambda_.1} parent=0 // loop_exit
    _

</llo_original>
